<compile_context>
chip_gen: v5e
topology: v5e:2x2
jax: 0.10.0
libtpu: 0.0.40
codegen_flags: <defaults>
</compile_context>

<pallas_src>
import functools

import numpy as np

import jax
import jax.numpy as jnp
from jax.experimental import pallas as pl
from jax.experimental.pallas import tpu as pltpu

_EPS = 1e-5


# ----------------------------------------------------------------------------- kernels


def _conv_stats_kernel(*refs, apply_bn_relu):
    """3x3 conv (pad=1, no bias) on one R-row slab + fused BN stat partials.

    If apply_bn_relu, a per-channel affine + ReLU (the previous layer's folded
    BatchNorm) is applied to the input while staging it into the padded
    scratch (halos included), so the zero padding stays zero post-activation,
    matching the reference which pads the already-activated tensor.
    """
    if apply_bn_relu:
        (xt_ref, xb_ref, xbot_ref, scale_ref, bias_ref, w_ref,
         out_ref, stats_ref, xpad_ref) = refs
    else:
        xt_ref, xb_ref, xbot_ref, w_ref, out_ref, stats_ref, xpad_ref = refs
        scale_ref = bias_ref = None

    _, R, W, Cin = xb_ref.shape           # body block = R rows of one image, NHWC
    Cout = out_ref.shape[3]
    cdt = xpad_ref.dtype                  # compute dtype (bf16 or f32)
    rb = pl.program_id(1)
    n_rb = pl.num_programs(1)

    def prep(v):
        if apply_bn_relu:                 # fused BN(prev layer) + ReLU
            v = jnp.maximum(v.astype(jnp.float32) * scale_ref[0] + bias_ref[0], 0.0)
        return v.astype(cdt)

    # ---- stage slab into zero-halo padded scratch (direct sub-view stores) --
    xpad_ref[1:R + 1, 1:W + 1, :] = prep(xb_ref[0])          # body rows
    zcol = jnp.zeros((R + 2, 1, Cin), cdt)
    xpad_ref[:, 0:1, :] = zcol                               # left zero column
    xpad_ref[:, W + 1:W + 2, :] = zcol                       # right zero column
    top = prep(xt_ref[0])                                    # neighbour row above
    xpad_ref[0:1, 1:W + 1, :] = jnp.where(rb > 0, top, jnp.zeros_like(top))
    bot = prep(xbot_ref[0])                                  # neighbour row below
    xpad_ref[R + 1:R + 2, 1:W + 1, :] = jnp.where(rb < n_rb - 1, bot,
                                                  jnp.zeros_like(bot))

    # ---- 9 accumulating tap matmuls on the MXU (K = Cin, f32 accumulation) --
    acc = jnp.zeros((R * W, Cout), jnp.float32)
    for t, (dy, dx) in enumerate([(dy, dx) for dy in range(3) for dx in range(3)]):
        tap = xpad_ref[dy:dy + R, dx:dx + W, :].reshape(R * W, Cin)
        acc = acc + jnp.dot(tap, w_ref[t], preferred_element_type=jnp.float32)

    out_ref[0, :, :, :] = acc.reshape(R, W, Cout).astype(out_ref.dtype)

    # ---- fused BN batch-stat partials (shifted / Chan-combinable form) ------
    cnt = float(R * W)
    s = jnp.sum(acc, axis=0, keepdims=True)                  # (1, Cout)
    mu = s * (1.0 / cnt)
    d = acc - mu
    m2 = jnp.sum(d * d, axis=0, keepdims=True)               # Σ (x - μ_blk)²
    stats_ref[0, 0, :, :] = jnp.concatenate([s, m2], axis=0)  # (2, Cout)


def _bn_relu_kernel(x_ref, scale_ref, bias_ref, o_ref):
    """Pointwise y = max(x * scale + bias, 0) on one row-block."""
    x = x_ref[...].astype(jnp.float32)                       # (1, R, W, C)
    o_ref[...] = jnp.maximum(x * scale_ref[0] + bias_ref[0], 0.0).astype(o_ref.dtype)


# ----------------------------------------------------------------------------- helpers


def _vmem_budget():
    """Generation-aware usable VMEM: ~3/4 of physical, with a safe fallback."""
    try:
        cap = int(pltpu.get_tpu_info().vmem_capacity_bytes)
    except Exception:
        cap = 64 * 1024 * 1024
    return max(32 * 1024 * 1024, (cap * 3) // 4)


def _vmem_limit(block_bytes, budget):
    return int(min(max(4 * block_bytes, 32 * 1024 * 1024), budget))


def _pick_rows_per_block(H, W, cin, cout, itemsize, budget, max_m=2048):
    """Largest divisor R of H whose slab fits the VMEM budget, prefer R*W % 8 == 0."""
    def footprint(r):
        return (2 * r * W * cin * itemsize            # body block (double-buffered)
                + 2 * r * W * cout * itemsize         # output block (double-buffered)
                + (r + 2) * (W + 2) * cin * itemsize  # padded staging scratch
                + r * W * (cin + 4 * cout) * itemsize # tap load + f32 accumulator
                + 9 * cin * cout * itemsize)

    divs = [r for r in range(1, H + 1) if H % r == 0]
    ok = [r for r in divs if r * W <= max_m and footprint(r) <= budget // 2]
    if not ok:
        ok = [min(divs)]
    aligned = [r for r in ok if (r * W) % 8 == 0]
    return max(aligned) if aligned else max(ok)


def _fold_bn(stats, gamma, beta, n_elems, cnt_blk):
    """Chan-style merge of per-block [sum, M2] partials -> BN scale/bias."""
    s = stats[:, :, 0, :]                                   # (N, HB, C)
    m2 = stats[:, :, 1, :]
    total_sum = jnp.sum(s, axis=(0, 1))
    mean = total_sum / n_elems
    mu_blk = s / cnt_blk
    m2_tot = jnp.sum(m2, axis=(0, 1)) + cnt_blk * jnp.sum((mu_blk - mean) ** 2,
                                                          axis=(0, 1))
    var = jnp.maximum(m2_tot / n_elems, 0.0)                # biased var (training BN)
    scale = gamma.astype(jnp.float32) * jax.lax.rsqrt(var + _EPS)
    bias = beta.astype(jnp.float32) - mean * scale
    return scale.reshape(1, -1), bias.reshape(1, -1)


# ----------------------------------------------------------------------------- passes


def _conv_pass(x, w9, scale, bias, cout, compute_dtype, apply_bn_relu, R, budget):
    """One conv layer: grid (N, H//R), one R-row slab per step, both axes parallel."""
    N, H, W, cin = x.shape
    HB = H // R
    kernel = functools.partial(_conv_stats_kernel, apply_bn_relu=apply_bn_relu)

    body_spec = pl.BlockSpec((1, R, W, cin), lambda n, rb: (n, rb, 0, 0))
    top_spec = pl.BlockSpec((1, 1, W, cin),
                            lambda n, rb: (n, jnp.maximum(rb * R - 1, 0), 0, 0))
    bot_spec = pl.BlockSpec((1, 1, W, cin),
                            lambda n, rb: (n, jnp.minimum(rb * R + R, H - 1), 0, 0))
    w_spec = pl.BlockSpec(w9.shape, lambda n, rb: (0, 0, 0))
    vec_spec = pl.BlockSpec((1, cin), lambda n, rb: (0, 0))
    if apply_bn_relu:
        in_specs = [top_spec, body_spec, bot_spec, vec_spec, vec_spec, w_spec]
        args = (x, x, x, scale, bias, w9)
    else:
        in_specs = [top_spec, body_spec, bot_spec, w_spec]
        args = (x, x, x, w9)

    itemsize = np.dtype(compute_dtype).itemsize
    block_bytes = (2 * R * W * cin * x.dtype.itemsize       # body (double-buffered)
                   + 4 * W * cin * x.dtype.itemsize         # halo rows
                   + 2 * R * W * cout * itemsize            # output block
                   + (R + 2) * (W + 2) * cin * itemsize     # padded staging scratch
                   + 9 * cin * cout * itemsize              # weights
                   + R * W * (cin + 4 * cout) * itemsize    # tap load + f32 acc
                   + 256 * 1024)

    return pl.pallas_call(
        kernel,
        grid=(N, HB),
        in_specs=in_specs,
        out_specs=(pl.BlockSpec((1, R, W, cout), lambda n, rb: (n, rb, 0, 0)),
                   pl.BlockSpec((1, 1, 2, cout), lambda n, rb: (n, rb, 0, 0))),
        out_shape=(jax.ShapeDtypeStruct((N, H, W, cout), compute_dtype),
                   jax.ShapeDtypeStruct((N, HB, 2, cout), jnp.float32)),
        scratch_shapes=[pltpu.VMEM((R + 2, W + 2, cin), compute_dtype)],
        compiler_params=pltpu.CompilerParams(
            dimension_semantics=("parallel", "parallel"),
            vmem_limit_bytes=_vmem_limit(block_bytes, budget)),
    )(*args)


def _bn_relu_pass(x, scale, bias, R, budget, out_dtype=jnp.float32):
    N, H, W, C = x.shape
    HB = H // R
    block_bytes = 2 * R * W * C * (x.dtype.itemsize + np.dtype(out_dtype).itemsize) \
        + 256 * 1024
    return pl.pallas_call(
        _bn_relu_kernel,
        grid=(N, HB),
        in_specs=[pl.BlockSpec((1, R, W, C), lambda n, rb: (n, rb, 0, 0)),
                  pl.BlockSpec((1, C), lambda n, rb: (0, 0)),
                  pl.BlockSpec((1, C), lambda n, rb: (0, 0))],
        out_specs=pl.BlockSpec((1, R, W, C), lambda n, rb: (n, rb, 0, 0)),
        out_shape=jax.ShapeDtypeStruct((N, H, W, C), out_dtype),
        compiler_params=pltpu.CompilerParams(
            dimension_semantics=("parallel", "parallel"),
            vmem_limit_bytes=_vmem_limit(block_bytes, budget)),
    )(x, scale, bias)


# ----------------------------------------------------------------------------- top level


@functools.partial(jax.jit, static_argnames=("compute_dtype",))
def double_conv(x_nchw, w1, g1, b1, w2, g2, b2, compute_dtype=jnp.bfloat16):
    """DoubleConv forward. x: (N,Cin,H,W); conv weights OIHW; returns (N,Cout,H,W) f32."""
    N, Cin, H, W = x_nchw.shape
    Cmid = w1.shape[0]
    Cout = w2.shape[0]
    itemsize = np.dtype(compute_dtype).itemsize
    budget = _vmem_budget()
    R1 = _pick_rows_per_block(H, W, Cin, Cmid, itemsize, budget)
    R2 = _pick_rows_per_block(H, W, Cmid, Cout, itemsize, budget)

    # Layout glue: NCHW -> NHWC (channels on lanes); OIHW -> (9, Cin, Cout),
    # tap order (dy, dx) matching the in-kernel loop.
    x = jnp.transpose(x_nchw, (0, 2, 3, 1)).astype(compute_dtype)
    w1t = jnp.transpose(w1, (2, 3, 1, 0)).reshape(9, Cin, Cmid).astype(compute_dtype)
    w2t = jnp.transpose(w2, (2, 3, 1, 0)).reshape(9, Cmid, Cout).astype(compute_dtype)

    count = N * H * W
    # conv1 + fused batch-stat partials.
    h1, st1 = _conv_pass(x, w1t, None, None, Cmid, compute_dtype, False, R1, budget)
    sc1, bi1 = _fold_bn(st1, g1, b1, count, R1 * W)
    # BN1+ReLU applied on-the-fly while staging conv2's input; conv2 + stats.
    h2, st2 = _conv_pass(h1, w2t, sc1, bi1, Cout, compute_dtype, True, R2, budget)
    sc2, bi2 = _fold_bn(st2, g2, b2, count, R2 * W)
    # BN2 + ReLU (f32 output to match the PyTorch module's dtype semantics).
    out = _bn_relu_pass(h2, sc2, bi2, R2, budget, out_dtype=jnp.float32)
    return jnp.transpose(out, (0, 3, 1, 2))                  # back to NCHW


# ----------------------------------------------------------------------------- reference


def double_conv_reference(x, w1, g1, b1, w2, g2, b2):
    """Pure-JAX reference matching PyTorch DoubleConv.forward (training-mode BN)."""
    def conv(x, w):
        return jax.lax.conv_general_dilated(
            x, w, window_strides=(1, 1), padding=((1, 1), (1, 1)),
            dimension_numbers=("NCHW", "OIHW", "NCHW"))

    def bn_relu(x, g, b):
        mu = jnp.mean(x, axis=(0, 2, 3), keepdims=True)
        var = jnp.mean((x - mu) ** 2, axis=(0, 2, 3), keepdims=True)
        y = (x - mu) * jax.lax.rsqrt(var + _EPS)
        y = y * g.reshape(1, -1, 1, 1) + b.reshape(1, -1, 1, 1)
        return jnp.maximum(y, 0.0)

    h = bn_relu(conv(x, w1), g1, b1)
    return bn_relu(conv(h, w2), g2, b2)


if __name__ == "__main__":
    N, Cin, Cmid, Cout, H, W = 2, 4, 8, 8, 16, 16

    key = jax.random.PRNGKey(0)
    k = jax.random.split(key, 7)
    x = jax.random.normal(k[0], (N, Cin, H, W), jnp.float32)
    w1 = 0.2 * jax.random.normal(k[1], (Cmid, Cin, 3, 3), jnp.float32)   # conv1 weight
    w2 = 0.2 * jax.random.normal(k[2], (Cout, Cmid, 3, 3), jnp.float32)  # conv2 weight
    g1 = 1.0 + 0.1 * jax.random.normal(k[3], (Cmid,), jnp.float32)       # BN1 gamma
    b1 = 0.1 * jax.random.normal(k[4], (Cmid,), jnp.float32)             # BN1 beta
    g2 = 1.0 + 0.1 * jax.random.normal(k[5], (Cout,), jnp.float32)       # BN2 gamma
    b2 = 0.1 * jax.random.normal(k[6], (Cout,), jnp.float32)             # BN2 beta

    ref = jax.block_until_ready(double_conv_reference(x, w1, g1, b1, w2, g2, b2))

    # Exact-semantics path (f32 MXU compute): tight elementwise check.
    out_f32 = jax.block_until_ready(
        double_conv(x, w1, g1, b1, w2, g2, b2, compute_dtype=jnp.float32))
    assert out_f32.shape == (N, Cout, H, W), out_f32.shape
    if not jnp.allclose(out_f32, ref, rtol=2e-3, atol=2e-3):
        max_err = float(jnp.max(jnp.abs(out_f32 - ref)))
        raise AssertionError(f"f32 path mismatch vs reference, max_err={max_err}")

    # Default fast path (bf16 MXU compute, f32 accumulation): relative-L2 check.
    out_bf16 = jax.block_until_ready(double_conv(x, w1, g1, b1, w2, g2, b2))
    assert out_bf16.shape == (N, Cout, H, W), out_bf16.shape
    rel = float(jnp.linalg.norm(out_bf16 - ref) / (jnp.linalg.norm(ref) + 1e-12))
    if rel > 3e-2:
        raise AssertionError(f"bf16 path relative L2 error too large: {rel}")

    print("KERNEL_OK")
</pallas_src>

<mosaic_0001>
module attributes {stable_mosaic.version = 11 : i64} {
  func.func @_conv_stats_kernel(%arg0: i32, %arg1: i32, %arg2: memref<1x1x16x4xf32, #tpu.memory_space<vmem>>, %arg3: memref<1x16x16x4xf32, #tpu.memory_space<vmem>>, %arg4: memref<1x1x16x4xf32, #tpu.memory_space<vmem>>, %arg5: memref<9x4x8xf32, #tpu.memory_space<vmem>>, %arg6: memref<1x16x16x8xf32, #tpu.memory_space<vmem>>, %arg7: memref<1x1x2x8xf32, #tpu.memory_space<vmem>>, %arg8: memref<18x18x4xf32, #tpu.memory_space<vmem>>) attributes {dimension_semantics = [#tpu.dimension_semantics<parallel>, #tpu.dimension_semantics<parallel>], iteration_bounds = array<i64: 2, 1>, scalar_prefetch = 0 : i64, scratch_operands = 1 : i64, tpu.core_type = #tpu.core_type<tc>, window_params = [{transform_indices = @transform_0, window_bounds = array<i64: 1, 1, 16, 4>}, {transform_indices = @transform_1, window_bounds = array<i64: 1, 16, 16, 4>}, {transform_indices = @transform_2, window_bounds = array<i64: 1, 1, 16, 4>}, {pipeline_mode = #tpu.pipeline_mode<synchronous>, transform_indices = @transform_3, window_bounds = array<i64: 9, 4, 8>}, {transform_indices = @transform_4, window_bounds = array<i64: 1, 16, 16, 8>}, {transform_indices = @transform_5, window_bounds = array<i64: 1, 1, 2, 8>}]} {
    %c0 = arith.constant 0 : index
    %c0_0 = arith.constant 0 : index
    %c0_1 = arith.constant 0 : index
    %c0_2 = arith.constant 0 : index
    %0 = vector.load %arg3[%c0, %c0_0, %c0_1, %c0_2] : memref<1x16x16x4xf32, #tpu.memory_space<vmem>>, vector<1x16x16x4xf32>
    %1 = vector.shape_cast %0 : vector<1x16x16x4xf32> to vector<16x16x4xf32>
    %c1 = arith.constant 1 : index
    %c1_3 = arith.constant 1 : index
    %c0_4 = arith.constant 0 : index
    %2 = vector.load %arg8[%c1, %c1_3, %c0_4] : memref<18x18x4xf32, #tpu.memory_space<vmem>>, vector<16x16x4xf32>
    tpu.vector_store %arg8[%c1, %c1_3, %c0_4], %1 {strides = array<i32>} : memref<18x18x4xf32, #tpu.memory_space<vmem>>, vector<16x16x4xf32>,
    %cst = arith.constant 0.000000e+00 : f32
    %3 = vector.broadcast %cst : f32 to vector<18x1x4xf32>
    %c0_5 = arith.constant 0 : index
    %c0_6 = arith.constant 0 : index
    %c0_7 = arith.constant 0 : index
    %4 = vector.load %arg8[%c0_5, %c0_6, %c0_7] : memref<18x18x4xf32, #tpu.memory_space<vmem>>, vector<18x1x4xf32>
    tpu.vector_store %arg8[%c0_5, %c0_6, %c0_7], %3 {strides = array<i32>} : memref<18x18x4xf32, #tpu.memory_space<vmem>>, vector<18x1x4xf32>,
    %c0_8 = arith.constant 0 : index
    %c17 = arith.constant 17 : index
    %c0_9 = arith.constant 0 : index
    %5 = vector.load %arg8[%c0_8, %c17, %c0_9] : memref<18x18x4xf32, #tpu.memory_space<vmem>>, vector<18x1x4xf32>
    tpu.vector_store %arg8[%c0_8, %c17, %c0_9], %3 {strides = array<i32>} : memref<18x18x4xf32, #tpu.memory_space<vmem>>, vector<18x1x4xf32>,
    %c0_10 = arith.constant 0 : index
    %c0_11 = arith.constant 0 : index
    %c0_12 = arith.constant 0 : index
    %c0_13 = arith.constant 0 : index
    %6 = vector.load %arg2[%c0_10, %c0_11, %c0_12, %c0_13] : memref<1x1x16x4xf32, #tpu.memory_space<vmem>>, vector<1x1x16x4xf32>
    %7 = vector.shape_cast %6 : vector<1x1x16x4xf32> to vector<1x16x4xf32>
    %c0_i32 = arith.constant 0 : i32
    %8 = arith.cmpi sgt, %arg1, %c0_i32 : i32
    %cst_14 = arith.constant 0.000000e+00 : f32
    %9 = vector.broadcast %cst_14 : f32 to vector<1x16x4xf32>
    %10 = arith.select %8, %7, %9 : vector<1x16x4xf32>
    %c0_15 = arith.constant 0 : index
    %c1_16 = arith.constant 1 : index
    %c0_17 = arith.constant 0 : index
    %11 = vector.load %arg8[%c0_15, %c1_16, %c0_17] : memref<18x18x4xf32, #tpu.memory_space<vmem>>, vector<1x16x4xf32>
    tpu.vector_store %arg8[%c0_15, %c1_16, %c0_17], %10 {strides = array<i32>} : memref<18x18x4xf32, #tpu.memory_space<vmem>>, vector<1x16x4xf32>,
    %c0_18 = arith.constant 0 : index
    %c0_19 = arith.constant 0 : index
    %c0_20 = arith.constant 0 : index
    %c0_21 = arith.constant 0 : index
    %12 = vector.load %arg4[%c0_18, %c0_19, %c0_20, %c0_21] : memref<1x1x16x4xf32, #tpu.memory_space<vmem>>, vector<1x1x16x4xf32>
    %13 = vector.shape_cast %12 : vector<1x1x16x4xf32> to vector<1x16x4xf32>
    %c0_i32_22 = arith.constant 0 : i32
    %14 = arith.cmpi slt, %arg1, %c0_i32_22 : i32
    %cst_23 = arith.constant 0.000000e+00 : f32
    %15 = vector.broadcast %cst_23 : f32 to vector<1x16x4xf32>
    %16 = arith.select %14, %13, %15 : vector<1x16x4xf32>
    %c17_24 = arith.constant 17 : index
    %c1_25 = arith.constant 1 : index
    %c0_26 = arith.constant 0 : index
    %17 = vector.load %arg8[%c17_24, %c1_25, %c0_26] : memref<18x18x4xf32, #tpu.memory_space<vmem>>, vector<1x16x4xf32>
    tpu.vector_store %arg8[%c17_24, %c1_25, %c0_26], %16 {strides = array<i32>} : memref<18x18x4xf32, #tpu.memory_space<vmem>>, vector<1x16x4xf32>,
    %cst_27 = arith.constant 0.000000e+00 : f32
    %18 = vector.broadcast %cst_27 : f32 to vector<256x8xf32>
    %c0_28 = arith.constant 0 : index
    %c0_29 = arith.constant 0 : index
    %c0_30 = arith.constant 0 : index
    %19 = vector.load %arg8[%c0_28, %c0_29, %c0_30] : memref<18x18x4xf32, #tpu.memory_space<vmem>>, vector<16x16x4xf32>
    %20 = vector.shape_cast %19 : vector<16x16x4xf32> to vector<256x4xf32>
    %c0_31 = arith.constant 0 : index
    %c0_32 = arith.constant 0 : index
    %c0_33 = arith.constant 0 : index
    %21 = vector.load %arg5[%c0_31, %c0_32, %c0_33] : memref<9x4x8xf32, #tpu.memory_space<vmem>>, vector<1x4x8xf32>
    %22 = vector.shape_cast %21 : vector<1x4x8xf32> to vector<4x8xf32>
    %cst_34 = arith.constant dense<0.000000e+00> : vector<256x8xf32>
    %23 = tpu.matmul %20, %22, %cst_34 {dimension_numbers = #tpu.dot_dimension_numbers<[1], [0], [0], [1], [0, 0, 1, 1], [], []>} : vector<256x4xf32>, vector<4x8xf32>, vector<256x8xf32> -> vector<256x8xf32>
    %24 = arith.addf %18, %23 : vector<256x8xf32>
    %c0_35 = arith.constant 0 : index
    %c1_36 = arith.constant 1 : index
    %c0_37 = arith.constant 0 : index
    %25 = vector.load %arg8[%c0_35, %c1_36, %c0_37] : memref<18x18x4xf32, #tpu.memory_space<vmem>>, vector<16x16x4xf32>
    %26 = vector.shape_cast %25 : vector<16x16x4xf32> to vector<256x4xf32>
    %c1_38 = arith.constant 1 : index
    %c0_39 = arith.constant 0 : index
    %c0_40 = arith.constant 0 : index
    %27 = vector.load %arg5[%c1_38, %c0_39, %c0_40] : memref<9x4x8xf32, #tpu.memory_space<vmem>>, vector<1x4x8xf32>
    %28 = vector.shape_cast %27 : vector<1x4x8xf32> to vector<4x8xf32>
    %cst_41 = arith.constant dense<0.000000e+00> : vector<256x8xf32>
    %29 = tpu.matmul %26, %28, %cst_41 {dimension_numbers = #tpu.dot_dimension_numbers<[1], [0], [0], [1], [0, 0, 1, 1], [], []>} : vector<256x4xf32>, vector<4x8xf32>, vector<256x8xf32> -> vector<256x8xf32>
    %30 = arith.addf %24, %29 : vector<256x8xf32>
    %c0_42 = arith.constant 0 : index
    %c2 = arith.constant 2 : index
    %c0_43 = arith.constant 0 : index
    %31 = vector.load %arg8[%c0_42, %c2, %c0_43] : memref<18x18x4xf32, #tpu.memory_space<vmem>>, vector<16x16x4xf32>
    %32 = vector.shape_cast %31 : vector<16x16x4xf32> to vector<256x4xf32>
    %c2_44 = arith.constant 2 : index
    %c0_45 = arith.constant 0 : index
    %c0_46 = arith.constant 0 : index
    %33 = vector.load %arg5[%c2_44, %c0_45, %c0_46] : memref<9x4x8xf32, #tpu.memory_space<vmem>>, vector<1x4x8xf32>
    %34 = vector.shape_cast %33 : vector<1x4x8xf32> to vector<4x8xf32>
    %cst_47 = arith.constant dense<0.000000e+00> : vector<256x8xf32>
    %35 = tpu.matmul %32, %34, %cst_47 {dimension_numbers = #tpu.dot_dimension_numbers<[1], [0], [0], [1], [0, 0, 1, 1], [], []>} : vector<256x4xf32>, vector<4x8xf32>, vector<256x8xf32> -> vector<256x8xf32>
    %36 = arith.addf %30, %35 : vector<256x8xf32>
    %c1_48 = arith.constant 1 : index
    %c0_49 = arith.constant 0 : index
    %c0_50 = arith.constant 0 : index
    %37 = vector.load %arg8[%c1_48, %c0_49, %c0_50] : memref<18x18x4xf32, #tpu.memory_space<vmem>>, vector<16x16x4xf32>
    %38 = vector.shape_cast %37 : vector<16x16x4xf32> to vector<256x4xf32>
    %c3 = arith.constant 3 : index
    %c0_51 = arith.constant 0 : index
    %c0_52 = arith.constant 0 : index
    %39 = vector.load %arg5[%c3, %c0_51, %c0_52] : memref<9x4x8xf32, #tpu.memory_space<vmem>>, vector<1x4x8xf32>
    %40 = vector.shape_cast %39 : vector<1x4x8xf32> to vector<4x8xf32>
    %cst_53 = arith.constant dense<0.000000e+00> : vector<256x8xf32>
    %41 = tpu.matmul %38, %40, %cst_53 {dimension_numbers = #tpu.dot_dimension_numbers<[1], [0], [0], [1], [0, 0, 1, 1], [], []>} : vector<256x4xf32>, vector<4x8xf32>, vector<256x8xf32> -> vector<256x8xf32>
    %42 = arith.addf %36, %41 : vector<256x8xf32>
    %c1_54 = arith.constant 1 : index
    %c1_55 = arith.constant 1 : index
    %c0_56 = arith.constant 0 : index
    %43 = vector.load %arg8[%c1_54, %c1_55, %c0_56] : memref<18x18x4xf32, #tpu.memory_space<vmem>>, vector<16x16x4xf32>
    %44 = vector.shape_cast %43 : vector<16x16x4xf32> to vector<256x4xf32>
    %c4 = arith.constant 4 : index
    %c0_57 = arith.constant 0 : index
    %c0_58 = arith.constant 0 : index
    %45 = vector.load %arg5[%c4, %c0_57, %c0_58] : memref<9x4x8xf32, #tpu.memory_space<vmem>>, vector<1x4x8xf32>
    %46 = vector.shape_cast %45 : vector<1x4x8xf32> to vector<4x8xf32>
    %cst_59 = arith.constant dense<0.000000e+00> : vector<256x8xf32>
    %47 = tpu.matmul %44, %46, %cst_59 {dimension_numbers = #tpu.dot_dimension_numbers<[1], [0], [0], [1], [0, 0, 1, 1], [], []>} : vector<256x4xf32>, vector<4x8xf32>, vector<256x8xf32> -> vector<256x8xf32>
    %48 = arith.addf %42, %47 : vector<256x8xf32>
    %c1_60 = arith.constant 1 : index
    %c2_61 = arith.constant 2 : index
    %c0_62 = arith.constant 0 : index
    %49 = vector.load %arg8[%c1_60, %c2_61, %c0_62] : memref<18x18x4xf32, #tpu.memory_space<vmem>>, vector<16x16x4xf32>
    %50 = vector.shape_cast %49 : vector<16x16x4xf32> to vector<256x4xf32>
    %c5 = arith.constant 5 : index
    %c0_63 = arith.constant 0 : index
    %c0_64 = arith.constant 0 : index
    %51 = vector.load %arg5[%c5, %c0_63, %c0_64] : memref<9x4x8xf32, #tpu.memory_space<vmem>>, vector<1x4x8xf32>
    %52 = vector.shape_cast %51 : vector<1x4x8xf32> to vector<4x8xf32>
    %cst_65 = arith.constant dense<0.000000e+00> : vector<256x8xf32>
    %53 = tpu.matmul %50, %52, %cst_65 {dimension_numbers = #tpu.dot_dimension_numbers<[1], [0], [0], [1], [0, 0, 1, 1], [], []>} : vector<256x4xf32>, vector<4x8xf32>, vector<256x8xf32> -> vector<256x8xf32>
    %54 = arith.addf %48, %53 : vector<256x8xf32>
    %c2_66 = arith.constant 2 : index
    %c0_67 = arith.constant 0 : index
    %c0_68 = arith.constant 0 : index
    %55 = vector.load %arg8[%c2_66, %c0_67, %c0_68] : memref<18x18x4xf32, #tpu.memory_space<vmem>>, vector<16x16x4xf32>
    %56 = vector.shape_cast %55 : vector<16x16x4xf32> to vector<256x4xf32>
    %c6 = arith.constant 6 : index
    %c0_69 = arith.constant 0 : index
    %c0_70 = arith.constant 0 : index
    %57 = vector.load %arg5[%c6, %c0_69, %c0_70] : memref<9x4x8xf32, #tpu.memory_space<vmem>>, vector<1x4x8xf32>
    %58 = vector.shape_cast %57 : vector<1x4x8xf32> to vector<4x8xf32>
    %cst_71 = arith.constant dense<0.000000e+00> : vector<256x8xf32>
    %59 = tpu.matmul %56, %58, %cst_71 {dimension_numbers = #tpu.dot_dimension_numbers<[1], [0], [0], [1], [0, 0, 1, 1], [], []>} : vector<256x4xf32>, vector<4x8xf32>, vector<256x8xf32> -> vector<256x8xf32>
    %60 = arith.addf %54, %59 : vector<256x8xf32>
    %c2_72 = arith.constant 2 : index
    %c1_73 = arith.constant 1 : index
    %c0_74 = arith.constant 0 : index
    %61 = vector.load %arg8[%c2_72, %c1_73, %c0_74] : memref<18x18x4xf32, #tpu.memory_space<vmem>>, vector<16x16x4xf32>
    %62 = vector.shape_cast %61 : vector<16x16x4xf32> to vector<256x4xf32>
    %c7 = arith.constant 7 : index
    %c0_75 = arith.constant 0 : index
    %c0_76 = arith.constant 0 : index
    %63 = vector.load %arg5[%c7, %c0_75, %c0_76] : memref<9x4x8xf32, #tpu.memory_space<vmem>>, vector<1x4x8xf32>
    %64 = vector.shape_cast %63 : vector<1x4x8xf32> to vector<4x8xf32>
    %cst_77 = arith.constant dense<0.000000e+00> : vector<256x8xf32>
    %65 = tpu.matmul %62, %64, %cst_77 {dimension_numbers = #tpu.dot_dimension_numbers<[1], [0], [0], [1], [0, 0, 1, 1], [], []>} : vector<256x4xf32>, vector<4x8xf32>, vector<256x8xf32> -> vector<256x8xf32>
    %66 = arith.addf %60, %65 : vector<256x8xf32>
    %c2_78 = arith.constant 2 : index
    %c2_79 = arith.constant 2 : index
    %c0_80 = arith.constant 0 : index
    %67 = vector.load %arg8[%c2_78, %c2_79, %c0_80] : memref<18x18x4xf32, #tpu.memory_space<vmem>>, vector<16x16x4xf32>
    %68 = vector.shape_cast %67 : vector<16x16x4xf32> to vector<256x4xf32>
    %c8 = arith.constant 8 : index
    %c0_81 = arith.constant 0 : index
    %c0_82 = arith.constant 0 : index
    %69 = vector.load %arg5[%c8, %c0_81, %c0_82] : memref<9x4x8xf32, #tpu.memory_space<vmem>>, vector<1x4x8xf32>
    %70 = vector.shape_cast %69 : vector<1x4x8xf32> to vector<4x8xf32>
    %cst_83 = arith.constant dense<0.000000e+00> : vector<256x8xf32>
    %71 = tpu.matmul %68, %70, %cst_83 {dimension_numbers = #tpu.dot_dimension_numbers<[1], [0], [0], [1], [0, 0, 1, 1], [], []>} : vector<256x4xf32>, vector<4x8xf32>, vector<256x8xf32> -> vector<256x8xf32>
    %72 = arith.addf %66, %71 : vector<256x8xf32>
    %73 = vector.shape_cast %72 : vector<256x8xf32> to vector<16x16x8xf32>
    %c0_84 = arith.constant 0 : index
    %c0_85 = arith.constant 0 : index
    %c0_86 = arith.constant 0 : index
    %c0_87 = arith.constant 0 : index
    %74 = vector.load %arg6[%c0_84, %c0_85, %c0_86, %c0_87] : memref<1x16x16x8xf32, #tpu.memory_space<vmem>>, vector<1x16x16x8xf32>
    %75 = vector.shape_cast %74 : vector<1x16x16x8xf32> to vector<16x16x8xf32>
    %76 = vector.shape_cast %73 : vector<16x16x8xf32> to vector<1x16x16x8xf32>
    tpu.vector_store %arg6[%c0_84, %c0_85, %c0_86, %c0_87], %76 {strides = array<i32>} : memref<1x16x16x8xf32, #tpu.memory_space<vmem>>, vector<1x16x16x8xf32>,
    %cst_88 = arith.constant dense<0.000000e+00> : vector<8xf32>
    %77 = vector.multi_reduction <add>, %72, %cst_88 [0] : vector<256x8xf32> to vector<8xf32>
    %78 = vector.shape_cast %77 : vector<8xf32> to vector<1x8xf32>
    %cst_89 = arith.constant 3.906250e-03 : f32
    %79 = vector.broadcast %cst_89 : f32 to vector<1x8xf32>
    %80 = arith.mulf %78, %79 : vector<1x8xf32>
    %81 = vector.broadcast %80 : vector<1x8xf32> to vector<256x8xf32>
    %82 = arith.subf %72, %81 : vector<256x8xf32>
    %83 = arith.mulf %82, %82 : vector<256x8xf32>
    %cst_90 = arith.constant dense<0.000000e+00> : vector<8xf32>
    %84 = vector.multi_reduction <add>, %83, %cst_90 [0] : vector<256x8xf32> to vector<8xf32>
    %85 = vector.shape_cast %84 : vector<8xf32> to vector<1x8xf32>
    %86 = tpu.concatenate %78, %85 in 0 : vector<1x8xf32>, vector<1x8xf32> -> vector<2x8xf32>
    %c0_91 = arith.constant 0 : index
    %c0_92 = arith.constant 0 : index
    %c0_93 = arith.constant 0 : index
    %c0_94 = arith.constant 0 : index
    %87 = vector.load %arg7[%c0_91, %c0_92, %c0_93, %c0_94] : memref<1x1x2x8xf32, #tpu.memory_space<vmem>>, vector<1x1x2x8xf32>
    %88 = vector.shape_cast %87 : vector<1x1x2x8xf32> to vector<2x8xf32>
    %89 = vector.shape_cast %86 : vector<2x8xf32> to vector<1x1x2x8xf32>
    tpu.vector_store %arg7[%c0_91, %c0_92, %c0_93, %c0_94], %89 {strides = array<i32>} : memref<1x1x2x8xf32, #tpu.memory_space<vmem>>, vector<1x1x2x8xf32>,
    return
  }
  func.func @transform_0(%arg0: i32, %arg1: i32) -> (i32, i32, i32, i32) {
    %c16_i32 = arith.constant 16 : i32
    %0 = arith.muli %arg1, %c16_i32 : i32
    %c1_i32 = arith.constant 1 : i32
    %1 = arith.subi %0, %c1_i32 : i32
    %c0_i32 = arith.constant 0 : i32
    %2 = arith.maxsi %1, %c0_i32 : i32
    %c0_i32_0 = arith.constant 0 : i32
    %c0_i32_1 = arith.constant 0 : i32
    %c0_i32_2 = arith.constant 0 : i32
    return %arg0, %2, %c0_i32_0, %c0_i32_1 : i32, i32, i32, i32
  }
  func.func @transform_1(%arg0: i32, %arg1: i32) -> (i32, i32, i32, i32) {
    %c0_i32 = arith.constant 0 : i32
    %c0_i32_0 = arith.constant 0 : i32
    %c0_i32_1 = arith.constant 0 : i32
    return %arg0, %arg1, %c0_i32, %c0_i32_0 : i32, i32, i32, i32
  }
  func.func @transform_2(%arg0: i32, %arg1: i32) -> (i32, i32, i32, i32) {
    %c16_i32 = arith.constant 16 : i32
    %0 = arith.muli %arg1, %c16_i32 : i32
    %c16_i32_0 = arith.constant 16 : i32
    %1 = arith.addi %0, %c16_i32_0 : i32
    %c15_i32 = arith.constant 15 : i32
    %2 = arith.minsi %1, %c15_i32 : i32
    %c0_i32 = arith.constant 0 : i32
    %c0_i32_1 = arith.constant 0 : i32
    %c0_i32_2 = arith.constant 0 : i32
    return %arg0, %2, %c0_i32, %c0_i32_1 : i32, i32, i32, i32
  }
  func.func @transform_3(%arg0: i32, %arg1: i32) -> (i32, i32, i32) {
    %c0_i32 = arith.constant 0 : i32
    %c0_i32_0 = arith.constant 0 : i32
    %c0_i32_1 = arith.constant 0 : i32
    %c0_i32_2 = arith.constant 0 : i32
    return %c0_i32, %c0_i32_0, %c0_i32_1 : i32, i32, i32
  }
  func.func @transform_4(%arg0: i32, %arg1: i32) -> (i32, i32, i32, i32) {
    %c0_i32 = arith.constant 0 : i32
    %c0_i32_0 = arith.constant 0 : i32
    %c0_i32_1 = arith.constant 0 : i32
    return %arg0, %arg1, %c0_i32, %c0_i32_0 : i32, i32, i32, i32
  }
  func.func @transform_5(%arg0: i32, %arg1: i32) -> (i32, i32, i32, i32) {
    %c0_i32 = arith.constant 0 : i32
    %c0_i32_0 = arith.constant 0 : i32
    %c0_i32_1 = arith.constant 0 : i32
    return %arg0, %arg1, %c0_i32, %c0_i32_0 : i32, i32, i32, i32
  }
}

module attributes {stable_mosaic.version = 11 : i64} {
  func.func @_conv_stats_kernel(%arg0: i32, %arg1: i32, %arg2: memref<1x1x16x8xf32, #tpu.memory_space<vmem>>, %arg3: memref<1x16x16x8xf32, #tpu.memory_space<vmem>>, %arg4: memref<1x1x16x8xf32, #tpu.memory_space<vmem>>, %arg5: memref<1x8xf32, #tpu.memory_space<vmem>>, %arg6: memref<1x8xf32, #tpu.memory_space<vmem>>, %arg7: memref<9x8x8xf32, #tpu.memory_space<vmem>>, %arg8: memref<1x16x16x8xf32, #tpu.memory_space<vmem>>, %arg9: memref<1x1x2x8xf32, #tpu.memory_space<vmem>>, %arg10: memref<18x18x8xf32, #tpu.memory_space<vmem>>) attributes {dimension_semantics = [#tpu.dimension_semantics<parallel>, #tpu.dimension_semantics<parallel>], iteration_bounds = array<i64: 2, 1>, scalar_prefetch = 0 : i64, scratch_operands = 1 : i64, tpu.core_type = #tpu.core_type<tc>, window_params = [{transform_indices = @transform_0, window_bounds = array<i64: 1, 1, 16, 8>}, {transform_indices = @transform_1, window_bounds = array<i64: 1, 16, 16, 8>}, {transform_indices = @transform_2, window_bounds = array<i64: 1, 1, 16, 8>}, {pipeline_mode = #tpu.pipeline_mode<synchronous>, transform_indices = @transform_3, window_bounds = array<i64: 1, 8>}, {pipeline_mode = #tpu.pipeline_mode<synchronous>, transform_indices = @transform_4, window_bounds = array<i64: 1, 8>}, {pipeline_mode = #tpu.pipeline_mode<synchronous>, transform_indices = @transform_5, window_bounds = array<i64: 9, 8, 8>}, {transform_indices = @transform_6, window_bounds = array<i64: 1, 16, 16, 8>}, {transform_indices = @transform_7, window_bounds = array<i64: 1, 1, 2, 8>}]} {
    %c0 = arith.constant 0 : index
    %c0_0 = arith.constant 0 : index
    %c0_1 = arith.constant 0 : index
    %c0_2 = arith.constant 0 : index
    %0 = vector.load %arg3[%c0, %c0_0, %c0_1, %c0_2] : memref<1x16x16x8xf32, #tpu.memory_space<vmem>>, vector<1x16x16x8xf32>
    %1 = vector.shape_cast %0 : vector<1x16x16x8xf32> to vector<16x16x8xf32>
    %c0_3 = arith.constant 0 : index
    %c0_4 = arith.constant 0 : index
    %2 = vector.load %arg5[%c0_3, %c0_4] : memref<1x8xf32, #tpu.memory_space<vmem>>, vector<1x8xf32>
    %3 = vector.shape_cast %2 : vector<1x8xf32> to vector<8xf32>
    %4 = vector.shape_cast %3 : vector<8xf32> to vector<1x1x8xf32>
    %5 = vector.broadcast %4 : vector<1x1x8xf32> to vector<16x16x8xf32>
    %6 = arith.mulf %1, %5 : vector<16x16x8xf32>
    %c0_5 = arith.constant 0 : index
    %c0_6 = arith.constant 0 : index
    %7 = vector.load %arg6[%c0_5, %c0_6] : memref<1x8xf32, #tpu.memory_space<vmem>>, vector<1x8xf32>
    %8 = vector.shape_cast %7 : vector<1x8xf32> to vector<8xf32>
    %9 = vector.shape_cast %8 : vector<8xf32> to vector<1x1x8xf32>
    %10 = vector.broadcast %9 : vector<1x1x8xf32> to vector<16x16x8xf32>
    %11 = arith.addf %6, %10 : vector<16x16x8xf32>
    %cst = arith.constant 0.000000e+00 : f32
    %12 = vector.broadcast %cst : f32 to vector<16x16x8xf32>
    %13 = arith.maximumf %11, %12 : vector<16x16x8xf32>
    %c1 = arith.constant 1 : index
    %c1_7 = arith.constant 1 : index
    %c0_8 = arith.constant 0 : index
    %14 = vector.load %arg10[%c1, %c1_7, %c0_8] : memref<18x18x8xf32, #tpu.memory_space<vmem>>, vector<16x16x8xf32>
    tpu.vector_store %arg10[%c1, %c1_7, %c0_8], %13 {strides = array<i32>} : memref<18x18x8xf32, #tpu.memory_space<vmem>>, vector<16x16x8xf32>,
    %cst_9 = arith.constant 0.000000e+00 : f32
    %15 = vector.broadcast %cst_9 : f32 to vector<18x1x8xf32>
    %c0_10 = arith.constant 0 : index
    %c0_11 = arith.constant 0 : index
    %c0_12 = arith.constant 0 : index
    %16 = vector.load %arg10[%c0_10, %c0_11, %c0_12] : memref<18x18x8xf32, #tpu.memory_space<vmem>>, vector<18x1x8xf32>
    tpu.vector_store %arg10[%c0_10, %c0_11, %c0_12], %15 {strides = array<i32>} : memref<18x18x8xf32, #tpu.memory_space<vmem>>, vector<18x1x8xf32>,
    %c0_13 = arith.constant 0 : index
    %c17 = arith.constant 17 : index
    %c0_14 = arith.constant 0 : index
    %17 = vector.load %arg10[%c0_13, %c17, %c0_14] : memref<18x18x8xf32, #tpu.memory_space<vmem>>, vector<18x1x8xf32>
    tpu.vector_store %arg10[%c0_13, %c17, %c0_14], %15 {strides = array<i32>} : memref<18x18x8xf32, #tpu.memory_space<vmem>>, vector<18x1x8xf32>,
    %c0_15 = arith.constant 0 : index
    %c0_16 = arith.constant 0 : index
    %c0_17 = arith.constant 0 : index
    %c0_18 = arith.constant 0 : index
    %18 = vector.load %arg2[%c0_15, %c0_16, %c0_17, %c0_18] : memref<1x1x16x8xf32, #tpu.memory_space<vmem>>, vector<1x1x16x8xf32>
    %19 = vector.shape_cast %18 : vector<1x1x16x8xf32> to vector<1x16x8xf32>
    %c0_19 = arith.constant 0 : index
    %c0_20 = arith.constant 0 : index
    %20 = vector.load %arg5[%c0_19, %c0_20] : memref<1x8xf32, #tpu.memory_space<vmem>>, vector<1x8xf32>
    %21 = vector.shape_cast %20 : vector<1x8xf32> to vector<8xf32>
    %22 = vector.shape_cast %21 : vector<8xf32> to vector<1x1x8xf32>
    %23 = vector.broadcast %22 : vector<1x1x8xf32> to vector<1x16x8xf32>
    %24 = arith.mulf %19, %23 : vector<1x16x8xf32>
    %c0_21 = arith.constant 0 : index
    %c0_22 = arith.constant 0 : index
    %25 = vector.load %arg6[%c0_21, %c0_22] : memref<1x8xf32, #tpu.memory_space<vmem>>, vector<1x8xf32>
    %26 = vector.shape_cast %25 : vector<1x8xf32> to vector<8xf32>
    %27 = vector.shape_cast %26 : vector<8xf32> to vector<1x1x8xf32>
    %28 = vector.broadcast %27 : vector<1x1x8xf32> to vector<1x16x8xf32>
    %29 = arith.addf %24, %28 : vector<1x16x8xf32>
    %cst_23 = arith.constant 0.000000e+00 : f32
    %30 = vector.broadcast %cst_23 : f32 to vector<1x16x8xf32>
    %31 = arith.maximumf %29, %30 : vector<1x16x8xf32>
    %c0_i32 = arith.constant 0 : i32
    %32 = arith.cmpi sgt, %arg1, %c0_i32 : i32
    %cst_24 = arith.constant 0.000000e+00 : f32
    %33 = vector.broadcast %cst_24 : f32 to vector<1x16x8xf32>
    %34 = arith.select %32, %31, %33 : vector<1x16x8xf32>
    %c0_25 = arith.constant 0 : index
    %c1_26 = arith.constant 1 : index
    %c0_27 = arith.constant 0 : index
    %35 = vector.load %arg10[%c0_25, %c1_26, %c0_27] : memref<18x18x8xf32, #tpu.memory_space<vmem>>, vector<1x16x8xf32>
    tpu.vector_store %arg10[%c0_25, %c1_26, %c0_27], %34 {strides = array<i32>} : memref<18x18x8xf32, #tpu.memory_space<vmem>>, vector<1x16x8xf32>,
    %c0_28 = arith.constant 0 : index
    %c0_29 = arith.constant 0 : index
    %c0_30 = arith.constant 0 : index
    %c0_31 = arith.constant 0 : index
    %36 = vector.load %arg4[%c0_28, %c0_29, %c0_30, %c0_31] : memref<1x1x16x8xf32, #tpu.memory_space<vmem>>, vector<1x1x16x8xf32>
    %37 = vector.shape_cast %36 : vector<1x1x16x8xf32> to vector<1x16x8xf32>
    %c0_32 = arith.constant 0 : index
    %c0_33 = arith.constant 0 : index
    %38 = vector.load %arg5[%c0_32, %c0_33] : memref<1x8xf32, #tpu.memory_space<vmem>>, vector<1x8xf32>
    %39 = vector.shape_cast %38 : vector<1x8xf32> to vector<8xf32>
    %40 = vector.shape_cast %39 : vector<8xf32> to vector<1x1x8xf32>
    %41 = vector.broadcast %40 : vector<1x1x8xf32> to vector<1x16x8xf32>
    %42 = arith.mulf %37, %41 : vector<1x16x8xf32>
    %c0_34 = arith.constant 0 : index
    %c0_35 = arith.constant 0 : index
    %43 = vector.load %arg6[%c0_34, %c0_35] : memref<1x8xf32, #tpu.memory_space<vmem>>, vector<1x8xf32>
    %44 = vector.shape_cast %43 : vector<1x8xf32> to vector<8xf32>
    %45 = vector.shape_cast %44 : vector<8xf32> to vector<1x1x8xf32>
    %46 = vector.broadcast %45 : vector<1x1x8xf32> to vector<1x16x8xf32>
    %47 = arith.addf %42, %46 : vector<1x16x8xf32>
    %cst_36 = arith.constant 0.000000e+00 : f32
    %48 = vector.broadcast %cst_36 : f32 to vector<1x16x8xf32>
    %49 = arith.maximumf %47, %48 : vector<1x16x8xf32>
    %c0_i32_37 = arith.constant 0 : i32
    %50 = arith.cmpi slt, %arg1, %c0_i32_37 : i32
    %cst_38 = arith.constant 0.000000e+00 : f32
    %51 = vector.broadcast %cst_38 : f32 to vector<1x16x8xf32>
    %52 = arith.select %50, %49, %51 : vector<1x16x8xf32>
    %c17_39 = arith.constant 17 : index
    %c1_40 = arith.constant 1 : index
    %c0_41 = arith.constant 0 : index
    %53 = vector.load %arg10[%c17_39, %c1_40, %c0_41] : memref<18x18x8xf32, #tpu.memory_space<vmem>>, vector<1x16x8xf32>
    tpu.vector_store %arg10[%c17_39, %c1_40, %c0_41], %52 {strides = array<i32>} : memref<18x18x8xf32, #tpu.memory_space<vmem>>, vector<1x16x8xf32>,
    %cst_42 = arith.constant 0.000000e+00 : f32
    %54 = vector.broadcast %cst_42 : f32 to vector<256x8xf32>
    %c0_43 = arith.constant 0 : index
    %c0_44 = arith.constant 0 : index
    %c0_45 = arith.constant 0 : index
    %55 = vector.load %arg10[%c0_43, %c0_44, %c0_45] : memref<18x18x8xf32, #tpu.memory_space<vmem>>, vector<16x16x8xf32>
    %56 = vector.shape_cast %55 : vector<16x16x8xf32> to vector<256x8xf32>
    %c0_46 = arith.constant 0 : index
    %c0_47 = arith.constant 0 : index
    %c0_48 = arith.constant 0 : index
    %57 = vector.load %arg7[%c0_46, %c0_47, %c0_48] : memref<9x8x8xf32, #tpu.memory_space<vmem>>, vector<1x8x8xf32>
    %58 = vector.shape_cast %57 : vector<1x8x8xf32> to vector<8x8xf32>
    %cst_49 = arith.constant dense<0.000000e+00> : vector<256x8xf32>
    %59 = tpu.matmul %56, %58, %cst_49 {dimension_numbers = #tpu.dot_dimension_numbers<[1], [0], [0], [1], [0, 0, 1, 1], [], []>} : vector<256x8xf32>, vector<8x8xf32>, vector<256x8xf32> -> vector<256x8xf32>
    %60 = arith.addf %54, %59 : vector<256x8xf32>
    %c0_50 = arith.constant 0 : index
    %c1_51 = arith.constant 1 : index
    %c0_52 = arith.constant 0 : index
    %61 = vector.load %arg10[%c0_50, %c1_51, %c0_52] : memref<18x18x8xf32, #tpu.memory_space<vmem>>, vector<16x16x8xf32>
    %62 = vector.shape_cast %61 : vector<16x16x8xf32> to vector<256x8xf32>
    %c1_53 = arith.constant 1 : index
    %c0_54 = arith.constant 0 : index
    %c0_55 = arith.constant 0 : index
    %63 = vector.load %arg7[%c1_53, %c0_54, %c0_55] : memref<9x8x8xf32, #tpu.memory_space<vmem>>, vector<1x8x8xf32>
    %64 = vector.shape_cast %63 : vector<1x8x8xf32> to vector<8x8xf32>
    %cst_56 = arith.constant dense<0.000000e+00> : vector<256x8xf32>
    %65 = tpu.matmul %62, %64, %cst_56 {dimension_numbers = #tpu.dot_dimension_numbers<[1], [0], [0], [1], [0, 0, 1, 1], [], []>} : vector<256x8xf32>, vector<8x8xf32>, vector<256x8xf32> -> vector<256x8xf32>
    %66 = arith.addf %60, %65 : vector<256x8xf32>
    %c0_57 = arith.constant 0 : index
    %c2 = arith.constant 2 : index
    %c0_58 = arith.constant 0 : index
    %67 = vector.load %arg10[%c0_57, %c2, %c0_58] : memref<18x18x8xf32, #tpu.memory_space<vmem>>, vector<16x16x8xf32>
    %68 = vector.shape_cast %67 : vector<16x16x8xf32> to vector<256x8xf32>
    %c2_59 = arith.constant 2 : index
    %c0_60 = arith.constant 0 : index
    %c0_61 = arith.constant 0 : index
    %69 = vector.load %arg7[%c2_59, %c0_60, %c0_61] : memref<9x8x8xf32, #tpu.memory_space<vmem>>, vector<1x8x8xf32>
    %70 = vector.shape_cast %69 : vector<1x8x8xf32> to vector<8x8xf32>
    %cst_62 = arith.constant dense<0.000000e+00> : vector<256x8xf32>
    %71 = tpu.matmul %68, %70, %cst_62 {dimension_numbers = #tpu.dot_dimension_numbers<[1], [0], [0], [1], [0, 0, 1, 1], [], []>} : vector<256x8xf32>, vector<8x8xf32>, vector<256x8xf32> -> vector<256x8xf32>
    %72 = arith.addf %66, %71 : vector<256x8xf32>
    %c1_63 = arith.constant 1 : index
    %c0_64 = arith.constant 0 : index
    %c0_65 = arith.constant 0 : index
    %73 = vector.load %arg10[%c1_63, %c0_64, %c0_65] : memref<18x18x8xf32, #tpu.memory_space<vmem>>, vector<16x16x8xf32>
    %74 = vector.shape_cast %73 : vector<16x16x8xf32> to vector<256x8xf32>
    %c3 = arith.constant 3 : index
    %c0_66 = arith.constant 0 : index
    %c0_67 = arith.constant 0 : index
    %75 = vector.load %arg7[%c3, %c0_66, %c0_67] : memref<9x8x8xf32, #tpu.memory_space<vmem>>, vector<1x8x8xf32>
    %76 = vector.shape_cast %75 : vector<1x8x8xf32> to vector<8x8xf32>
    %cst_68 = arith.constant dense<0.000000e+00> : vector<256x8xf32>
    %77 = tpu.matmul %74, %76, %cst_68 {dimension_numbers = #tpu.dot_dimension_numbers<[1], [0], [0], [1], [0, 0, 1, 1], [], []>} : vector<256x8xf32>, vector<8x8xf32>, vector<256x8xf32> -> vector<256x8xf32>
    %78 = arith.addf %72, %77 : vector<256x8xf32>
    %c1_69 = arith.constant 1 : index
    %c1_70 = arith.constant 1 : index
    %c0_71 = arith.constant 0 : index
    %79 = vector.load %arg10[%c1_69, %c1_70, %c0_71] : memref<18x18x8xf32, #tpu.memory_space<vmem>>, vector<16x16x8xf32>
    %80 = vector.shape_cast %79 : vector<16x16x8xf32> to vector<256x8xf32>
    %c4 = arith.constant 4 : index
    %c0_72 = arith.constant 0 : index
    %c0_73 = arith.constant 0 : index
    %81 = vector.load %arg7[%c4, %c0_72, %c0_73] : memref<9x8x8xf32, #tpu.memory_space<vmem>>, vector<1x8x8xf32>
    %82 = vector.shape_cast %81 : vector<1x8x8xf32> to vector<8x8xf32>
    %cst_74 = arith.constant dense<0.000000e+00> : vector<256x8xf32>
    %83 = tpu.matmul %80, %82, %cst_74 {dimension_numbers = #tpu.dot_dimension_numbers<[1], [0], [0], [1], [0, 0, 1, 1], [], []>} : vector<256x8xf32>, vector<8x8xf32>, vector<256x8xf32> -> vector<256x8xf32>
    %84 = arith.addf %78, %83 : vector<256x8xf32>
    %c1_75 = arith.constant 1 : index
    %c2_76 = arith.constant 2 : index
    %c0_77 = arith.constant 0 : index
    %85 = vector.load %arg10[%c1_75, %c2_76, %c0_77] : memref<18x18x8xf32, #tpu.memory_space<vmem>>, vector<16x16x8xf32>
    %86 = vector.shape_cast %85 : vector<16x16x8xf32> to vector<256x8xf32>
    %c5 = arith.constant 5 : index
    %c0_78 = arith.constant 0 : index
    %c0_79 = arith.constant 0 : index
    %87 = vector.load %arg7[%c5, %c0_78, %c0_79] : memref<9x8x8xf32, #tpu.memory_space<vmem>>, vector<1x8x8xf32>
    %88 = vector.shape_cast %87 : vector<1x8x8xf32> to vector<8x8xf32>
    %cst_80 = arith.constant dense<0.000000e+00> : vector<256x8xf32>
    %89 = tpu.matmul %86, %88, %cst_80 {dimension_numbers = #tpu.dot_dimension_numbers<[1], [0], [0], [1], [0, 0, 1, 1], [], []>} : vector<256x8xf32>, vector<8x8xf32>, vector<256x8xf32> -> vector<256x8xf32>
    %90 = arith.addf %84, %89 : vector<256x8xf32>
    %c2_81 = arith.constant 2 : index
    %c0_82 = arith.constant 0 : index
    %c0_83 = arith.constant 0 : index
    %91 = vector.load %arg10[%c2_81, %c0_82, %c0_83] : memref<18x18x8xf32, #tpu.memory_space<vmem>>, vector<16x16x8xf32>
    %92 = vector.shape_cast %91 : vector<16x16x8xf32> to vector<256x8xf32>
    %c6 = arith.constant 6 : index
    %c0_84 = arith.constant 0 : index
    %c0_85 = arith.constant 0 : index
    %93 = vector.load %arg7[%c6, %c0_84, %c0_85] : memref<9x8x8xf32, #tpu.memory_space<vmem>>, vector<1x8x8xf32>
    %94 = vector.shape_cast %93 : vector<1x8x8xf32> to vector<8x8xf32>
    %cst_86 = arith.constant dense<0.000000e+00> : vector<256x8xf32>
    %95 = tpu.matmul %92, %94, %cst_86 {dimension_numbers = #tpu.dot_dimension_numbers<[1], [0], [0], [1], [0, 0, 1, 1], [], []>} : vector<256x8xf32>, vector<8x8xf32>, vector<256x8xf32> -> vector<256x8xf32>
    %96 = arith.addf %90, %95 : vector<256x8xf32>
    %c2_87 = arith.constant 2 : index
    %c1_88 = arith.constant 1 : index
    %c0_89 = arith.constant 0 : index
    %97 = vector.load %arg10[%c2_87, %c1_88, %c0_89] : memref<18x18x8xf32, #tpu.memory_space<vmem>>, vector<16x16x8xf32>
    %98 = vector.shape_cast %97 : vector<16x16x8xf32> to vector<256x8xf32>
    %c7 = arith.constant 7 : index
    %c0_90 = arith.constant 0 : index
    %c0_91 = arith.constant 0 : index
    %99 = vector.load %arg7[%c7, %c0_90, %c0_91] : memref<9x8x8xf32, #tpu.memory_space<vmem>>, vector<1x8x8xf32>
    %100 = vector.shape_cast %99 : vector<1x8x8xf32> to vector<8x8xf32>
    %cst_92 = arith.constant dense<0.000000e+00> : vector<256x8xf32>
    %101 = tpu.matmul %98, %100, %cst_92 {dimension_numbers = #tpu.dot_dimension_numbers<[1], [0], [0], [1], [0, 0, 1, 1], [], []>} : vector<256x8xf32>, vector<8x8xf32>, vector<256x8xf32> -> vector<256x8xf32>
    %102 = arith.addf %96, %101 : vector<256x8xf32>
    %c2_93 = arith.constant 2 : index
    %c2_94 = arith.constant 2 : index
    %c0_95 = arith.constant 0 : index
    %103 = vector.load %arg10[%c2_93, %c2_94, %c0_95] : memref<18x18x8xf32, #tpu.memory_space<vmem>>, vector<16x16x8xf32>
    %104 = vector.shape_cast %103 : vector<16x16x8xf32> to vector<256x8xf32>
    %c8 = arith.constant 8 : index
    %c0_96 = arith.constant 0 : index
    %c0_97 = arith.constant 0 : index
    %105 = vector.load %arg7[%c8, %c0_96, %c0_97] : memref<9x8x8xf32, #tpu.memory_space<vmem>>, vector<1x8x8xf32>
    %106 = vector.shape_cast %105 : vector<1x8x8xf32> to vector<8x8xf32>
    %cst_98 = arith.constant dense<0.000000e+00> : vector<256x8xf32>
    %107 = tpu.matmul %104, %106, %cst_98 {dimension_numbers = #tpu.dot_dimension_numbers<[1], [0], [0], [1], [0, 0, 1, 1], [], []>} : vector<256x8xf32>, vector<8x8xf32>, vector<256x8xf32> -> vector<256x8xf32>
    %108 = arith.addf %102, %107 : vector<256x8xf32>
    %109 = vector.shape_cast %108 : vector<256x8xf32> to vector<16x16x8xf32>
    %c0_99 = arith.constant 0 : index
    %c0_100 = arith.constant 0 : index
    %c0_101 = arith.constant 0 : index
    %c0_102 = arith.constant 0 : index
    %110 = vector.load %arg8[%c0_99, %c0_100, %c0_101, %c0_102] : memref<1x16x16x8xf32, #tpu.memory_space<vmem>>, vector<1x16x16x8xf32>
    %111 = vector.shape_cast %110 : vector<1x16x16x8xf32> to vector<16x16x8xf32>
    %112 = vector.shape_cast %109 : vector<16x16x8xf32> to vector<1x16x16x8xf32>
    tpu.vector_store %arg8[%c0_99, %c0_100, %c0_101, %c0_102], %112 {strides = array<i32>} : memref<1x16x16x8xf32, #tpu.memory_space<vmem>>, vector<1x16x16x8xf32>,
    %cst_103 = arith.constant dense<0.000000e+00> : vector<8xf32>
    %113 = vector.multi_reduction <add>, %108, %cst_103 [0] : vector<256x8xf32> to vector<8xf32>
    %114 = vector.shape_cast %113 : vector<8xf32> to vector<1x8xf32>
    %cst_104 = arith.constant 3.906250e-03 : f32
    %115 = vector.broadcast %cst_104 : f32 to vector<1x8xf32>
    %116 = arith.mulf %114, %115 : vector<1x8xf32>
    %117 = vector.broadcast %116 : vector<1x8xf32> to vector<256x8xf32>
    %118 = arith.subf %108, %117 : vector<256x8xf32>
    %119 = arith.mulf %118, %118 : vector<256x8xf32>
    %cst_105 = arith.constant dense<0.000000e+00> : vector<8xf32>
    %120 = vector.multi_reduction <add>, %119, %cst_105 [0] : vector<256x8xf32> to vector<8xf32>
    %121 = vector.shape_cast %120 : vector<8xf32> to vector<1x8xf32>
    %122 = tpu.concatenate %114, %121 in 0 : vector<1x8xf32>, vector<1x8xf32> -> vector<2x8xf32>
    %c0_106 = arith.constant 0 : index
    %c0_107 = arith.constant 0 : index
    %c0_108 = arith.constant 0 : index
    %c0_109 = arith.constant 0 : index
    %123 = vector.load %arg9[%c0_106, %c0_107, %c0_108, %c0_109] : memref<1x1x2x8xf32, #tpu.memory_space<vmem>>, vector<1x1x2x8xf32>
    %124 = vector.shape_cast %123 : vector<1x1x2x8xf32> to vector<2x8xf32>
    %125 = vector.shape_cast %122 : vector<2x8xf32> to vector<1x1x2x8xf32>
    tpu.vector_store %arg9[%c0_106, %c0_107, %c0_108, %c0_109], %125 {strides = array<i32>} : memref<1x1x2x8xf32, #tpu.memory_space<vmem>>, vector<1x1x2x8xf32>,
    return
  }
  func.func @transform_0(%arg0: i32, %arg1: i32) -> (i32, i32, i32, i32) {
    %c16_i32 = arith.constant 16 : i32
    %0 = arith.muli %arg1, %c16_i32 : i32
    %c1_i32 = arith.constant 1 : i32
    %1 = arith.subi %0, %c1_i32 : i32
    %c0_i32 = arith.constant 0 : i32
    %2 = arith.maxsi %1, %c0_i32 : i32
    %c0_i32_0 = arith.constant 0 : i32
    %c0_i32_1 = arith.constant 0 : i32
    %c0_i32_2 = arith.constant 0 : i32
    return %arg0, %2, %c0_i32_0, %c0_i32_1 : i32, i32, i32, i32
  }
  func.func @transform_1(%arg0: i32, %arg1: i32) -> (i32, i32, i32, i32) {
    %c0_i32 = arith.constant 0 : i32
    %c0_i32_0 = arith.constant 0 : i32
    %c0_i32_1 = arith.constant 0 : i32
    return %arg0, %arg1, %c0_i32, %c0_i32_0 : i32, i32, i32, i32
  }
  func.func @transform_2(%arg0: i32, %arg1: i32) -> (i32, i32, i32, i32) {
    %c16_i32 = arith.constant 16 : i32
    %0 = arith.muli %arg1, %c16_i32 : i32
    %c16_i32_0 = arith.constant 16 : i32
    %1 = arith.addi %0, %c16_i32_0 : i32
    %c15_i32 = arith.constant 15 : i32
    %2 = arith.minsi %1, %c15_i32 : i32
    %c0_i32 = arith.constant 0 : i32
    %c0_i32_1 = arith.constant 0 : i32
    %c0_i32_2 = arith.constant 0 : i32
    return %arg0, %2, %c0_i32, %c0_i32_1 : i32, i32, i32, i32
  }
  func.func @transform_3(%arg0: i32, %arg1: i32) -> (i32, i32) {
    %c0_i32 = arith.constant 0 : i32
    %c0_i32_0 = arith.constant 0 : i32
    %c0_i32_1 = arith.constant 0 : i32
    return %c0_i32, %c0_i32_0 : i32, i32
  }
  func.func @transform_4(%arg0: i32, %arg1: i32) -> (i32, i32) {
    %c0_i32 = arith.constant 0 : i32
    %c0_i32_0 = arith.constant 0 : i32
    %c0_i32_1 = arith.constant 0 : i32
    return %c0_i32, %c0_i32_0 : i32, i32
  }
  func.func @transform_5(%arg0: i32, %arg1: i32) -> (i32, i32, i32) {
    %c0_i32 = arith.constant 0 : i32
    %c0_i32_0 = arith.constant 0 : i32
    %c0_i32_1 = arith.constant 0 : i32
    %c0_i32_2 = arith.constant 0 : i32
    return %c0_i32, %c0_i32_0, %c0_i32_1 : i32, i32, i32
  }
  func.func @transform_6(%arg0: i32, %arg1: i32) -> (i32, i32, i32, i32) {
    %c0_i32 = arith.constant 0 : i32
    %c0_i32_0 = arith.constant 0 : i32
    %c0_i32_1 = arith.constant 0 : i32
    return %arg0, %arg1, %c0_i32, %c0_i32_0 : i32, i32, i32, i32
  }
  func.func @transform_7(%arg0: i32, %arg1: i32) -> (i32, i32, i32, i32) {
    %c0_i32 = arith.constant 0 : i32
    %c0_i32_0 = arith.constant 0 : i32
    %c0_i32_1 = arith.constant 0 : i32
    return %arg0, %arg1, %c0_i32, %c0_i32_0 : i32, i32, i32, i32
  }
}

module attributes {stable_mosaic.version = 11 : i64} {
  func.func @_bn_relu_kernel(%arg0: i32, %arg1: i32, %arg2: memref<1x16x16x8xf32, #tpu.memory_space<vmem>>, %arg3: memref<1x8xf32, #tpu.memory_space<vmem>>, %arg4: memref<1x8xf32, #tpu.memory_space<vmem>>, %arg5: memref<1x16x16x8xf32, #tpu.memory_space<vmem>>) attributes {dimension_semantics = [#tpu.dimension_semantics<parallel>, #tpu.dimension_semantics<parallel>], iteration_bounds = array<i64: 2, 1>, scalar_prefetch = 0 : i64, scratch_operands = 0 : i64, tpu.core_type = #tpu.core_type<tc>, window_params = [{transform_indices = @transform_0, window_bounds = array<i64: 1, 16, 16, 8>}, {pipeline_mode = #tpu.pipeline_mode<synchronous>, transform_indices = @transform_1, window_bounds = array<i64: 1, 8>}, {pipeline_mode = #tpu.pipeline_mode<synchronous>, transform_indices = @transform_2, window_bounds = array<i64: 1, 8>}, {transform_indices = @transform_3, window_bounds = array<i64: 1, 16, 16, 8>}]} {
    %c0 = arith.constant 0 : index
    %c0_0 = arith.constant 0 : index
    %c0_1 = arith.constant 0 : index
    %c0_2 = arith.constant 0 : index
    %0 = vector.load %arg2[%c0, %c0_0, %c0_1, %c0_2] : memref<1x16x16x8xf32, #tpu.memory_space<vmem>>, vector<1x16x16x8xf32>
    %c0_3 = arith.constant 0 : index
    %c0_4 = arith.constant 0 : index
    %1 = vector.load %arg3[%c0_3, %c0_4] : memref<1x8xf32, #tpu.memory_space<vmem>>, vector<1x8xf32>
    %2 = vector.shape_cast %1 : vector<1x8xf32> to vector<8xf32>
    %3 = vector.shape_cast %2 : vector<8xf32> to vector<1x1x1x8xf32>
    %4 = vector.broadcast %3 : vector<1x1x1x8xf32> to vector<1x16x16x8xf32>
    %5 = arith.mulf %0, %4 : vector<1x16x16x8xf32>
    %c0_5 = arith.constant 0 : index
    %c0_6 = arith.constant 0 : index
    %6 = vector.load %arg4[%c0_5, %c0_6] : memref<1x8xf32, #tpu.memory_space<vmem>>, vector<1x8xf32>
    %7 = vector.shape_cast %6 : vector<1x8xf32> to vector<8xf32>
    %8 = vector.shape_cast %7 : vector<8xf32> to vector<1x1x1x8xf32>
    %9 = vector.broadcast %8 : vector<1x1x1x8xf32> to vector<1x16x16x8xf32>
    %10 = arith.addf %5, %9 : vector<1x16x16x8xf32>
    %cst = arith.constant 0.000000e+00 : f32
    %11 = vector.broadcast %cst : f32 to vector<1x16x16x8xf32>
    %12 = arith.maximumf %10, %11 : vector<1x16x16x8xf32>
    %c0_7 = arith.constant 0 : index
    %c0_8 = arith.constant 0 : index
    %c0_9 = arith.constant 0 : index
    %c0_10 = arith.constant 0 : index
    %13 = vector.load %arg5[%c0_7, %c0_8, %c0_9, %c0_10] : memref<1x16x16x8xf32, #tpu.memory_space<vmem>>, vector<1x16x16x8xf32>
    tpu.vector_store %arg5[%c0_7, %c0_8, %c0_9, %c0_10], %12 {strides = array<i32>} : memref<1x16x16x8xf32, #tpu.memory_space<vmem>>, vector<1x16x16x8xf32>,
    return
  }
  func.func @transform_0(%arg0: i32, %arg1: i32) -> (i32, i32, i32, i32) {
    %c0_i32 = arith.constant 0 : i32
    %c0_i32_0 = arith.constant 0 : i32
    %c0_i32_1 = arith.constant 0 : i32
    return %arg0, %arg1, %c0_i32, %c0_i32_0 : i32, i32, i32, i32
  }
  func.func @transform_1(%arg0: i32, %arg1: i32) -> (i32, i32) {
    %c0_i32 = arith.constant 0 : i32
    %c0_i32_0 = arith.constant 0 : i32
    %c0_i32_1 = arith.constant 0 : i32
    return %c0_i32, %c0_i32_0 : i32, i32
  }
  func.func @transform_2(%arg0: i32, %arg1: i32) -> (i32, i32) {
    %c0_i32 = arith.constant 0 : i32
    %c0_i32_0 = arith.constant 0 : i32
    %c0_i32_1 = arith.constant 0 : i32
    return %c0_i32, %c0_i32_0 : i32, i32
  }
  func.func @transform_3(%arg0: i32, %arg1: i32) -> (i32, i32, i32, i32) {
    %c0_i32 = arith.constant 0 : i32
    %c0_i32_0 = arith.constant 0 : i32
    %c0_i32_1 = arith.constant 0 : i32
    return %arg0, %arg1, %c0_i32, %c0_i32_0 : i32, i32, i32, i32
  }
}

</mosaic_0001>

<llo_original>
// kernel: double_conv.5
$region0: #{double_conv.5}
  #allocation0 [shape = 'u32[]', space=smem, size = 0x4, offset = 0x4, fixed_abs, tag = 'smem constant byte address 0x4 - core index']
  #allocation1 [shape = 'u32[72,128]{1,0:T(1,128)}', space=vmem, size = 0x9000, scoped, tag = 'internal scratch']
  %s0 = inlined_call_operand.vmem [shape: f32[2,16,16,8], index: 0, kind: input, shape index: {}]
  %s1 = inlined_call_operand.vmem [shape: f32[1,8], index: 1, kind: input, shape index: {}]
  %s2 = inlined_call_operand.vmem [shape: f32[1,8], index: 2, kind: input, shape index: {}]
  %s3 = inlined_call_operand.vmem [shape: f32[2,16,16,8], index: 3, kind: output, shape index: {}]
  %s4 = sld [smem:[#allocation0]]
  $region45: #{double_conv.5} parent=0
    _
  %s6 = ssub.s32 1, %s4
  %s7 = scalar_select 0, %s6, %s4
  loop: start=0, step=1, limit=4
  $region2: #{double_conv.5} parent=0 // loop_pre_header
    _
  $region3: #{double_conv.5} parent=0 // loop_header
    %s9 = sphi 0, %s13
    %p10 = scmp.ge.s32.totalorder %s9, 4
    %s16 = sphi 0, %s28
    %s17 = sphi 0, %s24
    %s18 = sphi 0, %s16
    %s19 = sphi 0, %s17
    %s20 = sphi 0, %s18
    %s21 = sphi 0, %s19
    %s33 = sphi 0, %s35
    %s36 = sphi 0, %s33
    %s37 = sphi 0, %s36
    %s53 = sphi 0, %s37
    %s57 = sphi 0, %s57
    %s59 = sphi 0, %s57
    %s60 = sphi 0, %s59
    %s74 = sphi 0, %s60
    %s78 = sphi 0, %s78
    %s80 = sphi 0, %s78
    %s81 = sphi 0, %s80
    %s95 = sphi 0, %s81
    %s103 = sphi 0, %s105
    %s106 = sphi 0, %s103
    %s107 = sphi 0, %s106
    %s123 = sphi 0, %s107
  $region4: #{double_conv.5} parent=0 // loop_header_branch
    %12 = sbr.rel (%p10) target = $region8
  $region5: #{double_conv.5} parent=0 // loop_body
    %s14 = ssub.s32 %s9, 1
    %s15 = ssub.s32 %s9, 2
    %s22 = sadd.s32 1, %s17
    %p23 = scmp.ge.s32.totalorder %s22, 1
    %s24 = scalar_select %p23, 0, %s22
    %s25 = sadd.s32 1, %s16
    %s26 = scalar_select %p23, %s25, %s16
    %p27 = scmp.ge.s32.totalorder %s26, 2
    %s28 = scalar_select %p27, 0, %s26
    %s29 = ssub.s32 %s16, %s28
    %s30 = ssub.s32 %s17, %s24
    %s31 = sor.u32 %s29, %s30
    %p32 = scmp.eq.s32.totalorder %s31, 0
    %s34 = sadd.s32 %s33, 1
    %s35 = scalar_select %p32, %s33, %s34
    %p38 = pneg %p32
    %p39 = scmp.eq.s32.totalorder %s9, 1
    %p40 = por %p38, %p39
    %p41 = scmp.ne.s32.totalorder %s33, %s36
    %p42 = scmp.eq.s32.totalorder %s9, 0
    %p43 = por %p41, %p42
    %p44 = scmp.ne.s32.totalorder %s33, %s36
    %p45 = scmp.eq.s32.totalorder %s14, 1
    %p46 = por %p44, %p45
    %p47 = scmp.ne.s32.totalorder %s36, %s37
    %p48 = scmp.eq.s32.totalorder %s14, 0
    %p49 = por %p47, %p48
    %p50 = scmp.ne.s32.totalorder %s36, %s37
    %p51 = scmp.eq.s32.totalorder %s15, 1
    %p52 = por %p50, %p51
    %p54 = scmp.ne.s32.totalorder %s37, %s53
    %p55 = scmp.eq.s32.totalorder %s15, 0
    %p56 = por %p54, %p55
    %s58 = sadd.s32 %s57, 1
    %p61 = scmp.eq.s32.totalorder %s9, 1
    %p62 = scmp.ne.s32.totalorder %s57, %s59
    %p63 = scmp.eq.s32.totalorder %s9, 0
    %p64 = por %p62, %p63
    %p65 = scmp.ne.s32.totalorder %s57, %s59
    %p66 = scmp.eq.s32.totalorder %s14, 1
    %p67 = por %p65, %p66
    %p68 = scmp.ne.s32.totalorder %s59, %s60
    %p69 = scmp.eq.s32.totalorder %s14, 0
    %p70 = por %p68, %p69
    %p71 = scmp.ne.s32.totalorder %s59, %s60
    %p72 = scmp.eq.s32.totalorder %s15, 1
    %p73 = por %p71, %p72
    %p75 = scmp.ne.s32.totalorder %s60, %s74
    %p76 = scmp.eq.s32.totalorder %s15, 0
    %p77 = por %p75, %p76
    %s79 = sadd.s32 %s78, 1
    %p82 = scmp.eq.s32.totalorder %s9, 1
    %p83 = scmp.ne.s32.totalorder %s78, %s80
    %p84 = scmp.eq.s32.totalorder %s9, 0
    %p85 = por %p83, %p84
    %p86 = scmp.ne.s32.totalorder %s78, %s80
    %p87 = scmp.eq.s32.totalorder %s14, 1
    %p88 = por %p86, %p87
    %p89 = scmp.ne.s32.totalorder %s80, %s81
    %p90 = scmp.eq.s32.totalorder %s14, 0
    %p91 = por %p89, %p90
    %p92 = scmp.ne.s32.totalorder %s80, %s81
    %p93 = scmp.eq.s32.totalorder %s15, 1
    %p94 = por %p92, %p93
    %p96 = scmp.ne.s32.totalorder %s81, %s95
    %p97 = scmp.eq.s32.totalorder %s15, 0
    %p98 = por %p96, %p97
    %s99 = ssub.s32 %s16, %s28
    %s100 = ssub.s32 %s17, %s24
    %s101 = sor.u32 %s99, %s100
    %p102 = scmp.eq.s32.totalorder %s101, 0
    %s104 = sadd.s32 %s103, 1
    %s105 = scalar_select %p102, %s103, %s104
    %p108 = pneg %p102
    %p109 = scmp.eq.s32.totalorder %s9, 1
    %p110 = por %p108, %p109
    %p111 = scmp.ne.s32.totalorder %s103, %s106
    %p112 = scmp.eq.s32.totalorder %s9, 0
    %p113 = por %p111, %p112
    %p114 = scmp.ne.s32.totalorder %s103, %s106
    %p115 = scmp.eq.s32.totalorder %s14, 1
    %p116 = por %p114, %p115
    %p117 = scmp.ne.s32.totalorder %s106, %s107
    %p118 = scmp.eq.s32.totalorder %s14, 0
    %p119 = por %p117, %p118
    %p120 = scmp.ne.s32.totalorder %s106, %s107
    %p121 = scmp.eq.s32.totalorder %s15, 1
    %p122 = por %p120, %p121
    %p124 = scmp.ne.s32.totalorder %s107, %s123
    %p125 = scmp.eq.s32.totalorder %s15, 0
    %p126 = por %p124, %p125
    %p127 = scmp.le.s32.totalorder 1, %s9
    %p128 = scmp.lt.s32.totalorder %s9, 3
    %p129 = pnand %p127, %p128
    %p130 = pneg %p129
    // Predicated region
    $region9: #{double_conv.5} parent=5 // pred_check
      _
    $region10: #{double_conv.5} parent=5 // pred_check_branch
      %132 = sbr.rel (%p129) target = $region12
    $region11: #{double_conv.5} parent=5 // pred_region
      %s133 = ssub.s32 %s9, 1
      // Predicated region
      $region13: #{double_conv.5} parent=11 // pred_check
        %p134 = pneg %p70
      $region14: #{double_conv.5} parent=11 // pred_check_branch
        %136 = sbr.rel (%p134) target = $region16
      $region15: #{double_conv.5} parent=11 // pred_region
        _
      $region16: #{double_conv.5} parent=11 // pred_fallthru
        _
      // Predicated region
      $region17: #{double_conv.5} parent=11 // pred_check
        %p137 = pneg %p91
      $region18: #{double_conv.5} parent=11 // pred_check_branch
        %139 = sbr.rel (%p137) target = $region20
      $region19: #{double_conv.5} parent=11 // pred_region
        _
      $region20: #{double_conv.5} parent=11 // pred_fallthru
        _
    $region12: #{double_conv.5} parent=5 // pred_fallthru
      _
    %p140 = scmp.lt.s32.totalorder %s9, 2
    // Predicated region
    $region21: #{double_conv.5} parent=5 // pred_check
      %p141 = pneg %p140
    $region22: #{double_conv.5} parent=5 // pred_check_branch
      %143 = sbr.rel (%p141) target = $region24
    $region23: #{double_conv.5} parent=5 // pred_region
      // Predicated region
      $region25: #{double_conv.5} parent=23 // pred_check
        %p144 = pneg %p43
      $region26: #{double_conv.5} parent=23 // pred_check_branch
        %146 = sbr.rel (%p144) target = $region28
      $region27: #{double_conv.5} parent=23 // pred_region
        %s147 = smul.u32 16, %s17
        %p148 = scmp.lt.s32.totalorder %s16, 1
        %s149 = scalar_select %p148, %s16, 1
        %p150 = scmp.lt.s32.totalorder %s147, 15
        %s151 = scalar_select %p150, %s147, 15
        %s152 = smul.addr %s151, 2
        %s153 = smul.addr %s149, 32
        %s154 = sadd.s32 %s152, %s153
        %s155 = smul.addr %s154, 8
        %s156 = scalar_lea.vmem %s0, %s155
        %s157 = smul.u32 16, %s17
      $region28: #{double_conv.5} parent=23 // pred_fallthru
        _
    $region24: #{double_conv.5} parent=5 // pred_fallthru
      _
    %p158 = scmp.le.s32.totalorder 1, %s9
    %p159 = scmp.lt.s32.totalorder %s9, 3
    %p160 = pnand %p158, %p159
    %p161 = pneg %p160
    // Predicated region
    $region29: #{double_conv.5} parent=5 // pred_check
      _
    $region30: #{double_conv.5} parent=5 // pred_check_branch
      %163 = sbr.rel (%p160) target = $region32
    $region31: #{double_conv.5} parent=5 // pred_region
      %s164 = ssub.s32 %s9, 1
      %s165 = smul.u32 16, %s19
      %p166 = scmp.lt.s32.totalorder %s18, 1
      %s167 = scalar_select %p166, %s18, 1
      %p168 = scmp.lt.s32.totalorder %s165, 15
      %s169 = scalar_select %p168, %s165, 15
      %s170 = smul.addr %s169, 2
      %s171 = smul.addr %s167, 32
      %s172 = sadd.s32 %s170, %s171
      %s173 = smul.addr %s172, 8
      %s174 = scalar_lea.vmem %s0, %s173
      %p175 = pneg %p49
      %p176 = pneg %p46
      %p177 = pneg %p70
      %p178 = pneg %p67
      %p179 = pneg %p91
      %p180 = pneg %p88
      %p181 = pneg %p119
      %p182 = pneg %p116
      %s183 = smul.u32 16, %s19
      %p184 = scmp.lt.s32.totalorder %s18, 1
      %s185 = scalar_select %p184, %s18, 1
      %p186 = scmp.lt.s32.totalorder %s183, 15
      %s187 = scalar_select %p186, %s183, 15
      %s188 = smul.addr %s187, 2
      %s189 = smul.addr %s185, 32
      %s190 = sadd.s32 %s188, %s189
      %s191 = smul.addr %s190, 8
      %s192 = scalar_lea.vmem %s3, %s191
      %s193 = smul.u32 16, %s19
      %p194 = scmp.lt.s32.totalorder %s18, 1
      %s195 = scalar_select %p194, %s18, 1
      %p196 = scmp.lt.s32.totalorder %s193, 15
      %s197 = scalar_select %p196, %s193, 15
      %s198 = smul.addr %s197, 2
      %s199 = smul.addr %s195, 32
      %s200 = sadd.s32 %s198, %s199
      %s201 = smul.addr %s200, 8
      %s202 = scalar_lea.vmem %s0, %s201
      %s203 = smul.u32 16, %s19
      %s204 = smul.u32 16, %s19
      %p205 = scmp.lt.s32.totalorder %s18, 1
      %s206 = scalar_select %p205, %s18, 1
      %p207 = scmp.lt.s32.totalorder %s204, 15
      %s208 = scalar_select %p207, %s204, 15
      %s209 = smul.addr %s208, 2
      %s210 = smul.addr %s206, 32
      %s211 = sadd.s32 %s209, %s210
      %s212 = smul.addr %s211, 8
      %s213 = scalar_lea.vmem %s3, %s212
      %s214 = smul.u32 16, %s19
      %v215 = vld [vmem:[%s202] sm:$0xff]
      %v216 = vld [vmem:[%s202 + $0x8] sm:$0xff]
      %v217 = vld [vmem:[%s202 + $0x10] sm:$0xff]
      %v218 = vld [vmem:[%s202 + $0x18] sm:$0xff]
      %v219 = vld [vmem:[%s202 + $0x20] sm:$0xff]
      %v220 = vld [vmem:[%s202 + $0x28] sm:$0xff]
      %v221 = vld [vmem:[%s202 + $0x30] sm:$0xff]
      %v222 = vld [vmem:[%s202 + $0x38] sm:$0xff]
      %v223 = vld [vmem:[%s202 + $0x40] sm:$0xff]
      %v224 = vld [vmem:[%s202 + $0x48] sm:$0xff]
      %v225 = vld [vmem:[%s202 + $0x50] sm:$0xff]
      %v226 = vld [vmem:[%s202 + $0x58] sm:$0xff]
      %v227 = vld [vmem:[%s202 + $0x60] sm:$0xff]
      %v228 = vld [vmem:[%s202 + $0x68] sm:$0xff]
      %v229 = vld [vmem:[%s202 + $0x70] sm:$0xff]
      %v230 = vld [vmem:[%s202 + $0x78] sm:$0xff]
      %v231 = vld [vmem:[%s202 + $0x80] sm:$0xff]
      %v232 = vld [vmem:[%s202 + $0x88] sm:$0xff]
      %v233 = vld [vmem:[%s202 + $0x90] sm:$0xff]
      %v234 = vld [vmem:[%s202 + $0x98] sm:$0xff]
      %v235 = vld [vmem:[%s202 + $0xa0] sm:$0xff]
      %v236 = vld [vmem:[%s202 + $0xa8] sm:$0xff]
      %v237 = vld [vmem:[%s202 + $0xb0] sm:$0xff]
      %v238 = vld [vmem:[%s202 + $0xb8] sm:$0xff]
      %v239 = vld [vmem:[%s202 + $0xc0] sm:$0xff]
      %v240 = vld [vmem:[%s202 + $0xc8] sm:$0xff]
      %v241 = vld [vmem:[%s202 + $0xd0] sm:$0xff]
      %v242 = vld [vmem:[%s202 + $0xd8] sm:$0xff]
      %v243 = vld [vmem:[%s202 + $0xe0] sm:$0xff]
      %v244 = vld [vmem:[%s202 + $0xe8] sm:$0xff]
      %v245 = vld [vmem:[%s202 + $0xf0] sm:$0xff]
      %v246 = vld [vmem:[%s202 + $0xf8] sm:$0xff]
      %v247 = vld [vmem:[%s1] sm:$0x1]
      %v249 = vperm.slane %v247, 0
      %v251 = vmul.f32 %v215, %v249
      %v252 = vmul.f32 %v216, %v249
      %v253 = vmul.f32 %v217, %v249
      %v254 = vmul.f32 %v218, %v249
      %v255 = vmul.f32 %v219, %v249
      %v256 = vmul.f32 %v220, %v249
      %v257 = vmul.f32 %v221, %v249
      %v258 = vmul.f32 %v222, %v249
      %v259 = vmul.f32 %v223, %v249
      %v260 = vmul.f32 %v224, %v249
      %v261 = vmul.f32 %v225, %v249
      %v262 = vmul.f32 %v226, %v249
      %v263 = vmul.f32 %v227, %v249
      %v264 = vmul.f32 %v228, %v249
      %v265 = vmul.f32 %v229, %v249
      %v266 = vmul.f32 %v230, %v249
      %v267 = vmul.f32 %v231, %v249
      %v268 = vmul.f32 %v232, %v249
      %v269 = vmul.f32 %v233, %v249
      %v270 = vmul.f32 %v234, %v249
      %v271 = vmul.f32 %v235, %v249
      %v272 = vmul.f32 %v236, %v249
      %v273 = vmul.f32 %v237, %v249
      %v274 = vmul.f32 %v238, %v249
      %v275 = vmul.f32 %v239, %v249
      %v276 = vmul.f32 %v240, %v249
      %v277 = vmul.f32 %v241, %v249
      %v278 = vmul.f32 %v242, %v249
      %v279 = vmul.f32 %v243, %v249
      %v280 = vmul.f32 %v244, %v249
      %v281 = vmul.f32 %v245, %v249
      %v282 = vmul.f32 %v246, %v249
      %v283 = vld [vmem:[%s2] sm:$0x1]
      %v285 = vperm.slane %v283, 0
      %v287 = vadd.f32 %v251, %v285
      %v288 = vadd.f32 %v252, %v285
      %v289 = vadd.f32 %v253, %v285
      %v290 = vadd.f32 %v254, %v285
      %v291 = vadd.f32 %v255, %v285
      %v292 = vadd.f32 %v256, %v285
      %v293 = vadd.f32 %v257, %v285
      %v294 = vadd.f32 %v258, %v285
      %v295 = vadd.f32 %v259, %v285
      %v296 = vadd.f32 %v260, %v285
      %v297 = vadd.f32 %v261, %v285
      %v298 = vadd.f32 %v262, %v285
      %v299 = vadd.f32 %v263, %v285
      %v300 = vadd.f32 %v264, %v285
      %v301 = vadd.f32 %v265, %v285
      %v302 = vadd.f32 %v266, %v285
      %v303 = vadd.f32 %v267, %v285
      %v304 = vadd.f32 %v268, %v285
      %v305 = vadd.f32 %v269, %v285
      %v306 = vadd.f32 %v270, %v285
      %v307 = vadd.f32 %v271, %v285
      %v308 = vadd.f32 %v272, %v285
      %v309 = vadd.f32 %v273, %v285
      %v310 = vadd.f32 %v274, %v285
      %v311 = vadd.f32 %v275, %v285
      %v312 = vadd.f32 %v276, %v285
      %v313 = vadd.f32 %v277, %v285
      %v314 = vadd.f32 %v278, %v285
      %v315 = vadd.f32 %v279, %v285
      %v316 = vadd.f32 %v280, %v285
      %v317 = vadd.f32 %v281, %v285
      %v318 = vadd.f32 %v282, %v285
      %v319 = vmax.f32 %v287, 0.0
      %v320 = vmax.f32 %v288, 0.0
      %v321 = vmax.f32 %v289, 0.0
      %v322 = vmax.f32 %v290, 0.0
      %v323 = vmax.f32 %v291, 0.0
      %v324 = vmax.f32 %v292, 0.0
      %v325 = vmax.f32 %v293, 0.0
      %v326 = vmax.f32 %v294, 0.0
      %v327 = vmax.f32 %v295, 0.0
      %v328 = vmax.f32 %v296, 0.0
      %v329 = vmax.f32 %v297, 0.0
      %v330 = vmax.f32 %v298, 0.0
      %v331 = vmax.f32 %v299, 0.0
      %v332 = vmax.f32 %v300, 0.0
      %v333 = vmax.f32 %v301, 0.0
      %v334 = vmax.f32 %v302, 0.0
      %v335 = vmax.f32 %v303, 0.0
      %v336 = vmax.f32 %v304, 0.0
      %v337 = vmax.f32 %v305, 0.0
      %v338 = vmax.f32 %v306, 0.0
      %v339 = vmax.f32 %v307, 0.0
      %v340 = vmax.f32 %v308, 0.0
      %v341 = vmax.f32 %v309, 0.0
      %v342 = vmax.f32 %v310, 0.0
      %v343 = vmax.f32 %v311, 0.0
      %v344 = vmax.f32 %v312, 0.0
      %v345 = vmax.f32 %v313, 0.0
      %v346 = vmax.f32 %v314, 0.0
      %v347 = vmax.f32 %v315, 0.0
      %v348 = vmax.f32 %v316, 0.0
      %v349 = vmax.f32 %v317, 0.0
      %v350 = vmax.f32 %v318, 0.0
      %vm351 = vcmask 64512
      %352 = vst.msk [vmem:[%s213] sm:$0xff] %vm351, %v319
      %353 = vst.msk [vmem:[%s213 + $0x8] sm:$0xff] %vm351, %v320
      %354 = vst.msk [vmem:[%s213 + $0x10] sm:$0xff] %vm351, %v321
      %355 = vst.msk [vmem:[%s213 + $0x18] sm:$0xff] %vm351, %v322
      %356 = vst.msk [vmem:[%s213 + $0x20] sm:$0xff] %vm351, %v323
      %357 = vst.msk [vmem:[%s213 + $0x28] sm:$0xff] %vm351, %v324
      %358 = vst.msk [vmem:[%s213 + $0x30] sm:$0xff] %vm351, %v325
      %359 = vst.msk [vmem:[%s213 + $0x38] sm:$0xff] %vm351, %v326
      %360 = vst.msk [vmem:[%s213 + $0x40] sm:$0xff] %vm351, %v327
      %361 = vst.msk [vmem:[%s213 + $0x48] sm:$0xff] %vm351, %v328
      %362 = vst.msk [vmem:[%s213 + $0x50] sm:$0xff] %vm351, %v329
      %363 = vst.msk [vmem:[%s213 + $0x58] sm:$0xff] %vm351, %v330
      %364 = vst.msk [vmem:[%s213 + $0x60] sm:$0xff] %vm351, %v331
      %365 = vst.msk [vmem:[%s213 + $0x68] sm:$0xff] %vm351, %v332
      %366 = vst.msk [vmem:[%s213 + $0x70] sm:$0xff] %vm351, %v333
      %367 = vst.msk [vmem:[%s213 + $0x78] sm:$0xff] %vm351, %v334
      %368 = vst.msk [vmem:[%s213 + $0x80] sm:$0xff] %vm351, %v335
      %369 = vst.msk [vmem:[%s213 + $0x88] sm:$0xff] %vm351, %v336
      %370 = vst.msk [vmem:[%s213 + $0x90] sm:$0xff] %vm351, %v337
      %371 = vst.msk [vmem:[%s213 + $0x98] sm:$0xff] %vm351, %v338
      %372 = vst.msk [vmem:[%s213 + $0xa0] sm:$0xff] %vm351, %v339
      %373 = vst.msk [vmem:[%s213 + $0xa8] sm:$0xff] %vm351, %v340
      %374 = vst.msk [vmem:[%s213 + $0xb0] sm:$0xff] %vm351, %v341
      %375 = vst.msk [vmem:[%s213 + $0xb8] sm:$0xff] %vm351, %v342
      %376 = vst.msk [vmem:[%s213 + $0xc0] sm:$0xff] %vm351, %v343
      %377 = vst.msk [vmem:[%s213 + $0xc8] sm:$0xff] %vm351, %v344
      %378 = vst.msk [vmem:[%s213 + $0xd0] sm:$0xff] %vm351, %v345
      %379 = vst.msk [vmem:[%s213 + $0xd8] sm:$0xff] %vm351, %v346
      %380 = vst.msk [vmem:[%s213 + $0xe0] sm:$0xff] %vm351, %v347
      %381 = vst.msk [vmem:[%s213 + $0xe8] sm:$0xff] %vm351, %v348
      %382 = vst.msk [vmem:[%s213 + $0xf0] sm:$0xff] %vm351, %v349
      %383 = vst.msk [vmem:[%s213 + $0xf8] sm:$0xff] %vm351, %v350
      %s384 = smul.u32 16, %s19
      %p385 = scmp.lt.s32.totalorder %s18, 1
      %s386 = scalar_select %p385, %s18, 1
      %p387 = scmp.lt.s32.totalorder %s384, 15
      %s388 = scalar_select %p387, %s384, 15
      %s389 = smul.addr %s388, 2
      %s390 = smul.addr %s386, 32
      %s391 = sadd.s32 %s389, %s390
      %s392 = smul.addr %s391, 8
      %s393 = scalar_lea.vmem %s3, %s392
      // Predicated region
      $region33: #{double_conv.5} parent=31 // pred_check
        %p394 = pneg %p116
      $region34: #{double_conv.5} parent=31 // pred_check_branch
        %396 = sbr.rel (%p394) target = $region36
      $region35: #{double_conv.5} parent=31 // pred_region
        %s397 = smul.u32 16, %s19
      $region36: #{double_conv.5} parent=31 // pred_fallthru
        _
    $region32: #{double_conv.5} parent=5 // pred_fallthru
      _
    %p398 = scmp.le.s32.totalorder 2, %s9
    // Predicated region
    $region37: #{double_conv.5} parent=5 // pred_check
      %p399 = pneg %p398
    $region38: #{double_conv.5} parent=5 // pred_check_branch
      %401 = sbr.rel (%p399) target = $region40
    $region39: #{double_conv.5} parent=5 // pred_region
      %s402 = ssub.s32 %s9, 2
      // Predicated region
      $region41: #{double_conv.5} parent=39 // pred_check
        %p403 = pneg %p122
      $region42: #{double_conv.5} parent=39 // pred_check_branch
        %405 = sbr.rel (%p403) target = $region44
      $region43: #{double_conv.5} parent=39 // pred_region
        %s406 = smul.u32 16, %s21
        %p407 = scmp.lt.s32.totalorder %s20, 1
        %s408 = scalar_select %p407, %s20, 1
        %p409 = scmp.lt.s32.totalorder %s406, 15
        %s410 = scalar_select %p409, %s406, 15
        %s411 = smul.addr %s410, 2
        %s412 = smul.addr %s408, 32
        %s413 = sadd.s32 %s411, %s412
        %s414 = smul.addr %s413, 8
        %s415 = scalar_lea.vmem %s3, %s414
      $region44: #{double_conv.5} parent=39 // pred_fallthru
        _
    $region40: #{double_conv.5} parent=5 // pred_fallthru
      _
  $region6: #{double_conv.5} parent=0 // loop_footer
    %s13 = sadd.s32 1, %s9
  $region7: #{double_conv.5} parent=0 // loop_footer_branch
    %8 = sbr.rel target = $region3
  $region8: #{double_conv.5} parent=0 // loop_exit
    _

// kernel: double_conv.3
$region0: #{double_conv.3}
  #allocation0 [shape = 'u32[]', space=smem, size = 0x4, offset = 0x4, fixed_abs, tag = 'smem constant byte address 0x4 - core index']
  #allocation1 [shape = 'u32[72,128]{1,0:T(1,128)}', space=vmem, size = 0x9000, scoped, tag = 'internal scratch']
  #allocation2 [shape = 'f32[18,18,4]{2,1,0:T(8,128)}', space=vmem, size = 0x36000, scoped, tag = 'scratch operand']
  %s0 = inlined_call_operand.vmem [shape: f32[2,16,16,4], index: 0, kind: input, shape index: {}, may-alias: {0,1,2}]
  %s1 = inlined_call_operand.vmem [shape: f32[2,16,16,4], index: 1, kind: input, shape index: {}, may-alias: {0,1,2}]
  %s2 = inlined_call_operand.vmem [shape: f32[2,16,16,4], index: 2, kind: input, shape index: {}, may-alias: {0,1,2}]
  %s3 = inlined_call_operand.vmem [shape: f32[9,4,8], index: 3, kind: input, shape index: {}]
  %s4 = inlined_call_operand.vmem [shape: f32[2,16,16,8], index: 4, kind: output, shape index: {0}]
  %s5 = inlined_call_operand.vmem [shape: f32[2,1,2,8], index: 5, kind: output, shape index: {1}]
  %6 = xla_tuple %s4, %s5
  %s7 = sld [smem:[#allocation0]]
  $region57: #{double_conv.3} parent=0
    _
  %s9 = ssub.s32 1, %s7
  %s10 = scalar_select 0, %s9, %s7
  loop: start=0, step=1, limit=4
  $region2: #{double_conv.3} parent=0 // loop_pre_header
    _
  $region3: #{double_conv.3} parent=0 // loop_header
    %s12 = sphi 0, %s16
    %p13 = scmp.ge.s32.totalorder %s12, 4
    %s19 = sphi 0, %s31
    %s20 = sphi 0, %s27
    %s21 = sphi 0, %s19
    %s22 = sphi 0, %s20
    %s23 = sphi 0, %s21
    %s24 = sphi 0, %s22
    %s44 = sphi 0, %s46
    %s47 = sphi 0, %s44
    %s48 = sphi 0, %s47
    %s64 = sphi 0, %s48
    %s72 = sphi 0, %s74
    %s75 = sphi 0, %s72
    %s76 = sphi 0, %s75
    %s92 = sphi 0, %s76
    %s108 = sphi 0, %s110
    %s111 = sphi 0, %s108
    %s112 = sphi 0, %s111
    %s128 = sphi 0, %s112
    %s132 = sphi 0, %s132
    %s134 = sphi 0, %s132
    %s135 = sphi 0, %s134
    %s149 = sphi 0, %s135
    %s157 = sphi 0, %s159
    %s160 = sphi 0, %s157
    %s161 = sphi 0, %s160
    %s177 = sphi 0, %s161
    %s185 = sphi 0, %s187
    %s188 = sphi 0, %s185
    %s189 = sphi 0, %s188
    %s205 = sphi 0, %s189
  $region4: #{double_conv.3} parent=0 // loop_header_branch
    %15 = sbr.rel (%p13) target = $region8
  $region5: #{double_conv.3} parent=0 // loop_body
    %s17 = ssub.s32 %s12, 1
    %s18 = ssub.s32 %s12, 2
    %s25 = sadd.s32 1, %s20
    %p26 = scmp.ge.s32.totalorder %s25, 1
    %s27 = scalar_select %p26, 0, %s25
    %s28 = sadd.s32 1, %s19
    %s29 = scalar_select %p26, %s28, %s19
    %p30 = scmp.ge.s32.totalorder %s29, 2
    %s31 = scalar_select %p30, 0, %s29
    %s32 = smul.u32 %s20, 16
    %s33 = ssub.s32 %s32, 1
    %p34 = scmp.gt.s32.totalorder %s33, 0
    %s35 = scalar_select %p34, %s33, 0
    %s36 = smul.u32 %s27, 16
    %s37 = ssub.s32 %s36, 1
    %p38 = scmp.gt.s32.totalorder %s37, 0
    %s39 = scalar_select %p38, %s37, 0
    %s40 = ssub.s32 %s19, %s31
    %s41 = ssub.s32 %s35, %s39
    %s42 = sor.u32 %s40, %s41
    %p43 = scmp.eq.s32.totalorder %s42, 0
    %s45 = sadd.s32 %s44, 1
    %s46 = scalar_select %p43, %s44, %s45
    %p49 = pneg %p43
    %p50 = scmp.eq.s32.totalorder %s12, 1
    %p51 = por %p49, %p50
    %p52 = scmp.ne.s32.totalorder %s44, %s47
    %p53 = scmp.eq.s32.totalorder %s12, 0
    %p54 = por %p52, %p53
    %p55 = scmp.ne.s32.totalorder %s44, %s47
    %p56 = scmp.eq.s32.totalorder %s17, 1
    %p57 = por %p55, %p56
    %p58 = scmp.ne.s32.totalorder %s47, %s48
    %p59 = scmp.eq.s32.totalorder %s17, 0
    %p60 = por %p58, %p59
    %p61 = scmp.ne.s32.totalorder %s47, %s48
    %p62 = scmp.eq.s32.totalorder %s18, 1
    %p63 = por %p61, %p62
    %p65 = scmp.ne.s32.totalorder %s48, %s64
    %p66 = scmp.eq.s32.totalorder %s18, 0
    %p67 = por %p65, %p66
    %s68 = ssub.s32 %s19, %s31
    %s69 = ssub.s32 %s20, %s27
    %s70 = sor.u32 %s68, %s69
    %p71 = scmp.eq.s32.totalorder %s70, 0
    %s73 = sadd.s32 %s72, 1
    %s74 = scalar_select %p71, %s72, %s73
    %p77 = pneg %p71
    %p78 = scmp.eq.s32.totalorder %s12, 1
    %p79 = por %p77, %p78
    %p80 = scmp.ne.s32.totalorder %s72, %s75
    %p81 = scmp.eq.s32.totalorder %s12, 0
    %p82 = por %p80, %p81
    %p83 = scmp.ne.s32.totalorder %s72, %s75
    %p84 = scmp.eq.s32.totalorder %s17, 1
    %p85 = por %p83, %p84
    %p86 = scmp.ne.s32.totalorder %s75, %s76
    %p87 = scmp.eq.s32.totalorder %s17, 0
    %p88 = por %p86, %p87
    %p89 = scmp.ne.s32.totalorder %s75, %s76
    %p90 = scmp.eq.s32.totalorder %s18, 1
    %p91 = por %p89, %p90
    %p93 = scmp.ne.s32.totalorder %s76, %s92
    %p94 = scmp.eq.s32.totalorder %s18, 0
    %p95 = por %p93, %p94
    %s96 = smul.u32 %s20, 16
    %s97 = sadd.s32 %s96, 16
    %p98 = scmp.lt.s32.totalorder %s97, 15
    %s99 = scalar_select %p98, %s97, 15
    %s100 = smul.u32 %s27, 16
    %s101 = sadd.s32 %s100, 16
    %p102 = scmp.lt.s32.totalorder %s101, 15
    %s103 = scalar_select %p102, %s101, 15
    %s104 = ssub.s32 %s19, %s31
    %s105 = ssub.s32 %s99, %s103
    %s106 = sor.u32 %s104, %s105
    %p107 = scmp.eq.s32.totalorder %s106, 0
    %s109 = sadd.s32 %s108, 1
    %s110 = scalar_select %p107, %s108, %s109
    %p113 = pneg %p107
    %p114 = scmp.eq.s32.totalorder %s12, 1
    %p115 = por %p113, %p114
    %p116 = scmp.ne.s32.totalorder %s108, %s111
    %p117 = scmp.eq.s32.totalorder %s12, 0
    %p118 = por %p116, %p117
    %p119 = scmp.ne.s32.totalorder %s108, %s111
    %p120 = scmp.eq.s32.totalorder %s17, 1
    %p121 = por %p119, %p120
    %p122 = scmp.ne.s32.totalorder %s111, %s112
    %p123 = scmp.eq.s32.totalorder %s17, 0
    %p124 = por %p122, %p123
    %p125 = scmp.ne.s32.totalorder %s111, %s112
    %p126 = scmp.eq.s32.totalorder %s18, 1
    %p127 = por %p125, %p126
    %p129 = scmp.ne.s32.totalorder %s112, %s128
    %p130 = scmp.eq.s32.totalorder %s18, 0
    %p131 = por %p129, %p130
    %s133 = sadd.s32 %s132, 1
    %p136 = scmp.eq.s32.totalorder %s12, 1
    %p137 = scmp.ne.s32.totalorder %s132, %s134
    %p138 = scmp.eq.s32.totalorder %s12, 0
    %p139 = por %p137, %p138
    %p140 = scmp.ne.s32.totalorder %s132, %s134
    %p141 = scmp.eq.s32.totalorder %s17, 1
    %p142 = por %p140, %p141
    %p143 = scmp.ne.s32.totalorder %s134, %s135
    %p144 = scmp.eq.s32.totalorder %s17, 0
    %p145 = por %p143, %p144
    %p146 = scmp.ne.s32.totalorder %s134, %s135
    %p147 = scmp.eq.s32.totalorder %s18, 1
    %p148 = por %p146, %p147
    %p150 = scmp.ne.s32.totalorder %s135, %s149
    %p151 = scmp.eq.s32.totalorder %s18, 0
    %p152 = por %p150, %p151
    %s153 = ssub.s32 %s19, %s31
    %s154 = ssub.s32 %s20, %s27
    %s155 = sor.u32 %s153, %s154
    %p156 = scmp.eq.s32.totalorder %s155, 0
    %s158 = sadd.s32 %s157, 1
    %s159 = scalar_select %p156, %s157, %s158
    %p162 = pneg %p156
    %p163 = scmp.eq.s32.totalorder %s12, 1
    %p164 = por %p162, %p163
    %p165 = scmp.ne.s32.totalorder %s157, %s160
    %p166 = scmp.eq.s32.totalorder %s12, 0
    %p167 = por %p165, %p166
    %p168 = scmp.ne.s32.totalorder %s157, %s160
    %p169 = scmp.eq.s32.totalorder %s17, 1
    %p170 = por %p168, %p169
    %p171 = scmp.ne.s32.totalorder %s160, %s161
    %p172 = scmp.eq.s32.totalorder %s17, 0
    %p173 = por %p171, %p172
    %p174 = scmp.ne.s32.totalorder %s160, %s161
    %p175 = scmp.eq.s32.totalorder %s18, 1
    %p176 = por %p174, %p175
    %p178 = scmp.ne.s32.totalorder %s161, %s177
    %p179 = scmp.eq.s32.totalorder %s18, 0
    %p180 = por %p178, %p179
    %s181 = ssub.s32 %s19, %s31
    %s182 = ssub.s32 %s20, %s27
    %s183 = sor.u32 %s181, %s182
    %p184 = scmp.eq.s32.totalorder %s183, 0
    %s186 = sadd.s32 %s185, 1
    %s187 = scalar_select %p184, %s185, %s186
    %p190 = pneg %p184
    %p191 = scmp.eq.s32.totalorder %s12, 1
    %p192 = por %p190, %p191
    %p193 = scmp.ne.s32.totalorder %s185, %s188
    %p194 = scmp.eq.s32.totalorder %s12, 0
    %p195 = por %p193, %p194
    %p196 = scmp.ne.s32.totalorder %s185, %s188
    %p197 = scmp.eq.s32.totalorder %s17, 1
    %p198 = por %p196, %p197
    %p199 = scmp.ne.s32.totalorder %s188, %s189
    %p200 = scmp.eq.s32.totalorder %s17, 0
    %p201 = por %p199, %p200
    %p202 = scmp.ne.s32.totalorder %s188, %s189
    %p203 = scmp.eq.s32.totalorder %s18, 1
    %p204 = por %p202, %p203
    %p206 = scmp.ne.s32.totalorder %s189, %s205
    %p207 = scmp.eq.s32.totalorder %s18, 0
    %p208 = por %p206, %p207
    %p209 = scmp.le.s32.totalorder 1, %s12
    %p210 = scmp.lt.s32.totalorder %s12, 3
    %p211 = pnand %p209, %p210
    %p212 = pneg %p211
    // Predicated region
    $region9: #{double_conv.3} parent=5 // pred_check
      _
    $region10: #{double_conv.3} parent=5 // pred_check_branch
      %214 = sbr.rel (%p211) target = $region12
    $region11: #{double_conv.3} parent=5 // pred_region
      %s215 = ssub.s32 %s12, 1
      // Predicated region
      $region13: #{double_conv.3} parent=11 // pred_check
        %p216 = pneg %p145
      $region14: #{double_conv.3} parent=11 // pred_check_branch
        %218 = sbr.rel (%p216) target = $region16
      $region15: #{double_conv.3} parent=11 // pred_region
        _
      $region16: #{double_conv.3} parent=11 // pred_fallthru
        _
    $region12: #{double_conv.3} parent=5 // pred_fallthru
      _
    %p219 = scmp.lt.s32.totalorder %s12, 2
    // Predicated region
    $region17: #{double_conv.3} parent=5 // pred_check
      %p220 = pneg %p219
    $region18: #{double_conv.3} parent=5 // pred_check_branch
      %222 = sbr.rel (%p220) target = $region20
    $region19: #{double_conv.3} parent=5 // pred_region
      // Predicated region
      $region21: #{double_conv.3} parent=19 // pred_check
        %p223 = pneg %p54
      $region22: #{double_conv.3} parent=19 // pred_check_branch
        %225 = sbr.rel (%p223) target = $region24
      $region23: #{double_conv.3} parent=19 // pred_region
        %s226 = smul.u32 %s20, 16
        %s227 = ssub.s32 %s226, 1
        %p228 = scmp.gt.s32.totalorder %s227, 0
        %s229 = scalar_select %p228, %s227, 0
        %p230 = scmp.lt.s32.totalorder %s19, 1
        %s231 = scalar_select %p230, %s19, 1
        %p232 = scmp.lt.s32.totalorder %s229, 15
        %s233 = scalar_select %p232, %s229, 15
        %s234 = smul.addr %s233, 2
        %s235 = smul.addr %s231, 32
        %s236 = sadd.s32 %s234, %s235
        %s237 = smul.addr %s236, 8
        %s238 = scalar_lea.vmem %s0, %s237
        %s239 = smul.u32 %s20, 16
        %s240 = ssub.s32 %s239, 1
        %p241 = scmp.gt.s32.totalorder %s240, 0
        %s242 = scalar_select %p241, %s240, 0
      $region24: #{double_conv.3} parent=19 // pred_fallthru
        _
      // Predicated region
      $region25: #{double_conv.3} parent=19 // pred_check
        %p243 = pneg %p82
      $region26: #{double_conv.3} parent=19 // pred_check_branch
        %245 = sbr.rel (%p243) target = $region28
      $region27: #{double_conv.3} parent=19 // pred_region
        %s246 = smul.u32 16, %s20
        %p247 = scmp.lt.s32.totalorder %s19, 1
        %s248 = scalar_select %p247, %s19, 1
        %p249 = scmp.lt.s32.totalorder %s246, 15
        %s250 = scalar_select %p249, %s246, 15
        %s251 = smul.addr %s250, 2
        %s252 = smul.addr %s248, 32
        %s253 = sadd.s32 %s251, %s252
        %s254 = smul.addr %s253, 8
        %s255 = scalar_lea.vmem %s1, %s254
        %s256 = smul.u32 16, %s20
      $region28: #{double_conv.3} parent=19 // pred_fallthru
        _
      // Predicated region
      $region29: #{double_conv.3} parent=19 // pred_check
        %p257 = pneg %p118
      $region30: #{double_conv.3} parent=19 // pred_check_branch
        %259 = sbr.rel (%p257) target = $region32
      $region31: #{double_conv.3} parent=19 // pred_region
        %s260 = smul.u32 %s20, 16
        %s261 = sadd.s32 %s260, 16
        %p262 = scmp.lt.s32.totalorder %s261, 15
        %s263 = scalar_select %p262, %s261, 15
        %p264 = scmp.lt.s32.totalorder %s19, 1
        %s265 = scalar_select %p264, %s19, 1
        %p266 = scmp.lt.s32.totalorder %s263, 15
        %s267 = scalar_select %p266, %s263, 15
        %s268 = smul.addr %s267, 2
        %s269 = smul.addr %s265, 32
        %s270 = sadd.s32 %s268, %s269
        %s271 = smul.addr %s270, 8
        %s272 = scalar_lea.vmem %s2, %s271
        %s273 = smul.u32 %s20, 16
        %s274 = sadd.s32 %s273, 16
        %p275 = scmp.lt.s32.totalorder %s274, 15
        %s276 = scalar_select %p275, %s274, 15
      $region32: #{double_conv.3} parent=19 // pred_fallthru
        _
    $region20: #{double_conv.3} parent=5 // pred_fallthru
      _
    %p277 = scmp.le.s32.totalorder 1, %s12
    %p278 = scmp.lt.s32.totalorder %s12, 3
    %p279 = pnand %p277, %p278
    %p280 = pneg %p279
    // Predicated region
    $region33: #{double_conv.3} parent=5 // pred_check
      _
    $region34: #{double_conv.3} parent=5 // pred_check_branch
      %282 = sbr.rel (%p279) target = $region36
    $region35: #{double_conv.3} parent=5 // pred_region
      %s283 = ssub.s32 %s12, 1
      %s284 = smul.u32 %s22, 16
      %s285 = ssub.s32 %s284, 1
      %p286 = scmp.gt.s32.totalorder %s285, 0
      %s287 = scalar_select %p286, %s285, 0
      %p288 = scmp.lt.s32.totalorder %s21, 1
      %s289 = scalar_select %p288, %s21, 1
      %p290 = scmp.lt.s32.totalorder %s287, 15
      %s291 = scalar_select %p290, %s287, 15
      %s292 = smul.addr %s291, 2
      %s293 = smul.addr %s289, 32
      %s294 = sadd.s32 %s292, %s293
      %s295 = smul.addr %s294, 8
      %s296 = scalar_lea.vmem %s0, %s295
      %p297 = pneg %p60
      %p298 = pneg %p57
      %s299 = smul.u32 16, %s22
      %p300 = scmp.lt.s32.totalorder %s21, 1
      %s301 = scalar_select %p300, %s21, 1
      %p302 = scmp.lt.s32.totalorder %s299, 15
      %s303 = scalar_select %p302, %s299, 15
      %s304 = smul.addr %s303, 2
      %s305 = smul.addr %s301, 32
      %s306 = sadd.s32 %s304, %s305
      %s307 = smul.addr %s306, 8
      %s308 = scalar_lea.vmem %s1, %s307
      %p309 = pneg %p88
      %p310 = pneg %p85
      %s311 = smul.u32 %s22, 16
      %s312 = sadd.s32 %s311, 16
      %p313 = scmp.lt.s32.totalorder %s312, 15
      %s314 = scalar_select %p313, %s312, 15
      %p315 = scmp.lt.s32.totalorder %s21, 1
      %s316 = scalar_select %p315, %s21, 1
      %p317 = scmp.lt.s32.totalorder %s314, 15
      %s318 = scalar_select %p317, %s314, 15
      %s319 = smul.addr %s318, 2
      %s320 = smul.addr %s316, 32
      %s321 = sadd.s32 %s319, %s320
      %s322 = smul.addr %s321, 8
      %s323 = scalar_lea.vmem %s2, %s322
      %p324 = pneg %p124
      %p325 = pneg %p121
      %p326 = pneg %p145
      %p327 = pneg %p142
      %p328 = pneg %p173
      %p329 = pneg %p170
      %s330 = smul.u32 16, %s22
      %p331 = scmp.lt.s32.totalorder %s21, 1
      %s332 = scalar_select %p331, %s21, 1
      %p333 = scmp.lt.s32.totalorder %s330, 15
      %s334 = scalar_select %p333, %s330, 15
      %s335 = smul.addr %s334, 2
      %s336 = smul.addr %s332, 32
      %s337 = sadd.s32 %s335, %s336
      %s338 = smul.addr %s337, 8
      %s339 = scalar_lea.vmem %s4, %s338
      %p340 = pneg %p201
      %p341 = pneg %p198
      %p342 = scmp.lt.s32.totalorder %s21, 1
      %s343 = scalar_select %p342, %s21, 1
      %p344 = scmp.lt.s32.totalorder %s22, 0
      %s345 = scalar_select %p344, %s22, 0
      %s346 = sadd.s32 %s345, %s343
      %s347 = smul.addr %s346, 2
      %s348 = scalar_lea.vmem %s5, %s347
      %s349 = smul.u32 %s22, 16
      %s350 = ssub.s32 %s349, 1
      %p351 = scmp.gt.s32.totalorder %s350, 0
      %s352 = scalar_select %p351, %s350, 0
      %p353 = scmp.lt.s32.totalorder %s21, 1
      %s354 = scalar_select %p353, %s21, 1
      %p355 = scmp.lt.s32.totalorder %s352, 15
      %s356 = scalar_select %p355, %s352, 15
      %s357 = smul.addr %s356, 2
      %s358 = smul.addr %s354, 32
      %s359 = sadd.s32 %s357, %s358
      %s360 = smul.addr %s359, 8
      %s361 = scalar_lea.vmem %s0, %s360
      %s362 = smul.u32 %s22, 16
      %s363 = ssub.s32 %s362, 1
      %p364 = scmp.gt.s32.totalorder %s363, 0
      %s365 = scalar_select %p364, %s363, 0
      %s366 = smul.u32 16, %s22
      %p367 = scmp.lt.s32.totalorder %s21, 1
      %s368 = scalar_select %p367, %s21, 1
      %p369 = scmp.lt.s32.totalorder %s366, 15
      %s370 = scalar_select %p369, %s366, 15
      %s371 = smul.addr %s370, 2
      %s372 = smul.addr %s368, 32
      %s373 = sadd.s32 %s371, %s372
      %s374 = smul.addr %s373, 8
      %s375 = scalar_lea.vmem %s1, %s374
      %s376 = smul.u32 16, %s22
      %s377 = smul.u32 %s22, 16
      %s378 = sadd.s32 %s377, 16
      %p379 = scmp.lt.s32.totalorder %s378, 15
      %s380 = scalar_select %p379, %s378, 15
      %p381 = scmp.lt.s32.totalorder %s21, 1
      %s382 = scalar_select %p381, %s21, 1
      %p383 = scmp.lt.s32.totalorder %s380, 15
      %s384 = scalar_select %p383, %s380, 15
      %s385 = smul.addr %s384, 2
      %s386 = smul.addr %s382, 32
      %s387 = sadd.s32 %s385, %s386
      %s388 = smul.addr %s387, 8
      %s389 = scalar_lea.vmem %s2, %s388
      %s390 = smul.u32 %s22, 16
      %s391 = sadd.s32 %s390, 16
      %p392 = scmp.lt.s32.totalorder %s391, 15
      %s393 = scalar_select %p392, %s391, 15
      %s394 = smul.u32 16, %s22
      %p395 = scmp.lt.s32.totalorder %s21, 1
      %s396 = scalar_select %p395, %s21, 1
      %p397 = scmp.lt.s32.totalorder %s394, 15
      %s398 = scalar_select %p397, %s394, 15
      %s399 = smul.addr %s398, 2
      %s400 = smul.addr %s396, 32
      %s401 = sadd.s32 %s399, %s400
      %s402 = smul.addr %s401, 8
      %s403 = scalar_lea.vmem %s4, %s402
      %s404 = smul.u32 16, %s22
      %p405 = scmp.lt.s32.totalorder %s21, 1
      %s406 = scalar_select %p405, %s21, 1
      %p407 = scmp.lt.s32.totalorder %s22, 0
      %s408 = scalar_select %p407, %s22, 0
      %s409 = sadd.s32 %s408, %s406
      %s410 = smul.addr %s409, 2
      %s411 = scalar_lea.vmem %s5, %s410
      %v412 = vld [vmem:[%s375] sm:$0xff]
      %v413 = vld [vmem:[%s375 + $0x8] sm:$0xff]
      %v414 = vld [vmem:[%s375 + $0x10] sm:$0xff]
      %v415 = vld [vmem:[%s375 + $0x18] sm:$0xff]
      %v416 = vld [vmem:[%s375 + $0x20] sm:$0xff]
      %v417 = vld [vmem:[%s375 + $0x28] sm:$0xff]
      %v418 = vld [vmem:[%s375 + $0x30] sm:$0xff]
      %v419 = vld [vmem:[%s375 + $0x38] sm:$0xff]
      %v420 = vld [vmem:[%s375 + $0x40] sm:$0xff]
      %v421 = vld [vmem:[%s375 + $0x48] sm:$0xff]
      %v422 = vld [vmem:[%s375 + $0x50] sm:$0xff]
      %v423 = vld [vmem:[%s375 + $0x58] sm:$0xff]
      %v424 = vld [vmem:[%s375 + $0x60] sm:$0xff]
      %v425 = vld [vmem:[%s375 + $0x68] sm:$0xff]
      %v426 = vld [vmem:[%s375 + $0x70] sm:$0xff]
      %v427 = vld [vmem:[%s375 + $0x78] sm:$0xff]
      %v428 = vld [vmem:[%s375 + $0x80] sm:$0xff]
      %v429 = vld [vmem:[%s375 + $0x88] sm:$0xff]
      %v430 = vld [vmem:[%s375 + $0x90] sm:$0xff]
      %v431 = vld [vmem:[%s375 + $0x98] sm:$0xff]
      %v432 = vld [vmem:[%s375 + $0xa0] sm:$0xff]
      %v433 = vld [vmem:[%s375 + $0xa8] sm:$0xff]
      %v434 = vld [vmem:[%s375 + $0xb0] sm:$0xff]
      %v435 = vld [vmem:[%s375 + $0xb8] sm:$0xff]
      %v436 = vld [vmem:[%s375 + $0xc0] sm:$0xff]
      %v437 = vld [vmem:[%s375 + $0xc8] sm:$0xff]
      %v438 = vld [vmem:[%s375 + $0xd0] sm:$0xff]
      %v439 = vld [vmem:[%s375 + $0xd8] sm:$0xff]
      %v440 = vld [vmem:[%s375 + $0xe0] sm:$0xff]
      %v441 = vld [vmem:[%s375 + $0xe8] sm:$0xff]
      %v442 = vld [vmem:[%s375 + $0xf0] sm:$0xff]
      %v443 = vld [vmem:[%s375 + $0xf8] sm:$0xff]
      %s444 = scalar_lea.vmem [#allocation2], 24
      %vm445 = vcmask 31744
      %446 = vst.msk [vmem:[%s444 + $0x1] sm:$0xff] %vm445, %v412
      %447 = vst.msk [vmem:[%s444 + $0x9] sm:$0xff] %vm445, %v413
      %448 = vst.msk [vmem:[%s444 + $0x19] sm:$0xff] %vm445, %v414
      %449 = vst.msk [vmem:[%s444 + $0x21] sm:$0xff] %vm445, %v415
      %450 = vst.msk [vmem:[%s444 + $0x31] sm:$0xff] %vm445, %v416
      %451 = vst.msk [vmem:[%s444 + $0x39] sm:$0xff] %vm445, %v417
      %452 = vst.msk [vmem:[%s444 + $0x49] sm:$0xff] %vm445, %v418
      %453 = vst.msk [vmem:[%s444 + $0x51] sm:$0xff] %vm445, %v419
      %454 = vst.msk [vmem:[%s444 + $0x61] sm:$0xff] %vm445, %v420
      %455 = vst.msk [vmem:[%s444 + $0x69] sm:$0xff] %vm445, %v421
      %456 = vst.msk [vmem:[%s444 + $0x79] sm:$0xff] %vm445, %v422
      %457 = vst.msk [vmem:[%s444 + $0x81] sm:$0xff] %vm445, %v423
      %458 = vst.msk [vmem:[%s444 + $0x91] sm:$0xff] %vm445, %v424
      %459 = vst.msk [vmem:[%s444 + $0x99] sm:$0xff] %vm445, %v425
      %460 = vst.msk [vmem:[%s444 + $0xa9] sm:$0xff] %vm445, %v426
      %461 = vst.msk [vmem:[%s444 + $0xb1] sm:$0xff] %vm445, %v427
      %462 = vst.msk [vmem:[%s444 + $0xc1] sm:$0xff] %vm445, %v428
      %463 = vst.msk [vmem:[%s444 + $0xc9] sm:$0xff] %vm445, %v429
      %464 = vst.msk [vmem:[%s444 + $0xd9] sm:$0xff] %vm445, %v430
      %465 = vst.msk [vmem:[%s444 + $0xe1] sm:$0xff] %vm445, %v431
      %466 = vst.msk [vmem:[%s444 + $0xf1] sm:$0xff] %vm445, %v432
      %467 = vst.msk [vmem:[%s444 + $0xf9] sm:$0xff] %vm445, %v433
      %468 = vst.msk [vmem:[%s444 + $0x109] sm:$0xff] %vm445, %v434
      %469 = vst.msk [vmem:[%s444 + $0x111] sm:$0xff] %vm445, %v435
      %470 = vst.msk [vmem:[%s444 + $0x121] sm:$0xff] %vm445, %v436
      %471 = vst.msk [vmem:[%s444 + $0x129] sm:$0xff] %vm445, %v437
      %472 = vst.msk [vmem:[%s444 + $0x139] sm:$0xff] %vm445, %v438
      %473 = vst.msk [vmem:[%s444 + $0x141] sm:$0xff] %vm445, %v439
      %474 = vst.msk [vmem:[%s444 + $0x151] sm:$0xff] %vm445, %v440
      %475 = vst.msk [vmem:[%s444 + $0x159] sm:$0xff] %vm445, %v441
      %476 = vst.msk [vmem:[%s444 + $0x169] sm:$0xff] %vm445, %v442
      %477 = vst.msk [vmem:[%s444 + $0x171] sm:$0xff] %vm445, %v443
      %vm478 = vcmask 24576
      %479 = vst.msk [vmem:[#allocation2] sm:$0x1] %vm478, 0.0
      %480 = vst.msk [vmem:[#allocation2 + $0x18] sm:$0x1] %vm478, 0.0
      %481 = vst.msk [vmem:[#allocation2 + $0x30] sm:$0x1] %vm478, 0.0
      %482 = vst.msk [vmem:[#allocation2 + $0x48] sm:$0x1] %vm478, 0.0
      %483 = vst.msk [vmem:[#allocation2 + $0x60] sm:$0x1] %vm478, 0.0
      %484 = vst.msk [vmem:[#allocation2 + $0x78] sm:$0x1] %vm478, 0.0
      %485 = vst.msk [vmem:[#allocation2 + $0x90] sm:$0x1] %vm478, 0.0
      %486 = vst.msk [vmem:[#allocation2 + $0xa8] sm:$0x1] %vm478, 0.0
      %487 = vst.msk [vmem:[#allocation2 + $0xc0] sm:$0x1] %vm478, 0.0
      %488 = vst.msk [vmem:[#allocation2 + $0xd8] sm:$0x1] %vm478, 0.0
      %489 = vst.msk [vmem:[#allocation2 + $0xf0] sm:$0x1] %vm478, 0.0
      %490 = vst.msk [vmem:[#allocation2 + $0x108] sm:$0x1] %vm478, 0.0
      %491 = vst.msk [vmem:[#allocation2 + $0x120] sm:$0x1] %vm478, 0.0
      %492 = vst.msk [vmem:[#allocation2 + $0x138] sm:$0x1] %vm478, 0.0
      %493 = vst.msk [vmem:[#allocation2 + $0x150] sm:$0x1] %vm478, 0.0
      %494 = vst.msk [vmem:[#allocation2 + $0x168] sm:$0x1] %vm478, 0.0
      %495 = vst.msk [vmem:[#allocation2 + $0x180] sm:$0x1] %vm478, 0.0
      %496 = vst.msk [vmem:[#allocation2 + $0x198] sm:$0x1] %vm478, 0.0
      %497 = vst.msk [vmem:[#allocation2 + $0x11] sm:$0x1] %vm478, 0.0
      %498 = vst.msk [vmem:[#allocation2 + $0x29] sm:$0x1] %vm478, 0.0
      %499 = vst.msk [vmem:[#allocation2 + $0x41] sm:$0x1] %vm478, 0.0
      %500 = vst.msk [vmem:[#allocation2 + $0x59] sm:$0x1] %vm478, 0.0
      %501 = vst.msk [vmem:[#allocation2 + $0x71] sm:$0x1] %vm478, 0.0
      %502 = vst.msk [vmem:[#allocation2 + $0x89] sm:$0x1] %vm478, 0.0
      %503 = vst.msk [vmem:[#allocation2 + $0xa1] sm:$0x1] %vm478, 0.0
      %504 = vst.msk [vmem:[#allocation2 + $0xb9] sm:$0x1] %vm478, 0.0
      %505 = vst.msk [vmem:[#allocation2 + $0xd1] sm:$0x1] %vm478, 0.0
      %506 = vst.msk [vmem:[#allocation2 + $0xe9] sm:$0x1] %vm478, 0.0
      %507 = vst.msk [vmem:[#allocation2 + $0x101] sm:$0x1] %vm478, 0.0
      %508 = vst.msk [vmem:[#allocation2 + $0x119] sm:$0x1] %vm478, 0.0
      %509 = vst.msk [vmem:[#allocation2 + $0x131] sm:$0x1] %vm478, 0.0
      %510 = vst.msk [vmem:[#allocation2 + $0x149] sm:$0x1] %vm478, 0.0
      %511 = vst.msk [vmem:[#allocation2 + $0x161] sm:$0x1] %vm478, 0.0
      %512 = vst.msk [vmem:[#allocation2 + $0x179] sm:$0x1] %vm478, 0.0
      %513 = vst.msk [vmem:[#allocation2 + $0x191] sm:$0x1] %vm478, 0.0
      %514 = vst.msk [vmem:[#allocation2 + $0x1a9] sm:$0x1] %vm478, 0.0
      %v515 = vld [vmem:[%s361] sm:$0xff]
      %v516 = vld [vmem:[%s361 + $0x8] sm:$0xff]
      %p517 = scmp.gt.s32.totalorder %s22, 0
      %s518 = scalar_select %p517, 1, 0
      %v519 = vstv %s518
      %vm520 = vcmp.eq.s32.totalorder %v519, 1
      %v521 = vsel %vm520, %v515, 0.0
      %v522 = vsel %vm520, %v516, 0.0
      %523 = vst.msk [vmem:[#allocation2 + $0x1] sm:$0xff] %vm445, %v521
      %524 = vst.msk [vmem:[#allocation2 + $0x9] sm:$0xff] %vm445, %v522
      %v525 = vld [vmem:[%s389] sm:$0xff]
      %v526 = vld [vmem:[%s389 + $0x8] sm:$0xff]
      %p527 = scmp.lt.s32.totalorder %s22, 0
      %s528 = scalar_select %p527, 1, 0
      %v529 = vstv %s528
      %vm530 = vcmp.eq.s32.totalorder %v529, 1
      %v531 = vsel %vm530, %v525, 0.0
      %v532 = vsel %vm530, %v526, 0.0
      %s533 = scalar_lea.vmem [#allocation2], 408
      %534 = vst.msk [vmem:[%s533 + $0x1] sm:$0xff] %vm445, %v531
      %535 = vst.msk [vmem:[%s533 + $0x9] sm:$0xff] %vm445, %v532
      %v536 = vld [vmem:[#allocation2] sm:$0xff]
      %v537 = vld [vmem:[#allocation2 + $0x8] sm:$0xff]
      %v538 = vld [vmem:[#allocation2 + $0x18] sm:$0xff]
      %v539 = vld [vmem:[#allocation2 + $0x20] sm:$0xff]
      %v540 = vld [vmem:[#allocation2 + $0x30] sm:$0xff]
      %v541 = vld [vmem:[#allocation2 + $0x38] sm:$0xff]
      %v542 = vld [vmem:[#allocation2 + $0x48] sm:$0xff]
      %v543 = vld [vmem:[#allocation2 + $0x50] sm:$0xff]
      %v544 = vld [vmem:[#allocation2 + $0x60] sm:$0xff]
      %v545 = vld [vmem:[#allocation2 + $0x68] sm:$0xff]
      %v546 = vld [vmem:[#allocation2 + $0x78] sm:$0xff]
      %v547 = vld [vmem:[#allocation2 + $0x80] sm:$0xff]
      %v548 = vld [vmem:[#allocation2 + $0x90] sm:$0xff]
      %v549 = vld [vmem:[#allocation2 + $0x98] sm:$0xff]
      %v550 = vld [vmem:[#allocation2 + $0xa8] sm:$0xff]
      %v551 = vld [vmem:[#allocation2 + $0xb0] sm:$0xff]
      %v552 = vld [vmem:[#allocation2 + $0xc0] sm:$0xff]
      %v553 = vld [vmem:[#allocation2 + $0xc8] sm:$0xff]
      %v554 = vld [vmem:[#allocation2 + $0xd8] sm:$0xff]
      %v555 = vld [vmem:[#allocation2 + $0xe0] sm:$0xff]
      %v556 = vld [vmem:[#allocation2 + $0xf0] sm:$0xff]
      %v557 = vld [vmem:[#allocation2 + $0xf8] sm:$0xff]
      %v558 = vld [vmem:[#allocation2 + $0x108] sm:$0xff]
      %v559 = vld [vmem:[#allocation2 + $0x110] sm:$0xff]
      %v560 = vld [vmem:[#allocation2 + $0x120] sm:$0xff]
      %v561 = vld [vmem:[#allocation2 + $0x128] sm:$0xff]
      %v562 = vld [vmem:[#allocation2 + $0x138] sm:$0xff]
      %v563 = vld [vmem:[#allocation2 + $0x140] sm:$0xff]
      %v564 = vld [vmem:[#allocation2 + $0x150] sm:$0xff]
      %v565 = vld [vmem:[#allocation2 + $0x158] sm:$0xff]
      %v566 = vld [vmem:[#allocation2 + $0x168] sm:$0xff]
      %v567 = vld [vmem:[#allocation2 + $0x170] sm:$0xff]
      %v568 = vld [vmem:[%s3] sm:$0xf]
      %v569 = vld [vmem:[#allocation2 + $0x1] sm:$0xff]
      %v570 = vld [vmem:[#allocation2 + $0x9] sm:$0xff]
      %v571 = vld [vmem:[#allocation2 + $0x19] sm:$0xff]
      %v572 = vld [vmem:[#allocation2 + $0x21] sm:$0xff]
      %v573 = vld [vmem:[#allocation2 + $0x31] sm:$0xff]
      %v574 = vld [vmem:[#allocation2 + $0x39] sm:$0xff]
      %v575 = vld [vmem:[#allocation2 + $0x49] sm:$0xff]
      %v576 = vld [vmem:[#allocation2 + $0x51] sm:$0xff]
      %v577 = vld [vmem:[#allocation2 + $0x61] sm:$0xff]
      %v578 = vld [vmem:[#allocation2 + $0x69] sm:$0xff]
      %v579 = vld [vmem:[#allocation2 + $0x79] sm:$0xff]
      %v580 = vld [vmem:[#allocation2 + $0x81] sm:$0xff]
      %v581 = vld [vmem:[#allocation2 + $0x91] sm:$0xff]
      %v582 = vld [vmem:[#allocation2 + $0x99] sm:$0xff]
      %v583 = vld [vmem:[#allocation2 + $0xa9] sm:$0xff]
      %v584 = vld [vmem:[#allocation2 + $0xb1] sm:$0xff]
      %v585 = vld [vmem:[#allocation2 + $0xc1] sm:$0xff]
      %v586 = vld [vmem:[#allocation2 + $0xc9] sm:$0xff]
      %v587 = vld [vmem:[#allocation2 + $0xd9] sm:$0xff]
      %v588 = vld [vmem:[#allocation2 + $0xe1] sm:$0xff]
      %v589 = vld [vmem:[#allocation2 + $0xf1] sm:$0xff]
      %v590 = vld [vmem:[#allocation2 + $0xf9] sm:$0xff]
      %v591 = vld [vmem:[#allocation2 + $0x109] sm:$0xff]
      %v592 = vld [vmem:[#allocation2 + $0x111] sm:$0xff]
      %v593 = vld [vmem:[#allocation2 + $0x121] sm:$0xff]
      %v594 = vld [vmem:[#allocation2 + $0x129] sm:$0xff]
      %v595 = vld [vmem:[#allocation2 + $0x139] sm:$0xff]
      %v596 = vld [vmem:[#allocation2 + $0x141] sm:$0xff]
      %v597 = vld [vmem:[#allocation2 + $0x151] sm:$0xff]
      %v598 = vld [vmem:[#allocation2 + $0x159] sm:$0xff]
      %v599 = vld [vmem:[#allocation2 + $0x169] sm:$0xff]
      %v600 = vld [vmem:[#allocation2 + $0x171] sm:$0xff]
      %s601 = scalar_lea.vmem %s3, 4
      %v602 = vld [vmem:[%s601] sm:$0xf]
      %v604 = vsel %vm445, %v569, 0
      %v607 = vsel %vm445, %v570, 0
      %v610 = vsel %vm445, %v571, 0
      %v613 = vsel %vm445, %v572, 0
      %v616 = vsel %vm445, %v573, 0
      %v619 = vsel %vm445, %v574, 0
      %v622 = vsel %vm445, %v575, 0
      %v625 = vsel %vm445, %v576, 0
      %v628 = vsel %vm445, %v577, 0
      %v631 = vsel %vm445, %v578, 0
      %v634 = vsel %vm445, %v579, 0
      %v637 = vsel %vm445, %v580, 0
      %v640 = vsel %vm445, %v581, 0
      %v643 = vsel %vm445, %v582, 0
      %v646 = vsel %vm445, %v583, 0
      %v649 = vsel %vm445, %v584, 0
      %v652 = vsel %vm445, %v585, 0
      %v655 = vsel %vm445, %v586, 0
      %v658 = vsel %vm445, %v587, 0
      %v661 = vsel %vm445, %v588, 0
      %v664 = vsel %vm445, %v589, 0
      %v667 = vsel %vm445, %v590, 0
      %v670 = vsel %vm445, %v591, 0
      %v673 = vsel %vm445, %v592, 0
      %v676 = vsel %vm445, %v593, 0
      %v679 = vsel %vm445, %v594, 0
      %v682 = vsel %vm445, %v595, 0
      %v685 = vsel %vm445, %v596, 0
      %v688 = vsel %vm445, %v597, 0
      %v691 = vsel %vm445, %v598, 0
      %v694 = vsel %vm445, %v599, 0
      %v697 = vsel %vm445, %v600, 0
      %vm699 = vcmask 1043456
      %v701 = vsel %vm699, %v602, 0
      %703 = vmatpush.msra.mxu0 0.0
      %704 = vmatpush.msra.mxu0 0.0
      %705 = vmatpush.msra.mxu0 0.0
      %706 = vmatpush.msra.mxu0 0.0
      %707 = vmatpush.msra.mxu0 0.0
      %708 = vmatpush.msra.mxu0 0.0
      %709 = vmatpush.msra.mxu0 0.0
      %710 = vmatpush.msra.mxu0 0.0
      %711 = vmatpush.msra.mxu0 0.0
      %712 = vmatpush.msra.mxu0 0.0
      %713 = vmatpush.msra.mxu0 0.0
      %714 = vmatpush.msra.mxu0 0.0
      %715 = vmatpush.msra.mxu0 0.0
      %716 = vmatpush.msra.mxu0 0.0
      %717 = vmatpush.msra.mxu0 0.0
      %718 = vmatpush.msra.mxu0 %v701
      %719 = vmatmul.f32.gmra.mxu0 %v604
      %v720 = vpop.f32.mrf.mxu0
      %v721 = vadd.f32 0.0, %v720
      %722 = vmatmul.f32.gmra.mxu0 %v607
      %v723 = vpop.f32.mrf.mxu0
      %v724 = vadd.f32 0.0, %v723
      %725 = vmatmul.f32.gmra.mxu0 %v610
      %v726 = vpop.f32.mrf.mxu0
      %v727 = vadd.f32 0.0, %v726
      %728 = vmatmul.f32.gmra.mxu0 %v613
      %v729 = vpop.f32.mrf.mxu0
      %v730 = vadd.f32 0.0, %v729
      %731 = vmatmul.f32.gmra.mxu0 %v616
      %v732 = vpop.f32.mrf.mxu0
      %v733 = vadd.f32 0.0, %v732
      %734 = vmatmul.f32.gmra.mxu0 %v619
      %v735 = vpop.f32.mrf.mxu0
      %v736 = vadd.f32 0.0, %v735
      %737 = vmatmul.f32.gmra.mxu0 %v622
      %v738 = vpop.f32.mrf.mxu0
      %v739 = vadd.f32 0.0, %v738
      %740 = vmatmul.f32.gmra.mxu0 %v625
      %v741 = vpop.f32.mrf.mxu0
      %v742 = vadd.f32 0.0, %v741
      %743 = vmatmul.f32.gmra.mxu0 %v628
      %v744 = vpop.f32.mrf.mxu0
      %v745 = vadd.f32 0.0, %v744
      %746 = vmatmul.f32.gmra.mxu0 %v631
      %v747 = vpop.f32.mrf.mxu0
      %v748 = vadd.f32 0.0, %v747
      %749 = vmatmul.f32.gmra.mxu0 %v634
      %v750 = vpop.f32.mrf.mxu0
      %v751 = vadd.f32 0.0, %v750
      %752 = vmatmul.f32.gmra.mxu0 %v637
      %v753 = vpop.f32.mrf.mxu0
      %v754 = vadd.f32 0.0, %v753
      %755 = vmatmul.f32.gmra.mxu0 %v640
      %v756 = vpop.f32.mrf.mxu0
      %v757 = vadd.f32 0.0, %v756
      %758 = vmatmul.f32.gmra.mxu0 %v643
      %v759 = vpop.f32.mrf.mxu0
      %v760 = vadd.f32 0.0, %v759
      %761 = vmatmul.f32.gmra.mxu0 %v646
      %v762 = vpop.f32.mrf.mxu0
      %v763 = vadd.f32 0.0, %v762
      %764 = vmatmul.f32.gmra.mxu0 %v649
      %v765 = vpop.f32.mrf.mxu0
      %v766 = vadd.f32 0.0, %v765
      %767 = vmatmul.f32.gmra.mxu0 %v652
      %v768 = vpop.f32.mrf.mxu0
      %v769 = vadd.f32 0.0, %v768
      %770 = vmatmul.f32.gmra.mxu0 %v655
      %v771 = vpop.f32.mrf.mxu0
      %v772 = vadd.f32 0.0, %v771
      %773 = vmatmul.f32.gmra.mxu0 %v658
      %v774 = vpop.f32.mrf.mxu0
      %v775 = vadd.f32 0.0, %v774
      %776 = vmatmul.f32.gmra.mxu0 %v661
      %v777 = vpop.f32.mrf.mxu0
      %v778 = vadd.f32 0.0, %v777
      %779 = vmatmul.f32.gmra.mxu0 %v664
      %v780 = vpop.f32.mrf.mxu0
      %v781 = vadd.f32 0.0, %v780
      %782 = vmatmul.f32.gmra.mxu0 %v667
      %v783 = vpop.f32.mrf.mxu0
      %v784 = vadd.f32 0.0, %v783
      %785 = vmatmul.f32.gmra.mxu0 %v670
      %v786 = vpop.f32.mrf.mxu0
      %v787 = vadd.f32 0.0, %v786
      %788 = vmatmul.f32.gmra.mxu0 %v673
      %v789 = vpop.f32.mrf.mxu0
      %v790 = vadd.f32 0.0, %v789
      %791 = vmatmul.f32.gmra.mxu0 %v676
      %v792 = vpop.f32.mrf.mxu0
      %v793 = vadd.f32 0.0, %v792
      %794 = vmatmul.f32.gmra.mxu0 %v679
      %v795 = vpop.f32.mrf.mxu0
      %v796 = vadd.f32 0.0, %v795
      %797 = vmatmul.f32.gmra.mxu0 %v682
      %v798 = vpop.f32.mrf.mxu0
      %v799 = vadd.f32 0.0, %v798
      %800 = vmatmul.f32.gmra.mxu0 %v685
      %v801 = vpop.f32.mrf.mxu0
      %v802 = vadd.f32 0.0, %v801
      %803 = vmatmul.f32.gmra.mxu0 %v688
      %v804 = vpop.f32.mrf.mxu0
      %v805 = vadd.f32 0.0, %v804
      %806 = vmatmul.f32.gmra.mxu0 %v691
      %v807 = vpop.f32.mrf.mxu0
      %v808 = vadd.f32 0.0, %v807
      %809 = vmatmul.f32.gmra.mxu0 %v694
      %v810 = vpop.f32.mrf.mxu0
      %v811 = vadd.f32 0.0, %v810
      %812 = vmatmul.f32.gmra.mxu0 %v697
      %v813 = vpop.f32.mrf.mxu0
      %v814 = vadd.f32 0.0, %v813
      %815 = vdwg.mxu0
      %v817 = vsel %vm445, %v536, 0
      %v820 = vsel %vm445, %v537, 0
      %v823 = vsel %vm445, %v538, 0
      %v826 = vsel %vm445, %v539, 0
      %v829 = vsel %vm445, %v540, 0
      %v832 = vsel %vm445, %v541, 0
      %v835 = vsel %vm445, %v542, 0
      %v838 = vsel %vm445, %v543, 0
      %v841 = vsel %vm445, %v544, 0
      %v844 = vsel %vm445, %v545, 0
      %v847 = vsel %vm445, %v546, 0
      %v850 = vsel %vm445, %v547, 0
      %v853 = vsel %vm445, %v548, 0
      %v856 = vsel %vm445, %v549, 0
      %v859 = vsel %vm445, %v550, 0
      %v862 = vsel %vm445, %v551, 0
      %v865 = vsel %vm445, %v552, 0
      %v868 = vsel %vm445, %v553, 0
      %v871 = vsel %vm445, %v554, 0
      %v874 = vsel %vm445, %v555, 0
      %v877 = vsel %vm445, %v556, 0
      %v880 = vsel %vm445, %v557, 0
      %v883 = vsel %vm445, %v558, 0
      %v886 = vsel %vm445, %v559, 0
      %v889 = vsel %vm445, %v560, 0
      %v892 = vsel %vm445, %v561, 0
      %v895 = vsel %vm445, %v562, 0
      %v898 = vsel %vm445, %v563, 0
      %v901 = vsel %vm445, %v564, 0
      %v904 = vsel %vm445, %v565, 0
      %v907 = vsel %vm445, %v566, 0
      %v910 = vsel %vm445, %v567, 0
      %v913 = vsel %vm699, %v568, 0
      %915 = vmatpush.msra.mxu0 0.0
      %916 = vmatpush.msra.mxu0 0.0
      %917 = vmatpush.msra.mxu0 0.0
      %918 = vmatpush.msra.mxu0 0.0
      %919 = vmatpush.msra.mxu0 0.0
      %920 = vmatpush.msra.mxu0 0.0
      %921 = vmatpush.msra.mxu0 0.0
      %922 = vmatpush.msra.mxu0 0.0
      %923 = vmatpush.msra.mxu0 0.0
      %924 = vmatpush.msra.mxu0 0.0
      %925 = vmatpush.msra.mxu0 0.0
      %926 = vmatpush.msra.mxu0 0.0
      %927 = vmatpush.msra.mxu0 0.0
      %928 = vmatpush.msra.mxu0 0.0
      %929 = vmatpush.msra.mxu0 0.0
      %930 = vmatpush.msra.mxu0 %v913
      %931 = vmatmul.f32.gmra.mxu0 %v817
      %v932 = vpop.f32.mrf.mxu0
      %v933 = vadd.f32 %v721, %v932
      %934 = vmatmul.f32.gmra.mxu0 %v820
      %v935 = vpop.f32.mrf.mxu0
      %v936 = vadd.f32 %v724, %v935
      %937 = vmatmul.f32.gmra.mxu0 %v823
      %v938 = vpop.f32.mrf.mxu0
      %v939 = vadd.f32 %v727, %v938
      %940 = vmatmul.f32.gmra.mxu0 %v826
      %v941 = vpop.f32.mrf.mxu0
      %v942 = vadd.f32 %v730, %v941
      %943 = vmatmul.f32.gmra.mxu0 %v829
      %v944 = vpop.f32.mrf.mxu0
      %v945 = vadd.f32 %v733, %v944
      %946 = vmatmul.f32.gmra.mxu0 %v832
      %v947 = vpop.f32.mrf.mxu0
      %v948 = vadd.f32 %v736, %v947
      %949 = vmatmul.f32.gmra.mxu0 %v835
      %v950 = vpop.f32.mrf.mxu0
      %v951 = vadd.f32 %v739, %v950
      %952 = vmatmul.f32.gmra.mxu0 %v838
      %v953 = vpop.f32.mrf.mxu0
      %v954 = vadd.f32 %v742, %v953
      %955 = vmatmul.f32.gmra.mxu0 %v841
      %v956 = vpop.f32.mrf.mxu0
      %v957 = vadd.f32 %v745, %v956
      %958 = vmatmul.f32.gmra.mxu0 %v844
      %v959 = vpop.f32.mrf.mxu0
      %v960 = vadd.f32 %v748, %v959
      %961 = vmatmul.f32.gmra.mxu0 %v847
      %v962 = vpop.f32.mrf.mxu0
      %v963 = vadd.f32 %v751, %v962
      %964 = vmatmul.f32.gmra.mxu0 %v850
      %v965 = vpop.f32.mrf.mxu0
      %v966 = vadd.f32 %v754, %v965
      %967 = vmatmul.f32.gmra.mxu0 %v853
      %v968 = vpop.f32.mrf.mxu0
      %v969 = vadd.f32 %v757, %v968
      %970 = vmatmul.f32.gmra.mxu0 %v856
      %v971 = vpop.f32.mrf.mxu0
      %v972 = vadd.f32 %v760, %v971
      %973 = vmatmul.f32.gmra.mxu0 %v859
      %v974 = vpop.f32.mrf.mxu0
      %v975 = vadd.f32 %v763, %v974
      %976 = vmatmul.f32.gmra.mxu0 %v862
      %v977 = vpop.f32.mrf.mxu0
      %v978 = vadd.f32 %v766, %v977
      %979 = vmatmul.f32.gmra.mxu0 %v865
      %v980 = vpop.f32.mrf.mxu0
      %v981 = vadd.f32 %v769, %v980
      %982 = vmatmul.f32.gmra.mxu0 %v868
      %v983 = vpop.f32.mrf.mxu0
      %v984 = vadd.f32 %v772, %v983
      %985 = vmatmul.f32.gmra.mxu0 %v871
      %v986 = vpop.f32.mrf.mxu0
      %v987 = vadd.f32 %v775, %v986
      %988 = vmatmul.f32.gmra.mxu0 %v874
      %v989 = vpop.f32.mrf.mxu0
      %v990 = vadd.f32 %v778, %v989
      %991 = vmatmul.f32.gmra.mxu0 %v877
      %v992 = vpop.f32.mrf.mxu0
      %v993 = vadd.f32 %v781, %v992
      %994 = vmatmul.f32.gmra.mxu0 %v880
      %v995 = vpop.f32.mrf.mxu0
      %v996 = vadd.f32 %v784, %v995
      %997 = vmatmul.f32.gmra.mxu0 %v883
      %v998 = vpop.f32.mrf.mxu0
      %v999 = vadd.f32 %v787, %v998
      %1000 = vmatmul.f32.gmra.mxu0 %v886
      %v1001 = vpop.f32.mrf.mxu0
      %v1002 = vadd.f32 %v790, %v1001
      %1003 = vmatmul.f32.gmra.mxu0 %v889
      %v1004 = vpop.f32.mrf.mxu0
      %v1005 = vadd.f32 %v793, %v1004
      %1006 = vmatmul.f32.gmra.mxu0 %v892
      %v1007 = vpop.f32.mrf.mxu0
      %v1008 = vadd.f32 %v796, %v1007
      %1009 = vmatmul.f32.gmra.mxu0 %v895
      %v1010 = vpop.f32.mrf.mxu0
      %v1011 = vadd.f32 %v799, %v1010
      %1012 = vmatmul.f32.gmra.mxu0 %v898
      %v1013 = vpop.f32.mrf.mxu0
      %v1014 = vadd.f32 %v802, %v1013
      %1015 = vmatmul.f32.gmra.mxu0 %v901
      %v1016 = vpop.f32.mrf.mxu0
      %v1017 = vadd.f32 %v805, %v1016
      %1018 = vmatmul.f32.gmra.mxu0 %v904
      %v1019 = vpop.f32.mrf.mxu0
      %v1020 = vadd.f32 %v808, %v1019
      %1021 = vmatmul.f32.gmra.mxu0 %v907
      %v1022 = vpop.f32.mrf.mxu0
      %v1023 = vadd.f32 %v811, %v1022
      %1024 = vmatmul.f32.gmra.mxu0 %v910
      %v1025 = vpop.f32.mrf.mxu0
      %v1026 = vadd.f32 %v814, %v1025
      %1027 = vdwg.mxu0
      %v1028 = vld [vmem:[#allocation2 + $0x2] sm:$0xff]
      %v1029 = vld [vmem:[#allocation2 + $0xa] sm:$0xff]
      %v1030 = vld [vmem:[#allocation2 + $0x1a] sm:$0xff]
      %v1031 = vld [vmem:[#allocation2 + $0x22] sm:$0xff]
      %v1032 = vld [vmem:[#allocation2 + $0x32] sm:$0xff]
      %v1033 = vld [vmem:[#allocation2 + $0x3a] sm:$0xff]
      %v1034 = vld [vmem:[#allocation2 + $0x4a] sm:$0xff]
      %v1035 = vld [vmem:[#allocation2 + $0x52] sm:$0xff]
      %v1036 = vld [vmem:[#allocation2 + $0x62] sm:$0xff]
      %v1037 = vld [vmem:[#allocation2 + $0x6a] sm:$0xff]
      %v1038 = vld [vmem:[#allocation2 + $0x7a] sm:$0xff]
      %v1039 = vld [vmem:[#allocation2 + $0x82] sm:$0xff]
      %v1040 = vld [vmem:[#allocation2 + $0x92] sm:$0xff]
      %v1041 = vld [vmem:[#allocation2 + $0x9a] sm:$0xff]
      %v1042 = vld [vmem:[#allocation2 + $0xaa] sm:$0xff]
      %v1043 = vld [vmem:[#allocation2 + $0xb2] sm:$0xff]
      %v1044 = vld [vmem:[#allocation2 + $0xc2] sm:$0xff]
      %v1045 = vld [vmem:[#allocation2 + $0xca] sm:$0xff]
      %v1046 = vld [vmem:[#allocation2 + $0xda] sm:$0xff]
      %v1047 = vld [vmem:[#allocation2 + $0xe2] sm:$0xff]
      %v1048 = vld [vmem:[#allocation2 + $0xf2] sm:$0xff]
      %v1049 = vld [vmem:[#allocation2 + $0xfa] sm:$0xff]
      %v1050 = vld [vmem:[#allocation2 + $0x10a] sm:$0xff]
      %v1051 = vld [vmem:[#allocation2 + $0x112] sm:$0xff]
      %v1052 = vld [vmem:[#allocation2 + $0x122] sm:$0xff]
      %v1053 = vld [vmem:[#allocation2 + $0x12a] sm:$0xff]
      %v1054 = vld [vmem:[#allocation2 + $0x13a] sm:$0xff]
      %v1055 = vld [vmem:[#allocation2 + $0x142] sm:$0xff]
      %v1056 = vld [vmem:[#allocation2 + $0x152] sm:$0xff]
      %v1057 = vld [vmem:[#allocation2 + $0x15a] sm:$0xff]
      %v1058 = vld [vmem:[#allocation2 + $0x16a] sm:$0xff]
      %v1059 = vld [vmem:[#allocation2 + $0x172] sm:$0xff]
      %s1060 = scalar_lea.vmem %s3, 8
      %v1061 = vld [vmem:[%s1060] sm:$0xf]
      %v1063 = vsel %vm445, %v1028, 0
      %v1066 = vsel %vm445, %v1029, 0
      %v1069 = vsel %vm445, %v1030, 0
      %v1072 = vsel %vm445, %v1031, 0
      %v1075 = vsel %vm445, %v1032, 0
      %v1078 = vsel %vm445, %v1033, 0
      %v1081 = vsel %vm445, %v1034, 0
      %v1084 = vsel %vm445, %v1035, 0
      %v1087 = vsel %vm445, %v1036, 0
      %v1090 = vsel %vm445, %v1037, 0
      %v1093 = vsel %vm445, %v1038, 0
      %v1096 = vsel %vm445, %v1039, 0
      %v1099 = vsel %vm445, %v1040, 0
      %v1102 = vsel %vm445, %v1041, 0
      %v1105 = vsel %vm445, %v1042, 0
      %v1108 = vsel %vm445, %v1043, 0
      %v1111 = vsel %vm445, %v1044, 0
      %v1114 = vsel %vm445, %v1045, 0
      %v1117 = vsel %vm445, %v1046, 0
      %v1120 = vsel %vm445, %v1047, 0
      %v1123 = vsel %vm445, %v1048, 0
      %v1126 = vsel %vm445, %v1049, 0
      %v1129 = vsel %vm445, %v1050, 0
      %v1132 = vsel %vm445, %v1051, 0
      %v1135 = vsel %vm445, %v1052, 0
      %v1138 = vsel %vm445, %v1053, 0
      %v1141 = vsel %vm445, %v1054, 0
      %v1144 = vsel %vm445, %v1055, 0
      %v1147 = vsel %vm445, %v1056, 0
      %v1150 = vsel %vm445, %v1057, 0
      %v1153 = vsel %vm445, %v1058, 0
      %v1156 = vsel %vm445, %v1059, 0
      %v1159 = vsel %vm699, %v1061, 0
      %1161 = vmatpush.msra.mxu0 0.0
      %1162 = vmatpush.msra.mxu0 0.0
      %1163 = vmatpush.msra.mxu0 0.0
      %1164 = vmatpush.msra.mxu0 0.0
      %1165 = vmatpush.msra.mxu0 0.0
      %1166 = vmatpush.msra.mxu0 0.0
      %1167 = vmatpush.msra.mxu0 0.0
      %1168 = vmatpush.msra.mxu0 0.0
      %1169 = vmatpush.msra.mxu0 0.0
      %1170 = vmatpush.msra.mxu0 0.0
      %1171 = vmatpush.msra.mxu0 0.0
      %1172 = vmatpush.msra.mxu0 0.0
      %1173 = vmatpush.msra.mxu0 0.0
      %1174 = vmatpush.msra.mxu0 0.0
      %1175 = vmatpush.msra.mxu0 0.0
      %1176 = vmatpush.msra.mxu0 %v1159
      %1177 = vmatmul.f32.gmra.mxu0 %v1063
      %v1178 = vpop.f32.mrf.mxu0
      %v1179 = vadd.f32 0.0, %v1178
      %1180 = vmatmul.f32.gmra.mxu0 %v1066
      %v1181 = vpop.f32.mrf.mxu0
      %v1182 = vadd.f32 0.0, %v1181
      %1183 = vmatmul.f32.gmra.mxu0 %v1069
      %v1184 = vpop.f32.mrf.mxu0
      %v1185 = vadd.f32 0.0, %v1184
      %1186 = vmatmul.f32.gmra.mxu0 %v1072
      %v1187 = vpop.f32.mrf.mxu0
      %v1188 = vadd.f32 0.0, %v1187
      %1189 = vmatmul.f32.gmra.mxu0 %v1075
      %v1190 = vpop.f32.mrf.mxu0
      %v1191 = vadd.f32 0.0, %v1190
      %1192 = vmatmul.f32.gmra.mxu0 %v1078
      %v1193 = vpop.f32.mrf.mxu0
      %v1194 = vadd.f32 0.0, %v1193
      %1195 = vmatmul.f32.gmra.mxu0 %v1081
      %v1196 = vpop.f32.mrf.mxu0
      %v1197 = vadd.f32 0.0, %v1196
      %1198 = vmatmul.f32.gmra.mxu0 %v1084
      %v1199 = vpop.f32.mrf.mxu0
      %v1200 = vadd.f32 0.0, %v1199
      %1201 = vmatmul.f32.gmra.mxu0 %v1087
      %v1202 = vpop.f32.mrf.mxu0
      %v1203 = vadd.f32 0.0, %v1202
      %1204 = vmatmul.f32.gmra.mxu0 %v1090
      %v1205 = vpop.f32.mrf.mxu0
      %v1206 = vadd.f32 0.0, %v1205
      %1207 = vmatmul.f32.gmra.mxu0 %v1093
      %v1208 = vpop.f32.mrf.mxu0
      %v1209 = vadd.f32 0.0, %v1208
      %1210 = vmatmul.f32.gmra.mxu0 %v1096
      %v1211 = vpop.f32.mrf.mxu0
      %v1212 = vadd.f32 0.0, %v1211
      %1213 = vmatmul.f32.gmra.mxu0 %v1099
      %v1214 = vpop.f32.mrf.mxu0
      %v1215 = vadd.f32 0.0, %v1214
      %1216 = vmatmul.f32.gmra.mxu0 %v1102
      %v1217 = vpop.f32.mrf.mxu0
      %v1218 = vadd.f32 0.0, %v1217
      %1219 = vmatmul.f32.gmra.mxu0 %v1105
      %v1220 = vpop.f32.mrf.mxu0
      %v1221 = vadd.f32 0.0, %v1220
      %1222 = vmatmul.f32.gmra.mxu0 %v1108
      %v1223 = vpop.f32.mrf.mxu0
      %v1224 = vadd.f32 0.0, %v1223
      %1225 = vmatmul.f32.gmra.mxu0 %v1111
      %v1226 = vpop.f32.mrf.mxu0
      %v1227 = vadd.f32 0.0, %v1226
      %1228 = vmatmul.f32.gmra.mxu0 %v1114
      %v1229 = vpop.f32.mrf.mxu0
      %v1230 = vadd.f32 0.0, %v1229
      %1231 = vmatmul.f32.gmra.mxu0 %v1117
      %v1232 = vpop.f32.mrf.mxu0
      %v1233 = vadd.f32 0.0, %v1232
      %1234 = vmatmul.f32.gmra.mxu0 %v1120
      %v1235 = vpop.f32.mrf.mxu0
      %v1236 = vadd.f32 0.0, %v1235
      %1237 = vmatmul.f32.gmra.mxu0 %v1123
      %v1238 = vpop.f32.mrf.mxu0
      %v1239 = vadd.f32 0.0, %v1238
      %1240 = vmatmul.f32.gmra.mxu0 %v1126
      %v1241 = vpop.f32.mrf.mxu0
      %v1242 = vadd.f32 0.0, %v1241
      %1243 = vmatmul.f32.gmra.mxu0 %v1129
      %v1244 = vpop.f32.mrf.mxu0
      %v1245 = vadd.f32 0.0, %v1244
      %1246 = vmatmul.f32.gmra.mxu0 %v1132
      %v1247 = vpop.f32.mrf.mxu0
      %v1248 = vadd.f32 0.0, %v1247
      %1249 = vmatmul.f32.gmra.mxu0 %v1135
      %v1250 = vpop.f32.mrf.mxu0
      %v1251 = vadd.f32 0.0, %v1250
      %1252 = vmatmul.f32.gmra.mxu0 %v1138
      %v1253 = vpop.f32.mrf.mxu0
      %v1254 = vadd.f32 0.0, %v1253
      %1255 = vmatmul.f32.gmra.mxu0 %v1141
      %v1256 = vpop.f32.mrf.mxu0
      %v1257 = vadd.f32 0.0, %v1256
      %1258 = vmatmul.f32.gmra.mxu0 %v1144
      %v1259 = vpop.f32.mrf.mxu0
      %v1260 = vadd.f32 0.0, %v1259
      %1261 = vmatmul.f32.gmra.mxu0 %v1147
      %v1262 = vpop.f32.mrf.mxu0
      %v1263 = vadd.f32 0.0, %v1262
      %1264 = vmatmul.f32.gmra.mxu0 %v1150
      %v1265 = vpop.f32.mrf.mxu0
      %v1266 = vadd.f32 0.0, %v1265
      %1267 = vmatmul.f32.gmra.mxu0 %v1153
      %v1268 = vpop.f32.mrf.mxu0
      %v1269 = vadd.f32 0.0, %v1268
      %1270 = vmatmul.f32.gmra.mxu0 %v1156
      %v1271 = vpop.f32.mrf.mxu0
      %v1272 = vadd.f32 0.0, %v1271
      %1273 = vdwg.mxu0
      %v1274 = vadd.f32 %v933, %v1179
      %v1275 = vadd.f32 %v936, %v1182
      %v1276 = vadd.f32 %v939, %v1185
      %v1277 = vadd.f32 %v942, %v1188
      %v1278 = vadd.f32 %v945, %v1191
      %v1279 = vadd.f32 %v948, %v1194
      %v1280 = vadd.f32 %v951, %v1197
      %v1281 = vadd.f32 %v954, %v1200
      %v1282 = vadd.f32 %v957, %v1203
      %v1283 = vadd.f32 %v960, %v1206
      %v1284 = vadd.f32 %v963, %v1209
      %v1285 = vadd.f32 %v966, %v1212
      %v1286 = vadd.f32 %v969, %v1215
      %v1287 = vadd.f32 %v972, %v1218
      %v1288 = vadd.f32 %v975, %v1221
      %v1289 = vadd.f32 %v978, %v1224
      %v1290 = vadd.f32 %v981, %v1227
      %v1291 = vadd.f32 %v984, %v1230
      %v1292 = vadd.f32 %v987, %v1233
      %v1293 = vadd.f32 %v990, %v1236
      %v1294 = vadd.f32 %v993, %v1239
      %v1295 = vadd.f32 %v996, %v1242
      %v1296 = vadd.f32 %v999, %v1245
      %v1297 = vadd.f32 %v1002, %v1248
      %v1298 = vadd.f32 %v1005, %v1251
      %v1299 = vadd.f32 %v1008, %v1254
      %v1300 = vadd.f32 %v1011, %v1257
      %v1301 = vadd.f32 %v1014, %v1260
      %v1302 = vadd.f32 %v1017, %v1263
      %v1303 = vadd.f32 %v1020, %v1266
      %v1304 = vadd.f32 %v1023, %v1269
      %v1305 = vadd.f32 %v1026, %v1272
      %v1306 = vld [vmem:[%s444] sm:$0xff]
      %v1307 = vld [vmem:[%s444 + $0x8] sm:$0xff]
      %v1308 = vld [vmem:[%s444 + $0x18] sm:$0xff]
      %v1309 = vld [vmem:[%s444 + $0x20] sm:$0xff]
      %v1310 = vld [vmem:[%s444 + $0x30] sm:$0xff]
      %v1311 = vld [vmem:[%s444 + $0x38] sm:$0xff]
      %v1312 = vld [vmem:[%s444 + $0x48] sm:$0xff]
      %v1313 = vld [vmem:[%s444 + $0x50] sm:$0xff]
      %v1314 = vld [vmem:[%s444 + $0x60] sm:$0xff]
      %v1315 = vld [vmem:[%s444 + $0x68] sm:$0xff]
      %v1316 = vld [vmem:[%s444 + $0x78] sm:$0xff]
      %v1317 = vld [vmem:[%s444 + $0x80] sm:$0xff]
      %v1318 = vld [vmem:[%s444 + $0x90] sm:$0xff]
      %v1319 = vld [vmem:[%s444 + $0x98] sm:$0xff]
      %v1320 = vld [vmem:[%s444 + $0xa8] sm:$0xff]
      %v1321 = vld [vmem:[%s444 + $0xb0] sm:$0xff]
      %v1322 = vld [vmem:[%s444 + $0xc0] sm:$0xff]
      %v1323 = vld [vmem:[%s444 + $0xc8] sm:$0xff]
      %v1324 = vld [vmem:[%s444 + $0xd8] sm:$0xff]
      %v1325 = vld [vmem:[%s444 + $0xe0] sm:$0xff]
      %v1326 = vld [vmem:[%s444 + $0xf0] sm:$0xff]
      %v1327 = vld [vmem:[%s444 + $0xf8] sm:$0xff]
      %v1328 = vld [vmem:[%s444 + $0x108] sm:$0xff]
      %v1329 = vld [vmem:[%s444 + $0x110] sm:$0xff]
      %v1330 = vld [vmem:[%s444 + $0x120] sm:$0xff]
      %v1331 = vld [vmem:[%s444 + $0x128] sm:$0xff]
      %v1332 = vld [vmem:[%s444 + $0x138] sm:$0xff]
      %v1333 = vld [vmem:[%s444 + $0x140] sm:$0xff]
      %v1334 = vld [vmem:[%s444 + $0x150] sm:$0xff]
      %v1335 = vld [vmem:[%s444 + $0x158] sm:$0xff]
      %v1336 = vld [vmem:[%s444 + $0x168] sm:$0xff]
      %v1337 = vld [vmem:[%s444 + $0x170] sm:$0xff]
      %s1338 = scalar_lea.vmem %s3, 12
      %v1339 = vld [vmem:[%s1338] sm:$0xf]
      %v1341 = vsel %vm445, %v1306, 0
      %v1344 = vsel %vm445, %v1307, 0
      %v1347 = vsel %vm445, %v1308, 0
      %v1350 = vsel %vm445, %v1309, 0
      %v1353 = vsel %vm445, %v1310, 0
      %v1356 = vsel %vm445, %v1311, 0
      %v1359 = vsel %vm445, %v1312, 0
      %v1362 = vsel %vm445, %v1313, 0
      %v1365 = vsel %vm445, %v1314, 0
      %v1368 = vsel %vm445, %v1315, 0
      %v1371 = vsel %vm445, %v1316, 0
      %v1374 = vsel %vm445, %v1317, 0
      %v1377 = vsel %vm445, %v1318, 0
      %v1380 = vsel %vm445, %v1319, 0
      %v1383 = vsel %vm445, %v1320, 0
      %v1386 = vsel %vm445, %v1321, 0
      %v1389 = vsel %vm445, %v1322, 0
      %v1392 = vsel %vm445, %v1323, 0
      %v1395 = vsel %vm445, %v1324, 0
      %v1398 = vsel %vm445, %v1325, 0
      %v1401 = vsel %vm445, %v1326, 0
      %v1404 = vsel %vm445, %v1327, 0
      %v1407 = vsel %vm445, %v1328, 0
      %v1410 = vsel %vm445, %v1329, 0
      %v1413 = vsel %vm445, %v1330, 0
      %v1416 = vsel %vm445, %v1331, 0
      %v1419 = vsel %vm445, %v1332, 0
      %v1422 = vsel %vm445, %v1333, 0
      %v1425 = vsel %vm445, %v1334, 0
      %v1428 = vsel %vm445, %v1335, 0
      %v1431 = vsel %vm445, %v1336, 0
      %v1434 = vsel %vm445, %v1337, 0
      %v1437 = vsel %vm699, %v1339, 0
      %1439 = vmatpush.msra.mxu0 0.0
      %1440 = vmatpush.msra.mxu0 0.0
      %1441 = vmatpush.msra.mxu0 0.0
      %1442 = vmatpush.msra.mxu0 0.0
      %1443 = vmatpush.msra.mxu0 0.0
      %1444 = vmatpush.msra.mxu0 0.0
      %1445 = vmatpush.msra.mxu0 0.0
      %1446 = vmatpush.msra.mxu0 0.0
      %1447 = vmatpush.msra.mxu0 0.0
      %1448 = vmatpush.msra.mxu0 0.0
      %1449 = vmatpush.msra.mxu0 0.0
      %1450 = vmatpush.msra.mxu0 0.0
      %1451 = vmatpush.msra.mxu0 0.0
      %1452 = vmatpush.msra.mxu0 0.0
      %1453 = vmatpush.msra.mxu0 0.0
      %1454 = vmatpush.msra.mxu0 %v1437
      %1455 = vmatmul.f32.gmra.mxu0 %v1341
      %v1456 = vpop.f32.mrf.mxu0
      %v1457 = vadd.f32 0.0, %v1456
      %1458 = vmatmul.f32.gmra.mxu0 %v1344
      %v1459 = vpop.f32.mrf.mxu0
      %v1460 = vadd.f32 0.0, %v1459
      %1461 = vmatmul.f32.gmra.mxu0 %v1347
      %v1462 = vpop.f32.mrf.mxu0
      %v1463 = vadd.f32 0.0, %v1462
      %1464 = vmatmul.f32.gmra.mxu0 %v1350
      %v1465 = vpop.f32.mrf.mxu0
      %v1466 = vadd.f32 0.0, %v1465
      %1467 = vmatmul.f32.gmra.mxu0 %v1353
      %v1468 = vpop.f32.mrf.mxu0
      %v1469 = vadd.f32 0.0, %v1468
      %1470 = vmatmul.f32.gmra.mxu0 %v1356
      %v1471 = vpop.f32.mrf.mxu0
      %v1472 = vadd.f32 0.0, %v1471
      %1473 = vmatmul.f32.gmra.mxu0 %v1359
      %v1474 = vpop.f32.mrf.mxu0
      %v1475 = vadd.f32 0.0, %v1474
      %1476 = vmatmul.f32.gmra.mxu0 %v1362
      %v1477 = vpop.f32.mrf.mxu0
      %v1478 = vadd.f32 0.0, %v1477
      %1479 = vmatmul.f32.gmra.mxu0 %v1365
      %v1480 = vpop.f32.mrf.mxu0
      %v1481 = vadd.f32 0.0, %v1480
      %1482 = vmatmul.f32.gmra.mxu0 %v1368
      %v1483 = vpop.f32.mrf.mxu0
      %v1484 = vadd.f32 0.0, %v1483
      %1485 = vmatmul.f32.gmra.mxu0 %v1371
      %v1486 = vpop.f32.mrf.mxu0
      %v1487 = vadd.f32 0.0, %v1486
      %1488 = vmatmul.f32.gmra.mxu0 %v1374
      %v1489 = vpop.f32.mrf.mxu0
      %v1490 = vadd.f32 0.0, %v1489
      %1491 = vmatmul.f32.gmra.mxu0 %v1377
      %v1492 = vpop.f32.mrf.mxu0
      %v1493 = vadd.f32 0.0, %v1492
      %1494 = vmatmul.f32.gmra.mxu0 %v1380
      %v1495 = vpop.f32.mrf.mxu0
      %v1496 = vadd.f32 0.0, %v1495
      %1497 = vmatmul.f32.gmra.mxu0 %v1383
      %v1498 = vpop.f32.mrf.mxu0
      %v1499 = vadd.f32 0.0, %v1498
      %1500 = vmatmul.f32.gmra.mxu0 %v1386
      %v1501 = vpop.f32.mrf.mxu0
      %v1502 = vadd.f32 0.0, %v1501
      %1503 = vmatmul.f32.gmra.mxu0 %v1389
      %v1504 = vpop.f32.mrf.mxu0
      %v1505 = vadd.f32 0.0, %v1504
      %1506 = vmatmul.f32.gmra.mxu0 %v1392
      %v1507 = vpop.f32.mrf.mxu0
      %v1508 = vadd.f32 0.0, %v1507
      %1509 = vmatmul.f32.gmra.mxu0 %v1395
      %v1510 = vpop.f32.mrf.mxu0
      %v1511 = vadd.f32 0.0, %v1510
      %1512 = vmatmul.f32.gmra.mxu0 %v1398
      %v1513 = vpop.f32.mrf.mxu0
      %v1514 = vadd.f32 0.0, %v1513
      %1515 = vmatmul.f32.gmra.mxu0 %v1401
      %v1516 = vpop.f32.mrf.mxu0
      %v1517 = vadd.f32 0.0, %v1516
      %1518 = vmatmul.f32.gmra.mxu0 %v1404
      %v1519 = vpop.f32.mrf.mxu0
      %v1520 = vadd.f32 0.0, %v1519
      %1521 = vmatmul.f32.gmra.mxu0 %v1407
      %v1522 = vpop.f32.mrf.mxu0
      %v1523 = vadd.f32 0.0, %v1522
      %1524 = vmatmul.f32.gmra.mxu0 %v1410
      %v1525 = vpop.f32.mrf.mxu0
      %v1526 = vadd.f32 0.0, %v1525
      %1527 = vmatmul.f32.gmra.mxu0 %v1413
      %v1528 = vpop.f32.mrf.mxu0
      %v1529 = vadd.f32 0.0, %v1528
      %1530 = vmatmul.f32.gmra.mxu0 %v1416
      %v1531 = vpop.f32.mrf.mxu0
      %v1532 = vadd.f32 0.0, %v1531
      %1533 = vmatmul.f32.gmra.mxu0 %v1419
      %v1534 = vpop.f32.mrf.mxu0
      %v1535 = vadd.f32 0.0, %v1534
      %1536 = vmatmul.f32.gmra.mxu0 %v1422
      %v1537 = vpop.f32.mrf.mxu0
      %v1538 = vadd.f32 0.0, %v1537
      %1539 = vmatmul.f32.gmra.mxu0 %v1425
      %v1540 = vpop.f32.mrf.mxu0
      %v1541 = vadd.f32 0.0, %v1540
      %1542 = vmatmul.f32.gmra.mxu0 %v1428
      %v1543 = vpop.f32.mrf.mxu0
      %v1544 = vadd.f32 0.0, %v1543
      %1545 = vmatmul.f32.gmra.mxu0 %v1431
      %v1546 = vpop.f32.mrf.mxu0
      %v1547 = vadd.f32 0.0, %v1546
      %1548 = vmatmul.f32.gmra.mxu0 %v1434
      %v1549 = vpop.f32.mrf.mxu0
      %v1550 = vadd.f32 0.0, %v1549
      %1551 = vdwg.mxu0
      %v1552 = vadd.f32 %v1274, %v1457
      %v1553 = vadd.f32 %v1275, %v1460
      %v1554 = vadd.f32 %v1276, %v1463
      %v1555 = vadd.f32 %v1277, %v1466
      %v1556 = vadd.f32 %v1278, %v1469
      %v1557 = vadd.f32 %v1279, %v1472
      %v1558 = vadd.f32 %v1280, %v1475
      %v1559 = vadd.f32 %v1281, %v1478
      %v1560 = vadd.f32 %v1282, %v1481
      %v1561 = vadd.f32 %v1283, %v1484
      %v1562 = vadd.f32 %v1284, %v1487
      %v1563 = vadd.f32 %v1285, %v1490
      %v1564 = vadd.f32 %v1286, %v1493
      %v1565 = vadd.f32 %v1287, %v1496
      %v1566 = vadd.f32 %v1288, %v1499
      %v1567 = vadd.f32 %v1289, %v1502
      %v1568 = vadd.f32 %v1290, %v1505
      %v1569 = vadd.f32 %v1291, %v1508
      %v1570 = vadd.f32 %v1292, %v1511
      %v1571 = vadd.f32 %v1293, %v1514
      %v1572 = vadd.f32 %v1294, %v1517
      %v1573 = vadd.f32 %v1295, %v1520
      %v1574 = vadd.f32 %v1296, %v1523
      %v1575 = vadd.f32 %v1297, %v1526
      %v1576 = vadd.f32 %v1298, %v1529
      %v1577 = vadd.f32 %v1299, %v1532
      %v1578 = vadd.f32 %v1300, %v1535
      %v1579 = vadd.f32 %v1301, %v1538
      %v1580 = vadd.f32 %v1302, %v1541
      %v1581 = vadd.f32 %v1303, %v1544
      %v1582 = vadd.f32 %v1304, %v1547
      %v1583 = vadd.f32 %v1305, %v1550
      %v1584 = vld [vmem:[%s444 + $0x1] sm:$0xff]
      %v1585 = vld [vmem:[%s444 + $0x9] sm:$0xff]
      %v1586 = vld [vmem:[%s444 + $0x19] sm:$0xff]
      %v1587 = vld [vmem:[%s444 + $0x21] sm:$0xff]
      %v1588 = vld [vmem:[%s444 + $0x31] sm:$0xff]
      %v1589 = vld [vmem:[%s444 + $0x39] sm:$0xff]
      %v1590 = vld [vmem:[%s444 + $0x49] sm:$0xff]
      %v1591 = vld [vmem:[%s444 + $0x51] sm:$0xff]
      %v1592 = vld [vmem:[%s444 + $0x61] sm:$0xff]
      %v1593 = vld [vmem:[%s444 + $0x69] sm:$0xff]
      %v1594 = vld [vmem:[%s444 + $0x79] sm:$0xff]
      %v1595 = vld [vmem:[%s444 + $0x81] sm:$0xff]
      %v1596 = vld [vmem:[%s444 + $0x91] sm:$0xff]
      %v1597 = vld [vmem:[%s444 + $0x99] sm:$0xff]
      %v1598 = vld [vmem:[%s444 + $0xa9] sm:$0xff]
      %v1599 = vld [vmem:[%s444 + $0xb1] sm:$0xff]
      %v1600 = vld [vmem:[%s444 + $0xc1] sm:$0xff]
      %v1601 = vld [vmem:[%s444 + $0xc9] sm:$0xff]
      %v1602 = vld [vmem:[%s444 + $0xd9] sm:$0xff]
      %v1603 = vld [vmem:[%s444 + $0xe1] sm:$0xff]
      %v1604 = vld [vmem:[%s444 + $0xf1] sm:$0xff]
      %v1605 = vld [vmem:[%s444 + $0xf9] sm:$0xff]
      %v1606 = vld [vmem:[%s444 + $0x109] sm:$0xff]
      %v1607 = vld [vmem:[%s444 + $0x111] sm:$0xff]
      %v1608 = vld [vmem:[%s444 + $0x121] sm:$0xff]
      %v1609 = vld [vmem:[%s444 + $0x129] sm:$0xff]
      %v1610 = vld [vmem:[%s444 + $0x139] sm:$0xff]
      %v1611 = vld [vmem:[%s444 + $0x141] sm:$0xff]
      %v1612 = vld [vmem:[%s444 + $0x151] sm:$0xff]
      %v1613 = vld [vmem:[%s444 + $0x159] sm:$0xff]
      %v1614 = vld [vmem:[%s444 + $0x169] sm:$0xff]
      %v1615 = vld [vmem:[%s444 + $0x171] sm:$0xff]
      %s1616 = scalar_lea.vmem %s3, 16
      %v1617 = vld [vmem:[%s1616] sm:$0xf]
      %v1619 = vsel %vm445, %v1584, 0
      %v1622 = vsel %vm445, %v1585, 0
      %v1625 = vsel %vm445, %v1586, 0
      %v1628 = vsel %vm445, %v1587, 0
      %v1631 = vsel %vm445, %v1588, 0
      %v1634 = vsel %vm445, %v1589, 0
      %v1637 = vsel %vm445, %v1590, 0
      %v1640 = vsel %vm445, %v1591, 0
      %v1643 = vsel %vm445, %v1592, 0
      %v1646 = vsel %vm445, %v1593, 0
      %v1649 = vsel %vm445, %v1594, 0
      %v1652 = vsel %vm445, %v1595, 0
      %v1655 = vsel %vm445, %v1596, 0
      %v1658 = vsel %vm445, %v1597, 0
      %v1661 = vsel %vm445, %v1598, 0
      %v1664 = vsel %vm445, %v1599, 0
      %v1667 = vsel %vm445, %v1600, 0
      %v1670 = vsel %vm445, %v1601, 0
      %v1673 = vsel %vm445, %v1602, 0
      %v1676 = vsel %vm445, %v1603, 0
      %v1679 = vsel %vm445, %v1604, 0
      %v1682 = vsel %vm445, %v1605, 0
      %v1685 = vsel %vm445, %v1606, 0
      %v1688 = vsel %vm445, %v1607, 0
      %v1691 = vsel %vm445, %v1608, 0
      %v1694 = vsel %vm445, %v1609, 0
      %v1697 = vsel %vm445, %v1610, 0
      %v1700 = vsel %vm445, %v1611, 0
      %v1703 = vsel %vm445, %v1612, 0
      %v1706 = vsel %vm445, %v1613, 0
      %v1709 = vsel %vm445, %v1614, 0
      %v1712 = vsel %vm445, %v1615, 0
      %v1715 = vsel %vm699, %v1617, 0
      %1717 = vmatpush.msra.mxu0 0.0
      %1718 = vmatpush.msra.mxu0 0.0
      %1719 = vmatpush.msra.mxu0 0.0
      %1720 = vmatpush.msra.mxu0 0.0
      %1721 = vmatpush.msra.mxu0 0.0
      %1722 = vmatpush.msra.mxu0 0.0
      %1723 = vmatpush.msra.mxu0 0.0
      %1724 = vmatpush.msra.mxu0 0.0
      %1725 = vmatpush.msra.mxu0 0.0
      %1726 = vmatpush.msra.mxu0 0.0
      %1727 = vmatpush.msra.mxu0 0.0
      %1728 = vmatpush.msra.mxu0 0.0
      %1729 = vmatpush.msra.mxu0 0.0
      %1730 = vmatpush.msra.mxu0 0.0
      %1731 = vmatpush.msra.mxu0 0.0
      %1732 = vmatpush.msra.mxu0 %v1715
      %1733 = vmatmul.f32.gmra.mxu0 %v1619
      %v1734 = vpop.f32.mrf.mxu0
      %v1735 = vadd.f32 0.0, %v1734
      %1736 = vmatmul.f32.gmra.mxu0 %v1622
      %v1737 = vpop.f32.mrf.mxu0
      %v1738 = vadd.f32 0.0, %v1737
      %1739 = vmatmul.f32.gmra.mxu0 %v1625
      %v1740 = vpop.f32.mrf.mxu0
      %v1741 = vadd.f32 0.0, %v1740
      %1742 = vmatmul.f32.gmra.mxu0 %v1628
      %v1743 = vpop.f32.mrf.mxu0
      %v1744 = vadd.f32 0.0, %v1743
      %1745 = vmatmul.f32.gmra.mxu0 %v1631
      %v1746 = vpop.f32.mrf.mxu0
      %v1747 = vadd.f32 0.0, %v1746
      %1748 = vmatmul.f32.gmra.mxu0 %v1634
      %v1749 = vpop.f32.mrf.mxu0
      %v1750 = vadd.f32 0.0, %v1749
      %1751 = vmatmul.f32.gmra.mxu0 %v1637
      %v1752 = vpop.f32.mrf.mxu0
      %v1753 = vadd.f32 0.0, %v1752
      %1754 = vmatmul.f32.gmra.mxu0 %v1640
      %v1755 = vpop.f32.mrf.mxu0
      %v1756 = vadd.f32 0.0, %v1755
      %1757 = vmatmul.f32.gmra.mxu0 %v1643
      %v1758 = vpop.f32.mrf.mxu0
      %v1759 = vadd.f32 0.0, %v1758
      %1760 = vmatmul.f32.gmra.mxu0 %v1646
      %v1761 = vpop.f32.mrf.mxu0
      %v1762 = vadd.f32 0.0, %v1761
      %1763 = vmatmul.f32.gmra.mxu0 %v1649
      %v1764 = vpop.f32.mrf.mxu0
      %v1765 = vadd.f32 0.0, %v1764
      %1766 = vmatmul.f32.gmra.mxu0 %v1652
      %v1767 = vpop.f32.mrf.mxu0
      %v1768 = vadd.f32 0.0, %v1767
      %1769 = vmatmul.f32.gmra.mxu0 %v1655
      %v1770 = vpop.f32.mrf.mxu0
      %v1771 = vadd.f32 0.0, %v1770
      %1772 = vmatmul.f32.gmra.mxu0 %v1658
      %v1773 = vpop.f32.mrf.mxu0
      %v1774 = vadd.f32 0.0, %v1773
      %1775 = vmatmul.f32.gmra.mxu0 %v1661
      %v1776 = vpop.f32.mrf.mxu0
      %v1777 = vadd.f32 0.0, %v1776
      %1778 = vmatmul.f32.gmra.mxu0 %v1664
      %v1779 = vpop.f32.mrf.mxu0
      %v1780 = vadd.f32 0.0, %v1779
      %1781 = vmatmul.f32.gmra.mxu0 %v1667
      %v1782 = vpop.f32.mrf.mxu0
      %v1783 = vadd.f32 0.0, %v1782
      %1784 = vmatmul.f32.gmra.mxu0 %v1670
      %v1785 = vpop.f32.mrf.mxu0
      %v1786 = vadd.f32 0.0, %v1785
      %1787 = vmatmul.f32.gmra.mxu0 %v1673
      %v1788 = vpop.f32.mrf.mxu0
      %v1789 = vadd.f32 0.0, %v1788
      %1790 = vmatmul.f32.gmra.mxu0 %v1676
      %v1791 = vpop.f32.mrf.mxu0
      %v1792 = vadd.f32 0.0, %v1791
      %1793 = vmatmul.f32.gmra.mxu0 %v1679
      %v1794 = vpop.f32.mrf.mxu0
      %v1795 = vadd.f32 0.0, %v1794
      %1796 = vmatmul.f32.gmra.mxu0 %v1682
      %v1797 = vpop.f32.mrf.mxu0
      %v1798 = vadd.f32 0.0, %v1797
      %1799 = vmatmul.f32.gmra.mxu0 %v1685
      %v1800 = vpop.f32.mrf.mxu0
      %v1801 = vadd.f32 0.0, %v1800
      %1802 = vmatmul.f32.gmra.mxu0 %v1688
      %v1803 = vpop.f32.mrf.mxu0
      %v1804 = vadd.f32 0.0, %v1803
      %1805 = vmatmul.f32.gmra.mxu0 %v1691
      %v1806 = vpop.f32.mrf.mxu0
      %v1807 = vadd.f32 0.0, %v1806
      %1808 = vmatmul.f32.gmra.mxu0 %v1694
      %v1809 = vpop.f32.mrf.mxu0
      %v1810 = vadd.f32 0.0, %v1809
      %1811 = vmatmul.f32.gmra.mxu0 %v1697
      %v1812 = vpop.f32.mrf.mxu0
      %v1813 = vadd.f32 0.0, %v1812
      %1814 = vmatmul.f32.gmra.mxu0 %v1700
      %v1815 = vpop.f32.mrf.mxu0
      %v1816 = vadd.f32 0.0, %v1815
      %1817 = vmatmul.f32.gmra.mxu0 %v1703
      %v1818 = vpop.f32.mrf.mxu0
      %v1819 = vadd.f32 0.0, %v1818
      %1820 = vmatmul.f32.gmra.mxu0 %v1706
      %v1821 = vpop.f32.mrf.mxu0
      %v1822 = vadd.f32 0.0, %v1821
      %1823 = vmatmul.f32.gmra.mxu0 %v1709
      %v1824 = vpop.f32.mrf.mxu0
      %v1825 = vadd.f32 0.0, %v1824
      %1826 = vmatmul.f32.gmra.mxu0 %v1712
      %v1827 = vpop.f32.mrf.mxu0
      %v1828 = vadd.f32 0.0, %v1827
      %1829 = vdwg.mxu0
      %v1830 = vadd.f32 %v1552, %v1735
      %v1831 = vadd.f32 %v1553, %v1738
      %v1832 = vadd.f32 %v1554, %v1741
      %v1833 = vadd.f32 %v1555, %v1744
      %v1834 = vadd.f32 %v1556, %v1747
      %v1835 = vadd.f32 %v1557, %v1750
      %v1836 = vadd.f32 %v1558, %v1753
      %v1837 = vadd.f32 %v1559, %v1756
      %v1838 = vadd.f32 %v1560, %v1759
      %v1839 = vadd.f32 %v1561, %v1762
      %v1840 = vadd.f32 %v1562, %v1765
      %v1841 = vadd.f32 %v1563, %v1768
      %v1842 = vadd.f32 %v1564, %v1771
      %v1843 = vadd.f32 %v1565, %v1774
      %v1844 = vadd.f32 %v1566, %v1777
      %v1845 = vadd.f32 %v1567, %v1780
      %v1846 = vadd.f32 %v1568, %v1783
      %v1847 = vadd.f32 %v1569, %v1786
      %v1848 = vadd.f32 %v1570, %v1789
      %v1849 = vadd.f32 %v1571, %v1792
      %v1850 = vadd.f32 %v1572, %v1795
      %v1851 = vadd.f32 %v1573, %v1798
      %v1852 = vadd.f32 %v1574, %v1801
      %v1853 = vadd.f32 %v1575, %v1804
      %v1854 = vadd.f32 %v1576, %v1807
      %v1855 = vadd.f32 %v1577, %v1810
      %v1856 = vadd.f32 %v1578, %v1813
      %v1857 = vadd.f32 %v1579, %v1816
      %v1858 = vadd.f32 %v1580, %v1819
      %v1859 = vadd.f32 %v1581, %v1822
      %v1860 = vadd.f32 %v1582, %v1825
      %v1861 = vadd.f32 %v1583, %v1828
      %v1862 = vld [vmem:[%s444 + $0x2] sm:$0xff]
      %v1863 = vld [vmem:[%s444 + $0xa] sm:$0xff]
      %v1864 = vld [vmem:[%s444 + $0x1a] sm:$0xff]
      %v1865 = vld [vmem:[%s444 + $0x22] sm:$0xff]
      %v1866 = vld [vmem:[%s444 + $0x32] sm:$0xff]
      %v1867 = vld [vmem:[%s444 + $0x3a] sm:$0xff]
      %v1868 = vld [vmem:[%s444 + $0x4a] sm:$0xff]
      %v1869 = vld [vmem:[%s444 + $0x52] sm:$0xff]
      %v1870 = vld [vmem:[%s444 + $0x62] sm:$0xff]
      %v1871 = vld [vmem:[%s444 + $0x6a] sm:$0xff]
      %v1872 = vld [vmem:[%s444 + $0x7a] sm:$0xff]
      %v1873 = vld [vmem:[%s444 + $0x82] sm:$0xff]
      %v1874 = vld [vmem:[%s444 + $0x92] sm:$0xff]
      %v1875 = vld [vmem:[%s444 + $0x9a] sm:$0xff]
      %v1876 = vld [vmem:[%s444 + $0xaa] sm:$0xff]
      %v1877 = vld [vmem:[%s444 + $0xb2] sm:$0xff]
      %v1878 = vld [vmem:[%s444 + $0xc2] sm:$0xff]
      %v1879 = vld [vmem:[%s444 + $0xca] sm:$0xff]
      %v1880 = vld [vmem:[%s444 + $0xda] sm:$0xff]
      %v1881 = vld [vmem:[%s444 + $0xe2] sm:$0xff]
      %v1882 = vld [vmem:[%s444 + $0xf2] sm:$0xff]
      %v1883 = vld [vmem:[%s444 + $0xfa] sm:$0xff]
      %v1884 = vld [vmem:[%s444 + $0x10a] sm:$0xff]
      %v1885 = vld [vmem:[%s444 + $0x112] sm:$0xff]
      %v1886 = vld [vmem:[%s444 + $0x122] sm:$0xff]
      %v1887 = vld [vmem:[%s444 + $0x12a] sm:$0xff]
      %v1888 = vld [vmem:[%s444 + $0x13a] sm:$0xff]
      %v1889 = vld [vmem:[%s444 + $0x142] sm:$0xff]
      %v1890 = vld [vmem:[%s444 + $0x152] sm:$0xff]
      %v1891 = vld [vmem:[%s444 + $0x15a] sm:$0xff]
      %v1892 = vld [vmem:[%s444 + $0x16a] sm:$0xff]
      %v1893 = vld [vmem:[%s444 + $0x172] sm:$0xff]
      %s1894 = scalar_lea.vmem %s3, 20
      %v1895 = vld [vmem:[%s1894] sm:$0xf]
      %v1897 = vsel %vm445, %v1862, 0
      %v1900 = vsel %vm445, %v1863, 0
      %v1903 = vsel %vm445, %v1864, 0
      %v1906 = vsel %vm445, %v1865, 0
      %v1909 = vsel %vm445, %v1866, 0
      %v1912 = vsel %vm445, %v1867, 0
      %v1915 = vsel %vm445, %v1868, 0
      %v1918 = vsel %vm445, %v1869, 0
      %v1921 = vsel %vm445, %v1870, 0
      %v1924 = vsel %vm445, %v1871, 0
      %v1927 = vsel %vm445, %v1872, 0
      %v1930 = vsel %vm445, %v1873, 0
      %v1933 = vsel %vm445, %v1874, 0
      %v1936 = vsel %vm445, %v1875, 0
      %v1939 = vsel %vm445, %v1876, 0
      %v1942 = vsel %vm445, %v1877, 0
      %v1945 = vsel %vm445, %v1878, 0
      %v1948 = vsel %vm445, %v1879, 0
      %v1951 = vsel %vm445, %v1880, 0
      %v1954 = vsel %vm445, %v1881, 0
      %v1957 = vsel %vm445, %v1882, 0
      %v1960 = vsel %vm445, %v1883, 0
      %v1963 = vsel %vm445, %v1884, 0
      %v1966 = vsel %vm445, %v1885, 0
      %v1969 = vsel %vm445, %v1886, 0
      %v1972 = vsel %vm445, %v1887, 0
      %v1975 = vsel %vm445, %v1888, 0
      %v1978 = vsel %vm445, %v1889, 0
      %v1981 = vsel %vm445, %v1890, 0
      %v1984 = vsel %vm445, %v1891, 0
      %v1987 = vsel %vm445, %v1892, 0
      %v1990 = vsel %vm445, %v1893, 0
      %v1993 = vsel %vm699, %v1895, 0
      %1995 = vmatpush.msra.mxu0 0.0
      %1996 = vmatpush.msra.mxu0 0.0
      %1997 = vmatpush.msra.mxu0 0.0
      %1998 = vmatpush.msra.mxu0 0.0
      %1999 = vmatpush.msra.mxu0 0.0
      %2000 = vmatpush.msra.mxu0 0.0
      %2001 = vmatpush.msra.mxu0 0.0
      %2002 = vmatpush.msra.mxu0 0.0
      %2003 = vmatpush.msra.mxu0 0.0
      %2004 = vmatpush.msra.mxu0 0.0
      %2005 = vmatpush.msra.mxu0 0.0
      %2006 = vmatpush.msra.mxu0 0.0
      %2007 = vmatpush.msra.mxu0 0.0
      %2008 = vmatpush.msra.mxu0 0.0
      %2009 = vmatpush.msra.mxu0 0.0
      %2010 = vmatpush.msra.mxu0 %v1993
      %2011 = vmatmul.f32.gmra.mxu0 %v1897
      %v2012 = vpop.f32.mrf.mxu0
      %v2013 = vadd.f32 0.0, %v2012
      %2014 = vmatmul.f32.gmra.mxu0 %v1900
      %v2015 = vpop.f32.mrf.mxu0
      %v2016 = vadd.f32 0.0, %v2015
      %2017 = vmatmul.f32.gmra.mxu0 %v1903
      %v2018 = vpop.f32.mrf.mxu0
      %v2019 = vadd.f32 0.0, %v2018
      %2020 = vmatmul.f32.gmra.mxu0 %v1906
      %v2021 = vpop.f32.mrf.mxu0
      %v2022 = vadd.f32 0.0, %v2021
      %2023 = vmatmul.f32.gmra.mxu0 %v1909
      %v2024 = vpop.f32.mrf.mxu0
      %v2025 = vadd.f32 0.0, %v2024
      %2026 = vmatmul.f32.gmra.mxu0 %v1912
      %v2027 = vpop.f32.mrf.mxu0
      %v2028 = vadd.f32 0.0, %v2027
      %2029 = vmatmul.f32.gmra.mxu0 %v1915
      %v2030 = vpop.f32.mrf.mxu0
      %v2031 = vadd.f32 0.0, %v2030
      %2032 = vmatmul.f32.gmra.mxu0 %v1918
      %v2033 = vpop.f32.mrf.mxu0
      %v2034 = vadd.f32 0.0, %v2033
      %2035 = vmatmul.f32.gmra.mxu0 %v1921
      %v2036 = vpop.f32.mrf.mxu0
      %v2037 = vadd.f32 0.0, %v2036
      %2038 = vmatmul.f32.gmra.mxu0 %v1924
      %v2039 = vpop.f32.mrf.mxu0
      %v2040 = vadd.f32 0.0, %v2039
      %2041 = vmatmul.f32.gmra.mxu0 %v1927
      %v2042 = vpop.f32.mrf.mxu0
      %v2043 = vadd.f32 0.0, %v2042
      %2044 = vmatmul.f32.gmra.mxu0 %v1930
      %v2045 = vpop.f32.mrf.mxu0
      %v2046 = vadd.f32 0.0, %v2045
      %2047 = vmatmul.f32.gmra.mxu0 %v1933
      %v2048 = vpop.f32.mrf.mxu0
      %v2049 = vadd.f32 0.0, %v2048
      %2050 = vmatmul.f32.gmra.mxu0 %v1936
      %v2051 = vpop.f32.mrf.mxu0
      %v2052 = vadd.f32 0.0, %v2051
      %2053 = vmatmul.f32.gmra.mxu0 %v1939
      %v2054 = vpop.f32.mrf.mxu0
      %v2055 = vadd.f32 0.0, %v2054
      %2056 = vmatmul.f32.gmra.mxu0 %v1942
      %v2057 = vpop.f32.mrf.mxu0
      %v2058 = vadd.f32 0.0, %v2057
      %2059 = vmatmul.f32.gmra.mxu0 %v1945
      %v2060 = vpop.f32.mrf.mxu0
      %v2061 = vadd.f32 0.0, %v2060
      %2062 = vmatmul.f32.gmra.mxu0 %v1948
      %v2063 = vpop.f32.mrf.mxu0
      %v2064 = vadd.f32 0.0, %v2063
      %2065 = vmatmul.f32.gmra.mxu0 %v1951
      %v2066 = vpop.f32.mrf.mxu0
      %v2067 = vadd.f32 0.0, %v2066
      %2068 = vmatmul.f32.gmra.mxu0 %v1954
      %v2069 = vpop.f32.mrf.mxu0
      %v2070 = vadd.f32 0.0, %v2069
      %2071 = vmatmul.f32.gmra.mxu0 %v1957
      %v2072 = vpop.f32.mrf.mxu0
      %v2073 = vadd.f32 0.0, %v2072
      %2074 = vmatmul.f32.gmra.mxu0 %v1960
      %v2075 = vpop.f32.mrf.mxu0
      %v2076 = vadd.f32 0.0, %v2075
      %2077 = vmatmul.f32.gmra.mxu0 %v1963
      %v2078 = vpop.f32.mrf.mxu0
      %v2079 = vadd.f32 0.0, %v2078
      %2080 = vmatmul.f32.gmra.mxu0 %v1966
      %v2081 = vpop.f32.mrf.mxu0
      %v2082 = vadd.f32 0.0, %v2081
      %2083 = vmatmul.f32.gmra.mxu0 %v1969
      %v2084 = vpop.f32.mrf.mxu0
      %v2085 = vadd.f32 0.0, %v2084
      %2086 = vmatmul.f32.gmra.mxu0 %v1972
      %v2087 = vpop.f32.mrf.mxu0
      %v2088 = vadd.f32 0.0, %v2087
      %2089 = vmatmul.f32.gmra.mxu0 %v1975
      %v2090 = vpop.f32.mrf.mxu0
      %v2091 = vadd.f32 0.0, %v2090
      %2092 = vmatmul.f32.gmra.mxu0 %v1978
      %v2093 = vpop.f32.mrf.mxu0
      %v2094 = vadd.f32 0.0, %v2093
      %2095 = vmatmul.f32.gmra.mxu0 %v1981
      %v2096 = vpop.f32.mrf.mxu0
      %v2097 = vadd.f32 0.0, %v2096
      %2098 = vmatmul.f32.gmra.mxu0 %v1984
      %v2099 = vpop.f32.mrf.mxu0
      %v2100 = vadd.f32 0.0, %v2099
      %2101 = vmatmul.f32.gmra.mxu0 %v1987
      %v2102 = vpop.f32.mrf.mxu0
      %v2103 = vadd.f32 0.0, %v2102
      %2104 = vmatmul.f32.gmra.mxu0 %v1990
      %v2105 = vpop.f32.mrf.mxu0
      %v2106 = vadd.f32 0.0, %v2105
      %2107 = vdwg.mxu0
      %v2108 = vadd.f32 %v1830, %v2013
      %v2109 = vadd.f32 %v1831, %v2016
      %v2110 = vadd.f32 %v1832, %v2019
      %v2111 = vadd.f32 %v1833, %v2022
      %v2112 = vadd.f32 %v1834, %v2025
      %v2113 = vadd.f32 %v1835, %v2028
      %v2114 = vadd.f32 %v1836, %v2031
      %v2115 = vadd.f32 %v1837, %v2034
      %v2116 = vadd.f32 %v1838, %v2037
      %v2117 = vadd.f32 %v1839, %v2040
      %v2118 = vadd.f32 %v1840, %v2043
      %v2119 = vadd.f32 %v1841, %v2046
      %v2120 = vadd.f32 %v1842, %v2049
      %v2121 = vadd.f32 %v1843, %v2052
      %v2122 = vadd.f32 %v1844, %v2055
      %v2123 = vadd.f32 %v1845, %v2058
      %v2124 = vadd.f32 %v1846, %v2061
      %v2125 = vadd.f32 %v1847, %v2064
      %v2126 = vadd.f32 %v1848, %v2067
      %v2127 = vadd.f32 %v1849, %v2070
      %v2128 = vadd.f32 %v1850, %v2073
      %v2129 = vadd.f32 %v1851, %v2076
      %v2130 = vadd.f32 %v1852, %v2079
      %v2131 = vadd.f32 %v1853, %v2082
      %v2132 = vadd.f32 %v1854, %v2085
      %v2133 = vadd.f32 %v1855, %v2088
      %v2134 = vadd.f32 %v1856, %v2091
      %v2135 = vadd.f32 %v1857, %v2094
      %v2136 = vadd.f32 %v1858, %v2097
      %v2137 = vadd.f32 %v1859, %v2100
      %v2138 = vadd.f32 %v1860, %v2103
      %v2139 = vadd.f32 %v1861, %v2106
      %s2140 = scalar_lea.vmem [#allocation2], 48
      %v2141 = vld [vmem:[%s2140] sm:$0xff]
      %v2142 = vld [vmem:[%s2140 + $0x8] sm:$0xff]
      %v2143 = vld [vmem:[%s2140 + $0x18] sm:$0xff]
      %v2144 = vld [vmem:[%s2140 + $0x20] sm:$0xff]
      %v2145 = vld [vmem:[%s2140 + $0x30] sm:$0xff]
      %v2146 = vld [vmem:[%s2140 + $0x38] sm:$0xff]
      %v2147 = vld [vmem:[%s2140 + $0x48] sm:$0xff]
      %v2148 = vld [vmem:[%s2140 + $0x50] sm:$0xff]
      %v2149 = vld [vmem:[%s2140 + $0x60] sm:$0xff]
      %v2150 = vld [vmem:[%s2140 + $0x68] sm:$0xff]
      %v2151 = vld [vmem:[%s2140 + $0x78] sm:$0xff]
      %v2152 = vld [vmem:[%s2140 + $0x80] sm:$0xff]
      %v2153 = vld [vmem:[%s2140 + $0x90] sm:$0xff]
      %v2154 = vld [vmem:[%s2140 + $0x98] sm:$0xff]
      %v2155 = vld [vmem:[%s2140 + $0xa8] sm:$0xff]
      %v2156 = vld [vmem:[%s2140 + $0xb0] sm:$0xff]
      %v2157 = vld [vmem:[%s2140 + $0xc0] sm:$0xff]
      %v2158 = vld [vmem:[%s2140 + $0xc8] sm:$0xff]
      %v2159 = vld [vmem:[%s2140 + $0xd8] sm:$0xff]
      %v2160 = vld [vmem:[%s2140 + $0xe0] sm:$0xff]
      %v2161 = vld [vmem:[%s2140 + $0xf0] sm:$0xff]
      %v2162 = vld [vmem:[%s2140 + $0xf8] sm:$0xff]
      %v2163 = vld [vmem:[%s2140 + $0x108] sm:$0xff]
      %v2164 = vld [vmem:[%s2140 + $0x110] sm:$0xff]
      %v2165 = vld [vmem:[%s2140 + $0x120] sm:$0xff]
      %v2166 = vld [vmem:[%s2140 + $0x128] sm:$0xff]
      %v2167 = vld [vmem:[%s2140 + $0x138] sm:$0xff]
      %v2168 = vld [vmem:[%s2140 + $0x140] sm:$0xff]
      %v2169 = vld [vmem:[%s2140 + $0x150] sm:$0xff]
      %v2170 = vld [vmem:[%s2140 + $0x158] sm:$0xff]
      %v2171 = vld [vmem:[%s2140 + $0x168] sm:$0xff]
      %v2172 = vld [vmem:[%s2140 + $0x170] sm:$0xff]
      %s2173 = scalar_lea.vmem %s3, 24
      %v2174 = vld [vmem:[%s2173] sm:$0xf]
      %v2176 = vsel %vm445, %v2141, 0
      %v2179 = vsel %vm445, %v2142, 0
      %v2182 = vsel %vm445, %v2143, 0
      %v2185 = vsel %vm445, %v2144, 0
      %v2188 = vsel %vm445, %v2145, 0
      %v2191 = vsel %vm445, %v2146, 0
      %v2194 = vsel %vm445, %v2147, 0
      %v2197 = vsel %vm445, %v2148, 0
      %v2200 = vsel %vm445, %v2149, 0
      %v2203 = vsel %vm445, %v2150, 0
      %v2206 = vsel %vm445, %v2151, 0
      %v2209 = vsel %vm445, %v2152, 0
      %v2212 = vsel %vm445, %v2153, 0
      %v2215 = vsel %vm445, %v2154, 0
      %v2218 = vsel %vm445, %v2155, 0
      %v2221 = vsel %vm445, %v2156, 0
      %v2224 = vsel %vm445, %v2157, 0
      %v2227 = vsel %vm445, %v2158, 0
      %v2230 = vsel %vm445, %v2159, 0
      %v2233 = vsel %vm445, %v2160, 0
      %v2236 = vsel %vm445, %v2161, 0
      %v2239 = vsel %vm445, %v2162, 0
      %v2242 = vsel %vm445, %v2163, 0
      %v2245 = vsel %vm445, %v2164, 0
      %v2248 = vsel %vm445, %v2165, 0
      %v2251 = vsel %vm445, %v2166, 0
      %v2254 = vsel %vm445, %v2167, 0
      %v2257 = vsel %vm445, %v2168, 0
      %v2260 = vsel %vm445, %v2169, 0
      %v2263 = vsel %vm445, %v2170, 0
      %v2266 = vsel %vm445, %v2171, 0
      %v2269 = vsel %vm445, %v2172, 0
      %v2272 = vsel %vm699, %v2174, 0
      %2274 = vmatpush.msra.mxu0 0.0
      %2275 = vmatpush.msra.mxu0 0.0
      %2276 = vmatpush.msra.mxu0 0.0
      %2277 = vmatpush.msra.mxu0 0.0
      %2278 = vmatpush.msra.mxu0 0.0
      %2279 = vmatpush.msra.mxu0 0.0
      %2280 = vmatpush.msra.mxu0 0.0
      %2281 = vmatpush.msra.mxu0 0.0
      %2282 = vmatpush.msra.mxu0 0.0
      %2283 = vmatpush.msra.mxu0 0.0
      %2284 = vmatpush.msra.mxu0 0.0
      %2285 = vmatpush.msra.mxu0 0.0
      %2286 = vmatpush.msra.mxu0 0.0
      %2287 = vmatpush.msra.mxu0 0.0
      %2288 = vmatpush.msra.mxu0 0.0
      %2289 = vmatpush.msra.mxu0 %v2272
      %2290 = vmatmul.f32.gmra.mxu0 %v2176
      %v2291 = vpop.f32.mrf.mxu0
      %v2292 = vadd.f32 0.0, %v2291
      %2293 = vmatmul.f32.gmra.mxu0 %v2179
      %v2294 = vpop.f32.mrf.mxu0
      %v2295 = vadd.f32 0.0, %v2294
      %2296 = vmatmul.f32.gmra.mxu0 %v2182
      %v2297 = vpop.f32.mrf.mxu0
      %v2298 = vadd.f32 0.0, %v2297
      %2299 = vmatmul.f32.gmra.mxu0 %v2185
      %v2300 = vpop.f32.mrf.mxu0
      %v2301 = vadd.f32 0.0, %v2300
      %2302 = vmatmul.f32.gmra.mxu0 %v2188
      %v2303 = vpop.f32.mrf.mxu0
      %v2304 = vadd.f32 0.0, %v2303
      %2305 = vmatmul.f32.gmra.mxu0 %v2191
      %v2306 = vpop.f32.mrf.mxu0
      %v2307 = vadd.f32 0.0, %v2306
      %2308 = vmatmul.f32.gmra.mxu0 %v2194
      %v2309 = vpop.f32.mrf.mxu0
      %v2310 = vadd.f32 0.0, %v2309
      %2311 = vmatmul.f32.gmra.mxu0 %v2197
      %v2312 = vpop.f32.mrf.mxu0
      %v2313 = vadd.f32 0.0, %v2312
      %2314 = vmatmul.f32.gmra.mxu0 %v2200
      %v2315 = vpop.f32.mrf.mxu0
      %v2316 = vadd.f32 0.0, %v2315
      %2317 = vmatmul.f32.gmra.mxu0 %v2203
      %v2318 = vpop.f32.mrf.mxu0
      %v2319 = vadd.f32 0.0, %v2318
      %2320 = vmatmul.f32.gmra.mxu0 %v2206
      %v2321 = vpop.f32.mrf.mxu0
      %v2322 = vadd.f32 0.0, %v2321
      %2323 = vmatmul.f32.gmra.mxu0 %v2209
      %v2324 = vpop.f32.mrf.mxu0
      %v2325 = vadd.f32 0.0, %v2324
      %2326 = vmatmul.f32.gmra.mxu0 %v2212
      %v2327 = vpop.f32.mrf.mxu0
      %v2328 = vadd.f32 0.0, %v2327
      %2329 = vmatmul.f32.gmra.mxu0 %v2215
      %v2330 = vpop.f32.mrf.mxu0
      %v2331 = vadd.f32 0.0, %v2330
      %2332 = vmatmul.f32.gmra.mxu0 %v2218
      %v2333 = vpop.f32.mrf.mxu0
      %v2334 = vadd.f32 0.0, %v2333
      %2335 = vmatmul.f32.gmra.mxu0 %v2221
      %v2336 = vpop.f32.mrf.mxu0
      %v2337 = vadd.f32 0.0, %v2336
      %2338 = vmatmul.f32.gmra.mxu0 %v2224
      %v2339 = vpop.f32.mrf.mxu0
      %v2340 = vadd.f32 0.0, %v2339
      %2341 = vmatmul.f32.gmra.mxu0 %v2227
      %v2342 = vpop.f32.mrf.mxu0
      %v2343 = vadd.f32 0.0, %v2342
      %2344 = vmatmul.f32.gmra.mxu0 %v2230
      %v2345 = vpop.f32.mrf.mxu0
      %v2346 = vadd.f32 0.0, %v2345
      %2347 = vmatmul.f32.gmra.mxu0 %v2233
      %v2348 = vpop.f32.mrf.mxu0
      %v2349 = vadd.f32 0.0, %v2348
      %2350 = vmatmul.f32.gmra.mxu0 %v2236
      %v2351 = vpop.f32.mrf.mxu0
      %v2352 = vadd.f32 0.0, %v2351
      %2353 = vmatmul.f32.gmra.mxu0 %v2239
      %v2354 = vpop.f32.mrf.mxu0
      %v2355 = vadd.f32 0.0, %v2354
      %2356 = vmatmul.f32.gmra.mxu0 %v2242
      %v2357 = vpop.f32.mrf.mxu0
      %v2358 = vadd.f32 0.0, %v2357
      %2359 = vmatmul.f32.gmra.mxu0 %v2245
      %v2360 = vpop.f32.mrf.mxu0
      %v2361 = vadd.f32 0.0, %v2360
      %2362 = vmatmul.f32.gmra.mxu0 %v2248
      %v2363 = vpop.f32.mrf.mxu0
      %v2364 = vadd.f32 0.0, %v2363
      %2365 = vmatmul.f32.gmra.mxu0 %v2251
      %v2366 = vpop.f32.mrf.mxu0
      %v2367 = vadd.f32 0.0, %v2366
      %2368 = vmatmul.f32.gmra.mxu0 %v2254
      %v2369 = vpop.f32.mrf.mxu0
      %v2370 = vadd.f32 0.0, %v2369
      %2371 = vmatmul.f32.gmra.mxu0 %v2257
      %v2372 = vpop.f32.mrf.mxu0
      %v2373 = vadd.f32 0.0, %v2372
      %2374 = vmatmul.f32.gmra.mxu0 %v2260
      %v2375 = vpop.f32.mrf.mxu0
      %v2376 = vadd.f32 0.0, %v2375
      %2377 = vmatmul.f32.gmra.mxu0 %v2263
      %v2378 = vpop.f32.mrf.mxu0
      %v2379 = vadd.f32 0.0, %v2378
      %2380 = vmatmul.f32.gmra.mxu0 %v2266
      %v2381 = vpop.f32.mrf.mxu0
      %v2382 = vadd.f32 0.0, %v2381
      %2383 = vmatmul.f32.gmra.mxu0 %v2269
      %v2384 = vpop.f32.mrf.mxu0
      %v2385 = vadd.f32 0.0, %v2384
      %2386 = vdwg.mxu0
      %v2387 = vadd.f32 %v2108, %v2292
      %v2388 = vadd.f32 %v2109, %v2295
      %v2389 = vadd.f32 %v2110, %v2298
      %v2390 = vadd.f32 %v2111, %v2301
      %v2391 = vadd.f32 %v2112, %v2304
      %v2392 = vadd.f32 %v2113, %v2307
      %v2393 = vadd.f32 %v2114, %v2310
      %v2394 = vadd.f32 %v2115, %v2313
      %v2395 = vadd.f32 %v2116, %v2316
      %v2396 = vadd.f32 %v2117, %v2319
      %v2397 = vadd.f32 %v2118, %v2322
      %v2398 = vadd.f32 %v2119, %v2325
      %v2399 = vadd.f32 %v2120, %v2328
      %v2400 = vadd.f32 %v2121, %v2331
      %v2401 = vadd.f32 %v2122, %v2334
      %v2402 = vadd.f32 %v2123, %v2337
      %v2403 = vadd.f32 %v2124, %v2340
      %v2404 = vadd.f32 %v2125, %v2343
      %v2405 = vadd.f32 %v2126, %v2346
      %v2406 = vadd.f32 %v2127, %v2349
      %v2407 = vadd.f32 %v2128, %v2352
      %v2408 = vadd.f32 %v2129, %v2355
      %v2409 = vadd.f32 %v2130, %v2358
      %v2410 = vadd.f32 %v2131, %v2361
      %v2411 = vadd.f32 %v2132, %v2364
      %v2412 = vadd.f32 %v2133, %v2367
      %v2413 = vadd.f32 %v2134, %v2370
      %v2414 = vadd.f32 %v2135, %v2373
      %v2415 = vadd.f32 %v2136, %v2376
      %v2416 = vadd.f32 %v2137, %v2379
      %v2417 = vadd.f32 %v2138, %v2382
      %v2418 = vadd.f32 %v2139, %v2385
      %v2419 = vld [vmem:[%s2140 + $0x1] sm:$0xff]
      %v2420 = vld [vmem:[%s2140 + $0x9] sm:$0xff]
      %v2421 = vld [vmem:[%s2140 + $0x19] sm:$0xff]
      %v2422 = vld [vmem:[%s2140 + $0x21] sm:$0xff]
      %v2423 = vld [vmem:[%s2140 + $0x31] sm:$0xff]
      %v2424 = vld [vmem:[%s2140 + $0x39] sm:$0xff]
      %v2425 = vld [vmem:[%s2140 + $0x49] sm:$0xff]
      %v2426 = vld [vmem:[%s2140 + $0x51] sm:$0xff]
      %v2427 = vld [vmem:[%s2140 + $0x61] sm:$0xff]
      %v2428 = vld [vmem:[%s2140 + $0x69] sm:$0xff]
      %v2429 = vld [vmem:[%s2140 + $0x79] sm:$0xff]
      %v2430 = vld [vmem:[%s2140 + $0x81] sm:$0xff]
      %v2431 = vld [vmem:[%s2140 + $0x91] sm:$0xff]
      %v2432 = vld [vmem:[%s2140 + $0x99] sm:$0xff]
      %v2433 = vld [vmem:[%s2140 + $0xa9] sm:$0xff]
      %v2434 = vld [vmem:[%s2140 + $0xb1] sm:$0xff]
      %v2435 = vld [vmem:[%s2140 + $0xc1] sm:$0xff]
      %v2436 = vld [vmem:[%s2140 + $0xc9] sm:$0xff]
      %v2437 = vld [vmem:[%s2140 + $0xd9] sm:$0xff]
      %v2438 = vld [vmem:[%s2140 + $0xe1] sm:$0xff]
      %v2439 = vld [vmem:[%s2140 + $0xf1] sm:$0xff]
      %v2440 = vld [vmem:[%s2140 + $0xf9] sm:$0xff]
      %v2441 = vld [vmem:[%s2140 + $0x109] sm:$0xff]
      %v2442 = vld [vmem:[%s2140 + $0x111] sm:$0xff]
      %v2443 = vld [vmem:[%s2140 + $0x121] sm:$0xff]
      %v2444 = vld [vmem:[%s2140 + $0x129] sm:$0xff]
      %v2445 = vld [vmem:[%s2140 + $0x139] sm:$0xff]
      %v2446 = vld [vmem:[%s2140 + $0x141] sm:$0xff]
      %v2447 = vld [vmem:[%s2140 + $0x151] sm:$0xff]
      %v2448 = vld [vmem:[%s2140 + $0x159] sm:$0xff]
      %v2449 = vld [vmem:[%s2140 + $0x169] sm:$0xff]
      %v2450 = vld [vmem:[%s2140 + $0x171] sm:$0xff]
      %s2451 = scalar_lea.vmem %s3, 28
      %v2452 = vld [vmem:[%s2451] sm:$0xf]
      %v2454 = vsel %vm445, %v2419, 0
      %v2457 = vsel %vm445, %v2420, 0
      %v2460 = vsel %vm445, %v2421, 0
      %v2463 = vsel %vm445, %v2422, 0
      %v2466 = vsel %vm445, %v2423, 0
      %v2469 = vsel %vm445, %v2424, 0
      %v2472 = vsel %vm445, %v2425, 0
      %v2475 = vsel %vm445, %v2426, 0
      %v2478 = vsel %vm445, %v2427, 0
      %v2481 = vsel %vm445, %v2428, 0
      %v2484 = vsel %vm445, %v2429, 0
      %v2487 = vsel %vm445, %v2430, 0
      %v2490 = vsel %vm445, %v2431, 0
      %v2493 = vsel %vm445, %v2432, 0
      %v2496 = vsel %vm445, %v2433, 0
      %v2499 = vsel %vm445, %v2434, 0
      %v2502 = vsel %vm445, %v2435, 0
      %v2505 = vsel %vm445, %v2436, 0
      %v2508 = vsel %vm445, %v2437, 0
      %v2511 = vsel %vm445, %v2438, 0
      %v2514 = vsel %vm445, %v2439, 0
      %v2517 = vsel %vm445, %v2440, 0
      %v2520 = vsel %vm445, %v2441, 0
      %v2523 = vsel %vm445, %v2442, 0
      %v2526 = vsel %vm445, %v2443, 0
      %v2529 = vsel %vm445, %v2444, 0
      %v2532 = vsel %vm445, %v2445, 0
      %v2535 = vsel %vm445, %v2446, 0
      %v2538 = vsel %vm445, %v2447, 0
      %v2541 = vsel %vm445, %v2448, 0
      %v2544 = vsel %vm445, %v2449, 0
      %v2547 = vsel %vm445, %v2450, 0
      %v2550 = vsel %vm699, %v2452, 0
      %2552 = vmatpush.msra.mxu0 0.0
      %2553 = vmatpush.msra.mxu0 0.0
      %2554 = vmatpush.msra.mxu0 0.0
      %2555 = vmatpush.msra.mxu0 0.0
      %2556 = vmatpush.msra.mxu0 0.0
      %2557 = vmatpush.msra.mxu0 0.0
      %2558 = vmatpush.msra.mxu0 0.0
      %2559 = vmatpush.msra.mxu0 0.0
      %2560 = vmatpush.msra.mxu0 0.0
      %2561 = vmatpush.msra.mxu0 0.0
      %2562 = vmatpush.msra.mxu0 0.0
      %2563 = vmatpush.msra.mxu0 0.0
      %2564 = vmatpush.msra.mxu0 0.0
      %2565 = vmatpush.msra.mxu0 0.0
      %2566 = vmatpush.msra.mxu0 0.0
      %2567 = vmatpush.msra.mxu0 %v2550
      %2568 = vmatmul.f32.gmra.mxu0 %v2454
      %v2569 = vpop.f32.mrf.mxu0
      %v2570 = vadd.f32 0.0, %v2569
      %2571 = vmatmul.f32.gmra.mxu0 %v2457
      %v2572 = vpop.f32.mrf.mxu0
      %v2573 = vadd.f32 0.0, %v2572
      %2574 = vmatmul.f32.gmra.mxu0 %v2460
      %v2575 = vpop.f32.mrf.mxu0
      %v2576 = vadd.f32 0.0, %v2575
      %2577 = vmatmul.f32.gmra.mxu0 %v2463
      %v2578 = vpop.f32.mrf.mxu0
      %v2579 = vadd.f32 0.0, %v2578
      %2580 = vmatmul.f32.gmra.mxu0 %v2466
      %v2581 = vpop.f32.mrf.mxu0
      %v2582 = vadd.f32 0.0, %v2581
      %2583 = vmatmul.f32.gmra.mxu0 %v2469
      %v2584 = vpop.f32.mrf.mxu0
      %v2585 = vadd.f32 0.0, %v2584
      %2586 = vmatmul.f32.gmra.mxu0 %v2472
      %v2587 = vpop.f32.mrf.mxu0
      %v2588 = vadd.f32 0.0, %v2587
      %2589 = vmatmul.f32.gmra.mxu0 %v2475
      %v2590 = vpop.f32.mrf.mxu0
      %v2591 = vadd.f32 0.0, %v2590
      %2592 = vmatmul.f32.gmra.mxu0 %v2478
      %v2593 = vpop.f32.mrf.mxu0
      %v2594 = vadd.f32 0.0, %v2593
      %2595 = vmatmul.f32.gmra.mxu0 %v2481
      %v2596 = vpop.f32.mrf.mxu0
      %v2597 = vadd.f32 0.0, %v2596
      %2598 = vmatmul.f32.gmra.mxu0 %v2484
      %v2599 = vpop.f32.mrf.mxu0
      %v2600 = vadd.f32 0.0, %v2599
      %2601 = vmatmul.f32.gmra.mxu0 %v2487
      %v2602 = vpop.f32.mrf.mxu0
      %v2603 = vadd.f32 0.0, %v2602
      %2604 = vmatmul.f32.gmra.mxu0 %v2490
      %v2605 = vpop.f32.mrf.mxu0
      %v2606 = vadd.f32 0.0, %v2605
      %2607 = vmatmul.f32.gmra.mxu0 %v2493
      %v2608 = vpop.f32.mrf.mxu0
      %v2609 = vadd.f32 0.0, %v2608
      %2610 = vmatmul.f32.gmra.mxu0 %v2496
      %v2611 = vpop.f32.mrf.mxu0
      %v2612 = vadd.f32 0.0, %v2611
      %2613 = vmatmul.f32.gmra.mxu0 %v2499
      %v2614 = vpop.f32.mrf.mxu0
      %v2615 = vadd.f32 0.0, %v2614
      %2616 = vmatmul.f32.gmra.mxu0 %v2502
      %v2617 = vpop.f32.mrf.mxu0
      %v2618 = vadd.f32 0.0, %v2617
      %2619 = vmatmul.f32.gmra.mxu0 %v2505
      %v2620 = vpop.f32.mrf.mxu0
      %v2621 = vadd.f32 0.0, %v2620
      %2622 = vmatmul.f32.gmra.mxu0 %v2508
      %v2623 = vpop.f32.mrf.mxu0
      %v2624 = vadd.f32 0.0, %v2623
      %2625 = vmatmul.f32.gmra.mxu0 %v2511
      %v2626 = vpop.f32.mrf.mxu0
      %v2627 = vadd.f32 0.0, %v2626
      %2628 = vmatmul.f32.gmra.mxu0 %v2514
      %v2629 = vpop.f32.mrf.mxu0
      %v2630 = vadd.f32 0.0, %v2629
      %2631 = vmatmul.f32.gmra.mxu0 %v2517
      %v2632 = vpop.f32.mrf.mxu0
      %v2633 = vadd.f32 0.0, %v2632
      %2634 = vmatmul.f32.gmra.mxu0 %v2520
      %v2635 = vpop.f32.mrf.mxu0
      %v2636 = vadd.f32 0.0, %v2635
      %2637 = vmatmul.f32.gmra.mxu0 %v2523
      %v2638 = vpop.f32.mrf.mxu0
      %v2639 = vadd.f32 0.0, %v2638
      %2640 = vmatmul.f32.gmra.mxu0 %v2526
      %v2641 = vpop.f32.mrf.mxu0
      %v2642 = vadd.f32 0.0, %v2641
      %2643 = vmatmul.f32.gmra.mxu0 %v2529
      %v2644 = vpop.f32.mrf.mxu0
      %v2645 = vadd.f32 0.0, %v2644
      %2646 = vmatmul.f32.gmra.mxu0 %v2532
      %v2647 = vpop.f32.mrf.mxu0
      %v2648 = vadd.f32 0.0, %v2647
      %2649 = vmatmul.f32.gmra.mxu0 %v2535
      %v2650 = vpop.f32.mrf.mxu0
      %v2651 = vadd.f32 0.0, %v2650
      %2652 = vmatmul.f32.gmra.mxu0 %v2538
      %v2653 = vpop.f32.mrf.mxu0
      %v2654 = vadd.f32 0.0, %v2653
      %2655 = vmatmul.f32.gmra.mxu0 %v2541
      %v2656 = vpop.f32.mrf.mxu0
      %v2657 = vadd.f32 0.0, %v2656
      %2658 = vmatmul.f32.gmra.mxu0 %v2544
      %v2659 = vpop.f32.mrf.mxu0
      %v2660 = vadd.f32 0.0, %v2659
      %2661 = vmatmul.f32.gmra.mxu0 %v2547
      %v2662 = vpop.f32.mrf.mxu0
      %v2663 = vadd.f32 0.0, %v2662
      %2664 = vdwg.mxu0
      %v2665 = vadd.f32 %v2387, %v2570
      %v2666 = vadd.f32 %v2388, %v2573
      %v2667 = vadd.f32 %v2389, %v2576
      %v2668 = vadd.f32 %v2390, %v2579
      %v2669 = vadd.f32 %v2391, %v2582
      %v2670 = vadd.f32 %v2392, %v2585
      %v2671 = vadd.f32 %v2393, %v2588
      %v2672 = vadd.f32 %v2394, %v2591
      %v2673 = vadd.f32 %v2395, %v2594
      %v2674 = vadd.f32 %v2396, %v2597
      %v2675 = vadd.f32 %v2397, %v2600
      %v2676 = vadd.f32 %v2398, %v2603
      %v2677 = vadd.f32 %v2399, %v2606
      %v2678 = vadd.f32 %v2400, %v2609
      %v2679 = vadd.f32 %v2401, %v2612
      %v2680 = vadd.f32 %v2402, %v2615
      %v2681 = vadd.f32 %v2403, %v2618
      %v2682 = vadd.f32 %v2404, %v2621
      %v2683 = vadd.f32 %v2405, %v2624
      %v2684 = vadd.f32 %v2406, %v2627
      %v2685 = vadd.f32 %v2407, %v2630
      %v2686 = vadd.f32 %v2408, %v2633
      %v2687 = vadd.f32 %v2409, %v2636
      %v2688 = vadd.f32 %v2410, %v2639
      %v2689 = vadd.f32 %v2411, %v2642
      %v2690 = vadd.f32 %v2412, %v2645
      %v2691 = vadd.f32 %v2413, %v2648
      %v2692 = vadd.f32 %v2414, %v2651
      %v2693 = vadd.f32 %v2415, %v2654
      %v2694 = vadd.f32 %v2416, %v2657
      %v2695 = vadd.f32 %v2417, %v2660
      %v2696 = vadd.f32 %v2418, %v2663
      %v2697 = vld [vmem:[%s2140 + $0x2] sm:$0xff]
      %v2698 = vld [vmem:[%s2140 + $0xa] sm:$0xff]
      %v2699 = vld [vmem:[%s2140 + $0x1a] sm:$0xff]
      %v2700 = vld [vmem:[%s2140 + $0x22] sm:$0xff]
      %v2701 = vld [vmem:[%s2140 + $0x32] sm:$0xff]
      %v2702 = vld [vmem:[%s2140 + $0x3a] sm:$0xff]
      %v2703 = vld [vmem:[%s2140 + $0x4a] sm:$0xff]
      %v2704 = vld [vmem:[%s2140 + $0x52] sm:$0xff]
      %v2705 = vld [vmem:[%s2140 + $0x62] sm:$0xff]
      %v2706 = vld [vmem:[%s2140 + $0x6a] sm:$0xff]
      %v2707 = vld [vmem:[%s2140 + $0x7a] sm:$0xff]
      %v2708 = vld [vmem:[%s2140 + $0x82] sm:$0xff]
      %v2709 = vld [vmem:[%s2140 + $0x92] sm:$0xff]
      %v2710 = vld [vmem:[%s2140 + $0x9a] sm:$0xff]
      %v2711 = vld [vmem:[%s2140 + $0xaa] sm:$0xff]
      %v2712 = vld [vmem:[%s2140 + $0xb2] sm:$0xff]
      %v2713 = vld [vmem:[%s2140 + $0xc2] sm:$0xff]
      %v2714 = vld [vmem:[%s2140 + $0xca] sm:$0xff]
      %v2715 = vld [vmem:[%s2140 + $0xda] sm:$0xff]
      %v2716 = vld [vmem:[%s2140 + $0xe2] sm:$0xff]
      %v2717 = vld [vmem:[%s2140 + $0xf2] sm:$0xff]
      %v2718 = vld [vmem:[%s2140 + $0xfa] sm:$0xff]
      %v2719 = vld [vmem:[%s2140 + $0x10a] sm:$0xff]
      %v2720 = vld [vmem:[%s2140 + $0x112] sm:$0xff]
      %v2721 = vld [vmem:[%s2140 + $0x122] sm:$0xff]
      %v2722 = vld [vmem:[%s2140 + $0x12a] sm:$0xff]
      %v2723 = vld [vmem:[%s2140 + $0x13a] sm:$0xff]
      %v2724 = vld [vmem:[%s2140 + $0x142] sm:$0xff]
      %v2725 = vld [vmem:[%s2140 + $0x152] sm:$0xff]
      %v2726 = vld [vmem:[%s2140 + $0x15a] sm:$0xff]
      %v2727 = vld [vmem:[%s2140 + $0x16a] sm:$0xff]
      %v2728 = vld [vmem:[%s2140 + $0x172] sm:$0xff]
      %s2729 = scalar_lea.vmem %s3, 32
      %v2730 = vld [vmem:[%s2729] sm:$0xf]
      %v2732 = vsel %vm445, %v2697, 0
      %v2735 = vsel %vm445, %v2698, 0
      %v2738 = vsel %vm445, %v2699, 0
      %v2741 = vsel %vm445, %v2700, 0
      %v2744 = vsel %vm445, %v2701, 0
      %v2747 = vsel %vm445, %v2702, 0
      %v2750 = vsel %vm445, %v2703, 0
      %v2753 = vsel %vm445, %v2704, 0
      %v2756 = vsel %vm445, %v2705, 0
      %v2759 = vsel %vm445, %v2706, 0
      %v2762 = vsel %vm445, %v2707, 0
      %v2765 = vsel %vm445, %v2708, 0
      %v2768 = vsel %vm445, %v2709, 0
      %v2771 = vsel %vm445, %v2710, 0
      %v2774 = vsel %vm445, %v2711, 0
      %v2777 = vsel %vm445, %v2712, 0
      %v2780 = vsel %vm445, %v2713, 0
      %v2783 = vsel %vm445, %v2714, 0
      %v2786 = vsel %vm445, %v2715, 0
      %v2789 = vsel %vm445, %v2716, 0
      %v2792 = vsel %vm445, %v2717, 0
      %v2795 = vsel %vm445, %v2718, 0
      %v2798 = vsel %vm445, %v2719, 0
      %v2801 = vsel %vm445, %v2720, 0
      %v2804 = vsel %vm445, %v2721, 0
      %v2807 = vsel %vm445, %v2722, 0
      %v2810 = vsel %vm445, %v2723, 0
      %v2813 = vsel %vm445, %v2724, 0
      %v2816 = vsel %vm445, %v2725, 0
      %v2819 = vsel %vm445, %v2726, 0
      %v2822 = vsel %vm445, %v2727, 0
      %v2825 = vsel %vm445, %v2728, 0
      %v2828 = vsel %vm699, %v2730, 0
      %2830 = vmatpush.msra.mxu0 0.0
      %2831 = vmatpush.msra.mxu0 0.0
      %2832 = vmatpush.msra.mxu0 0.0
      %2833 = vmatpush.msra.mxu0 0.0
      %2834 = vmatpush.msra.mxu0 0.0
      %2835 = vmatpush.msra.mxu0 0.0
      %2836 = vmatpush.msra.mxu0 0.0
      %2837 = vmatpush.msra.mxu0 0.0
      %2838 = vmatpush.msra.mxu0 0.0
      %2839 = vmatpush.msra.mxu0 0.0
      %2840 = vmatpush.msra.mxu0 0.0
      %2841 = vmatpush.msra.mxu0 0.0
      %2842 = vmatpush.msra.mxu0 0.0
      %2843 = vmatpush.msra.mxu0 0.0
      %2844 = vmatpush.msra.mxu0 0.0
      %2845 = vmatpush.msra.mxu0 %v2828
      %2846 = vmatmul.f32.gmra.mxu0 %v2732
      %v2847 = vpop.f32.mrf.mxu0
      %v2848 = vadd.f32 0.0, %v2847
      %2849 = vmatmul.f32.gmra.mxu0 %v2735
      %v2850 = vpop.f32.mrf.mxu0
      %v2851 = vadd.f32 0.0, %v2850
      %2852 = vmatmul.f32.gmra.mxu0 %v2738
      %v2853 = vpop.f32.mrf.mxu0
      %v2854 = vadd.f32 0.0, %v2853
      %2855 = vmatmul.f32.gmra.mxu0 %v2741
      %v2856 = vpop.f32.mrf.mxu0
      %v2857 = vadd.f32 0.0, %v2856
      %2858 = vmatmul.f32.gmra.mxu0 %v2744
      %v2859 = vpop.f32.mrf.mxu0
      %v2860 = vadd.f32 0.0, %v2859
      %2861 = vmatmul.f32.gmra.mxu0 %v2747
      %v2862 = vpop.f32.mrf.mxu0
      %v2863 = vadd.f32 0.0, %v2862
      %2864 = vmatmul.f32.gmra.mxu0 %v2750
      %v2865 = vpop.f32.mrf.mxu0
      %v2866 = vadd.f32 0.0, %v2865
      %2867 = vmatmul.f32.gmra.mxu0 %v2753
      %v2868 = vpop.f32.mrf.mxu0
      %v2869 = vadd.f32 0.0, %v2868
      %2870 = vmatmul.f32.gmra.mxu0 %v2756
      %v2871 = vpop.f32.mrf.mxu0
      %v2872 = vadd.f32 0.0, %v2871
      %2873 = vmatmul.f32.gmra.mxu0 %v2759
      %v2874 = vpop.f32.mrf.mxu0
      %v2875 = vadd.f32 0.0, %v2874
      %2876 = vmatmul.f32.gmra.mxu0 %v2762
      %v2877 = vpop.f32.mrf.mxu0
      %v2878 = vadd.f32 0.0, %v2877
      %2879 = vmatmul.f32.gmra.mxu0 %v2765
      %v2880 = vpop.f32.mrf.mxu0
      %v2881 = vadd.f32 0.0, %v2880
      %2882 = vmatmul.f32.gmra.mxu0 %v2768
      %v2883 = vpop.f32.mrf.mxu0
      %v2884 = vadd.f32 0.0, %v2883
      %2885 = vmatmul.f32.gmra.mxu0 %v2771
      %v2886 = vpop.f32.mrf.mxu0
      %v2887 = vadd.f32 0.0, %v2886
      %2888 = vmatmul.f32.gmra.mxu0 %v2774
      %v2889 = vpop.f32.mrf.mxu0
      %v2890 = vadd.f32 0.0, %v2889
      %2891 = vmatmul.f32.gmra.mxu0 %v2777
      %v2892 = vpop.f32.mrf.mxu0
      %v2893 = vadd.f32 0.0, %v2892
      %2894 = vmatmul.f32.gmra.mxu0 %v2780
      %v2895 = vpop.f32.mrf.mxu0
      %v2896 = vadd.f32 0.0, %v2895
      %2897 = vmatmul.f32.gmra.mxu0 %v2783
      %v2898 = vpop.f32.mrf.mxu0
      %v2899 = vadd.f32 0.0, %v2898
      %2900 = vmatmul.f32.gmra.mxu0 %v2786
      %v2901 = vpop.f32.mrf.mxu0
      %v2902 = vadd.f32 0.0, %v2901
      %2903 = vmatmul.f32.gmra.mxu0 %v2789
      %v2904 = vpop.f32.mrf.mxu0
      %v2905 = vadd.f32 0.0, %v2904
      %2906 = vmatmul.f32.gmra.mxu0 %v2792
      %v2907 = vpop.f32.mrf.mxu0
      %v2908 = vadd.f32 0.0, %v2907
      %2909 = vmatmul.f32.gmra.mxu0 %v2795
      %v2910 = vpop.f32.mrf.mxu0
      %v2911 = vadd.f32 0.0, %v2910
      %2912 = vmatmul.f32.gmra.mxu0 %v2798
      %v2913 = vpop.f32.mrf.mxu0
      %v2914 = vadd.f32 0.0, %v2913
      %2915 = vmatmul.f32.gmra.mxu0 %v2801
      %v2916 = vpop.f32.mrf.mxu0
      %v2917 = vadd.f32 0.0, %v2916
      %2918 = vmatmul.f32.gmra.mxu0 %v2804
      %v2919 = vpop.f32.mrf.mxu0
      %v2920 = vadd.f32 0.0, %v2919
      %2921 = vmatmul.f32.gmra.mxu0 %v2807
      %v2922 = vpop.f32.mrf.mxu0
      %v2923 = vadd.f32 0.0, %v2922
      %2924 = vmatmul.f32.gmra.mxu0 %v2810
      %v2925 = vpop.f32.mrf.mxu0
      %v2926 = vadd.f32 0.0, %v2925
      %2927 = vmatmul.f32.gmra.mxu0 %v2813
      %v2928 = vpop.f32.mrf.mxu0
      %v2929 = vadd.f32 0.0, %v2928
      %2930 = vmatmul.f32.gmra.mxu0 %v2816
      %v2931 = vpop.f32.mrf.mxu0
      %v2932 = vadd.f32 0.0, %v2931
      %2933 = vmatmul.f32.gmra.mxu0 %v2819
      %v2934 = vpop.f32.mrf.mxu0
      %v2935 = vadd.f32 0.0, %v2934
      %2936 = vmatmul.f32.gmra.mxu0 %v2822
      %v2937 = vpop.f32.mrf.mxu0
      %v2938 = vadd.f32 0.0, %v2937
      %2939 = vmatmul.f32.gmra.mxu0 %v2825
      %v2940 = vpop.f32.mrf.mxu0
      %v2941 = vadd.f32 0.0, %v2940
      %2942 = vdwg.mxu0
      %v2943 = vadd.f32 %v2665, %v2848
      %v2944 = vadd.f32 %v2666, %v2851
      %v2945 = vadd.f32 %v2667, %v2854
      %v2946 = vadd.f32 %v2668, %v2857
      %v2947 = vadd.f32 %v2669, %v2860
      %v2948 = vadd.f32 %v2670, %v2863
      %v2949 = vadd.f32 %v2671, %v2866
      %v2950 = vadd.f32 %v2672, %v2869
      %v2951 = vadd.f32 %v2673, %v2872
      %v2952 = vadd.f32 %v2674, %v2875
      %v2953 = vadd.f32 %v2675, %v2878
      %v2954 = vadd.f32 %v2676, %v2881
      %v2955 = vadd.f32 %v2677, %v2884
      %v2956 = vadd.f32 %v2678, %v2887
      %v2957 = vadd.f32 %v2679, %v2890
      %v2958 = vadd.f32 %v2680, %v2893
      %v2959 = vadd.f32 %v2681, %v2896
      %v2960 = vadd.f32 %v2682, %v2899
      %v2961 = vadd.f32 %v2683, %v2902
      %v2962 = vadd.f32 %v2684, %v2905
      %v2963 = vadd.f32 %v2685, %v2908
      %v2964 = vadd.f32 %v2686, %v2911
      %v2965 = vadd.f32 %v2687, %v2914
      %v2966 = vadd.f32 %v2688, %v2917
      %v2967 = vadd.f32 %v2689, %v2920
      %v2968 = vadd.f32 %v2690, %v2923
      %v2969 = vadd.f32 %v2691, %v2926
      %v2970 = vadd.f32 %v2692, %v2929
      %v2971 = vadd.f32 %v2693, %v2932
      %v2972 = vadd.f32 %v2694, %v2935
      %v2973 = vadd.f32 %v2695, %v2938
      %v2974 = vadd.f32 %v2696, %v2941
      %vm2975 = vcmask 64512
      %2976 = vst.msk [vmem:[%s403] sm:$0xff] %vm2975, %v2943
      %2977 = vst.msk [vmem:[%s403 + $0x8] sm:$0xff] %vm2975, %v2944
      %2978 = vst.msk [vmem:[%s403 + $0x10] sm:$0xff] %vm2975, %v2945
      %2979 = vst.msk [vmem:[%s403 + $0x18] sm:$0xff] %vm2975, %v2946
      %2980 = vst.msk [vmem:[%s403 + $0x20] sm:$0xff] %vm2975, %v2947
      %2981 = vst.msk [vmem:[%s403 + $0x28] sm:$0xff] %vm2975, %v2948
      %2982 = vst.msk [vmem:[%s403 + $0x30] sm:$0xff] %vm2975, %v2949
      %2983 = vst.msk [vmem:[%s403 + $0x38] sm:$0xff] %vm2975, %v2950
      %2984 = vst.msk [vmem:[%s403 + $0x40] sm:$0xff] %vm2975, %v2951
      %2985 = vst.msk [vmem:[%s403 + $0x48] sm:$0xff] %vm2975, %v2952
      %2986 = vst.msk [vmem:[%s403 + $0x50] sm:$0xff] %vm2975, %v2953
      %2987 = vst.msk [vmem:[%s403 + $0x58] sm:$0xff] %vm2975, %v2954
      %2988 = vst.msk [vmem:[%s403 + $0x60] sm:$0xff] %vm2975, %v2955
      %2989 = vst.msk [vmem:[%s403 + $0x68] sm:$0xff] %vm2975, %v2956
      %2990 = vst.msk [vmem:[%s403 + $0x70] sm:$0xff] %vm2975, %v2957
      %2991 = vst.msk [vmem:[%s403 + $0x78] sm:$0xff] %vm2975, %v2958
      %2992 = vst.msk [vmem:[%s403 + $0x80] sm:$0xff] %vm2975, %v2959
      %2993 = vst.msk [vmem:[%s403 + $0x88] sm:$0xff] %vm2975, %v2960
      %2994 = vst.msk [vmem:[%s403 + $0x90] sm:$0xff] %vm2975, %v2961
      %2995 = vst.msk [vmem:[%s403 + $0x98] sm:$0xff] %vm2975, %v2962
      %2996 = vst.msk [vmem:[%s403 + $0xa0] sm:$0xff] %vm2975, %v2963
      %2997 = vst.msk [vmem:[%s403 + $0xa8] sm:$0xff] %vm2975, %v2964
      %2998 = vst.msk [vmem:[%s403 + $0xb0] sm:$0xff] %vm2975, %v2965
      %2999 = vst.msk [vmem:[%s403 + $0xb8] sm:$0xff] %vm2975, %v2966
      %3000 = vst.msk [vmem:[%s403 + $0xc0] sm:$0xff] %vm2975, %v2967
      %3001 = vst.msk [vmem:[%s403 + $0xc8] sm:$0xff] %vm2975, %v2968
      %3002 = vst.msk [vmem:[%s403 + $0xd0] sm:$0xff] %vm2975, %v2969
      %3003 = vst.msk [vmem:[%s403 + $0xd8] sm:$0xff] %vm2975, %v2970
      %3004 = vst.msk [vmem:[%s403 + $0xe0] sm:$0xff] %vm2975, %v2971
      %3005 = vst.msk [vmem:[%s403 + $0xe8] sm:$0xff] %vm2975, %v2972
      %3006 = vst.msk [vmem:[%s403 + $0xf0] sm:$0xff] %vm2975, %v2973
      %3007 = vst.msk [vmem:[%s403 + $0xf8] sm:$0xff] %vm2975, %v2974
      %v3008 = vsel %vm2975, %v2943, 0.0
      %v3009 = vsel %vm2975, %v2944, 0.0
      %v3010 = vadd.f32 %v3008, %v3009
      %v3011 = vsel %vm2975, %v2945, 0.0
      %v3012 = vadd.f32 %v3010, %v3011
      %v3013 = vsel %vm2975, %v2946, 0.0
      %v3014 = vadd.f32 %v3012, %v3013
      %v3015 = vsel %vm2975, %v2947, 0.0
      %v3016 = vadd.f32 %v3014, %v3015
      %v3017 = vsel %vm2975, %v2948, 0.0
      %v3018 = vadd.f32 %v3016, %v3017
      %v3019 = vsel %vm2975, %v2949, 0.0
      %v3020 = vadd.f32 %v3018, %v3019
      %v3021 = vsel %vm2975, %v2950, 0.0
      %v3022 = vadd.f32 %v3020, %v3021
      %v3023 = vsel %vm2975, %v2951, 0.0
      %v3024 = vadd.f32 %v3022, %v3023
      %v3025 = vsel %vm2975, %v2952, 0.0
      %v3026 = vadd.f32 %v3024, %v3025
      %v3027 = vsel %vm2975, %v2953, 0.0
      %v3028 = vadd.f32 %v3026, %v3027
      %v3029 = vsel %vm2975, %v2954, 0.0
      %v3030 = vadd.f32 %v3028, %v3029
      %v3031 = vsel %vm2975, %v2955, 0.0
      %v3032 = vadd.f32 %v3030, %v3031
      %v3033 = vsel %vm2975, %v2956, 0.0
      %v3034 = vadd.f32 %v3032, %v3033
      %v3035 = vsel %vm2975, %v2957, 0.0
      %v3036 = vadd.f32 %v3034, %v3035
      %v3037 = vsel %vm2975, %v2958, 0.0
      %v3038 = vadd.f32 %v3036, %v3037
      %v3039 = vsel %vm2975, %v2959, 0.0
      %v3040 = vadd.f32 %v3038, %v3039
      %v3041 = vsel %vm2975, %v2960, 0.0
      %v3042 = vadd.f32 %v3040, %v3041
      %v3043 = vsel %vm2975, %v2961, 0.0
      %v3044 = vadd.f32 %v3042, %v3043
      %v3045 = vsel %vm2975, %v2962, 0.0
      %v3046 = vadd.f32 %v3044, %v3045
      %v3047 = vsel %vm2975, %v2963, 0.0
      %v3048 = vadd.f32 %v3046, %v3047
      %v3049 = vsel %vm2975, %v2964, 0.0
      %v3050 = vadd.f32 %v3048, %v3049
      %v3051 = vsel %vm2975, %v2965, 0.0
      %v3052 = vadd.f32 %v3050, %v3051
      %v3053 = vsel %vm2975, %v2966, 0.0
      %v3054 = vadd.f32 %v3052, %v3053
      %v3055 = vsel %vm2975, %v2967, 0.0
      %v3056 = vadd.f32 %v3054, %v3055
      %v3057 = vsel %vm2975, %v2968, 0.0
      %v3058 = vadd.f32 %v3056, %v3057
      %v3059 = vsel %vm2975, %v2969, 0.0
      %v3060 = vadd.f32 %v3058, %v3059
      %v3061 = vsel %vm2975, %v2970, 0.0
      %v3062 = vadd.f32 %v3060, %v3061
      %v3063 = vsel %vm2975, %v2971, 0.0
      %v3064 = vadd.f32 %v3062, %v3063
      %v3065 = vsel %vm2975, %v2972, 0.0
      %v3066 = vadd.f32 %v3064, %v3065
      %v3067 = vsel %vm2975, %v2973, 0.0
      %v3068 = vadd.f32 %v3066, %v3067
      %v3069 = vsel %vm2975, %v2974, 0.0
      %v3070 = vadd.f32 %v3068, %v3069
      %v3071 = vrot.slane %v3070, 4
      %v3072 = vadd.f32 %v3070, %v3071
      %v3073 = vrot.slane %v3072, 2
      %v3074 = vadd.f32 %v3072, %v3073
      %v3075 = vrot.slane %v3074, 1
      %v3076 = vadd.f32 %v3074, %v3075
      %v3077 = vmul.f32 %v3076, 0.00390625
      %v3078 = vsub.f32 %v2943, %v3077
      %v3079 = vsub.f32 %v2944, %v3077
      %v3080 = vsub.f32 %v2945, %v3077
      %v3081 = vsub.f32 %v2946, %v3077
      %v3082 = vsub.f32 %v2947, %v3077
      %v3083 = vsub.f32 %v2948, %v3077
      %v3084 = vsub.f32 %v2949, %v3077
      %v3085 = vsub.f32 %v2950, %v3077
      %v3086 = vsub.f32 %v2951, %v3077
      %v3087 = vsub.f32 %v2952, %v3077
      %v3088 = vsub.f32 %v2953, %v3077
      %v3089 = vsub.f32 %v2954, %v3077
      %v3090 = vsub.f32 %v2955, %v3077
      %v3091 = vsub.f32 %v2956, %v3077
      %v3092 = vsub.f32 %v2957, %v3077
      %v3093 = vsub.f32 %v2958, %v3077
      %v3094 = vsub.f32 %v2959, %v3077
      %v3095 = vsub.f32 %v2960, %v3077
      %v3096 = vsub.f32 %v2961, %v3077
      %v3097 = vsub.f32 %v2962, %v3077
      %v3098 = vsub.f32 %v2963, %v3077
      %v3099 = vsub.f32 %v2964, %v3077
      %v3100 = vsub.f32 %v2965, %v3077
      %v3101 = vsub.f32 %v2966, %v3077
      %v3102 = vsub.f32 %v2967, %v3077
      %v3103 = vsub.f32 %v2968, %v3077
      %v3104 = vsub.f32 %v2969, %v3077
      %v3105 = vsub.f32 %v2970, %v3077
      %v3106 = vsub.f32 %v2971, %v3077
      %v3107 = vsub.f32 %v2972, %v3077
      %v3108 = vsub.f32 %v2973, %v3077
      %v3109 = vsub.f32 %v2974, %v3077
      %v3110 = vmul.f32 %v3078, %v3078
      %v3111 = vmul.f32 %v3079, %v3079
      %v3112 = vmul.f32 %v3080, %v3080
      %v3113 = vmul.f32 %v3081, %v3081
      %v3114 = vmul.f32 %v3082, %v3082
      %v3115 = vmul.f32 %v3083, %v3083
      %v3116 = vmul.f32 %v3084, %v3084
      %v3117 = vmul.f32 %v3085, %v3085
      %v3118 = vmul.f32 %v3086, %v3086
      %v3119 = vmul.f32 %v3087, %v3087
      %v3120 = vmul.f32 %v3088, %v3088
      %v3121 = vmul.f32 %v3089, %v3089
      %v3122 = vmul.f32 %v3090, %v3090
      %v3123 = vmul.f32 %v3091, %v3091
      %v3124 = vmul.f32 %v3092, %v3092
      %v3125 = vmul.f32 %v3093, %v3093
      %v3126 = vmul.f32 %v3094, %v3094
      %v3127 = vmul.f32 %v3095, %v3095
      %v3128 = vmul.f32 %v3096, %v3096
      %v3129 = vmul.f32 %v3097, %v3097
      %v3130 = vmul.f32 %v3098, %v3098
      %v3131 = vmul.f32 %v3099, %v3099
      %v3132 = vmul.f32 %v3100, %v3100
      %v3133 = vmul.f32 %v3101, %v3101
      %v3134 = vmul.f32 %v3102, %v3102
      %v3135 = vmul.f32 %v3103, %v3103
      %v3136 = vmul.f32 %v3104, %v3104
      %v3137 = vmul.f32 %v3105, %v3105
      %v3138 = vmul.f32 %v3106, %v3106
      %v3139 = vmul.f32 %v3107, %v3107
      %v3140 = vmul.f32 %v3108, %v3108
      %v3141 = vmul.f32 %v3109, %v3109
      %v3142 = vsel %vm2975, %v3110, 0.0
      %v3143 = vsel %vm2975, %v3111, 0.0
      %v3144 = vadd.f32 %v3142, %v3143
      %v3145 = vsel %vm2975, %v3112, 0.0
      %v3146 = vadd.f32 %v3144, %v3145
      %v3147 = vsel %vm2975, %v3113, 0.0
      %v3148 = vadd.f32 %v3146, %v3147
      %v3149 = vsel %vm2975, %v3114, 0.0
      %v3150 = vadd.f32 %v3148, %v3149
      %v3151 = vsel %vm2975, %v3115, 0.0
      %v3152 = vadd.f32 %v3150, %v3151
      %v3153 = vsel %vm2975, %v3116, 0.0
      %v3154 = vadd.f32 %v3152, %v3153
      %v3155 = vsel %vm2975, %v3117, 0.0
      %v3156 = vadd.f32 %v3154, %v3155
      %v3157 = vsel %vm2975, %v3118, 0.0
      %v3158 = vadd.f32 %v3156, %v3157
      %v3159 = vsel %vm2975, %v3119, 0.0
      %v3160 = vadd.f32 %v3158, %v3159
      %v3161 = vsel %vm2975, %v3120, 0.0
      %v3162 = vadd.f32 %v3160, %v3161
      %v3163 = vsel %vm2975, %v3121, 0.0
      %v3164 = vadd.f32 %v3162, %v3163
      %v3165 = vsel %vm2975, %v3122, 0.0
      %v3166 = vadd.f32 %v3164, %v3165
      %v3167 = vsel %vm2975, %v3123, 0.0
      %v3168 = vadd.f32 %v3166, %v3167
      %v3169 = vsel %vm2975, %v3124, 0.0
      %v3170 = vadd.f32 %v3168, %v3169
      %v3171 = vsel %vm2975, %v3125, 0.0
      %v3172 = vadd.f32 %v3170, %v3171
      %v3173 = vsel %vm2975, %v3126, 0.0
      %v3174 = vadd.f32 %v3172, %v3173
      %v3175 = vsel %vm2975, %v3127, 0.0
      %v3176 = vadd.f32 %v3174, %v3175
      %v3177 = vsel %vm2975, %v3128, 0.0
      %v3178 = vadd.f32 %v3176, %v3177
      %v3179 = vsel %vm2975, %v3129, 0.0
      %v3180 = vadd.f32 %v3178, %v3179
      %v3181 = vsel %vm2975, %v3130, 0.0
      %v3182 = vadd.f32 %v3180, %v3181
      %v3183 = vsel %vm2975, %v3131, 0.0
      %v3184 = vadd.f32 %v3182, %v3183
      %v3185 = vsel %vm2975, %v3132, 0.0
      %v3186 = vadd.f32 %v3184, %v3185
      %v3187 = vsel %vm2975, %v3133, 0.0
      %v3188 = vadd.f32 %v3186, %v3187
      %v3189 = vsel %vm2975, %v3134, 0.0
      %v3190 = vadd.f32 %v3188, %v3189
      %v3191 = vsel %vm2975, %v3135, 0.0
      %v3192 = vadd.f32 %v3190, %v3191
      %v3193 = vsel %vm2975, %v3136, 0.0
      %v3194 = vadd.f32 %v3192, %v3193
      %v3195 = vsel %vm2975, %v3137, 0.0
      %v3196 = vadd.f32 %v3194, %v3195
      %v3197 = vsel %vm2975, %v3138, 0.0
      %v3198 = vadd.f32 %v3196, %v3197
      %v3199 = vsel %vm2975, %v3139, 0.0
      %v3200 = vadd.f32 %v3198, %v3199
      %v3201 = vsel %vm2975, %v3140, 0.0
      %v3202 = vadd.f32 %v3200, %v3201
      %v3203 = vsel %vm2975, %v3141, 0.0
      %v3204 = vadd.f32 %v3202, %v3203
      %v3205 = vrot.slane %v3204, 4
      %v3206 = vadd.f32 %v3204, %v3205
      %v3207 = vrot.slane %v3206, 2
      %v3208 = vadd.f32 %v3206, %v3207
      %v3209 = vrot.slane %v3208, 1
      %v3210 = vadd.f32 %v3208, %v3209
      %vm3211 = vcmask 1040384
      %v3212 = vsel %vm3211, %v3076, %v3210
      %vm3213 = vcmask 58368
      %3214 = vst.msk [vmem:[%s411] sm:$0x3] %vm3213, %v3212
      %s3215 = smul.u32 16, %s22
      %p3216 = scmp.lt.s32.totalorder %s21, 1
      %s3217 = scalar_select %p3216, %s21, 1
      %p3218 = scmp.lt.s32.totalorder %s3215, 15
      %s3219 = scalar_select %p3218, %s3215, 15
      %s3220 = smul.addr %s3219, 2
      %s3221 = smul.addr %s3217, 32
      %s3222 = sadd.s32 %s3220, %s3221
      %s3223 = smul.addr %s3222, 8
      %s3224 = scalar_lea.vmem %s4, %s3223
      %p3225 = scmp.lt.s32.totalorder %s21, 1
      %s3226 = scalar_select %p3225, %s21, 1
      %p3227 = scmp.lt.s32.totalorder %s22, 0
      %s3228 = scalar_select %p3227, %s22, 0
      %s3229 = sadd.s32 %s3228, %s3226
      %s3230 = smul.addr %s3229, 2
      %s3231 = scalar_lea.vmem %s5, %s3230
      // Predicated region
      $region37: #{double_conv.3} parent=35 // pred_check
        %p3232 = pneg %p170
      $region38: #{double_conv.3} parent=35 // pred_check_branch
        %3234 = sbr.rel (%p3232) target = $region40
      $region39: #{double_conv.3} parent=35 // pred_region
        %s3235 = smul.u32 16, %s22
      $region40: #{double_conv.3} parent=35 // pred_fallthru
        _
      // Predicated region
      $region41: #{double_conv.3} parent=35 // pred_check
        %p3236 = pneg %p198
      $region42: #{double_conv.3} parent=35 // pred_check_branch
        %3238 = sbr.rel (%p3236) target = $region44
      $region43: #{double_conv.3} parent=35 // pred_region
        _
      $region44: #{double_conv.3} parent=35 // pred_fallthru
        _
    $region36: #{double_conv.3} parent=5 // pred_fallthru
      _
    %p3239 = scmp.le.s32.totalorder 2, %s12
    // Predicated region
    $region45: #{double_conv.3} parent=5 // pred_check
      %p3240 = pneg %p3239
    $region46: #{double_conv.3} parent=5 // pred_check_branch
      %3242 = sbr.rel (%p3240) target = $region48
    $region47: #{double_conv.3} parent=5 // pred_region
      %s3243 = ssub.s32 %s12, 2
      // Predicated region
      $region49: #{double_conv.3} parent=47 // pred_check
        %p3244 = pneg %p176
      $region50: #{double_conv.3} parent=47 // pred_check_branch
        %3246 = sbr.rel (%p3244) target = $region52
      $region51: #{double_conv.3} parent=47 // pred_region
        %s3247 = smul.u32 16, %s24
        %p3248 = scmp.lt.s32.totalorder %s23, 1
        %s3249 = scalar_select %p3248, %s23, 1
        %p3250 = scmp.lt.s32.totalorder %s3247, 15
        %s3251 = scalar_select %p3250, %s3247, 15
        %s3252 = smul.addr %s3251, 2
        %s3253 = smul.addr %s3249, 32
        %s3254 = sadd.s32 %s3252, %s3253
        %s3255 = smul.addr %s3254, 8
        %s3256 = scalar_lea.vmem %s4, %s3255
      $region52: #{double_conv.3} parent=47 // pred_fallthru
        _
      // Predicated region
      $region53: #{double_conv.3} parent=47 // pred_check
        %p3257 = pneg %p204
      $region54: #{double_conv.3} parent=47 // pred_check_branch
        %3259 = sbr.rel (%p3257) target = $region56
      $region55: #{double_conv.3} parent=47 // pred_region
        %p3260 = scmp.lt.s32.totalorder %s23, 1
        %s3261 = scalar_select %p3260, %s23, 1
        %p3262 = scmp.lt.s32.totalorder %s24, 0
        %s3263 = scalar_select %p3262, %s24, 0
        %s3264 = sadd.s32 %s3263, %s3261
        %s3265 = smul.addr %s3264, 2
        %s3266 = scalar_lea.vmem %s5, %s3265
      $region56: #{double_conv.3} parent=47 // pred_fallthru
        _
    $region48: #{double_conv.3} parent=5 // pred_fallthru
      _
  $region6: #{double_conv.3} parent=0 // loop_footer
    %s16 = sadd.s32 1, %s12
  $region7: #{double_conv.3} parent=0 // loop_footer_branch
    %11 = sbr.rel target = $region3
  $region8: #{double_conv.3} parent=0 // loop_exit
    _

// kernel: double_conv.4
$region0: #{double_conv.4}
  #allocation0 [shape = 'u32[]', space=smem, size = 0x4, offset = 0x4, fixed_abs, tag = 'smem constant byte address 0x4 - core index']
  #allocation1 [shape = 'u32[72,128]{1,0:T(1,128)}', space=vmem, size = 0x9000, scoped, tag = 'internal scratch']
  #allocation2 [shape = 'f32[18,18,8]{2,1,0:T(8,128)}', space=vmem, size = 0x36000, scoped, tag = 'scratch operand']
  %s0 = inlined_call_operand.vmem [shape: f32[2,16,16,8], index: 0, kind: input, shape index: {}, may-alias: {0,1,2}]
  %s1 = inlined_call_operand.vmem [shape: f32[2,16,16,8], index: 1, kind: input, shape index: {}, may-alias: {0,1,2}]
  %s2 = inlined_call_operand.vmem [shape: f32[2,16,16,8], index: 2, kind: input, shape index: {}, may-alias: {0,1,2}]
  %s3 = inlined_call_operand.vmem [shape: f32[1,8], index: 3, kind: input, shape index: {}]
  %s4 = inlined_call_operand.vmem [shape: f32[1,8], index: 4, kind: input, shape index: {}]
  %s5 = inlined_call_operand.vmem [shape: f32[9,8,8], index: 5, kind: input, shape index: {}]
  %s6 = inlined_call_operand.vmem [shape: f32[2,16,16,8], index: 6, kind: output, shape index: {0}]
  %s7 = inlined_call_operand.vmem [shape: f32[2,1,2,8], index: 7, kind: output, shape index: {1}]
  %8 = xla_tuple %s6, %s7
  %s9 = sld [smem:[#allocation0]]
  $region65: #{double_conv.4} parent=0
    _
  %s11 = ssub.s32 1, %s9
  %s12 = scalar_select 0, %s11, %s9
  loop: start=0, step=1, limit=4
  $region2: #{double_conv.4} parent=0 // loop_pre_header
    _
  $region3: #{double_conv.4} parent=0 // loop_header
    %s14 = sphi 0, %s18
    %p15 = scmp.ge.s32.totalorder %s14, 4
    %s21 = sphi 0, %s33
    %s22 = sphi 0, %s29
    %s23 = sphi 0, %s21
    %s24 = sphi 0, %s22
    %s25 = sphi 0, %s23
    %s26 = sphi 0, %s24
    %s46 = sphi 0, %s48
    %s49 = sphi 0, %s46
    %s50 = sphi 0, %s49
    %s66 = sphi 0, %s50
    %s74 = sphi 0, %s76
    %s77 = sphi 0, %s74
    %s78 = sphi 0, %s77
    %s94 = sphi 0, %s78
    %s110 = sphi 0, %s112
    %s113 = sphi 0, %s110
    %s114 = sphi 0, %s113
    %s130 = sphi 0, %s114
    %s134 = sphi 0, %s134
    %s136 = sphi 0, %s134
    %s137 = sphi 0, %s136
    %s151 = sphi 0, %s137
    %s155 = sphi 0, %s155
    %s157 = sphi 0, %s155
    %s158 = sphi 0, %s157
    %s172 = sphi 0, %s158
    %s176 = sphi 0, %s176
    %s178 = sphi 0, %s176
    %s179 = sphi 0, %s178
    %s193 = sphi 0, %s179
    %s201 = sphi 0, %s203
    %s204 = sphi 0, %s201
    %s205 = sphi 0, %s204
    %s221 = sphi 0, %s205
    %s229 = sphi 0, %s231
    %s232 = sphi 0, %s229
    %s233 = sphi 0, %s232
    %s249 = sphi 0, %s233
  $region4: #{double_conv.4} parent=0 // loop_header_branch
    %17 = sbr.rel (%p15) target = $region8
  $region5: #{double_conv.4} parent=0 // loop_body
    %s19 = ssub.s32 %s14, 1
    %s20 = ssub.s32 %s14, 2
    %s27 = sadd.s32 1, %s22
    %p28 = scmp.ge.s32.totalorder %s27, 1
    %s29 = scalar_select %p28, 0, %s27
    %s30 = sadd.s32 1, %s21
    %s31 = scalar_select %p28, %s30, %s21
    %p32 = scmp.ge.s32.totalorder %s31, 2
    %s33 = scalar_select %p32, 0, %s31
    %s34 = smul.u32 %s22, 16
    %s35 = ssub.s32 %s34, 1
    %p36 = scmp.gt.s32.totalorder %s35, 0
    %s37 = scalar_select %p36, %s35, 0
    %s38 = smul.u32 %s29, 16
    %s39 = ssub.s32 %s38, 1
    %p40 = scmp.gt.s32.totalorder %s39, 0
    %s41 = scalar_select %p40, %s39, 0
    %s42 = ssub.s32 %s21, %s33
    %s43 = ssub.s32 %s37, %s41
    %s44 = sor.u32 %s42, %s43
    %p45 = scmp.eq.s32.totalorder %s44, 0
    %s47 = sadd.s32 %s46, 1
    %s48 = scalar_select %p45, %s46, %s47
    %p51 = pneg %p45
    %p52 = scmp.eq.s32.totalorder %s14, 1
    %p53 = por %p51, %p52
    %p54 = scmp.ne.s32.totalorder %s46, %s49
    %p55 = scmp.eq.s32.totalorder %s14, 0
    %p56 = por %p54, %p55
    %p57 = scmp.ne.s32.totalorder %s46, %s49
    %p58 = scmp.eq.s32.totalorder %s19, 1
    %p59 = por %p57, %p58
    %p60 = scmp.ne.s32.totalorder %s49, %s50
    %p61 = scmp.eq.s32.totalorder %s19, 0
    %p62 = por %p60, %p61
    %p63 = scmp.ne.s32.totalorder %s49, %s50
    %p64 = scmp.eq.s32.totalorder %s20, 1
    %p65 = por %p63, %p64
    %p67 = scmp.ne.s32.totalorder %s50, %s66
    %p68 = scmp.eq.s32.totalorder %s20, 0
    %p69 = por %p67, %p68
    %s70 = ssub.s32 %s21, %s33
    %s71 = ssub.s32 %s22, %s29
    %s72 = sor.u32 %s70, %s71
    %p73 = scmp.eq.s32.totalorder %s72, 0
    %s75 = sadd.s32 %s74, 1
    %s76 = scalar_select %p73, %s74, %s75
    %p79 = pneg %p73
    %p80 = scmp.eq.s32.totalorder %s14, 1
    %p81 = por %p79, %p80
    %p82 = scmp.ne.s32.totalorder %s74, %s77
    %p83 = scmp.eq.s32.totalorder %s14, 0
    %p84 = por %p82, %p83
    %p85 = scmp.ne.s32.totalorder %s74, %s77
    %p86 = scmp.eq.s32.totalorder %s19, 1
    %p87 = por %p85, %p86
    %p88 = scmp.ne.s32.totalorder %s77, %s78
    %p89 = scmp.eq.s32.totalorder %s19, 0
    %p90 = por %p88, %p89
    %p91 = scmp.ne.s32.totalorder %s77, %s78
    %p92 = scmp.eq.s32.totalorder %s20, 1
    %p93 = por %p91, %p92
    %p95 = scmp.ne.s32.totalorder %s78, %s94
    %p96 = scmp.eq.s32.totalorder %s20, 0
    %p97 = por %p95, %p96
    %s98 = smul.u32 %s22, 16
    %s99 = sadd.s32 %s98, 16
    %p100 = scmp.lt.s32.totalorder %s99, 15
    %s101 = scalar_select %p100, %s99, 15
    %s102 = smul.u32 %s29, 16
    %s103 = sadd.s32 %s102, 16
    %p104 = scmp.lt.s32.totalorder %s103, 15
    %s105 = scalar_select %p104, %s103, 15
    %s106 = ssub.s32 %s21, %s33
    %s107 = ssub.s32 %s101, %s105
    %s108 = sor.u32 %s106, %s107
    %p109 = scmp.eq.s32.totalorder %s108, 0
    %s111 = sadd.s32 %s110, 1
    %s112 = scalar_select %p109, %s110, %s111
    %p115 = pneg %p109
    %p116 = scmp.eq.s32.totalorder %s14, 1
    %p117 = por %p115, %p116
    %p118 = scmp.ne.s32.totalorder %s110, %s113
    %p119 = scmp.eq.s32.totalorder %s14, 0
    %p120 = por %p118, %p119
    %p121 = scmp.ne.s32.totalorder %s110, %s113
    %p122 = scmp.eq.s32.totalorder %s19, 1
    %p123 = por %p121, %p122
    %p124 = scmp.ne.s32.totalorder %s113, %s114
    %p125 = scmp.eq.s32.totalorder %s19, 0
    %p126 = por %p124, %p125
    %p127 = scmp.ne.s32.totalorder %s113, %s114
    %p128 = scmp.eq.s32.totalorder %s20, 1
    %p129 = por %p127, %p128
    %p131 = scmp.ne.s32.totalorder %s114, %s130
    %p132 = scmp.eq.s32.totalorder %s20, 0
    %p133 = por %p131, %p132
    %s135 = sadd.s32 %s134, 1
    %p138 = scmp.eq.s32.totalorder %s14, 1
    %p139 = scmp.ne.s32.totalorder %s134, %s136
    %p140 = scmp.eq.s32.totalorder %s14, 0
    %p141 = por %p139, %p140
    %p142 = scmp.ne.s32.totalorder %s134, %s136
    %p143 = scmp.eq.s32.totalorder %s19, 1
    %p144 = por %p142, %p143
    %p145 = scmp.ne.s32.totalorder %s136, %s137
    %p146 = scmp.eq.s32.totalorder %s19, 0
    %p147 = por %p145, %p146
    %p148 = scmp.ne.s32.totalorder %s136, %s137
    %p149 = scmp.eq.s32.totalorder %s20, 1
    %p150 = por %p148, %p149
    %p152 = scmp.ne.s32.totalorder %s137, %s151
    %p153 = scmp.eq.s32.totalorder %s20, 0
    %p154 = por %p152, %p153
    %s156 = sadd.s32 %s155, 1
    %p159 = scmp.eq.s32.totalorder %s14, 1
    %p160 = scmp.ne.s32.totalorder %s155, %s157
    %p161 = scmp.eq.s32.totalorder %s14, 0
    %p162 = por %p160, %p161
    %p163 = scmp.ne.s32.totalorder %s155, %s157
    %p164 = scmp.eq.s32.totalorder %s19, 1
    %p165 = por %p163, %p164
    %p166 = scmp.ne.s32.totalorder %s157, %s158
    %p167 = scmp.eq.s32.totalorder %s19, 0
    %p168 = por %p166, %p167
    %p169 = scmp.ne.s32.totalorder %s157, %s158
    %p170 = scmp.eq.s32.totalorder %s20, 1
    %p171 = por %p169, %p170
    %p173 = scmp.ne.s32.totalorder %s158, %s172
    %p174 = scmp.eq.s32.totalorder %s20, 0
    %p175 = por %p173, %p174
    %s177 = sadd.s32 %s176, 1
    %p180 = scmp.eq.s32.totalorder %s14, 1
    %p181 = scmp.ne.s32.totalorder %s176, %s178
    %p182 = scmp.eq.s32.totalorder %s14, 0
    %p183 = por %p181, %p182
    %p184 = scmp.ne.s32.totalorder %s176, %s178
    %p185 = scmp.eq.s32.totalorder %s19, 1
    %p186 = por %p184, %p185
    %p187 = scmp.ne.s32.totalorder %s178, %s179
    %p188 = scmp.eq.s32.totalorder %s19, 0
    %p189 = por %p187, %p188
    %p190 = scmp.ne.s32.totalorder %s178, %s179
    %p191 = scmp.eq.s32.totalorder %s20, 1
    %p192 = por %p190, %p191
    %p194 = scmp.ne.s32.totalorder %s179, %s193
    %p195 = scmp.eq.s32.totalorder %s20, 0
    %p196 = por %p194, %p195
    %s197 = ssub.s32 %s21, %s33
    %s198 = ssub.s32 %s22, %s29
    %s199 = sor.u32 %s197, %s198
    %p200 = scmp.eq.s32.totalorder %s199, 0
    %s202 = sadd.s32 %s201, 1
    %s203 = scalar_select %p200, %s201, %s202
    %p206 = pneg %p200
    %p207 = scmp.eq.s32.totalorder %s14, 1
    %p208 = por %p206, %p207
    %p209 = scmp.ne.s32.totalorder %s201, %s204
    %p210 = scmp.eq.s32.totalorder %s14, 0
    %p211 = por %p209, %p210
    %p212 = scmp.ne.s32.totalorder %s201, %s204
    %p213 = scmp.eq.s32.totalorder %s19, 1
    %p214 = por %p212, %p213
    %p215 = scmp.ne.s32.totalorder %s204, %s205
    %p216 = scmp.eq.s32.totalorder %s19, 0
    %p217 = por %p215, %p216
    %p218 = scmp.ne.s32.totalorder %s204, %s205
    %p219 = scmp.eq.s32.totalorder %s20, 1
    %p220 = por %p218, %p219
    %p222 = scmp.ne.s32.totalorder %s205, %s221
    %p223 = scmp.eq.s32.totalorder %s20, 0
    %p224 = por %p222, %p223
    %s225 = ssub.s32 %s21, %s33
    %s226 = ssub.s32 %s22, %s29
    %s227 = sor.u32 %s225, %s226
    %p228 = scmp.eq.s32.totalorder %s227, 0
    %s230 = sadd.s32 %s229, 1
    %s231 = scalar_select %p228, %s229, %s230
    %p234 = pneg %p228
    %p235 = scmp.eq.s32.totalorder %s14, 1
    %p236 = por %p234, %p235
    %p237 = scmp.ne.s32.totalorder %s229, %s232
    %p238 = scmp.eq.s32.totalorder %s14, 0
    %p239 = por %p237, %p238
    %p240 = scmp.ne.s32.totalorder %s229, %s232
    %p241 = scmp.eq.s32.totalorder %s19, 1
    %p242 = por %p240, %p241
    %p243 = scmp.ne.s32.totalorder %s232, %s233
    %p244 = scmp.eq.s32.totalorder %s19, 0
    %p245 = por %p243, %p244
    %p246 = scmp.ne.s32.totalorder %s232, %s233
    %p247 = scmp.eq.s32.totalorder %s20, 1
    %p248 = por %p246, %p247
    %p250 = scmp.ne.s32.totalorder %s233, %s249
    %p251 = scmp.eq.s32.totalorder %s20, 0
    %p252 = por %p250, %p251
    %p253 = scmp.le.s32.totalorder 1, %s14
    %p254 = scmp.lt.s32.totalorder %s14, 3
    %p255 = pnand %p253, %p254
    %p256 = pneg %p255
    // Predicated region
    $region9: #{double_conv.4} parent=5 // pred_check
      _
    $region10: #{double_conv.4} parent=5 // pred_check_branch
      %258 = sbr.rel (%p255) target = $region12
    $region11: #{double_conv.4} parent=5 // pred_region
      %s259 = ssub.s32 %s14, 1
      // Predicated region
      $region13: #{double_conv.4} parent=11 // pred_check
        %p260 = pneg %p147
      $region14: #{double_conv.4} parent=11 // pred_check_branch
        %262 = sbr.rel (%p260) target = $region16
      $region15: #{double_conv.4} parent=11 // pred_region
        _
      $region16: #{double_conv.4} parent=11 // pred_fallthru
        _
      // Predicated region
      $region17: #{double_conv.4} parent=11 // pred_check
        %p263 = pneg %p168
      $region18: #{double_conv.4} parent=11 // pred_check_branch
        %265 = sbr.rel (%p263) target = $region20
      $region19: #{double_conv.4} parent=11 // pred_region
        _
      $region20: #{double_conv.4} parent=11 // pred_fallthru
        _
      // Predicated region
      $region21: #{double_conv.4} parent=11 // pred_check
        %p266 = pneg %p189
      $region22: #{double_conv.4} parent=11 // pred_check_branch
        %268 = sbr.rel (%p266) target = $region24
      $region23: #{double_conv.4} parent=11 // pred_region
        _
      $region24: #{double_conv.4} parent=11 // pred_fallthru
        _
    $region12: #{double_conv.4} parent=5 // pred_fallthru
      _
    %p269 = scmp.lt.s32.totalorder %s14, 2
    // Predicated region
    $region25: #{double_conv.4} parent=5 // pred_check
      %p270 = pneg %p269
    $region26: #{double_conv.4} parent=5 // pred_check_branch
      %272 = sbr.rel (%p270) target = $region28
    $region27: #{double_conv.4} parent=5 // pred_region
      // Predicated region
      $region29: #{double_conv.4} parent=27 // pred_check
        %p273 = pneg %p56
      $region30: #{double_conv.4} parent=27 // pred_check_branch
        %275 = sbr.rel (%p273) target = $region32
      $region31: #{double_conv.4} parent=27 // pred_region
        %s276 = smul.u32 %s22, 16
        %s277 = ssub.s32 %s276, 1
        %p278 = scmp.gt.s32.totalorder %s277, 0
        %s279 = scalar_select %p278, %s277, 0
        %p280 = scmp.lt.s32.totalorder %s21, 1
        %s281 = scalar_select %p280, %s21, 1
        %p282 = scmp.lt.s32.totalorder %s279, 15
        %s283 = scalar_select %p282, %s279, 15
        %s284 = smul.addr %s283, 2
        %s285 = smul.addr %s281, 32
        %s286 = sadd.s32 %s284, %s285
        %s287 = smul.addr %s286, 8
        %s288 = scalar_lea.vmem %s0, %s287
        %s289 = smul.u32 %s22, 16
        %s290 = ssub.s32 %s289, 1
        %p291 = scmp.gt.s32.totalorder %s290, 0
        %s292 = scalar_select %p291, %s290, 0
      $region32: #{double_conv.4} parent=27 // pred_fallthru
        _
      // Predicated region
      $region33: #{double_conv.4} parent=27 // pred_check
        %p293 = pneg %p84
      $region34: #{double_conv.4} parent=27 // pred_check_branch
        %295 = sbr.rel (%p293) target = $region36
      $region35: #{double_conv.4} parent=27 // pred_region
        %s296 = smul.u32 16, %s22
        %p297 = scmp.lt.s32.totalorder %s21, 1
        %s298 = scalar_select %p297, %s21, 1
        %p299 = scmp.lt.s32.totalorder %s296, 15
        %s300 = scalar_select %p299, %s296, 15
        %s301 = smul.addr %s300, 2
        %s302 = smul.addr %s298, 32
        %s303 = sadd.s32 %s301, %s302
        %s304 = smul.addr %s303, 8
        %s305 = scalar_lea.vmem %s1, %s304
        %s306 = smul.u32 16, %s22
      $region36: #{double_conv.4} parent=27 // pred_fallthru
        _
      // Predicated region
      $region37: #{double_conv.4} parent=27 // pred_check
        %p307 = pneg %p120
      $region38: #{double_conv.4} parent=27 // pred_check_branch
        %309 = sbr.rel (%p307) target = $region40
      $region39: #{double_conv.4} parent=27 // pred_region
        %s310 = smul.u32 %s22, 16
        %s311 = sadd.s32 %s310, 16
        %p312 = scmp.lt.s32.totalorder %s311, 15
        %s313 = scalar_select %p312, %s311, 15
        %p314 = scmp.lt.s32.totalorder %s21, 1
        %s315 = scalar_select %p314, %s21, 1
        %p316 = scmp.lt.s32.totalorder %s313, 15
        %s317 = scalar_select %p316, %s313, 15
        %s318 = smul.addr %s317, 2
        %s319 = smul.addr %s315, 32
        %s320 = sadd.s32 %s318, %s319
        %s321 = smul.addr %s320, 8
        %s322 = scalar_lea.vmem %s2, %s321
        %s323 = smul.u32 %s22, 16
        %s324 = sadd.s32 %s323, 16
        %p325 = scmp.lt.s32.totalorder %s324, 15
        %s326 = scalar_select %p325, %s324, 15
      $region40: #{double_conv.4} parent=27 // pred_fallthru
        _
    $region28: #{double_conv.4} parent=5 // pred_fallthru
      _
    %p327 = scmp.le.s32.totalorder 1, %s14
    %p328 = scmp.lt.s32.totalorder %s14, 3
    %p329 = pnand %p327, %p328
    %p330 = pneg %p329
    // Predicated region
    $region41: #{double_conv.4} parent=5 // pred_check
      _
    $region42: #{double_conv.4} parent=5 // pred_check_branch
      %332 = sbr.rel (%p329) target = $region44
    $region43: #{double_conv.4} parent=5 // pred_region
      %s333 = ssub.s32 %s14, 1
      %s334 = smul.u32 %s24, 16
      %s335 = ssub.s32 %s334, 1
      %p336 = scmp.gt.s32.totalorder %s335, 0
      %s337 = scalar_select %p336, %s335, 0
      %p338 = scmp.lt.s32.totalorder %s23, 1
      %s339 = scalar_select %p338, %s23, 1
      %p340 = scmp.lt.s32.totalorder %s337, 15
      %s341 = scalar_select %p340, %s337, 15
      %s342 = smul.addr %s341, 2
      %s343 = smul.addr %s339, 32
      %s344 = sadd.s32 %s342, %s343
      %s345 = smul.addr %s344, 8
      %s346 = scalar_lea.vmem %s0, %s345
      %p347 = pneg %p62
      %p348 = pneg %p59
      %s349 = smul.u32 16, %s24
      %p350 = scmp.lt.s32.totalorder %s23, 1
      %s351 = scalar_select %p350, %s23, 1
      %p352 = scmp.lt.s32.totalorder %s349, 15
      %s353 = scalar_select %p352, %s349, 15
      %s354 = smul.addr %s353, 2
      %s355 = smul.addr %s351, 32
      %s356 = sadd.s32 %s354, %s355
      %s357 = smul.addr %s356, 8
      %s358 = scalar_lea.vmem %s1, %s357
      %p359 = pneg %p90
      %p360 = pneg %p87
      %s361 = smul.u32 %s24, 16
      %s362 = sadd.s32 %s361, 16
      %p363 = scmp.lt.s32.totalorder %s362, 15
      %s364 = scalar_select %p363, %s362, 15
      %p365 = scmp.lt.s32.totalorder %s23, 1
      %s366 = scalar_select %p365, %s23, 1
      %p367 = scmp.lt.s32.totalorder %s364, 15
      %s368 = scalar_select %p367, %s364, 15
      %s369 = smul.addr %s368, 2
      %s370 = smul.addr %s366, 32
      %s371 = sadd.s32 %s369, %s370
      %s372 = smul.addr %s371, 8
      %s373 = scalar_lea.vmem %s2, %s372
      %p374 = pneg %p126
      %p375 = pneg %p123
      %p376 = pneg %p147
      %p377 = pneg %p144
      %p378 = pneg %p168
      %p379 = pneg %p165
      %p380 = pneg %p189
      %p381 = pneg %p186
      %p382 = pneg %p217
      %p383 = pneg %p214
      %s384 = smul.u32 16, %s24
      %p385 = scmp.lt.s32.totalorder %s23, 1
      %s386 = scalar_select %p385, %s23, 1
      %p387 = scmp.lt.s32.totalorder %s384, 15
      %s388 = scalar_select %p387, %s384, 15
      %s389 = smul.addr %s388, 2
      %s390 = smul.addr %s386, 32
      %s391 = sadd.s32 %s389, %s390
      %s392 = smul.addr %s391, 8
      %s393 = scalar_lea.vmem %s6, %s392
      %p394 = pneg %p245
      %p395 = pneg %p242
      %p396 = scmp.lt.s32.totalorder %s23, 1
      %s397 = scalar_select %p396, %s23, 1
      %p398 = scmp.lt.s32.totalorder %s24, 0
      %s399 = scalar_select %p398, %s24, 0
      %s400 = sadd.s32 %s399, %s397
      %s401 = smul.addr %s400, 2
      %s402 = scalar_lea.vmem %s7, %s401
      %s403 = smul.u32 %s24, 16
      %s404 = ssub.s32 %s403, 1
      %p405 = scmp.gt.s32.totalorder %s404, 0
      %s406 = scalar_select %p405, %s404, 0
      %p407 = scmp.lt.s32.totalorder %s23, 1
      %s408 = scalar_select %p407, %s23, 1
      %p409 = scmp.lt.s32.totalorder %s406, 15
      %s410 = scalar_select %p409, %s406, 15
      %s411 = smul.addr %s410, 2
      %s412 = smul.addr %s408, 32
      %s413 = sadd.s32 %s411, %s412
      %s414 = smul.addr %s413, 8
      %s415 = scalar_lea.vmem %s0, %s414
      %s416 = smul.u32 %s24, 16
      %s417 = ssub.s32 %s416, 1
      %p418 = scmp.gt.s32.totalorder %s417, 0
      %s419 = scalar_select %p418, %s417, 0
      %s420 = smul.u32 16, %s24
      %p421 = scmp.lt.s32.totalorder %s23, 1
      %s422 = scalar_select %p421, %s23, 1
      %p423 = scmp.lt.s32.totalorder %s420, 15
      %s424 = scalar_select %p423, %s420, 15
      %s425 = smul.addr %s424, 2
      %s426 = smul.addr %s422, 32
      %s427 = sadd.s32 %s425, %s426
      %s428 = smul.addr %s427, 8
      %s429 = scalar_lea.vmem %s1, %s428
      %s430 = smul.u32 16, %s24
      %s431 = smul.u32 %s24, 16
      %s432 = sadd.s32 %s431, 16
      %p433 = scmp.lt.s32.totalorder %s432, 15
      %s434 = scalar_select %p433, %s432, 15
      %p435 = scmp.lt.s32.totalorder %s23, 1
      %s436 = scalar_select %p435, %s23, 1
      %p437 = scmp.lt.s32.totalorder %s434, 15
      %s438 = scalar_select %p437, %s434, 15
      %s439 = smul.addr %s438, 2
      %s440 = smul.addr %s436, 32
      %s441 = sadd.s32 %s439, %s440
      %s442 = smul.addr %s441, 8
      %s443 = scalar_lea.vmem %s2, %s442
      %s444 = smul.u32 %s24, 16
      %s445 = sadd.s32 %s444, 16
      %p446 = scmp.lt.s32.totalorder %s445, 15
      %s447 = scalar_select %p446, %s445, 15
      %s448 = smul.u32 16, %s24
      %p449 = scmp.lt.s32.totalorder %s23, 1
      %s450 = scalar_select %p449, %s23, 1
      %p451 = scmp.lt.s32.totalorder %s448, 15
      %s452 = scalar_select %p451, %s448, 15
      %s453 = smul.addr %s452, 2
      %s454 = smul.addr %s450, 32
      %s455 = sadd.s32 %s453, %s454
      %s456 = smul.addr %s455, 8
      %s457 = scalar_lea.vmem %s6, %s456
      %s458 = smul.u32 16, %s24
      %p459 = scmp.lt.s32.totalorder %s23, 1
      %s460 = scalar_select %p459, %s23, 1
      %p461 = scmp.lt.s32.totalorder %s24, 0
      %s462 = scalar_select %p461, %s24, 0
      %s463 = sadd.s32 %s462, %s460
      %s464 = smul.addr %s463, 2
      %s465 = scalar_lea.vmem %s7, %s464
      %v466 = vld [vmem:[%s429] sm:$0xff]
      %v467 = vld [vmem:[%s429 + $0x8] sm:$0xff]
      %v468 = vld [vmem:[%s429 + $0x10] sm:$0xff]
      %v469 = vld [vmem:[%s429 + $0x18] sm:$0xff]
      %v470 = vld [vmem:[%s429 + $0x20] sm:$0xff]
      %v471 = vld [vmem:[%s429 + $0x28] sm:$0xff]
      %v472 = vld [vmem:[%s429 + $0x30] sm:$0xff]
      %v473 = vld [vmem:[%s429 + $0x38] sm:$0xff]
      %v474 = vld [vmem:[%s429 + $0x40] sm:$0xff]
      %v475 = vld [vmem:[%s429 + $0x48] sm:$0xff]
      %v476 = vld [vmem:[%s429 + $0x50] sm:$0xff]
      %v477 = vld [vmem:[%s429 + $0x58] sm:$0xff]
      %v478 = vld [vmem:[%s429 + $0x60] sm:$0xff]
      %v479 = vld [vmem:[%s429 + $0x68] sm:$0xff]
      %v480 = vld [vmem:[%s429 + $0x70] sm:$0xff]
      %v481 = vld [vmem:[%s429 + $0x78] sm:$0xff]
      %v482 = vld [vmem:[%s429 + $0x80] sm:$0xff]
      %v483 = vld [vmem:[%s429 + $0x88] sm:$0xff]
      %v484 = vld [vmem:[%s429 + $0x90] sm:$0xff]
      %v485 = vld [vmem:[%s429 + $0x98] sm:$0xff]
      %v486 = vld [vmem:[%s429 + $0xa0] sm:$0xff]
      %v487 = vld [vmem:[%s429 + $0xa8] sm:$0xff]
      %v488 = vld [vmem:[%s429 + $0xb0] sm:$0xff]
      %v489 = vld [vmem:[%s429 + $0xb8] sm:$0xff]
      %v490 = vld [vmem:[%s429 + $0xc0] sm:$0xff]
      %v491 = vld [vmem:[%s429 + $0xc8] sm:$0xff]
      %v492 = vld [vmem:[%s429 + $0xd0] sm:$0xff]
      %v493 = vld [vmem:[%s429 + $0xd8] sm:$0xff]
      %v494 = vld [vmem:[%s429 + $0xe0] sm:$0xff]
      %v495 = vld [vmem:[%s429 + $0xe8] sm:$0xff]
      %v496 = vld [vmem:[%s429 + $0xf0] sm:$0xff]
      %v497 = vld [vmem:[%s429 + $0xf8] sm:$0xff]
      %v498 = vld [vmem:[%s3] sm:$0x1]
      %v500 = vperm.slane %v498, 0
      %v502 = vmul.f32 %v466, %v500
      %v503 = vmul.f32 %v467, %v500
      %v504 = vmul.f32 %v468, %v500
      %v505 = vmul.f32 %v469, %v500
      %v506 = vmul.f32 %v470, %v500
      %v507 = vmul.f32 %v471, %v500
      %v508 = vmul.f32 %v472, %v500
      %v509 = vmul.f32 %v473, %v500
      %v510 = vmul.f32 %v474, %v500
      %v511 = vmul.f32 %v475, %v500
      %v512 = vmul.f32 %v476, %v500
      %v513 = vmul.f32 %v477, %v500
      %v514 = vmul.f32 %v478, %v500
      %v515 = vmul.f32 %v479, %v500
      %v516 = vmul.f32 %v480, %v500
      %v517 = vmul.f32 %v481, %v500
      %v518 = vmul.f32 %v482, %v500
      %v519 = vmul.f32 %v483, %v500
      %v520 = vmul.f32 %v484, %v500
      %v521 = vmul.f32 %v485, %v500
      %v522 = vmul.f32 %v486, %v500
      %v523 = vmul.f32 %v487, %v500
      %v524 = vmul.f32 %v488, %v500
      %v525 = vmul.f32 %v489, %v500
      %v526 = vmul.f32 %v490, %v500
      %v527 = vmul.f32 %v491, %v500
      %v528 = vmul.f32 %v492, %v500
      %v529 = vmul.f32 %v493, %v500
      %v530 = vmul.f32 %v494, %v500
      %v531 = vmul.f32 %v495, %v500
      %v532 = vmul.f32 %v496, %v500
      %v533 = vmul.f32 %v497, %v500
      %v534 = vld [vmem:[%s4] sm:$0x1]
      %v536 = vperm.slane %v534, 0
      %v538 = vadd.f32 %v502, %v536
      %v539 = vadd.f32 %v503, %v536
      %v540 = vadd.f32 %v504, %v536
      %v541 = vadd.f32 %v505, %v536
      %v542 = vadd.f32 %v506, %v536
      %v543 = vadd.f32 %v507, %v536
      %v544 = vadd.f32 %v508, %v536
      %v545 = vadd.f32 %v509, %v536
      %v546 = vadd.f32 %v510, %v536
      %v547 = vadd.f32 %v511, %v536
      %v548 = vadd.f32 %v512, %v536
      %v549 = vadd.f32 %v513, %v536
      %v550 = vadd.f32 %v514, %v536
      %v551 = vadd.f32 %v515, %v536
      %v552 = vadd.f32 %v516, %v536
      %v553 = vadd.f32 %v517, %v536
      %v554 = vadd.f32 %v518, %v536
      %v555 = vadd.f32 %v519, %v536
      %v556 = vadd.f32 %v520, %v536
      %v557 = vadd.f32 %v521, %v536
      %v558 = vadd.f32 %v522, %v536
      %v559 = vadd.f32 %v523, %v536
      %v560 = vadd.f32 %v524, %v536
      %v561 = vadd.f32 %v525, %v536
      %v562 = vadd.f32 %v526, %v536
      %v563 = vadd.f32 %v527, %v536
      %v564 = vadd.f32 %v528, %v536
      %v565 = vadd.f32 %v529, %v536
      %v566 = vadd.f32 %v530, %v536
      %v567 = vadd.f32 %v531, %v536
      %v568 = vadd.f32 %v532, %v536
      %v569 = vadd.f32 %v533, %v536
      %v570 = vmax.f32 %v538, 0.0
      %v571 = vmax.f32 %v539, 0.0
      %v572 = vmax.f32 %v540, 0.0
      %v573 = vmax.f32 %v541, 0.0
      %v574 = vmax.f32 %v542, 0.0
      %v575 = vmax.f32 %v543, 0.0
      %v576 = vmax.f32 %v544, 0.0
      %v577 = vmax.f32 %v545, 0.0
      %v578 = vmax.f32 %v546, 0.0
      %v579 = vmax.f32 %v547, 0.0
      %v580 = vmax.f32 %v548, 0.0
      %v581 = vmax.f32 %v549, 0.0
      %v582 = vmax.f32 %v550, 0.0
      %v583 = vmax.f32 %v551, 0.0
      %v584 = vmax.f32 %v552, 0.0
      %v585 = vmax.f32 %v553, 0.0
      %v586 = vmax.f32 %v554, 0.0
      %v587 = vmax.f32 %v555, 0.0
      %v588 = vmax.f32 %v556, 0.0
      %v589 = vmax.f32 %v557, 0.0
      %v590 = vmax.f32 %v558, 0.0
      %v591 = vmax.f32 %v559, 0.0
      %v592 = vmax.f32 %v560, 0.0
      %v593 = vmax.f32 %v561, 0.0
      %v594 = vmax.f32 %v562, 0.0
      %v595 = vmax.f32 %v563, 0.0
      %v596 = vmax.f32 %v564, 0.0
      %v597 = vmax.f32 %v565, 0.0
      %v598 = vmax.f32 %v566, 0.0
      %v599 = vmax.f32 %v567, 0.0
      %v600 = vmax.f32 %v568, 0.0
      %v601 = vmax.f32 %v569, 0.0
      %s602 = scalar_lea.vmem [#allocation2], 24
      %vm603 = vcmask 64512
      %604 = vst.msk [vmem:[%s602 + $0x1] sm:$0xff] %vm603, %v570
      %605 = vst.msk [vmem:[%s602 + $0x9] sm:$0xff] %vm603, %v571
      %606 = vst.msk [vmem:[%s602 + $0x19] sm:$0xff] %vm603, %v572
      %607 = vst.msk [vmem:[%s602 + $0x21] sm:$0xff] %vm603, %v573
      %608 = vst.msk [vmem:[%s602 + $0x31] sm:$0xff] %vm603, %v574
      %609 = vst.msk [vmem:[%s602 + $0x39] sm:$0xff] %vm603, %v575
      %610 = vst.msk [vmem:[%s602 + $0x49] sm:$0xff] %vm603, %v576
      %611 = vst.msk [vmem:[%s602 + $0x51] sm:$0xff] %vm603, %v577
      %612 = vst.msk [vmem:[%s602 + $0x61] sm:$0xff] %vm603, %v578
      %613 = vst.msk [vmem:[%s602 + $0x69] sm:$0xff] %vm603, %v579
      %614 = vst.msk [vmem:[%s602 + $0x79] sm:$0xff] %vm603, %v580
      %615 = vst.msk [vmem:[%s602 + $0x81] sm:$0xff] %vm603, %v581
      %616 = vst.msk [vmem:[%s602 + $0x91] sm:$0xff] %vm603, %v582
      %617 = vst.msk [vmem:[%s602 + $0x99] sm:$0xff] %vm603, %v583
      %618 = vst.msk [vmem:[%s602 + $0xa9] sm:$0xff] %vm603, %v584
      %619 = vst.msk [vmem:[%s602 + $0xb1] sm:$0xff] %vm603, %v585
      %620 = vst.msk [vmem:[%s602 + $0xc1] sm:$0xff] %vm603, %v586
      %621 = vst.msk [vmem:[%s602 + $0xc9] sm:$0xff] %vm603, %v587
      %622 = vst.msk [vmem:[%s602 + $0xd9] sm:$0xff] %vm603, %v588
      %623 = vst.msk [vmem:[%s602 + $0xe1] sm:$0xff] %vm603, %v589
      %624 = vst.msk [vmem:[%s602 + $0xf1] sm:$0xff] %vm603, %v590
      %625 = vst.msk [vmem:[%s602 + $0xf9] sm:$0xff] %vm603, %v591
      %626 = vst.msk [vmem:[%s602 + $0x109] sm:$0xff] %vm603, %v592
      %627 = vst.msk [vmem:[%s602 + $0x111] sm:$0xff] %vm603, %v593
      %628 = vst.msk [vmem:[%s602 + $0x121] sm:$0xff] %vm603, %v594
      %629 = vst.msk [vmem:[%s602 + $0x129] sm:$0xff] %vm603, %v595
      %630 = vst.msk [vmem:[%s602 + $0x139] sm:$0xff] %vm603, %v596
      %631 = vst.msk [vmem:[%s602 + $0x141] sm:$0xff] %vm603, %v597
      %632 = vst.msk [vmem:[%s602 + $0x151] sm:$0xff] %vm603, %v598
      %633 = vst.msk [vmem:[%s602 + $0x159] sm:$0xff] %vm603, %v599
      %634 = vst.msk [vmem:[%s602 + $0x169] sm:$0xff] %vm603, %v600
      %635 = vst.msk [vmem:[%s602 + $0x171] sm:$0xff] %vm603, %v601
      %vm636 = vcmask 57344
      %637 = vst.msk [vmem:[#allocation2] sm:$0x1] %vm636, 0.0
      %638 = vst.msk [vmem:[#allocation2 + $0x18] sm:$0x1] %vm636, 0.0
      %639 = vst.msk [vmem:[#allocation2 + $0x30] sm:$0x1] %vm636, 0.0
      %640 = vst.msk [vmem:[#allocation2 + $0x48] sm:$0x1] %vm636, 0.0
      %641 = vst.msk [vmem:[#allocation2 + $0x60] sm:$0x1] %vm636, 0.0
      %642 = vst.msk [vmem:[#allocation2 + $0x78] sm:$0x1] %vm636, 0.0
      %643 = vst.msk [vmem:[#allocation2 + $0x90] sm:$0x1] %vm636, 0.0
      %644 = vst.msk [vmem:[#allocation2 + $0xa8] sm:$0x1] %vm636, 0.0
      %645 = vst.msk [vmem:[#allocation2 + $0xc0] sm:$0x1] %vm636, 0.0
      %646 = vst.msk [vmem:[#allocation2 + $0xd8] sm:$0x1] %vm636, 0.0
      %647 = vst.msk [vmem:[#allocation2 + $0xf0] sm:$0x1] %vm636, 0.0
      %648 = vst.msk [vmem:[#allocation2 + $0x108] sm:$0x1] %vm636, 0.0
      %649 = vst.msk [vmem:[#allocation2 + $0x120] sm:$0x1] %vm636, 0.0
      %650 = vst.msk [vmem:[#allocation2 + $0x138] sm:$0x1] %vm636, 0.0
      %651 = vst.msk [vmem:[#allocation2 + $0x150] sm:$0x1] %vm636, 0.0
      %652 = vst.msk [vmem:[#allocation2 + $0x168] sm:$0x1] %vm636, 0.0
      %653 = vst.msk [vmem:[#allocation2 + $0x180] sm:$0x1] %vm636, 0.0
      %654 = vst.msk [vmem:[#allocation2 + $0x198] sm:$0x1] %vm636, 0.0
      %655 = vst.msk [vmem:[#allocation2 + $0x11] sm:$0x1] %vm636, 0.0
      %656 = vst.msk [vmem:[#allocation2 + $0x29] sm:$0x1] %vm636, 0.0
      %657 = vst.msk [vmem:[#allocation2 + $0x41] sm:$0x1] %vm636, 0.0
      %658 = vst.msk [vmem:[#allocation2 + $0x59] sm:$0x1] %vm636, 0.0
      %659 = vst.msk [vmem:[#allocation2 + $0x71] sm:$0x1] %vm636, 0.0
      %660 = vst.msk [vmem:[#allocation2 + $0x89] sm:$0x1] %vm636, 0.0
      %661 = vst.msk [vmem:[#allocation2 + $0xa1] sm:$0x1] %vm636, 0.0
      %662 = vst.msk [vmem:[#allocation2 + $0xb9] sm:$0x1] %vm636, 0.0
      %663 = vst.msk [vmem:[#allocation2 + $0xd1] sm:$0x1] %vm636, 0.0
      %664 = vst.msk [vmem:[#allocation2 + $0xe9] sm:$0x1] %vm636, 0.0
      %665 = vst.msk [vmem:[#allocation2 + $0x101] sm:$0x1] %vm636, 0.0
      %666 = vst.msk [vmem:[#allocation2 + $0x119] sm:$0x1] %vm636, 0.0
      %667 = vst.msk [vmem:[#allocation2 + $0x131] sm:$0x1] %vm636, 0.0
      %668 = vst.msk [vmem:[#allocation2 + $0x149] sm:$0x1] %vm636, 0.0
      %669 = vst.msk [vmem:[#allocation2 + $0x161] sm:$0x1] %vm636, 0.0
      %670 = vst.msk [vmem:[#allocation2 + $0x179] sm:$0x1] %vm636, 0.0
      %671 = vst.msk [vmem:[#allocation2 + $0x191] sm:$0x1] %vm636, 0.0
      %672 = vst.msk [vmem:[#allocation2 + $0x1a9] sm:$0x1] %vm636, 0.0
      %v673 = vld [vmem:[%s415] sm:$0xff]
      %v674 = vld [vmem:[%s415 + $0x8] sm:$0xff]
      %v675 = vld [vmem:[%s3] sm:$0x1]
      %v677 = vperm.slane %v675, 0
      %v679 = vmul.f32 %v673, %v677
      %v680 = vmul.f32 %v674, %v677
      %v681 = vld [vmem:[%s4] sm:$0x1]
      %v683 = vperm.slane %v681, 0
      %v685 = vadd.f32 %v679, %v683
      %v686 = vadd.f32 %v680, %v683
      %v687 = vmax.f32 %v685, 0.0
      %v688 = vmax.f32 %v686, 0.0
      %p689 = scmp.gt.s32.totalorder %s24, 0
      %s690 = scalar_select %p689, 1, 0
      %v691 = vstv %s690
      %vm692 = vcmp.eq.s32.totalorder %v691, 1
      %v693 = vsel %vm692, %v687, 0.0
      %v694 = vsel %vm692, %v688, 0.0
      %695 = vst.msk [vmem:[#allocation2 + $0x1] sm:$0xff] %vm603, %v693
      %696 = vst.msk [vmem:[#allocation2 + $0x9] sm:$0xff] %vm603, %v694
      %v697 = vld [vmem:[%s443] sm:$0xff]
      %v698 = vld [vmem:[%s443 + $0x8] sm:$0xff]
      %v699 = vld [vmem:[%s3] sm:$0x1]
      %v701 = vperm.slane %v699, 0
      %v703 = vmul.f32 %v697, %v701
      %v704 = vmul.f32 %v698, %v701
      %v705 = vld [vmem:[%s4] sm:$0x1]
      %v707 = vperm.slane %v705, 0
      %v709 = vadd.f32 %v703, %v707
      %v710 = vadd.f32 %v704, %v707
      %v711 = vmax.f32 %v709, 0.0
      %v712 = vmax.f32 %v710, 0.0
      %p713 = scmp.lt.s32.totalorder %s24, 0
      %s714 = scalar_select %p713, 1, 0
      %v715 = vstv %s714
      %vm716 = vcmp.eq.s32.totalorder %v715, 1
      %v717 = vsel %vm716, %v711, 0.0
      %v718 = vsel %vm716, %v712, 0.0
      %s719 = scalar_lea.vmem [#allocation2], 408
      %720 = vst.msk [vmem:[%s719 + $0x1] sm:$0xff] %vm603, %v717
      %721 = vst.msk [vmem:[%s719 + $0x9] sm:$0xff] %vm603, %v718
      %v722 = vld [vmem:[#allocation2] sm:$0xff]
      %v723 = vld [vmem:[#allocation2 + $0x8] sm:$0xff]
      %v724 = vld [vmem:[#allocation2 + $0x18] sm:$0xff]
      %v725 = vld [vmem:[#allocation2 + $0x20] sm:$0xff]
      %v726 = vld [vmem:[#allocation2 + $0x30] sm:$0xff]
      %v727 = vld [vmem:[#allocation2 + $0x38] sm:$0xff]
      %v728 = vld [vmem:[#allocation2 + $0x48] sm:$0xff]
      %v729 = vld [vmem:[#allocation2 + $0x50] sm:$0xff]
      %v730 = vld [vmem:[#allocation2 + $0x60] sm:$0xff]
      %v731 = vld [vmem:[#allocation2 + $0x68] sm:$0xff]
      %v732 = vld [vmem:[#allocation2 + $0x78] sm:$0xff]
      %v733 = vld [vmem:[#allocation2 + $0x80] sm:$0xff]
      %v734 = vld [vmem:[#allocation2 + $0x90] sm:$0xff]
      %v735 = vld [vmem:[#allocation2 + $0x98] sm:$0xff]
      %v736 = vld [vmem:[#allocation2 + $0xa8] sm:$0xff]
      %v737 = vld [vmem:[#allocation2 + $0xb0] sm:$0xff]
      %v738 = vld [vmem:[#allocation2 + $0xc0] sm:$0xff]
      %v739 = vld [vmem:[#allocation2 + $0xc8] sm:$0xff]
      %v740 = vld [vmem:[#allocation2 + $0xd8] sm:$0xff]
      %v741 = vld [vmem:[#allocation2 + $0xe0] sm:$0xff]
      %v742 = vld [vmem:[#allocation2 + $0xf0] sm:$0xff]
      %v743 = vld [vmem:[#allocation2 + $0xf8] sm:$0xff]
      %v744 = vld [vmem:[#allocation2 + $0x108] sm:$0xff]
      %v745 = vld [vmem:[#allocation2 + $0x110] sm:$0xff]
      %v746 = vld [vmem:[#allocation2 + $0x120] sm:$0xff]
      %v747 = vld [vmem:[#allocation2 + $0x128] sm:$0xff]
      %v748 = vld [vmem:[#allocation2 + $0x138] sm:$0xff]
      %v749 = vld [vmem:[#allocation2 + $0x140] sm:$0xff]
      %v750 = vld [vmem:[#allocation2 + $0x150] sm:$0xff]
      %v751 = vld [vmem:[#allocation2 + $0x158] sm:$0xff]
      %v752 = vld [vmem:[#allocation2 + $0x168] sm:$0xff]
      %v753 = vld [vmem:[#allocation2 + $0x170] sm:$0xff]
      %v754 = vld [vmem:[%s5] sm:$0xff]
      %v755 = vld [vmem:[#allocation2 + $0x1] sm:$0xff]
      %v756 = vld [vmem:[#allocation2 + $0x9] sm:$0xff]
      %v757 = vld [vmem:[#allocation2 + $0x19] sm:$0xff]
      %v758 = vld [vmem:[#allocation2 + $0x21] sm:$0xff]
      %v759 = vld [vmem:[#allocation2 + $0x31] sm:$0xff]
      %v760 = vld [vmem:[#allocation2 + $0x39] sm:$0xff]
      %v761 = vld [vmem:[#allocation2 + $0x49] sm:$0xff]
      %v762 = vld [vmem:[#allocation2 + $0x51] sm:$0xff]
      %v763 = vld [vmem:[#allocation2 + $0x61] sm:$0xff]
      %v764 = vld [vmem:[#allocation2 + $0x69] sm:$0xff]
      %v765 = vld [vmem:[#allocation2 + $0x79] sm:$0xff]
      %v766 = vld [vmem:[#allocation2 + $0x81] sm:$0xff]
      %v767 = vld [vmem:[#allocation2 + $0x91] sm:$0xff]
      %v768 = vld [vmem:[#allocation2 + $0x99] sm:$0xff]
      %v769 = vld [vmem:[#allocation2 + $0xa9] sm:$0xff]
      %v770 = vld [vmem:[#allocation2 + $0xb1] sm:$0xff]
      %v771 = vld [vmem:[#allocation2 + $0xc1] sm:$0xff]
      %v772 = vld [vmem:[#allocation2 + $0xc9] sm:$0xff]
      %v773 = vld [vmem:[#allocation2 + $0xd9] sm:$0xff]
      %v774 = vld [vmem:[#allocation2 + $0xe1] sm:$0xff]
      %v775 = vld [vmem:[#allocation2 + $0xf1] sm:$0xff]
      %v776 = vld [vmem:[#allocation2 + $0xf9] sm:$0xff]
      %v777 = vld [vmem:[#allocation2 + $0x109] sm:$0xff]
      %v778 = vld [vmem:[#allocation2 + $0x111] sm:$0xff]
      %v779 = vld [vmem:[#allocation2 + $0x121] sm:$0xff]
      %v780 = vld [vmem:[#allocation2 + $0x129] sm:$0xff]
      %v781 = vld [vmem:[#allocation2 + $0x139] sm:$0xff]
      %v782 = vld [vmem:[#allocation2 + $0x141] sm:$0xff]
      %v783 = vld [vmem:[#allocation2 + $0x151] sm:$0xff]
      %v784 = vld [vmem:[#allocation2 + $0x159] sm:$0xff]
      %v785 = vld [vmem:[#allocation2 + $0x169] sm:$0xff]
      %v786 = vld [vmem:[#allocation2 + $0x171] sm:$0xff]
      %s787 = scalar_lea.vmem %s5, 8
      %v788 = vld [vmem:[%s787] sm:$0xff]
      %v790 = vsel %vm603, %v755, 0
      %v793 = vsel %vm603, %v756, 0
      %v796 = vsel %vm603, %v757, 0
      %v799 = vsel %vm603, %v758, 0
      %v802 = vsel %vm603, %v759, 0
      %v805 = vsel %vm603, %v760, 0
      %v808 = vsel %vm603, %v761, 0
      %v811 = vsel %vm603, %v762, 0
      %v814 = vsel %vm603, %v763, 0
      %v817 = vsel %vm603, %v764, 0
      %v820 = vsel %vm603, %v765, 0
      %v823 = vsel %vm603, %v766, 0
      %v826 = vsel %vm603, %v767, 0
      %v829 = vsel %vm603, %v768, 0
      %v832 = vsel %vm603, %v769, 0
      %v835 = vsel %vm603, %v770, 0
      %v838 = vsel %vm603, %v771, 0
      %v841 = vsel %vm603, %v772, 0
      %v844 = vsel %vm603, %v773, 0
      %v847 = vsel %vm603, %v774, 0
      %v850 = vsel %vm603, %v775, 0
      %v853 = vsel %vm603, %v776, 0
      %v856 = vsel %vm603, %v777, 0
      %v859 = vsel %vm603, %v778, 0
      %v862 = vsel %vm603, %v779, 0
      %v865 = vsel %vm603, %v780, 0
      %v868 = vsel %vm603, %v781, 0
      %v871 = vsel %vm603, %v782, 0
      %v874 = vsel %vm603, %v783, 0
      %v877 = vsel %vm603, %v784, 0
      %v880 = vsel %vm603, %v785, 0
      %v883 = vsel %vm603, %v786, 0
      %885 = vmatpush.msra.mxu0 0.0
      %886 = vmatpush.msra.mxu0 0.0
      %887 = vmatpush.msra.mxu0 0.0
      %888 = vmatpush.msra.mxu0 0.0
      %889 = vmatpush.msra.mxu0 0.0
      %890 = vmatpush.msra.mxu0 0.0
      %891 = vmatpush.msra.mxu0 0.0
      %892 = vmatpush.msra.mxu0 0.0
      %893 = vmatpush.msra.mxu0 0.0
      %894 = vmatpush.msra.mxu0 0.0
      %895 = vmatpush.msra.mxu0 0.0
      %896 = vmatpush.msra.mxu0 0.0
      %897 = vmatpush.msra.mxu0 0.0
      %898 = vmatpush.msra.mxu0 0.0
      %899 = vmatpush.msra.mxu0 0.0
      %900 = vmatpush.msra.mxu0 %v788
      %901 = vmatmul.f32.gmra.mxu0 %v790
      %v902 = vpop.f32.mrf.mxu0
      %v903 = vadd.f32 0.0, %v902
      %904 = vmatmul.f32.gmra.mxu0 %v793
      %v905 = vpop.f32.mrf.mxu0
      %v906 = vadd.f32 0.0, %v905
      %907 = vmatmul.f32.gmra.mxu0 %v796
      %v908 = vpop.f32.mrf.mxu0
      %v909 = vadd.f32 0.0, %v908
      %910 = vmatmul.f32.gmra.mxu0 %v799
      %v911 = vpop.f32.mrf.mxu0
      %v912 = vadd.f32 0.0, %v911
      %913 = vmatmul.f32.gmra.mxu0 %v802
      %v914 = vpop.f32.mrf.mxu0
      %v915 = vadd.f32 0.0, %v914
      %916 = vmatmul.f32.gmra.mxu0 %v805
      %v917 = vpop.f32.mrf.mxu0
      %v918 = vadd.f32 0.0, %v917
      %919 = vmatmul.f32.gmra.mxu0 %v808
      %v920 = vpop.f32.mrf.mxu0
      %v921 = vadd.f32 0.0, %v920
      %922 = vmatmul.f32.gmra.mxu0 %v811
      %v923 = vpop.f32.mrf.mxu0
      %v924 = vadd.f32 0.0, %v923
      %925 = vmatmul.f32.gmra.mxu0 %v814
      %v926 = vpop.f32.mrf.mxu0
      %v927 = vadd.f32 0.0, %v926
      %928 = vmatmul.f32.gmra.mxu0 %v817
      %v929 = vpop.f32.mrf.mxu0
      %v930 = vadd.f32 0.0, %v929
      %931 = vmatmul.f32.gmra.mxu0 %v820
      %v932 = vpop.f32.mrf.mxu0
      %v933 = vadd.f32 0.0, %v932
      %934 = vmatmul.f32.gmra.mxu0 %v823
      %v935 = vpop.f32.mrf.mxu0
      %v936 = vadd.f32 0.0, %v935
      %937 = vmatmul.f32.gmra.mxu0 %v826
      %v938 = vpop.f32.mrf.mxu0
      %v939 = vadd.f32 0.0, %v938
      %940 = vmatmul.f32.gmra.mxu0 %v829
      %v941 = vpop.f32.mrf.mxu0
      %v942 = vadd.f32 0.0, %v941
      %943 = vmatmul.f32.gmra.mxu0 %v832
      %v944 = vpop.f32.mrf.mxu0
      %v945 = vadd.f32 0.0, %v944
      %946 = vmatmul.f32.gmra.mxu0 %v835
      %v947 = vpop.f32.mrf.mxu0
      %v948 = vadd.f32 0.0, %v947
      %949 = vmatmul.f32.gmra.mxu0 %v838
      %v950 = vpop.f32.mrf.mxu0
      %v951 = vadd.f32 0.0, %v950
      %952 = vmatmul.f32.gmra.mxu0 %v841
      %v953 = vpop.f32.mrf.mxu0
      %v954 = vadd.f32 0.0, %v953
      %955 = vmatmul.f32.gmra.mxu0 %v844
      %v956 = vpop.f32.mrf.mxu0
      %v957 = vadd.f32 0.0, %v956
      %958 = vmatmul.f32.gmra.mxu0 %v847
      %v959 = vpop.f32.mrf.mxu0
      %v960 = vadd.f32 0.0, %v959
      %961 = vmatmul.f32.gmra.mxu0 %v850
      %v962 = vpop.f32.mrf.mxu0
      %v963 = vadd.f32 0.0, %v962
      %964 = vmatmul.f32.gmra.mxu0 %v853
      %v965 = vpop.f32.mrf.mxu0
      %v966 = vadd.f32 0.0, %v965
      %967 = vmatmul.f32.gmra.mxu0 %v856
      %v968 = vpop.f32.mrf.mxu0
      %v969 = vadd.f32 0.0, %v968
      %970 = vmatmul.f32.gmra.mxu0 %v859
      %v971 = vpop.f32.mrf.mxu0
      %v972 = vadd.f32 0.0, %v971
      %973 = vmatmul.f32.gmra.mxu0 %v862
      %v974 = vpop.f32.mrf.mxu0
      %v975 = vadd.f32 0.0, %v974
      %976 = vmatmul.f32.gmra.mxu0 %v865
      %v977 = vpop.f32.mrf.mxu0
      %v978 = vadd.f32 0.0, %v977
      %979 = vmatmul.f32.gmra.mxu0 %v868
      %v980 = vpop.f32.mrf.mxu0
      %v981 = vadd.f32 0.0, %v980
      %982 = vmatmul.f32.gmra.mxu0 %v871
      %v983 = vpop.f32.mrf.mxu0
      %v984 = vadd.f32 0.0, %v983
      %985 = vmatmul.f32.gmra.mxu0 %v874
      %v986 = vpop.f32.mrf.mxu0
      %v987 = vadd.f32 0.0, %v986
      %988 = vmatmul.f32.gmra.mxu0 %v877
      %v989 = vpop.f32.mrf.mxu0
      %v990 = vadd.f32 0.0, %v989
      %991 = vmatmul.f32.gmra.mxu0 %v880
      %v992 = vpop.f32.mrf.mxu0
      %v993 = vadd.f32 0.0, %v992
      %994 = vmatmul.f32.gmra.mxu0 %v883
      %v995 = vpop.f32.mrf.mxu0
      %v996 = vadd.f32 0.0, %v995
      %997 = vdwg.mxu0
      %v999 = vsel %vm603, %v722, 0
      %v1002 = vsel %vm603, %v723, 0
      %v1005 = vsel %vm603, %v724, 0
      %v1008 = vsel %vm603, %v725, 0
      %v1011 = vsel %vm603, %v726, 0
      %v1014 = vsel %vm603, %v727, 0
      %v1017 = vsel %vm603, %v728, 0
      %v1020 = vsel %vm603, %v729, 0
      %v1023 = vsel %vm603, %v730, 0
      %v1026 = vsel %vm603, %v731, 0
      %v1029 = vsel %vm603, %v732, 0
      %v1032 = vsel %vm603, %v733, 0
      %v1035 = vsel %vm603, %v734, 0
      %v1038 = vsel %vm603, %v735, 0
      %v1041 = vsel %vm603, %v736, 0
      %v1044 = vsel %vm603, %v737, 0
      %v1047 = vsel %vm603, %v738, 0
      %v1050 = vsel %vm603, %v739, 0
      %v1053 = vsel %vm603, %v740, 0
      %v1056 = vsel %vm603, %v741, 0
      %v1059 = vsel %vm603, %v742, 0
      %v1062 = vsel %vm603, %v743, 0
      %v1065 = vsel %vm603, %v744, 0
      %v1068 = vsel %vm603, %v745, 0
      %v1071 = vsel %vm603, %v746, 0
      %v1074 = vsel %vm603, %v747, 0
      %v1077 = vsel %vm603, %v748, 0
      %v1080 = vsel %vm603, %v749, 0
      %v1083 = vsel %vm603, %v750, 0
      %v1086 = vsel %vm603, %v751, 0
      %v1089 = vsel %vm603, %v752, 0
      %v1092 = vsel %vm603, %v753, 0
      %1094 = vmatpush.msra.mxu0 0.0
      %1095 = vmatpush.msra.mxu0 0.0
      %1096 = vmatpush.msra.mxu0 0.0
      %1097 = vmatpush.msra.mxu0 0.0
      %1098 = vmatpush.msra.mxu0 0.0
      %1099 = vmatpush.msra.mxu0 0.0
      %1100 = vmatpush.msra.mxu0 0.0
      %1101 = vmatpush.msra.mxu0 0.0
      %1102 = vmatpush.msra.mxu0 0.0
      %1103 = vmatpush.msra.mxu0 0.0
      %1104 = vmatpush.msra.mxu0 0.0
      %1105 = vmatpush.msra.mxu0 0.0
      %1106 = vmatpush.msra.mxu0 0.0
      %1107 = vmatpush.msra.mxu0 0.0
      %1108 = vmatpush.msra.mxu0 0.0
      %1109 = vmatpush.msra.mxu0 %v754
      %1110 = vmatmul.f32.gmra.mxu0 %v999
      %v1111 = vpop.f32.mrf.mxu0
      %v1112 = vadd.f32 %v903, %v1111
      %1113 = vmatmul.f32.gmra.mxu0 %v1002
      %v1114 = vpop.f32.mrf.mxu0
      %v1115 = vadd.f32 %v906, %v1114
      %1116 = vmatmul.f32.gmra.mxu0 %v1005
      %v1117 = vpop.f32.mrf.mxu0
      %v1118 = vadd.f32 %v909, %v1117
      %1119 = vmatmul.f32.gmra.mxu0 %v1008
      %v1120 = vpop.f32.mrf.mxu0
      %v1121 = vadd.f32 %v912, %v1120
      %1122 = vmatmul.f32.gmra.mxu0 %v1011
      %v1123 = vpop.f32.mrf.mxu0
      %v1124 = vadd.f32 %v915, %v1123
      %1125 = vmatmul.f32.gmra.mxu0 %v1014
      %v1126 = vpop.f32.mrf.mxu0
      %v1127 = vadd.f32 %v918, %v1126
      %1128 = vmatmul.f32.gmra.mxu0 %v1017
      %v1129 = vpop.f32.mrf.mxu0
      %v1130 = vadd.f32 %v921, %v1129
      %1131 = vmatmul.f32.gmra.mxu0 %v1020
      %v1132 = vpop.f32.mrf.mxu0
      %v1133 = vadd.f32 %v924, %v1132
      %1134 = vmatmul.f32.gmra.mxu0 %v1023
      %v1135 = vpop.f32.mrf.mxu0
      %v1136 = vadd.f32 %v927, %v1135
      %1137 = vmatmul.f32.gmra.mxu0 %v1026
      %v1138 = vpop.f32.mrf.mxu0
      %v1139 = vadd.f32 %v930, %v1138
      %1140 = vmatmul.f32.gmra.mxu0 %v1029
      %v1141 = vpop.f32.mrf.mxu0
      %v1142 = vadd.f32 %v933, %v1141
      %1143 = vmatmul.f32.gmra.mxu0 %v1032
      %v1144 = vpop.f32.mrf.mxu0
      %v1145 = vadd.f32 %v936, %v1144
      %1146 = vmatmul.f32.gmra.mxu0 %v1035
      %v1147 = vpop.f32.mrf.mxu0
      %v1148 = vadd.f32 %v939, %v1147
      %1149 = vmatmul.f32.gmra.mxu0 %v1038
      %v1150 = vpop.f32.mrf.mxu0
      %v1151 = vadd.f32 %v942, %v1150
      %1152 = vmatmul.f32.gmra.mxu0 %v1041
      %v1153 = vpop.f32.mrf.mxu0
      %v1154 = vadd.f32 %v945, %v1153
      %1155 = vmatmul.f32.gmra.mxu0 %v1044
      %v1156 = vpop.f32.mrf.mxu0
      %v1157 = vadd.f32 %v948, %v1156
      %1158 = vmatmul.f32.gmra.mxu0 %v1047
      %v1159 = vpop.f32.mrf.mxu0
      %v1160 = vadd.f32 %v951, %v1159
      %1161 = vmatmul.f32.gmra.mxu0 %v1050
      %v1162 = vpop.f32.mrf.mxu0
      %v1163 = vadd.f32 %v954, %v1162
      %1164 = vmatmul.f32.gmra.mxu0 %v1053
      %v1165 = vpop.f32.mrf.mxu0
      %v1166 = vadd.f32 %v957, %v1165
      %1167 = vmatmul.f32.gmra.mxu0 %v1056
      %v1168 = vpop.f32.mrf.mxu0
      %v1169 = vadd.f32 %v960, %v1168
      %1170 = vmatmul.f32.gmra.mxu0 %v1059
      %v1171 = vpop.f32.mrf.mxu0
      %v1172 = vadd.f32 %v963, %v1171
      %1173 = vmatmul.f32.gmra.mxu0 %v1062
      %v1174 = vpop.f32.mrf.mxu0
      %v1175 = vadd.f32 %v966, %v1174
      %1176 = vmatmul.f32.gmra.mxu0 %v1065
      %v1177 = vpop.f32.mrf.mxu0
      %v1178 = vadd.f32 %v969, %v1177
      %1179 = vmatmul.f32.gmra.mxu0 %v1068
      %v1180 = vpop.f32.mrf.mxu0
      %v1181 = vadd.f32 %v972, %v1180
      %1182 = vmatmul.f32.gmra.mxu0 %v1071
      %v1183 = vpop.f32.mrf.mxu0
      %v1184 = vadd.f32 %v975, %v1183
      %1185 = vmatmul.f32.gmra.mxu0 %v1074
      %v1186 = vpop.f32.mrf.mxu0
      %v1187 = vadd.f32 %v978, %v1186
      %1188 = vmatmul.f32.gmra.mxu0 %v1077
      %v1189 = vpop.f32.mrf.mxu0
      %v1190 = vadd.f32 %v981, %v1189
      %1191 = vmatmul.f32.gmra.mxu0 %v1080
      %v1192 = vpop.f32.mrf.mxu0
      %v1193 = vadd.f32 %v984, %v1192
      %1194 = vmatmul.f32.gmra.mxu0 %v1083
      %v1195 = vpop.f32.mrf.mxu0
      %v1196 = vadd.f32 %v987, %v1195
      %1197 = vmatmul.f32.gmra.mxu0 %v1086
      %v1198 = vpop.f32.mrf.mxu0
      %v1199 = vadd.f32 %v990, %v1198
      %1200 = vmatmul.f32.gmra.mxu0 %v1089
      %v1201 = vpop.f32.mrf.mxu0
      %v1202 = vadd.f32 %v993, %v1201
      %1203 = vmatmul.f32.gmra.mxu0 %v1092
      %v1204 = vpop.f32.mrf.mxu0
      %v1205 = vadd.f32 %v996, %v1204
      %1206 = vdwg.mxu0
      %v1207 = vld [vmem:[#allocation2 + $0x2] sm:$0xff]
      %v1208 = vld [vmem:[#allocation2 + $0xa] sm:$0xff]
      %v1209 = vld [vmem:[#allocation2 + $0x1a] sm:$0xff]
      %v1210 = vld [vmem:[#allocation2 + $0x22] sm:$0xff]
      %v1211 = vld [vmem:[#allocation2 + $0x32] sm:$0xff]
      %v1212 = vld [vmem:[#allocation2 + $0x3a] sm:$0xff]
      %v1213 = vld [vmem:[#allocation2 + $0x4a] sm:$0xff]
      %v1214 = vld [vmem:[#allocation2 + $0x52] sm:$0xff]
      %v1215 = vld [vmem:[#allocation2 + $0x62] sm:$0xff]
      %v1216 = vld [vmem:[#allocation2 + $0x6a] sm:$0xff]
      %v1217 = vld [vmem:[#allocation2 + $0x7a] sm:$0xff]
      %v1218 = vld [vmem:[#allocation2 + $0x82] sm:$0xff]
      %v1219 = vld [vmem:[#allocation2 + $0x92] sm:$0xff]
      %v1220 = vld [vmem:[#allocation2 + $0x9a] sm:$0xff]
      %v1221 = vld [vmem:[#allocation2 + $0xaa] sm:$0xff]
      %v1222 = vld [vmem:[#allocation2 + $0xb2] sm:$0xff]
      %v1223 = vld [vmem:[#allocation2 + $0xc2] sm:$0xff]
      %v1224 = vld [vmem:[#allocation2 + $0xca] sm:$0xff]
      %v1225 = vld [vmem:[#allocation2 + $0xda] sm:$0xff]
      %v1226 = vld [vmem:[#allocation2 + $0xe2] sm:$0xff]
      %v1227 = vld [vmem:[#allocation2 + $0xf2] sm:$0xff]
      %v1228 = vld [vmem:[#allocation2 + $0xfa] sm:$0xff]
      %v1229 = vld [vmem:[#allocation2 + $0x10a] sm:$0xff]
      %v1230 = vld [vmem:[#allocation2 + $0x112] sm:$0xff]
      %v1231 = vld [vmem:[#allocation2 + $0x122] sm:$0xff]
      %v1232 = vld [vmem:[#allocation2 + $0x12a] sm:$0xff]
      %v1233 = vld [vmem:[#allocation2 + $0x13a] sm:$0xff]
      %v1234 = vld [vmem:[#allocation2 + $0x142] sm:$0xff]
      %v1235 = vld [vmem:[#allocation2 + $0x152] sm:$0xff]
      %v1236 = vld [vmem:[#allocation2 + $0x15a] sm:$0xff]
      %v1237 = vld [vmem:[#allocation2 + $0x16a] sm:$0xff]
      %v1238 = vld [vmem:[#allocation2 + $0x172] sm:$0xff]
      %s1239 = scalar_lea.vmem %s5, 16
      %v1240 = vld [vmem:[%s1239] sm:$0xff]
      %v1242 = vsel %vm603, %v1207, 0
      %v1245 = vsel %vm603, %v1208, 0
      %v1248 = vsel %vm603, %v1209, 0
      %v1251 = vsel %vm603, %v1210, 0
      %v1254 = vsel %vm603, %v1211, 0
      %v1257 = vsel %vm603, %v1212, 0
      %v1260 = vsel %vm603, %v1213, 0
      %v1263 = vsel %vm603, %v1214, 0
      %v1266 = vsel %vm603, %v1215, 0
      %v1269 = vsel %vm603, %v1216, 0
      %v1272 = vsel %vm603, %v1217, 0
      %v1275 = vsel %vm603, %v1218, 0
      %v1278 = vsel %vm603, %v1219, 0
      %v1281 = vsel %vm603, %v1220, 0
      %v1284 = vsel %vm603, %v1221, 0
      %v1287 = vsel %vm603, %v1222, 0
      %v1290 = vsel %vm603, %v1223, 0
      %v1293 = vsel %vm603, %v1224, 0
      %v1296 = vsel %vm603, %v1225, 0
      %v1299 = vsel %vm603, %v1226, 0
      %v1302 = vsel %vm603, %v1227, 0
      %v1305 = vsel %vm603, %v1228, 0
      %v1308 = vsel %vm603, %v1229, 0
      %v1311 = vsel %vm603, %v1230, 0
      %v1314 = vsel %vm603, %v1231, 0
      %v1317 = vsel %vm603, %v1232, 0
      %v1320 = vsel %vm603, %v1233, 0
      %v1323 = vsel %vm603, %v1234, 0
      %v1326 = vsel %vm603, %v1235, 0
      %v1329 = vsel %vm603, %v1236, 0
      %v1332 = vsel %vm603, %v1237, 0
      %v1335 = vsel %vm603, %v1238, 0
      %1337 = vmatpush.msra.mxu0 0.0
      %1338 = vmatpush.msra.mxu0 0.0
      %1339 = vmatpush.msra.mxu0 0.0
      %1340 = vmatpush.msra.mxu0 0.0
      %1341 = vmatpush.msra.mxu0 0.0
      %1342 = vmatpush.msra.mxu0 0.0
      %1343 = vmatpush.msra.mxu0 0.0
      %1344 = vmatpush.msra.mxu0 0.0
      %1345 = vmatpush.msra.mxu0 0.0
      %1346 = vmatpush.msra.mxu0 0.0
      %1347 = vmatpush.msra.mxu0 0.0
      %1348 = vmatpush.msra.mxu0 0.0
      %1349 = vmatpush.msra.mxu0 0.0
      %1350 = vmatpush.msra.mxu0 0.0
      %1351 = vmatpush.msra.mxu0 0.0
      %1352 = vmatpush.msra.mxu0 %v1240
      %1353 = vmatmul.f32.gmra.mxu0 %v1242
      %v1354 = vpop.f32.mrf.mxu0
      %v1355 = vadd.f32 0.0, %v1354
      %1356 = vmatmul.f32.gmra.mxu0 %v1245
      %v1357 = vpop.f32.mrf.mxu0
      %v1358 = vadd.f32 0.0, %v1357
      %1359 = vmatmul.f32.gmra.mxu0 %v1248
      %v1360 = vpop.f32.mrf.mxu0
      %v1361 = vadd.f32 0.0, %v1360
      %1362 = vmatmul.f32.gmra.mxu0 %v1251
      %v1363 = vpop.f32.mrf.mxu0
      %v1364 = vadd.f32 0.0, %v1363
      %1365 = vmatmul.f32.gmra.mxu0 %v1254
      %v1366 = vpop.f32.mrf.mxu0
      %v1367 = vadd.f32 0.0, %v1366
      %1368 = vmatmul.f32.gmra.mxu0 %v1257
      %v1369 = vpop.f32.mrf.mxu0
      %v1370 = vadd.f32 0.0, %v1369
      %1371 = vmatmul.f32.gmra.mxu0 %v1260
      %v1372 = vpop.f32.mrf.mxu0
      %v1373 = vadd.f32 0.0, %v1372
      %1374 = vmatmul.f32.gmra.mxu0 %v1263
      %v1375 = vpop.f32.mrf.mxu0
      %v1376 = vadd.f32 0.0, %v1375
      %1377 = vmatmul.f32.gmra.mxu0 %v1266
      %v1378 = vpop.f32.mrf.mxu0
      %v1379 = vadd.f32 0.0, %v1378
      %1380 = vmatmul.f32.gmra.mxu0 %v1269
      %v1381 = vpop.f32.mrf.mxu0
      %v1382 = vadd.f32 0.0, %v1381
      %1383 = vmatmul.f32.gmra.mxu0 %v1272
      %v1384 = vpop.f32.mrf.mxu0
      %v1385 = vadd.f32 0.0, %v1384
      %1386 = vmatmul.f32.gmra.mxu0 %v1275
      %v1387 = vpop.f32.mrf.mxu0
      %v1388 = vadd.f32 0.0, %v1387
      %1389 = vmatmul.f32.gmra.mxu0 %v1278
      %v1390 = vpop.f32.mrf.mxu0
      %v1391 = vadd.f32 0.0, %v1390
      %1392 = vmatmul.f32.gmra.mxu0 %v1281
      %v1393 = vpop.f32.mrf.mxu0
      %v1394 = vadd.f32 0.0, %v1393
      %1395 = vmatmul.f32.gmra.mxu0 %v1284
      %v1396 = vpop.f32.mrf.mxu0
      %v1397 = vadd.f32 0.0, %v1396
      %1398 = vmatmul.f32.gmra.mxu0 %v1287
      %v1399 = vpop.f32.mrf.mxu0
      %v1400 = vadd.f32 0.0, %v1399
      %1401 = vmatmul.f32.gmra.mxu0 %v1290
      %v1402 = vpop.f32.mrf.mxu0
      %v1403 = vadd.f32 0.0, %v1402
      %1404 = vmatmul.f32.gmra.mxu0 %v1293
      %v1405 = vpop.f32.mrf.mxu0
      %v1406 = vadd.f32 0.0, %v1405
      %1407 = vmatmul.f32.gmra.mxu0 %v1296
      %v1408 = vpop.f32.mrf.mxu0
      %v1409 = vadd.f32 0.0, %v1408
      %1410 = vmatmul.f32.gmra.mxu0 %v1299
      %v1411 = vpop.f32.mrf.mxu0
      %v1412 = vadd.f32 0.0, %v1411
      %1413 = vmatmul.f32.gmra.mxu0 %v1302
      %v1414 = vpop.f32.mrf.mxu0
      %v1415 = vadd.f32 0.0, %v1414
      %1416 = vmatmul.f32.gmra.mxu0 %v1305
      %v1417 = vpop.f32.mrf.mxu0
      %v1418 = vadd.f32 0.0, %v1417
      %1419 = vmatmul.f32.gmra.mxu0 %v1308
      %v1420 = vpop.f32.mrf.mxu0
      %v1421 = vadd.f32 0.0, %v1420
      %1422 = vmatmul.f32.gmra.mxu0 %v1311
      %v1423 = vpop.f32.mrf.mxu0
      %v1424 = vadd.f32 0.0, %v1423
      %1425 = vmatmul.f32.gmra.mxu0 %v1314
      %v1426 = vpop.f32.mrf.mxu0
      %v1427 = vadd.f32 0.0, %v1426
      %1428 = vmatmul.f32.gmra.mxu0 %v1317
      %v1429 = vpop.f32.mrf.mxu0
      %v1430 = vadd.f32 0.0, %v1429
      %1431 = vmatmul.f32.gmra.mxu0 %v1320
      %v1432 = vpop.f32.mrf.mxu0
      %v1433 = vadd.f32 0.0, %v1432
      %1434 = vmatmul.f32.gmra.mxu0 %v1323
      %v1435 = vpop.f32.mrf.mxu0
      %v1436 = vadd.f32 0.0, %v1435
      %1437 = vmatmul.f32.gmra.mxu0 %v1326
      %v1438 = vpop.f32.mrf.mxu0
      %v1439 = vadd.f32 0.0, %v1438
      %1440 = vmatmul.f32.gmra.mxu0 %v1329
      %v1441 = vpop.f32.mrf.mxu0
      %v1442 = vadd.f32 0.0, %v1441
      %1443 = vmatmul.f32.gmra.mxu0 %v1332
      %v1444 = vpop.f32.mrf.mxu0
      %v1445 = vadd.f32 0.0, %v1444
      %1446 = vmatmul.f32.gmra.mxu0 %v1335
      %v1447 = vpop.f32.mrf.mxu0
      %v1448 = vadd.f32 0.0, %v1447
      %1449 = vdwg.mxu0
      %v1450 = vadd.f32 %v1112, %v1355
      %v1451 = vadd.f32 %v1115, %v1358
      %v1452 = vadd.f32 %v1118, %v1361
      %v1453 = vadd.f32 %v1121, %v1364
      %v1454 = vadd.f32 %v1124, %v1367
      %v1455 = vadd.f32 %v1127, %v1370
      %v1456 = vadd.f32 %v1130, %v1373
      %v1457 = vadd.f32 %v1133, %v1376
      %v1458 = vadd.f32 %v1136, %v1379
      %v1459 = vadd.f32 %v1139, %v1382
      %v1460 = vadd.f32 %v1142, %v1385
      %v1461 = vadd.f32 %v1145, %v1388
      %v1462 = vadd.f32 %v1148, %v1391
      %v1463 = vadd.f32 %v1151, %v1394
      %v1464 = vadd.f32 %v1154, %v1397
      %v1465 = vadd.f32 %v1157, %v1400
      %v1466 = vadd.f32 %v1160, %v1403
      %v1467 = vadd.f32 %v1163, %v1406
      %v1468 = vadd.f32 %v1166, %v1409
      %v1469 = vadd.f32 %v1169, %v1412
      %v1470 = vadd.f32 %v1172, %v1415
      %v1471 = vadd.f32 %v1175, %v1418
      %v1472 = vadd.f32 %v1178, %v1421
      %v1473 = vadd.f32 %v1181, %v1424
      %v1474 = vadd.f32 %v1184, %v1427
      %v1475 = vadd.f32 %v1187, %v1430
      %v1476 = vadd.f32 %v1190, %v1433
      %v1477 = vadd.f32 %v1193, %v1436
      %v1478 = vadd.f32 %v1196, %v1439
      %v1479 = vadd.f32 %v1199, %v1442
      %v1480 = vadd.f32 %v1202, %v1445
      %v1481 = vadd.f32 %v1205, %v1448
      %v1482 = vld [vmem:[%s602] sm:$0xff]
      %v1483 = vld [vmem:[%s602 + $0x8] sm:$0xff]
      %v1484 = vld [vmem:[%s602 + $0x18] sm:$0xff]
      %v1485 = vld [vmem:[%s602 + $0x20] sm:$0xff]
      %v1486 = vld [vmem:[%s602 + $0x30] sm:$0xff]
      %v1487 = vld [vmem:[%s602 + $0x38] sm:$0xff]
      %v1488 = vld [vmem:[%s602 + $0x48] sm:$0xff]
      %v1489 = vld [vmem:[%s602 + $0x50] sm:$0xff]
      %v1490 = vld [vmem:[%s602 + $0x60] sm:$0xff]
      %v1491 = vld [vmem:[%s602 + $0x68] sm:$0xff]
      %v1492 = vld [vmem:[%s602 + $0x78] sm:$0xff]
      %v1493 = vld [vmem:[%s602 + $0x80] sm:$0xff]
      %v1494 = vld [vmem:[%s602 + $0x90] sm:$0xff]
      %v1495 = vld [vmem:[%s602 + $0x98] sm:$0xff]
      %v1496 = vld [vmem:[%s602 + $0xa8] sm:$0xff]
      %v1497 = vld [vmem:[%s602 + $0xb0] sm:$0xff]
      %v1498 = vld [vmem:[%s602 + $0xc0] sm:$0xff]
      %v1499 = vld [vmem:[%s602 + $0xc8] sm:$0xff]
      %v1500 = vld [vmem:[%s602 + $0xd8] sm:$0xff]
      %v1501 = vld [vmem:[%s602 + $0xe0] sm:$0xff]
      %v1502 = vld [vmem:[%s602 + $0xf0] sm:$0xff]
      %v1503 = vld [vmem:[%s602 + $0xf8] sm:$0xff]
      %v1504 = vld [vmem:[%s602 + $0x108] sm:$0xff]
      %v1505 = vld [vmem:[%s602 + $0x110] sm:$0xff]
      %v1506 = vld [vmem:[%s602 + $0x120] sm:$0xff]
      %v1507 = vld [vmem:[%s602 + $0x128] sm:$0xff]
      %v1508 = vld [vmem:[%s602 + $0x138] sm:$0xff]
      %v1509 = vld [vmem:[%s602 + $0x140] sm:$0xff]
      %v1510 = vld [vmem:[%s602 + $0x150] sm:$0xff]
      %v1511 = vld [vmem:[%s602 + $0x158] sm:$0xff]
      %v1512 = vld [vmem:[%s602 + $0x168] sm:$0xff]
      %v1513 = vld [vmem:[%s602 + $0x170] sm:$0xff]
      %s1514 = scalar_lea.vmem %s5, 24
      %v1515 = vld [vmem:[%s1514] sm:$0xff]
      %v1517 = vsel %vm603, %v1482, 0
      %v1520 = vsel %vm603, %v1483, 0
      %v1523 = vsel %vm603, %v1484, 0
      %v1526 = vsel %vm603, %v1485, 0
      %v1529 = vsel %vm603, %v1486, 0
      %v1532 = vsel %vm603, %v1487, 0
      %v1535 = vsel %vm603, %v1488, 0
      %v1538 = vsel %vm603, %v1489, 0
      %v1541 = vsel %vm603, %v1490, 0
      %v1544 = vsel %vm603, %v1491, 0
      %v1547 = vsel %vm603, %v1492, 0
      %v1550 = vsel %vm603, %v1493, 0
      %v1553 = vsel %vm603, %v1494, 0
      %v1556 = vsel %vm603, %v1495, 0
      %v1559 = vsel %vm603, %v1496, 0
      %v1562 = vsel %vm603, %v1497, 0
      %v1565 = vsel %vm603, %v1498, 0
      %v1568 = vsel %vm603, %v1499, 0
      %v1571 = vsel %vm603, %v1500, 0
      %v1574 = vsel %vm603, %v1501, 0
      %v1577 = vsel %vm603, %v1502, 0
      %v1580 = vsel %vm603, %v1503, 0
      %v1583 = vsel %vm603, %v1504, 0
      %v1586 = vsel %vm603, %v1505, 0
      %v1589 = vsel %vm603, %v1506, 0
      %v1592 = vsel %vm603, %v1507, 0
      %v1595 = vsel %vm603, %v1508, 0
      %v1598 = vsel %vm603, %v1509, 0
      %v1601 = vsel %vm603, %v1510, 0
      %v1604 = vsel %vm603, %v1511, 0
      %v1607 = vsel %vm603, %v1512, 0
      %v1610 = vsel %vm603, %v1513, 0
      %1612 = vmatpush.msra.mxu0 0.0
      %1613 = vmatpush.msra.mxu0 0.0
      %1614 = vmatpush.msra.mxu0 0.0
      %1615 = vmatpush.msra.mxu0 0.0
      %1616 = vmatpush.msra.mxu0 0.0
      %1617 = vmatpush.msra.mxu0 0.0
      %1618 = vmatpush.msra.mxu0 0.0
      %1619 = vmatpush.msra.mxu0 0.0
      %1620 = vmatpush.msra.mxu0 0.0
      %1621 = vmatpush.msra.mxu0 0.0
      %1622 = vmatpush.msra.mxu0 0.0
      %1623 = vmatpush.msra.mxu0 0.0
      %1624 = vmatpush.msra.mxu0 0.0
      %1625 = vmatpush.msra.mxu0 0.0
      %1626 = vmatpush.msra.mxu0 0.0
      %1627 = vmatpush.msra.mxu0 %v1515
      %1628 = vmatmul.f32.gmra.mxu0 %v1517
      %v1629 = vpop.f32.mrf.mxu0
      %v1630 = vadd.f32 0.0, %v1629
      %1631 = vmatmul.f32.gmra.mxu0 %v1520
      %v1632 = vpop.f32.mrf.mxu0
      %v1633 = vadd.f32 0.0, %v1632
      %1634 = vmatmul.f32.gmra.mxu0 %v1523
      %v1635 = vpop.f32.mrf.mxu0
      %v1636 = vadd.f32 0.0, %v1635
      %1637 = vmatmul.f32.gmra.mxu0 %v1526
      %v1638 = vpop.f32.mrf.mxu0
      %v1639 = vadd.f32 0.0, %v1638
      %1640 = vmatmul.f32.gmra.mxu0 %v1529
      %v1641 = vpop.f32.mrf.mxu0
      %v1642 = vadd.f32 0.0, %v1641
      %1643 = vmatmul.f32.gmra.mxu0 %v1532
      %v1644 = vpop.f32.mrf.mxu0
      %v1645 = vadd.f32 0.0, %v1644
      %1646 = vmatmul.f32.gmra.mxu0 %v1535
      %v1647 = vpop.f32.mrf.mxu0
      %v1648 = vadd.f32 0.0, %v1647
      %1649 = vmatmul.f32.gmra.mxu0 %v1538
      %v1650 = vpop.f32.mrf.mxu0
      %v1651 = vadd.f32 0.0, %v1650
      %1652 = vmatmul.f32.gmra.mxu0 %v1541
      %v1653 = vpop.f32.mrf.mxu0
      %v1654 = vadd.f32 0.0, %v1653
      %1655 = vmatmul.f32.gmra.mxu0 %v1544
      %v1656 = vpop.f32.mrf.mxu0
      %v1657 = vadd.f32 0.0, %v1656
      %1658 = vmatmul.f32.gmra.mxu0 %v1547
      %v1659 = vpop.f32.mrf.mxu0
      %v1660 = vadd.f32 0.0, %v1659
      %1661 = vmatmul.f32.gmra.mxu0 %v1550
      %v1662 = vpop.f32.mrf.mxu0
      %v1663 = vadd.f32 0.0, %v1662
      %1664 = vmatmul.f32.gmra.mxu0 %v1553
      %v1665 = vpop.f32.mrf.mxu0
      %v1666 = vadd.f32 0.0, %v1665
      %1667 = vmatmul.f32.gmra.mxu0 %v1556
      %v1668 = vpop.f32.mrf.mxu0
      %v1669 = vadd.f32 0.0, %v1668
      %1670 = vmatmul.f32.gmra.mxu0 %v1559
      %v1671 = vpop.f32.mrf.mxu0
      %v1672 = vadd.f32 0.0, %v1671
      %1673 = vmatmul.f32.gmra.mxu0 %v1562
      %v1674 = vpop.f32.mrf.mxu0
      %v1675 = vadd.f32 0.0, %v1674
      %1676 = vmatmul.f32.gmra.mxu0 %v1565
      %v1677 = vpop.f32.mrf.mxu0
      %v1678 = vadd.f32 0.0, %v1677
      %1679 = vmatmul.f32.gmra.mxu0 %v1568
      %v1680 = vpop.f32.mrf.mxu0
      %v1681 = vadd.f32 0.0, %v1680
      %1682 = vmatmul.f32.gmra.mxu0 %v1571
      %v1683 = vpop.f32.mrf.mxu0
      %v1684 = vadd.f32 0.0, %v1683
      %1685 = vmatmul.f32.gmra.mxu0 %v1574
      %v1686 = vpop.f32.mrf.mxu0
      %v1687 = vadd.f32 0.0, %v1686
      %1688 = vmatmul.f32.gmra.mxu0 %v1577
      %v1689 = vpop.f32.mrf.mxu0
      %v1690 = vadd.f32 0.0, %v1689
      %1691 = vmatmul.f32.gmra.mxu0 %v1580
      %v1692 = vpop.f32.mrf.mxu0
      %v1693 = vadd.f32 0.0, %v1692
      %1694 = vmatmul.f32.gmra.mxu0 %v1583
      %v1695 = vpop.f32.mrf.mxu0
      %v1696 = vadd.f32 0.0, %v1695
      %1697 = vmatmul.f32.gmra.mxu0 %v1586
      %v1698 = vpop.f32.mrf.mxu0
      %v1699 = vadd.f32 0.0, %v1698
      %1700 = vmatmul.f32.gmra.mxu0 %v1589
      %v1701 = vpop.f32.mrf.mxu0
      %v1702 = vadd.f32 0.0, %v1701
      %1703 = vmatmul.f32.gmra.mxu0 %v1592
      %v1704 = vpop.f32.mrf.mxu0
      %v1705 = vadd.f32 0.0, %v1704
      %1706 = vmatmul.f32.gmra.mxu0 %v1595
      %v1707 = vpop.f32.mrf.mxu0
      %v1708 = vadd.f32 0.0, %v1707
      %1709 = vmatmul.f32.gmra.mxu0 %v1598
      %v1710 = vpop.f32.mrf.mxu0
      %v1711 = vadd.f32 0.0, %v1710
      %1712 = vmatmul.f32.gmra.mxu0 %v1601
      %v1713 = vpop.f32.mrf.mxu0
      %v1714 = vadd.f32 0.0, %v1713
      %1715 = vmatmul.f32.gmra.mxu0 %v1604
      %v1716 = vpop.f32.mrf.mxu0
      %v1717 = vadd.f32 0.0, %v1716
      %1718 = vmatmul.f32.gmra.mxu0 %v1607
      %v1719 = vpop.f32.mrf.mxu0
      %v1720 = vadd.f32 0.0, %v1719
      %1721 = vmatmul.f32.gmra.mxu0 %v1610
      %v1722 = vpop.f32.mrf.mxu0
      %v1723 = vadd.f32 0.0, %v1722
      %1724 = vdwg.mxu0
      %v1725 = vadd.f32 %v1450, %v1630
      %v1726 = vadd.f32 %v1451, %v1633
      %v1727 = vadd.f32 %v1452, %v1636
      %v1728 = vadd.f32 %v1453, %v1639
      %v1729 = vadd.f32 %v1454, %v1642
      %v1730 = vadd.f32 %v1455, %v1645
      %v1731 = vadd.f32 %v1456, %v1648
      %v1732 = vadd.f32 %v1457, %v1651
      %v1733 = vadd.f32 %v1458, %v1654
      %v1734 = vadd.f32 %v1459, %v1657
      %v1735 = vadd.f32 %v1460, %v1660
      %v1736 = vadd.f32 %v1461, %v1663
      %v1737 = vadd.f32 %v1462, %v1666
      %v1738 = vadd.f32 %v1463, %v1669
      %v1739 = vadd.f32 %v1464, %v1672
      %v1740 = vadd.f32 %v1465, %v1675
      %v1741 = vadd.f32 %v1466, %v1678
      %v1742 = vadd.f32 %v1467, %v1681
      %v1743 = vadd.f32 %v1468, %v1684
      %v1744 = vadd.f32 %v1469, %v1687
      %v1745 = vadd.f32 %v1470, %v1690
      %v1746 = vadd.f32 %v1471, %v1693
      %v1747 = vadd.f32 %v1472, %v1696
      %v1748 = vadd.f32 %v1473, %v1699
      %v1749 = vadd.f32 %v1474, %v1702
      %v1750 = vadd.f32 %v1475, %v1705
      %v1751 = vadd.f32 %v1476, %v1708
      %v1752 = vadd.f32 %v1477, %v1711
      %v1753 = vadd.f32 %v1478, %v1714
      %v1754 = vadd.f32 %v1479, %v1717
      %v1755 = vadd.f32 %v1480, %v1720
      %v1756 = vadd.f32 %v1481, %v1723
      %v1757 = vld [vmem:[%s602 + $0x1] sm:$0xff]
      %v1758 = vld [vmem:[%s602 + $0x9] sm:$0xff]
      %v1759 = vld [vmem:[%s602 + $0x19] sm:$0xff]
      %v1760 = vld [vmem:[%s602 + $0x21] sm:$0xff]
      %v1761 = vld [vmem:[%s602 + $0x31] sm:$0xff]
      %v1762 = vld [vmem:[%s602 + $0x39] sm:$0xff]
      %v1763 = vld [vmem:[%s602 + $0x49] sm:$0xff]
      %v1764 = vld [vmem:[%s602 + $0x51] sm:$0xff]
      %v1765 = vld [vmem:[%s602 + $0x61] sm:$0xff]
      %v1766 = vld [vmem:[%s602 + $0x69] sm:$0xff]
      %v1767 = vld [vmem:[%s602 + $0x79] sm:$0xff]
      %v1768 = vld [vmem:[%s602 + $0x81] sm:$0xff]
      %v1769 = vld [vmem:[%s602 + $0x91] sm:$0xff]
      %v1770 = vld [vmem:[%s602 + $0x99] sm:$0xff]
      %v1771 = vld [vmem:[%s602 + $0xa9] sm:$0xff]
      %v1772 = vld [vmem:[%s602 + $0xb1] sm:$0xff]
      %v1773 = vld [vmem:[%s602 + $0xc1] sm:$0xff]
      %v1774 = vld [vmem:[%s602 + $0xc9] sm:$0xff]
      %v1775 = vld [vmem:[%s602 + $0xd9] sm:$0xff]
      %v1776 = vld [vmem:[%s602 + $0xe1] sm:$0xff]
      %v1777 = vld [vmem:[%s602 + $0xf1] sm:$0xff]
      %v1778 = vld [vmem:[%s602 + $0xf9] sm:$0xff]
      %v1779 = vld [vmem:[%s602 + $0x109] sm:$0xff]
      %v1780 = vld [vmem:[%s602 + $0x111] sm:$0xff]
      %v1781 = vld [vmem:[%s602 + $0x121] sm:$0xff]
      %v1782 = vld [vmem:[%s602 + $0x129] sm:$0xff]
      %v1783 = vld [vmem:[%s602 + $0x139] sm:$0xff]
      %v1784 = vld [vmem:[%s602 + $0x141] sm:$0xff]
      %v1785 = vld [vmem:[%s602 + $0x151] sm:$0xff]
      %v1786 = vld [vmem:[%s602 + $0x159] sm:$0xff]
      %v1787 = vld [vmem:[%s602 + $0x169] sm:$0xff]
      %v1788 = vld [vmem:[%s602 + $0x171] sm:$0xff]
      %s1789 = scalar_lea.vmem %s5, 32
      %v1790 = vld [vmem:[%s1789] sm:$0xff]
      %v1792 = vsel %vm603, %v1757, 0
      %v1795 = vsel %vm603, %v1758, 0
      %v1798 = vsel %vm603, %v1759, 0
      %v1801 = vsel %vm603, %v1760, 0
      %v1804 = vsel %vm603, %v1761, 0
      %v1807 = vsel %vm603, %v1762, 0
      %v1810 = vsel %vm603, %v1763, 0
      %v1813 = vsel %vm603, %v1764, 0
      %v1816 = vsel %vm603, %v1765, 0
      %v1819 = vsel %vm603, %v1766, 0
      %v1822 = vsel %vm603, %v1767, 0
      %v1825 = vsel %vm603, %v1768, 0
      %v1828 = vsel %vm603, %v1769, 0
      %v1831 = vsel %vm603, %v1770, 0
      %v1834 = vsel %vm603, %v1771, 0
      %v1837 = vsel %vm603, %v1772, 0
      %v1840 = vsel %vm603, %v1773, 0
      %v1843 = vsel %vm603, %v1774, 0
      %v1846 = vsel %vm603, %v1775, 0
      %v1849 = vsel %vm603, %v1776, 0
      %v1852 = vsel %vm603, %v1777, 0
      %v1855 = vsel %vm603, %v1778, 0
      %v1858 = vsel %vm603, %v1779, 0
      %v1861 = vsel %vm603, %v1780, 0
      %v1864 = vsel %vm603, %v1781, 0
      %v1867 = vsel %vm603, %v1782, 0
      %v1870 = vsel %vm603, %v1783, 0
      %v1873 = vsel %vm603, %v1784, 0
      %v1876 = vsel %vm603, %v1785, 0
      %v1879 = vsel %vm603, %v1786, 0
      %v1882 = vsel %vm603, %v1787, 0
      %v1885 = vsel %vm603, %v1788, 0
      %1887 = vmatpush.msra.mxu0 0.0
      %1888 = vmatpush.msra.mxu0 0.0
      %1889 = vmatpush.msra.mxu0 0.0
      %1890 = vmatpush.msra.mxu0 0.0
      %1891 = vmatpush.msra.mxu0 0.0
      %1892 = vmatpush.msra.mxu0 0.0
      %1893 = vmatpush.msra.mxu0 0.0
      %1894 = vmatpush.msra.mxu0 0.0
      %1895 = vmatpush.msra.mxu0 0.0
      %1896 = vmatpush.msra.mxu0 0.0
      %1897 = vmatpush.msra.mxu0 0.0
      %1898 = vmatpush.msra.mxu0 0.0
      %1899 = vmatpush.msra.mxu0 0.0
      %1900 = vmatpush.msra.mxu0 0.0
      %1901 = vmatpush.msra.mxu0 0.0
      %1902 = vmatpush.msra.mxu0 %v1790
      %1903 = vmatmul.f32.gmra.mxu0 %v1792
      %v1904 = vpop.f32.mrf.mxu0
      %v1905 = vadd.f32 0.0, %v1904
      %1906 = vmatmul.f32.gmra.mxu0 %v1795
      %v1907 = vpop.f32.mrf.mxu0
      %v1908 = vadd.f32 0.0, %v1907
      %1909 = vmatmul.f32.gmra.mxu0 %v1798
      %v1910 = vpop.f32.mrf.mxu0
      %v1911 = vadd.f32 0.0, %v1910
      %1912 = vmatmul.f32.gmra.mxu0 %v1801
      %v1913 = vpop.f32.mrf.mxu0
      %v1914 = vadd.f32 0.0, %v1913
      %1915 = vmatmul.f32.gmra.mxu0 %v1804
      %v1916 = vpop.f32.mrf.mxu0
      %v1917 = vadd.f32 0.0, %v1916
      %1918 = vmatmul.f32.gmra.mxu0 %v1807
      %v1919 = vpop.f32.mrf.mxu0
      %v1920 = vadd.f32 0.0, %v1919
      %1921 = vmatmul.f32.gmra.mxu0 %v1810
      %v1922 = vpop.f32.mrf.mxu0
      %v1923 = vadd.f32 0.0, %v1922
      %1924 = vmatmul.f32.gmra.mxu0 %v1813
      %v1925 = vpop.f32.mrf.mxu0
      %v1926 = vadd.f32 0.0, %v1925
      %1927 = vmatmul.f32.gmra.mxu0 %v1816
      %v1928 = vpop.f32.mrf.mxu0
      %v1929 = vadd.f32 0.0, %v1928
      %1930 = vmatmul.f32.gmra.mxu0 %v1819
      %v1931 = vpop.f32.mrf.mxu0
      %v1932 = vadd.f32 0.0, %v1931
      %1933 = vmatmul.f32.gmra.mxu0 %v1822
      %v1934 = vpop.f32.mrf.mxu0
      %v1935 = vadd.f32 0.0, %v1934
      %1936 = vmatmul.f32.gmra.mxu0 %v1825
      %v1937 = vpop.f32.mrf.mxu0
      %v1938 = vadd.f32 0.0, %v1937
      %1939 = vmatmul.f32.gmra.mxu0 %v1828
      %v1940 = vpop.f32.mrf.mxu0
      %v1941 = vadd.f32 0.0, %v1940
      %1942 = vmatmul.f32.gmra.mxu0 %v1831
      %v1943 = vpop.f32.mrf.mxu0
      %v1944 = vadd.f32 0.0, %v1943
      %1945 = vmatmul.f32.gmra.mxu0 %v1834
      %v1946 = vpop.f32.mrf.mxu0
      %v1947 = vadd.f32 0.0, %v1946
      %1948 = vmatmul.f32.gmra.mxu0 %v1837
      %v1949 = vpop.f32.mrf.mxu0
      %v1950 = vadd.f32 0.0, %v1949
      %1951 = vmatmul.f32.gmra.mxu0 %v1840
      %v1952 = vpop.f32.mrf.mxu0
      %v1953 = vadd.f32 0.0, %v1952
      %1954 = vmatmul.f32.gmra.mxu0 %v1843
      %v1955 = vpop.f32.mrf.mxu0
      %v1956 = vadd.f32 0.0, %v1955
      %1957 = vmatmul.f32.gmra.mxu0 %v1846
      %v1958 = vpop.f32.mrf.mxu0
      %v1959 = vadd.f32 0.0, %v1958
      %1960 = vmatmul.f32.gmra.mxu0 %v1849
      %v1961 = vpop.f32.mrf.mxu0
      %v1962 = vadd.f32 0.0, %v1961
      %1963 = vmatmul.f32.gmra.mxu0 %v1852
      %v1964 = vpop.f32.mrf.mxu0
      %v1965 = vadd.f32 0.0, %v1964
      %1966 = vmatmul.f32.gmra.mxu0 %v1855
      %v1967 = vpop.f32.mrf.mxu0
      %v1968 = vadd.f32 0.0, %v1967
      %1969 = vmatmul.f32.gmra.mxu0 %v1858
      %v1970 = vpop.f32.mrf.mxu0
      %v1971 = vadd.f32 0.0, %v1970
      %1972 = vmatmul.f32.gmra.mxu0 %v1861
      %v1973 = vpop.f32.mrf.mxu0
      %v1974 = vadd.f32 0.0, %v1973
      %1975 = vmatmul.f32.gmra.mxu0 %v1864
      %v1976 = vpop.f32.mrf.mxu0
      %v1977 = vadd.f32 0.0, %v1976
      %1978 = vmatmul.f32.gmra.mxu0 %v1867
      %v1979 = vpop.f32.mrf.mxu0
      %v1980 = vadd.f32 0.0, %v1979
      %1981 = vmatmul.f32.gmra.mxu0 %v1870
      %v1982 = vpop.f32.mrf.mxu0
      %v1983 = vadd.f32 0.0, %v1982
      %1984 = vmatmul.f32.gmra.mxu0 %v1873
      %v1985 = vpop.f32.mrf.mxu0
      %v1986 = vadd.f32 0.0, %v1985
      %1987 = vmatmul.f32.gmra.mxu0 %v1876
      %v1988 = vpop.f32.mrf.mxu0
      %v1989 = vadd.f32 0.0, %v1988
      %1990 = vmatmul.f32.gmra.mxu0 %v1879
      %v1991 = vpop.f32.mrf.mxu0
      %v1992 = vadd.f32 0.0, %v1991
      %1993 = vmatmul.f32.gmra.mxu0 %v1882
      %v1994 = vpop.f32.mrf.mxu0
      %v1995 = vadd.f32 0.0, %v1994
      %1996 = vmatmul.f32.gmra.mxu0 %v1885
      %v1997 = vpop.f32.mrf.mxu0
      %v1998 = vadd.f32 0.0, %v1997
      %1999 = vdwg.mxu0
      %v2000 = vadd.f32 %v1725, %v1905
      %v2001 = vadd.f32 %v1726, %v1908
      %v2002 = vadd.f32 %v1727, %v1911
      %v2003 = vadd.f32 %v1728, %v1914
      %v2004 = vadd.f32 %v1729, %v1917
      %v2005 = vadd.f32 %v1730, %v1920
      %v2006 = vadd.f32 %v1731, %v1923
      %v2007 = vadd.f32 %v1732, %v1926
      %v2008 = vadd.f32 %v1733, %v1929
      %v2009 = vadd.f32 %v1734, %v1932
      %v2010 = vadd.f32 %v1735, %v1935
      %v2011 = vadd.f32 %v1736, %v1938
      %v2012 = vadd.f32 %v1737, %v1941
      %v2013 = vadd.f32 %v1738, %v1944
      %v2014 = vadd.f32 %v1739, %v1947
      %v2015 = vadd.f32 %v1740, %v1950
      %v2016 = vadd.f32 %v1741, %v1953
      %v2017 = vadd.f32 %v1742, %v1956
      %v2018 = vadd.f32 %v1743, %v1959
      %v2019 = vadd.f32 %v1744, %v1962
      %v2020 = vadd.f32 %v1745, %v1965
      %v2021 = vadd.f32 %v1746, %v1968
      %v2022 = vadd.f32 %v1747, %v1971
      %v2023 = vadd.f32 %v1748, %v1974
      %v2024 = vadd.f32 %v1749, %v1977
      %v2025 = vadd.f32 %v1750, %v1980
      %v2026 = vadd.f32 %v1751, %v1983
      %v2027 = vadd.f32 %v1752, %v1986
      %v2028 = vadd.f32 %v1753, %v1989
      %v2029 = vadd.f32 %v1754, %v1992
      %v2030 = vadd.f32 %v1755, %v1995
      %v2031 = vadd.f32 %v1756, %v1998
      %v2032 = vld [vmem:[%s602 + $0x2] sm:$0xff]
      %v2033 = vld [vmem:[%s602 + $0xa] sm:$0xff]
      %v2034 = vld [vmem:[%s602 + $0x1a] sm:$0xff]
      %v2035 = vld [vmem:[%s602 + $0x22] sm:$0xff]
      %v2036 = vld [vmem:[%s602 + $0x32] sm:$0xff]
      %v2037 = vld [vmem:[%s602 + $0x3a] sm:$0xff]
      %v2038 = vld [vmem:[%s602 + $0x4a] sm:$0xff]
      %v2039 = vld [vmem:[%s602 + $0x52] sm:$0xff]
      %v2040 = vld [vmem:[%s602 + $0x62] sm:$0xff]
      %v2041 = vld [vmem:[%s602 + $0x6a] sm:$0xff]
      %v2042 = vld [vmem:[%s602 + $0x7a] sm:$0xff]
      %v2043 = vld [vmem:[%s602 + $0x82] sm:$0xff]
      %v2044 = vld [vmem:[%s602 + $0x92] sm:$0xff]
      %v2045 = vld [vmem:[%s602 + $0x9a] sm:$0xff]
      %v2046 = vld [vmem:[%s602 + $0xaa] sm:$0xff]
      %v2047 = vld [vmem:[%s602 + $0xb2] sm:$0xff]
      %v2048 = vld [vmem:[%s602 + $0xc2] sm:$0xff]
      %v2049 = vld [vmem:[%s602 + $0xca] sm:$0xff]
      %v2050 = vld [vmem:[%s602 + $0xda] sm:$0xff]
      %v2051 = vld [vmem:[%s602 + $0xe2] sm:$0xff]
      %v2052 = vld [vmem:[%s602 + $0xf2] sm:$0xff]
      %v2053 = vld [vmem:[%s602 + $0xfa] sm:$0xff]
      %v2054 = vld [vmem:[%s602 + $0x10a] sm:$0xff]
      %v2055 = vld [vmem:[%s602 + $0x112] sm:$0xff]
      %v2056 = vld [vmem:[%s602 + $0x122] sm:$0xff]
      %v2057 = vld [vmem:[%s602 + $0x12a] sm:$0xff]
      %v2058 = vld [vmem:[%s602 + $0x13a] sm:$0xff]
      %v2059 = vld [vmem:[%s602 + $0x142] sm:$0xff]
      %v2060 = vld [vmem:[%s602 + $0x152] sm:$0xff]
      %v2061 = vld [vmem:[%s602 + $0x15a] sm:$0xff]
      %v2062 = vld [vmem:[%s602 + $0x16a] sm:$0xff]
      %v2063 = vld [vmem:[%s602 + $0x172] sm:$0xff]
      %s2064 = scalar_lea.vmem %s5, 40
      %v2065 = vld [vmem:[%s2064] sm:$0xff]
      %v2067 = vsel %vm603, %v2032, 0
      %v2070 = vsel %vm603, %v2033, 0
      %v2073 = vsel %vm603, %v2034, 0
      %v2076 = vsel %vm603, %v2035, 0
      %v2079 = vsel %vm603, %v2036, 0
      %v2082 = vsel %vm603, %v2037, 0
      %v2085 = vsel %vm603, %v2038, 0
      %v2088 = vsel %vm603, %v2039, 0
      %v2091 = vsel %vm603, %v2040, 0
      %v2094 = vsel %vm603, %v2041, 0
      %v2097 = vsel %vm603, %v2042, 0
      %v2100 = vsel %vm603, %v2043, 0
      %v2103 = vsel %vm603, %v2044, 0
      %v2106 = vsel %vm603, %v2045, 0
      %v2109 = vsel %vm603, %v2046, 0
      %v2112 = vsel %vm603, %v2047, 0
      %v2115 = vsel %vm603, %v2048, 0
      %v2118 = vsel %vm603, %v2049, 0
      %v2121 = vsel %vm603, %v2050, 0
      %v2124 = vsel %vm603, %v2051, 0
      %v2127 = vsel %vm603, %v2052, 0
      %v2130 = vsel %vm603, %v2053, 0
      %v2133 = vsel %vm603, %v2054, 0
      %v2136 = vsel %vm603, %v2055, 0
      %v2139 = vsel %vm603, %v2056, 0
      %v2142 = vsel %vm603, %v2057, 0
      %v2145 = vsel %vm603, %v2058, 0
      %v2148 = vsel %vm603, %v2059, 0
      %v2151 = vsel %vm603, %v2060, 0
      %v2154 = vsel %vm603, %v2061, 0
      %v2157 = vsel %vm603, %v2062, 0
      %v2160 = vsel %vm603, %v2063, 0
      %2162 = vmatpush.msra.mxu0 0.0
      %2163 = vmatpush.msra.mxu0 0.0
      %2164 = vmatpush.msra.mxu0 0.0
      %2165 = vmatpush.msra.mxu0 0.0
      %2166 = vmatpush.msra.mxu0 0.0
      %2167 = vmatpush.msra.mxu0 0.0
      %2168 = vmatpush.msra.mxu0 0.0
      %2169 = vmatpush.msra.mxu0 0.0
      %2170 = vmatpush.msra.mxu0 0.0
      %2171 = vmatpush.msra.mxu0 0.0
      %2172 = vmatpush.msra.mxu0 0.0
      %2173 = vmatpush.msra.mxu0 0.0
      %2174 = vmatpush.msra.mxu0 0.0
      %2175 = vmatpush.msra.mxu0 0.0
      %2176 = vmatpush.msra.mxu0 0.0
      %2177 = vmatpush.msra.mxu0 %v2065
      %2178 = vmatmul.f32.gmra.mxu0 %v2067
      %v2179 = vpop.f32.mrf.mxu0
      %v2180 = vadd.f32 0.0, %v2179
      %2181 = vmatmul.f32.gmra.mxu0 %v2070
      %v2182 = vpop.f32.mrf.mxu0
      %v2183 = vadd.f32 0.0, %v2182
      %2184 = vmatmul.f32.gmra.mxu0 %v2073
      %v2185 = vpop.f32.mrf.mxu0
      %v2186 = vadd.f32 0.0, %v2185
      %2187 = vmatmul.f32.gmra.mxu0 %v2076
      %v2188 = vpop.f32.mrf.mxu0
      %v2189 = vadd.f32 0.0, %v2188
      %2190 = vmatmul.f32.gmra.mxu0 %v2079
      %v2191 = vpop.f32.mrf.mxu0
      %v2192 = vadd.f32 0.0, %v2191
      %2193 = vmatmul.f32.gmra.mxu0 %v2082
      %v2194 = vpop.f32.mrf.mxu0
      %v2195 = vadd.f32 0.0, %v2194
      %2196 = vmatmul.f32.gmra.mxu0 %v2085
      %v2197 = vpop.f32.mrf.mxu0
      %v2198 = vadd.f32 0.0, %v2197
      %2199 = vmatmul.f32.gmra.mxu0 %v2088
      %v2200 = vpop.f32.mrf.mxu0
      %v2201 = vadd.f32 0.0, %v2200
      %2202 = vmatmul.f32.gmra.mxu0 %v2091
      %v2203 = vpop.f32.mrf.mxu0
      %v2204 = vadd.f32 0.0, %v2203
      %2205 = vmatmul.f32.gmra.mxu0 %v2094
      %v2206 = vpop.f32.mrf.mxu0
      %v2207 = vadd.f32 0.0, %v2206
      %2208 = vmatmul.f32.gmra.mxu0 %v2097
      %v2209 = vpop.f32.mrf.mxu0
      %v2210 = vadd.f32 0.0, %v2209
      %2211 = vmatmul.f32.gmra.mxu0 %v2100
      %v2212 = vpop.f32.mrf.mxu0
      %v2213 = vadd.f32 0.0, %v2212
      %2214 = vmatmul.f32.gmra.mxu0 %v2103
      %v2215 = vpop.f32.mrf.mxu0
      %v2216 = vadd.f32 0.0, %v2215
      %2217 = vmatmul.f32.gmra.mxu0 %v2106
      %v2218 = vpop.f32.mrf.mxu0
      %v2219 = vadd.f32 0.0, %v2218
      %2220 = vmatmul.f32.gmra.mxu0 %v2109
      %v2221 = vpop.f32.mrf.mxu0
      %v2222 = vadd.f32 0.0, %v2221
      %2223 = vmatmul.f32.gmra.mxu0 %v2112
      %v2224 = vpop.f32.mrf.mxu0
      %v2225 = vadd.f32 0.0, %v2224
      %2226 = vmatmul.f32.gmra.mxu0 %v2115
      %v2227 = vpop.f32.mrf.mxu0
      %v2228 = vadd.f32 0.0, %v2227
      %2229 = vmatmul.f32.gmra.mxu0 %v2118
      %v2230 = vpop.f32.mrf.mxu0
      %v2231 = vadd.f32 0.0, %v2230
      %2232 = vmatmul.f32.gmra.mxu0 %v2121
      %v2233 = vpop.f32.mrf.mxu0
      %v2234 = vadd.f32 0.0, %v2233
      %2235 = vmatmul.f32.gmra.mxu0 %v2124
      %v2236 = vpop.f32.mrf.mxu0
      %v2237 = vadd.f32 0.0, %v2236
      %2238 = vmatmul.f32.gmra.mxu0 %v2127
      %v2239 = vpop.f32.mrf.mxu0
      %v2240 = vadd.f32 0.0, %v2239
      %2241 = vmatmul.f32.gmra.mxu0 %v2130
      %v2242 = vpop.f32.mrf.mxu0
      %v2243 = vadd.f32 0.0, %v2242
      %2244 = vmatmul.f32.gmra.mxu0 %v2133
      %v2245 = vpop.f32.mrf.mxu0
      %v2246 = vadd.f32 0.0, %v2245
      %2247 = vmatmul.f32.gmra.mxu0 %v2136
      %v2248 = vpop.f32.mrf.mxu0
      %v2249 = vadd.f32 0.0, %v2248
      %2250 = vmatmul.f32.gmra.mxu0 %v2139
      %v2251 = vpop.f32.mrf.mxu0
      %v2252 = vadd.f32 0.0, %v2251
      %2253 = vmatmul.f32.gmra.mxu0 %v2142
      %v2254 = vpop.f32.mrf.mxu0
      %v2255 = vadd.f32 0.0, %v2254
      %2256 = vmatmul.f32.gmra.mxu0 %v2145
      %v2257 = vpop.f32.mrf.mxu0
      %v2258 = vadd.f32 0.0, %v2257
      %2259 = vmatmul.f32.gmra.mxu0 %v2148
      %v2260 = vpop.f32.mrf.mxu0
      %v2261 = vadd.f32 0.0, %v2260
      %2262 = vmatmul.f32.gmra.mxu0 %v2151
      %v2263 = vpop.f32.mrf.mxu0
      %v2264 = vadd.f32 0.0, %v2263
      %2265 = vmatmul.f32.gmra.mxu0 %v2154
      %v2266 = vpop.f32.mrf.mxu0
      %v2267 = vadd.f32 0.0, %v2266
      %2268 = vmatmul.f32.gmra.mxu0 %v2157
      %v2269 = vpop.f32.mrf.mxu0
      %v2270 = vadd.f32 0.0, %v2269
      %2271 = vmatmul.f32.gmra.mxu0 %v2160
      %v2272 = vpop.f32.mrf.mxu0
      %v2273 = vadd.f32 0.0, %v2272
      %2274 = vdwg.mxu0
      %v2275 = vadd.f32 %v2000, %v2180
      %v2276 = vadd.f32 %v2001, %v2183
      %v2277 = vadd.f32 %v2002, %v2186
      %v2278 = vadd.f32 %v2003, %v2189
      %v2279 = vadd.f32 %v2004, %v2192
      %v2280 = vadd.f32 %v2005, %v2195
      %v2281 = vadd.f32 %v2006, %v2198
      %v2282 = vadd.f32 %v2007, %v2201
      %v2283 = vadd.f32 %v2008, %v2204
      %v2284 = vadd.f32 %v2009, %v2207
      %v2285 = vadd.f32 %v2010, %v2210
      %v2286 = vadd.f32 %v2011, %v2213
      %v2287 = vadd.f32 %v2012, %v2216
      %v2288 = vadd.f32 %v2013, %v2219
      %v2289 = vadd.f32 %v2014, %v2222
      %v2290 = vadd.f32 %v2015, %v2225
      %v2291 = vadd.f32 %v2016, %v2228
      %v2292 = vadd.f32 %v2017, %v2231
      %v2293 = vadd.f32 %v2018, %v2234
      %v2294 = vadd.f32 %v2019, %v2237
      %v2295 = vadd.f32 %v2020, %v2240
      %v2296 = vadd.f32 %v2021, %v2243
      %v2297 = vadd.f32 %v2022, %v2246
      %v2298 = vadd.f32 %v2023, %v2249
      %v2299 = vadd.f32 %v2024, %v2252
      %v2300 = vadd.f32 %v2025, %v2255
      %v2301 = vadd.f32 %v2026, %v2258
      %v2302 = vadd.f32 %v2027, %v2261
      %v2303 = vadd.f32 %v2028, %v2264
      %v2304 = vadd.f32 %v2029, %v2267
      %v2305 = vadd.f32 %v2030, %v2270
      %v2306 = vadd.f32 %v2031, %v2273
      %s2307 = scalar_lea.vmem [#allocation2], 48
      %v2308 = vld [vmem:[%s2307] sm:$0xff]
      %v2309 = vld [vmem:[%s2307 + $0x8] sm:$0xff]
      %v2310 = vld [vmem:[%s2307 + $0x18] sm:$0xff]
      %v2311 = vld [vmem:[%s2307 + $0x20] sm:$0xff]
      %v2312 = vld [vmem:[%s2307 + $0x30] sm:$0xff]
      %v2313 = vld [vmem:[%s2307 + $0x38] sm:$0xff]
      %v2314 = vld [vmem:[%s2307 + $0x48] sm:$0xff]
      %v2315 = vld [vmem:[%s2307 + $0x50] sm:$0xff]
      %v2316 = vld [vmem:[%s2307 + $0x60] sm:$0xff]
      %v2317 = vld [vmem:[%s2307 + $0x68] sm:$0xff]
      %v2318 = vld [vmem:[%s2307 + $0x78] sm:$0xff]
      %v2319 = vld [vmem:[%s2307 + $0x80] sm:$0xff]
      %v2320 = vld [vmem:[%s2307 + $0x90] sm:$0xff]
      %v2321 = vld [vmem:[%s2307 + $0x98] sm:$0xff]
      %v2322 = vld [vmem:[%s2307 + $0xa8] sm:$0xff]
      %v2323 = vld [vmem:[%s2307 + $0xb0] sm:$0xff]
      %v2324 = vld [vmem:[%s2307 + $0xc0] sm:$0xff]
      %v2325 = vld [vmem:[%s2307 + $0xc8] sm:$0xff]
      %v2326 = vld [vmem:[%s2307 + $0xd8] sm:$0xff]
      %v2327 = vld [vmem:[%s2307 + $0xe0] sm:$0xff]
      %v2328 = vld [vmem:[%s2307 + $0xf0] sm:$0xff]
      %v2329 = vld [vmem:[%s2307 + $0xf8] sm:$0xff]
      %v2330 = vld [vmem:[%s2307 + $0x108] sm:$0xff]
      %v2331 = vld [vmem:[%s2307 + $0x110] sm:$0xff]
      %v2332 = vld [vmem:[%s2307 + $0x120] sm:$0xff]
      %v2333 = vld [vmem:[%s2307 + $0x128] sm:$0xff]
      %v2334 = vld [vmem:[%s2307 + $0x138] sm:$0xff]
      %v2335 = vld [vmem:[%s2307 + $0x140] sm:$0xff]
      %v2336 = vld [vmem:[%s2307 + $0x150] sm:$0xff]
      %v2337 = vld [vmem:[%s2307 + $0x158] sm:$0xff]
      %v2338 = vld [vmem:[%s2307 + $0x168] sm:$0xff]
      %v2339 = vld [vmem:[%s2307 + $0x170] sm:$0xff]
      %s2340 = scalar_lea.vmem %s5, 48
      %v2341 = vld [vmem:[%s2340] sm:$0xff]
      %v2343 = vsel %vm603, %v2308, 0
      %v2346 = vsel %vm603, %v2309, 0
      %v2349 = vsel %vm603, %v2310, 0
      %v2352 = vsel %vm603, %v2311, 0
      %v2355 = vsel %vm603, %v2312, 0
      %v2358 = vsel %vm603, %v2313, 0
      %v2361 = vsel %vm603, %v2314, 0
      %v2364 = vsel %vm603, %v2315, 0
      %v2367 = vsel %vm603, %v2316, 0
      %v2370 = vsel %vm603, %v2317, 0
      %v2373 = vsel %vm603, %v2318, 0
      %v2376 = vsel %vm603, %v2319, 0
      %v2379 = vsel %vm603, %v2320, 0
      %v2382 = vsel %vm603, %v2321, 0
      %v2385 = vsel %vm603, %v2322, 0
      %v2388 = vsel %vm603, %v2323, 0
      %v2391 = vsel %vm603, %v2324, 0
      %v2394 = vsel %vm603, %v2325, 0
      %v2397 = vsel %vm603, %v2326, 0
      %v2400 = vsel %vm603, %v2327, 0
      %v2403 = vsel %vm603, %v2328, 0
      %v2406 = vsel %vm603, %v2329, 0
      %v2409 = vsel %vm603, %v2330, 0
      %v2412 = vsel %vm603, %v2331, 0
      %v2415 = vsel %vm603, %v2332, 0
      %v2418 = vsel %vm603, %v2333, 0
      %v2421 = vsel %vm603, %v2334, 0
      %v2424 = vsel %vm603, %v2335, 0
      %v2427 = vsel %vm603, %v2336, 0
      %v2430 = vsel %vm603, %v2337, 0
      %v2433 = vsel %vm603, %v2338, 0
      %v2436 = vsel %vm603, %v2339, 0
      %2438 = vmatpush.msra.mxu0 0.0
      %2439 = vmatpush.msra.mxu0 0.0
      %2440 = vmatpush.msra.mxu0 0.0
      %2441 = vmatpush.msra.mxu0 0.0
      %2442 = vmatpush.msra.mxu0 0.0
      %2443 = vmatpush.msra.mxu0 0.0
      %2444 = vmatpush.msra.mxu0 0.0
      %2445 = vmatpush.msra.mxu0 0.0
      %2446 = vmatpush.msra.mxu0 0.0
      %2447 = vmatpush.msra.mxu0 0.0
      %2448 = vmatpush.msra.mxu0 0.0
      %2449 = vmatpush.msra.mxu0 0.0
      %2450 = vmatpush.msra.mxu0 0.0
      %2451 = vmatpush.msra.mxu0 0.0
      %2452 = vmatpush.msra.mxu0 0.0
      %2453 = vmatpush.msra.mxu0 %v2341
      %2454 = vmatmul.f32.gmra.mxu0 %v2343
      %v2455 = vpop.f32.mrf.mxu0
      %v2456 = vadd.f32 0.0, %v2455
      %2457 = vmatmul.f32.gmra.mxu0 %v2346
      %v2458 = vpop.f32.mrf.mxu0
      %v2459 = vadd.f32 0.0, %v2458
      %2460 = vmatmul.f32.gmra.mxu0 %v2349
      %v2461 = vpop.f32.mrf.mxu0
      %v2462 = vadd.f32 0.0, %v2461
      %2463 = vmatmul.f32.gmra.mxu0 %v2352
      %v2464 = vpop.f32.mrf.mxu0
      %v2465 = vadd.f32 0.0, %v2464
      %2466 = vmatmul.f32.gmra.mxu0 %v2355
      %v2467 = vpop.f32.mrf.mxu0
      %v2468 = vadd.f32 0.0, %v2467
      %2469 = vmatmul.f32.gmra.mxu0 %v2358
      %v2470 = vpop.f32.mrf.mxu0
      %v2471 = vadd.f32 0.0, %v2470
      %2472 = vmatmul.f32.gmra.mxu0 %v2361
      %v2473 = vpop.f32.mrf.mxu0
      %v2474 = vadd.f32 0.0, %v2473
      %2475 = vmatmul.f32.gmra.mxu0 %v2364
      %v2476 = vpop.f32.mrf.mxu0
      %v2477 = vadd.f32 0.0, %v2476
      %2478 = vmatmul.f32.gmra.mxu0 %v2367
      %v2479 = vpop.f32.mrf.mxu0
      %v2480 = vadd.f32 0.0, %v2479
      %2481 = vmatmul.f32.gmra.mxu0 %v2370
      %v2482 = vpop.f32.mrf.mxu0
      %v2483 = vadd.f32 0.0, %v2482
      %2484 = vmatmul.f32.gmra.mxu0 %v2373
      %v2485 = vpop.f32.mrf.mxu0
      %v2486 = vadd.f32 0.0, %v2485
      %2487 = vmatmul.f32.gmra.mxu0 %v2376
      %v2488 = vpop.f32.mrf.mxu0
      %v2489 = vadd.f32 0.0, %v2488
      %2490 = vmatmul.f32.gmra.mxu0 %v2379
      %v2491 = vpop.f32.mrf.mxu0
      %v2492 = vadd.f32 0.0, %v2491
      %2493 = vmatmul.f32.gmra.mxu0 %v2382
      %v2494 = vpop.f32.mrf.mxu0
      %v2495 = vadd.f32 0.0, %v2494
      %2496 = vmatmul.f32.gmra.mxu0 %v2385
      %v2497 = vpop.f32.mrf.mxu0
      %v2498 = vadd.f32 0.0, %v2497
      %2499 = vmatmul.f32.gmra.mxu0 %v2388
      %v2500 = vpop.f32.mrf.mxu0
      %v2501 = vadd.f32 0.0, %v2500
      %2502 = vmatmul.f32.gmra.mxu0 %v2391
      %v2503 = vpop.f32.mrf.mxu0
      %v2504 = vadd.f32 0.0, %v2503
      %2505 = vmatmul.f32.gmra.mxu0 %v2394
      %v2506 = vpop.f32.mrf.mxu0
      %v2507 = vadd.f32 0.0, %v2506
      %2508 = vmatmul.f32.gmra.mxu0 %v2397
      %v2509 = vpop.f32.mrf.mxu0
      %v2510 = vadd.f32 0.0, %v2509
      %2511 = vmatmul.f32.gmra.mxu0 %v2400
      %v2512 = vpop.f32.mrf.mxu0
      %v2513 = vadd.f32 0.0, %v2512
      %2514 = vmatmul.f32.gmra.mxu0 %v2403
      %v2515 = vpop.f32.mrf.mxu0
      %v2516 = vadd.f32 0.0, %v2515
      %2517 = vmatmul.f32.gmra.mxu0 %v2406
      %v2518 = vpop.f32.mrf.mxu0
      %v2519 = vadd.f32 0.0, %v2518
      %2520 = vmatmul.f32.gmra.mxu0 %v2409
      %v2521 = vpop.f32.mrf.mxu0
      %v2522 = vadd.f32 0.0, %v2521
      %2523 = vmatmul.f32.gmra.mxu0 %v2412
      %v2524 = vpop.f32.mrf.mxu0
      %v2525 = vadd.f32 0.0, %v2524
      %2526 = vmatmul.f32.gmra.mxu0 %v2415
      %v2527 = vpop.f32.mrf.mxu0
      %v2528 = vadd.f32 0.0, %v2527
      %2529 = vmatmul.f32.gmra.mxu0 %v2418
      %v2530 = vpop.f32.mrf.mxu0
      %v2531 = vadd.f32 0.0, %v2530
      %2532 = vmatmul.f32.gmra.mxu0 %v2421
      %v2533 = vpop.f32.mrf.mxu0
      %v2534 = vadd.f32 0.0, %v2533
      %2535 = vmatmul.f32.gmra.mxu0 %v2424
      %v2536 = vpop.f32.mrf.mxu0
      %v2537 = vadd.f32 0.0, %v2536
      %2538 = vmatmul.f32.gmra.mxu0 %v2427
      %v2539 = vpop.f32.mrf.mxu0
      %v2540 = vadd.f32 0.0, %v2539
      %2541 = vmatmul.f32.gmra.mxu0 %v2430
      %v2542 = vpop.f32.mrf.mxu0
      %v2543 = vadd.f32 0.0, %v2542
      %2544 = vmatmul.f32.gmra.mxu0 %v2433
      %v2545 = vpop.f32.mrf.mxu0
      %v2546 = vadd.f32 0.0, %v2545
      %2547 = vmatmul.f32.gmra.mxu0 %v2436
      %v2548 = vpop.f32.mrf.mxu0
      %v2549 = vadd.f32 0.0, %v2548
      %2550 = vdwg.mxu0
      %v2551 = vadd.f32 %v2275, %v2456
      %v2552 = vadd.f32 %v2276, %v2459
      %v2553 = vadd.f32 %v2277, %v2462
      %v2554 = vadd.f32 %v2278, %v2465
      %v2555 = vadd.f32 %v2279, %v2468
      %v2556 = vadd.f32 %v2280, %v2471
      %v2557 = vadd.f32 %v2281, %v2474
      %v2558 = vadd.f32 %v2282, %v2477
      %v2559 = vadd.f32 %v2283, %v2480
      %v2560 = vadd.f32 %v2284, %v2483
      %v2561 = vadd.f32 %v2285, %v2486
      %v2562 = vadd.f32 %v2286, %v2489
      %v2563 = vadd.f32 %v2287, %v2492
      %v2564 = vadd.f32 %v2288, %v2495
      %v2565 = vadd.f32 %v2289, %v2498
      %v2566 = vadd.f32 %v2290, %v2501
      %v2567 = vadd.f32 %v2291, %v2504
      %v2568 = vadd.f32 %v2292, %v2507
      %v2569 = vadd.f32 %v2293, %v2510
      %v2570 = vadd.f32 %v2294, %v2513
      %v2571 = vadd.f32 %v2295, %v2516
      %v2572 = vadd.f32 %v2296, %v2519
      %v2573 = vadd.f32 %v2297, %v2522
      %v2574 = vadd.f32 %v2298, %v2525
      %v2575 = vadd.f32 %v2299, %v2528
      %v2576 = vadd.f32 %v2300, %v2531
      %v2577 = vadd.f32 %v2301, %v2534
      %v2578 = vadd.f32 %v2302, %v2537
      %v2579 = vadd.f32 %v2303, %v2540
      %v2580 = vadd.f32 %v2304, %v2543
      %v2581 = vadd.f32 %v2305, %v2546
      %v2582 = vadd.f32 %v2306, %v2549
      %v2583 = vld [vmem:[%s2307 + $0x1] sm:$0xff]
      %v2584 = vld [vmem:[%s2307 + $0x9] sm:$0xff]
      %v2585 = vld [vmem:[%s2307 + $0x19] sm:$0xff]
      %v2586 = vld [vmem:[%s2307 + $0x21] sm:$0xff]
      %v2587 = vld [vmem:[%s2307 + $0x31] sm:$0xff]
      %v2588 = vld [vmem:[%s2307 + $0x39] sm:$0xff]
      %v2589 = vld [vmem:[%s2307 + $0x49] sm:$0xff]
      %v2590 = vld [vmem:[%s2307 + $0x51] sm:$0xff]
      %v2591 = vld [vmem:[%s2307 + $0x61] sm:$0xff]
      %v2592 = vld [vmem:[%s2307 + $0x69] sm:$0xff]
      %v2593 = vld [vmem:[%s2307 + $0x79] sm:$0xff]
      %v2594 = vld [vmem:[%s2307 + $0x81] sm:$0xff]
      %v2595 = vld [vmem:[%s2307 + $0x91] sm:$0xff]
      %v2596 = vld [vmem:[%s2307 + $0x99] sm:$0xff]
      %v2597 = vld [vmem:[%s2307 + $0xa9] sm:$0xff]
      %v2598 = vld [vmem:[%s2307 + $0xb1] sm:$0xff]
      %v2599 = vld [vmem:[%s2307 + $0xc1] sm:$0xff]
      %v2600 = vld [vmem:[%s2307 + $0xc9] sm:$0xff]
      %v2601 = vld [vmem:[%s2307 + $0xd9] sm:$0xff]
      %v2602 = vld [vmem:[%s2307 + $0xe1] sm:$0xff]
      %v2603 = vld [vmem:[%s2307 + $0xf1] sm:$0xff]
      %v2604 = vld [vmem:[%s2307 + $0xf9] sm:$0xff]
      %v2605 = vld [vmem:[%s2307 + $0x109] sm:$0xff]
      %v2606 = vld [vmem:[%s2307 + $0x111] sm:$0xff]
      %v2607 = vld [vmem:[%s2307 + $0x121] sm:$0xff]
      %v2608 = vld [vmem:[%s2307 + $0x129] sm:$0xff]
      %v2609 = vld [vmem:[%s2307 + $0x139] sm:$0xff]
      %v2610 = vld [vmem:[%s2307 + $0x141] sm:$0xff]
      %v2611 = vld [vmem:[%s2307 + $0x151] sm:$0xff]
      %v2612 = vld [vmem:[%s2307 + $0x159] sm:$0xff]
      %v2613 = vld [vmem:[%s2307 + $0x169] sm:$0xff]
      %v2614 = vld [vmem:[%s2307 + $0x171] sm:$0xff]
      %s2615 = scalar_lea.vmem %s5, 56
      %v2616 = vld [vmem:[%s2615] sm:$0xff]
      %v2618 = vsel %vm603, %v2583, 0
      %v2621 = vsel %vm603, %v2584, 0
      %v2624 = vsel %vm603, %v2585, 0
      %v2627 = vsel %vm603, %v2586, 0
      %v2630 = vsel %vm603, %v2587, 0
      %v2633 = vsel %vm603, %v2588, 0
      %v2636 = vsel %vm603, %v2589, 0
      %v2639 = vsel %vm603, %v2590, 0
      %v2642 = vsel %vm603, %v2591, 0
      %v2645 = vsel %vm603, %v2592, 0
      %v2648 = vsel %vm603, %v2593, 0
      %v2651 = vsel %vm603, %v2594, 0
      %v2654 = vsel %vm603, %v2595, 0
      %v2657 = vsel %vm603, %v2596, 0
      %v2660 = vsel %vm603, %v2597, 0
      %v2663 = vsel %vm603, %v2598, 0
      %v2666 = vsel %vm603, %v2599, 0
      %v2669 = vsel %vm603, %v2600, 0
      %v2672 = vsel %vm603, %v2601, 0
      %v2675 = vsel %vm603, %v2602, 0
      %v2678 = vsel %vm603, %v2603, 0
      %v2681 = vsel %vm603, %v2604, 0
      %v2684 = vsel %vm603, %v2605, 0
      %v2687 = vsel %vm603, %v2606, 0
      %v2690 = vsel %vm603, %v2607, 0
      %v2693 = vsel %vm603, %v2608, 0
      %v2696 = vsel %vm603, %v2609, 0
      %v2699 = vsel %vm603, %v2610, 0
      %v2702 = vsel %vm603, %v2611, 0
      %v2705 = vsel %vm603, %v2612, 0
      %v2708 = vsel %vm603, %v2613, 0
      %v2711 = vsel %vm603, %v2614, 0
      %2713 = vmatpush.msra.mxu0 0.0
      %2714 = vmatpush.msra.mxu0 0.0
      %2715 = vmatpush.msra.mxu0 0.0
      %2716 = vmatpush.msra.mxu0 0.0
      %2717 = vmatpush.msra.mxu0 0.0
      %2718 = vmatpush.msra.mxu0 0.0
      %2719 = vmatpush.msra.mxu0 0.0
      %2720 = vmatpush.msra.mxu0 0.0
      %2721 = vmatpush.msra.mxu0 0.0
      %2722 = vmatpush.msra.mxu0 0.0
      %2723 = vmatpush.msra.mxu0 0.0
      %2724 = vmatpush.msra.mxu0 0.0
      %2725 = vmatpush.msra.mxu0 0.0
      %2726 = vmatpush.msra.mxu0 0.0
      %2727 = vmatpush.msra.mxu0 0.0
      %2728 = vmatpush.msra.mxu0 %v2616
      %2729 = vmatmul.f32.gmra.mxu0 %v2618
      %v2730 = vpop.f32.mrf.mxu0
      %v2731 = vadd.f32 0.0, %v2730
      %2732 = vmatmul.f32.gmra.mxu0 %v2621
      %v2733 = vpop.f32.mrf.mxu0
      %v2734 = vadd.f32 0.0, %v2733
      %2735 = vmatmul.f32.gmra.mxu0 %v2624
      %v2736 = vpop.f32.mrf.mxu0
      %v2737 = vadd.f32 0.0, %v2736
      %2738 = vmatmul.f32.gmra.mxu0 %v2627
      %v2739 = vpop.f32.mrf.mxu0
      %v2740 = vadd.f32 0.0, %v2739
      %2741 = vmatmul.f32.gmra.mxu0 %v2630
      %v2742 = vpop.f32.mrf.mxu0
      %v2743 = vadd.f32 0.0, %v2742
      %2744 = vmatmul.f32.gmra.mxu0 %v2633
      %v2745 = vpop.f32.mrf.mxu0
      %v2746 = vadd.f32 0.0, %v2745
      %2747 = vmatmul.f32.gmra.mxu0 %v2636
      %v2748 = vpop.f32.mrf.mxu0
      %v2749 = vadd.f32 0.0, %v2748
      %2750 = vmatmul.f32.gmra.mxu0 %v2639
      %v2751 = vpop.f32.mrf.mxu0
      %v2752 = vadd.f32 0.0, %v2751
      %2753 = vmatmul.f32.gmra.mxu0 %v2642
      %v2754 = vpop.f32.mrf.mxu0
      %v2755 = vadd.f32 0.0, %v2754
      %2756 = vmatmul.f32.gmra.mxu0 %v2645
      %v2757 = vpop.f32.mrf.mxu0
      %v2758 = vadd.f32 0.0, %v2757
      %2759 = vmatmul.f32.gmra.mxu0 %v2648
      %v2760 = vpop.f32.mrf.mxu0
      %v2761 = vadd.f32 0.0, %v2760
      %2762 = vmatmul.f32.gmra.mxu0 %v2651
      %v2763 = vpop.f32.mrf.mxu0
      %v2764 = vadd.f32 0.0, %v2763
      %2765 = vmatmul.f32.gmra.mxu0 %v2654
      %v2766 = vpop.f32.mrf.mxu0
      %v2767 = vadd.f32 0.0, %v2766
      %2768 = vmatmul.f32.gmra.mxu0 %v2657
      %v2769 = vpop.f32.mrf.mxu0
      %v2770 = vadd.f32 0.0, %v2769
      %2771 = vmatmul.f32.gmra.mxu0 %v2660
      %v2772 = vpop.f32.mrf.mxu0
      %v2773 = vadd.f32 0.0, %v2772
      %2774 = vmatmul.f32.gmra.mxu0 %v2663
      %v2775 = vpop.f32.mrf.mxu0
      %v2776 = vadd.f32 0.0, %v2775
      %2777 = vmatmul.f32.gmra.mxu0 %v2666
      %v2778 = vpop.f32.mrf.mxu0
      %v2779 = vadd.f32 0.0, %v2778
      %2780 = vmatmul.f32.gmra.mxu0 %v2669
      %v2781 = vpop.f32.mrf.mxu0
      %v2782 = vadd.f32 0.0, %v2781
      %2783 = vmatmul.f32.gmra.mxu0 %v2672
      %v2784 = vpop.f32.mrf.mxu0
      %v2785 = vadd.f32 0.0, %v2784
      %2786 = vmatmul.f32.gmra.mxu0 %v2675
      %v2787 = vpop.f32.mrf.mxu0
      %v2788 = vadd.f32 0.0, %v2787
      %2789 = vmatmul.f32.gmra.mxu0 %v2678
      %v2790 = vpop.f32.mrf.mxu0
      %v2791 = vadd.f32 0.0, %v2790
      %2792 = vmatmul.f32.gmra.mxu0 %v2681
      %v2793 = vpop.f32.mrf.mxu0
      %v2794 = vadd.f32 0.0, %v2793
      %2795 = vmatmul.f32.gmra.mxu0 %v2684
      %v2796 = vpop.f32.mrf.mxu0
      %v2797 = vadd.f32 0.0, %v2796
      %2798 = vmatmul.f32.gmra.mxu0 %v2687
      %v2799 = vpop.f32.mrf.mxu0
      %v2800 = vadd.f32 0.0, %v2799
      %2801 = vmatmul.f32.gmra.mxu0 %v2690
      %v2802 = vpop.f32.mrf.mxu0
      %v2803 = vadd.f32 0.0, %v2802
      %2804 = vmatmul.f32.gmra.mxu0 %v2693
      %v2805 = vpop.f32.mrf.mxu0
      %v2806 = vadd.f32 0.0, %v2805
      %2807 = vmatmul.f32.gmra.mxu0 %v2696
      %v2808 = vpop.f32.mrf.mxu0
      %v2809 = vadd.f32 0.0, %v2808
      %2810 = vmatmul.f32.gmra.mxu0 %v2699
      %v2811 = vpop.f32.mrf.mxu0
      %v2812 = vadd.f32 0.0, %v2811
      %2813 = vmatmul.f32.gmra.mxu0 %v2702
      %v2814 = vpop.f32.mrf.mxu0
      %v2815 = vadd.f32 0.0, %v2814
      %2816 = vmatmul.f32.gmra.mxu0 %v2705
      %v2817 = vpop.f32.mrf.mxu0
      %v2818 = vadd.f32 0.0, %v2817
      %2819 = vmatmul.f32.gmra.mxu0 %v2708
      %v2820 = vpop.f32.mrf.mxu0
      %v2821 = vadd.f32 0.0, %v2820
      %2822 = vmatmul.f32.gmra.mxu0 %v2711
      %v2823 = vpop.f32.mrf.mxu0
      %v2824 = vadd.f32 0.0, %v2823
      %2825 = vdwg.mxu0
      %v2826 = vadd.f32 %v2551, %v2731
      %v2827 = vadd.f32 %v2552, %v2734
      %v2828 = vadd.f32 %v2553, %v2737
      %v2829 = vadd.f32 %v2554, %v2740
      %v2830 = vadd.f32 %v2555, %v2743
      %v2831 = vadd.f32 %v2556, %v2746
      %v2832 = vadd.f32 %v2557, %v2749
      %v2833 = vadd.f32 %v2558, %v2752
      %v2834 = vadd.f32 %v2559, %v2755
      %v2835 = vadd.f32 %v2560, %v2758
      %v2836 = vadd.f32 %v2561, %v2761
      %v2837 = vadd.f32 %v2562, %v2764
      %v2838 = vadd.f32 %v2563, %v2767
      %v2839 = vadd.f32 %v2564, %v2770
      %v2840 = vadd.f32 %v2565, %v2773
      %v2841 = vadd.f32 %v2566, %v2776
      %v2842 = vadd.f32 %v2567, %v2779
      %v2843 = vadd.f32 %v2568, %v2782
      %v2844 = vadd.f32 %v2569, %v2785
      %v2845 = vadd.f32 %v2570, %v2788
      %v2846 = vadd.f32 %v2571, %v2791
      %v2847 = vadd.f32 %v2572, %v2794
      %v2848 = vadd.f32 %v2573, %v2797
      %v2849 = vadd.f32 %v2574, %v2800
      %v2850 = vadd.f32 %v2575, %v2803
      %v2851 = vadd.f32 %v2576, %v2806
      %v2852 = vadd.f32 %v2577, %v2809
      %v2853 = vadd.f32 %v2578, %v2812
      %v2854 = vadd.f32 %v2579, %v2815
      %v2855 = vadd.f32 %v2580, %v2818
      %v2856 = vadd.f32 %v2581, %v2821
      %v2857 = vadd.f32 %v2582, %v2824
      %v2858 = vld [vmem:[%s2307 + $0x2] sm:$0xff]
      %v2859 = vld [vmem:[%s2307 + $0xa] sm:$0xff]
      %v2860 = vld [vmem:[%s2307 + $0x1a] sm:$0xff]
      %v2861 = vld [vmem:[%s2307 + $0x22] sm:$0xff]
      %v2862 = vld [vmem:[%s2307 + $0x32] sm:$0xff]
      %v2863 = vld [vmem:[%s2307 + $0x3a] sm:$0xff]
      %v2864 = vld [vmem:[%s2307 + $0x4a] sm:$0xff]
      %v2865 = vld [vmem:[%s2307 + $0x52] sm:$0xff]
      %v2866 = vld [vmem:[%s2307 + $0x62] sm:$0xff]
      %v2867 = vld [vmem:[%s2307 + $0x6a] sm:$0xff]
      %v2868 = vld [vmem:[%s2307 + $0x7a] sm:$0xff]
      %v2869 = vld [vmem:[%s2307 + $0x82] sm:$0xff]
      %v2870 = vld [vmem:[%s2307 + $0x92] sm:$0xff]
      %v2871 = vld [vmem:[%s2307 + $0x9a] sm:$0xff]
      %v2872 = vld [vmem:[%s2307 + $0xaa] sm:$0xff]
      %v2873 = vld [vmem:[%s2307 + $0xb2] sm:$0xff]
      %v2874 = vld [vmem:[%s2307 + $0xc2] sm:$0xff]
      %v2875 = vld [vmem:[%s2307 + $0xca] sm:$0xff]
      %v2876 = vld [vmem:[%s2307 + $0xda] sm:$0xff]
      %v2877 = vld [vmem:[%s2307 + $0xe2] sm:$0xff]
      %v2878 = vld [vmem:[%s2307 + $0xf2] sm:$0xff]
      %v2879 = vld [vmem:[%s2307 + $0xfa] sm:$0xff]
      %v2880 = vld [vmem:[%s2307 + $0x10a] sm:$0xff]
      %v2881 = vld [vmem:[%s2307 + $0x112] sm:$0xff]
      %v2882 = vld [vmem:[%s2307 + $0x122] sm:$0xff]
      %v2883 = vld [vmem:[%s2307 + $0x12a] sm:$0xff]
      %v2884 = vld [vmem:[%s2307 + $0x13a] sm:$0xff]
      %v2885 = vld [vmem:[%s2307 + $0x142] sm:$0xff]
      %v2886 = vld [vmem:[%s2307 + $0x152] sm:$0xff]
      %v2887 = vld [vmem:[%s2307 + $0x15a] sm:$0xff]
      %v2888 = vld [vmem:[%s2307 + $0x16a] sm:$0xff]
      %v2889 = vld [vmem:[%s2307 + $0x172] sm:$0xff]
      %s2890 = scalar_lea.vmem %s5, 64
      %v2891 = vld [vmem:[%s2890] sm:$0xff]
      %v2893 = vsel %vm603, %v2858, 0
      %v2896 = vsel %vm603, %v2859, 0
      %v2899 = vsel %vm603, %v2860, 0
      %v2902 = vsel %vm603, %v2861, 0
      %v2905 = vsel %vm603, %v2862, 0
      %v2908 = vsel %vm603, %v2863, 0
      %v2911 = vsel %vm603, %v2864, 0
      %v2914 = vsel %vm603, %v2865, 0
      %v2917 = vsel %vm603, %v2866, 0
      %v2920 = vsel %vm603, %v2867, 0
      %v2923 = vsel %vm603, %v2868, 0
      %v2926 = vsel %vm603, %v2869, 0
      %v2929 = vsel %vm603, %v2870, 0
      %v2932 = vsel %vm603, %v2871, 0
      %v2935 = vsel %vm603, %v2872, 0
      %v2938 = vsel %vm603, %v2873, 0
      %v2941 = vsel %vm603, %v2874, 0
      %v2944 = vsel %vm603, %v2875, 0
      %v2947 = vsel %vm603, %v2876, 0
      %v2950 = vsel %vm603, %v2877, 0
      %v2953 = vsel %vm603, %v2878, 0
      %v2956 = vsel %vm603, %v2879, 0
      %v2959 = vsel %vm603, %v2880, 0
      %v2962 = vsel %vm603, %v2881, 0
      %v2965 = vsel %vm603, %v2882, 0
      %v2968 = vsel %vm603, %v2883, 0
      %v2971 = vsel %vm603, %v2884, 0
      %v2974 = vsel %vm603, %v2885, 0
      %v2977 = vsel %vm603, %v2886, 0
      %v2980 = vsel %vm603, %v2887, 0
      %v2983 = vsel %vm603, %v2888, 0
      %v2986 = vsel %vm603, %v2889, 0
      %2988 = vmatpush.msra.mxu0 0.0
      %2989 = vmatpush.msra.mxu0 0.0
      %2990 = vmatpush.msra.mxu0 0.0
      %2991 = vmatpush.msra.mxu0 0.0
      %2992 = vmatpush.msra.mxu0 0.0
      %2993 = vmatpush.msra.mxu0 0.0
      %2994 = vmatpush.msra.mxu0 0.0
      %2995 = vmatpush.msra.mxu0 0.0
      %2996 = vmatpush.msra.mxu0 0.0
      %2997 = vmatpush.msra.mxu0 0.0
      %2998 = vmatpush.msra.mxu0 0.0
      %2999 = vmatpush.msra.mxu0 0.0
      %3000 = vmatpush.msra.mxu0 0.0
      %3001 = vmatpush.msra.mxu0 0.0
      %3002 = vmatpush.msra.mxu0 0.0
      %3003 = vmatpush.msra.mxu0 %v2891
      %3004 = vmatmul.f32.gmra.mxu0 %v2893
      %v3005 = vpop.f32.mrf.mxu0
      %v3006 = vadd.f32 0.0, %v3005
      %3007 = vmatmul.f32.gmra.mxu0 %v2896
      %v3008 = vpop.f32.mrf.mxu0
      %v3009 = vadd.f32 0.0, %v3008
      %3010 = vmatmul.f32.gmra.mxu0 %v2899
      %v3011 = vpop.f32.mrf.mxu0
      %v3012 = vadd.f32 0.0, %v3011
      %3013 = vmatmul.f32.gmra.mxu0 %v2902
      %v3014 = vpop.f32.mrf.mxu0
      %v3015 = vadd.f32 0.0, %v3014
      %3016 = vmatmul.f32.gmra.mxu0 %v2905
      %v3017 = vpop.f32.mrf.mxu0
      %v3018 = vadd.f32 0.0, %v3017
      %3019 = vmatmul.f32.gmra.mxu0 %v2908
      %v3020 = vpop.f32.mrf.mxu0
      %v3021 = vadd.f32 0.0, %v3020
      %3022 = vmatmul.f32.gmra.mxu0 %v2911
      %v3023 = vpop.f32.mrf.mxu0
      %v3024 = vadd.f32 0.0, %v3023
      %3025 = vmatmul.f32.gmra.mxu0 %v2914
      %v3026 = vpop.f32.mrf.mxu0
      %v3027 = vadd.f32 0.0, %v3026
      %3028 = vmatmul.f32.gmra.mxu0 %v2917
      %v3029 = vpop.f32.mrf.mxu0
      %v3030 = vadd.f32 0.0, %v3029
      %3031 = vmatmul.f32.gmra.mxu0 %v2920
      %v3032 = vpop.f32.mrf.mxu0
      %v3033 = vadd.f32 0.0, %v3032
      %3034 = vmatmul.f32.gmra.mxu0 %v2923
      %v3035 = vpop.f32.mrf.mxu0
      %v3036 = vadd.f32 0.0, %v3035
      %3037 = vmatmul.f32.gmra.mxu0 %v2926
      %v3038 = vpop.f32.mrf.mxu0
      %v3039 = vadd.f32 0.0, %v3038
      %3040 = vmatmul.f32.gmra.mxu0 %v2929
      %v3041 = vpop.f32.mrf.mxu0
      %v3042 = vadd.f32 0.0, %v3041
      %3043 = vmatmul.f32.gmra.mxu0 %v2932
      %v3044 = vpop.f32.mrf.mxu0
      %v3045 = vadd.f32 0.0, %v3044
      %3046 = vmatmul.f32.gmra.mxu0 %v2935
      %v3047 = vpop.f32.mrf.mxu0
      %v3048 = vadd.f32 0.0, %v3047
      %3049 = vmatmul.f32.gmra.mxu0 %v2938
      %v3050 = vpop.f32.mrf.mxu0
      %v3051 = vadd.f32 0.0, %v3050
      %3052 = vmatmul.f32.gmra.mxu0 %v2941
      %v3053 = vpop.f32.mrf.mxu0
      %v3054 = vadd.f32 0.0, %v3053
      %3055 = vmatmul.f32.gmra.mxu0 %v2944
      %v3056 = vpop.f32.mrf.mxu0
      %v3057 = vadd.f32 0.0, %v3056
      %3058 = vmatmul.f32.gmra.mxu0 %v2947
      %v3059 = vpop.f32.mrf.mxu0
      %v3060 = vadd.f32 0.0, %v3059
      %3061 = vmatmul.f32.gmra.mxu0 %v2950
      %v3062 = vpop.f32.mrf.mxu0
      %v3063 = vadd.f32 0.0, %v3062
      %3064 = vmatmul.f32.gmra.mxu0 %v2953
      %v3065 = vpop.f32.mrf.mxu0
      %v3066 = vadd.f32 0.0, %v3065
      %3067 = vmatmul.f32.gmra.mxu0 %v2956
      %v3068 = vpop.f32.mrf.mxu0
      %v3069 = vadd.f32 0.0, %v3068
      %3070 = vmatmul.f32.gmra.mxu0 %v2959
      %v3071 = vpop.f32.mrf.mxu0
      %v3072 = vadd.f32 0.0, %v3071
      %3073 = vmatmul.f32.gmra.mxu0 %v2962
      %v3074 = vpop.f32.mrf.mxu0
      %v3075 = vadd.f32 0.0, %v3074
      %3076 = vmatmul.f32.gmra.mxu0 %v2965
      %v3077 = vpop.f32.mrf.mxu0
      %v3078 = vadd.f32 0.0, %v3077
      %3079 = vmatmul.f32.gmra.mxu0 %v2968
      %v3080 = vpop.f32.mrf.mxu0
      %v3081 = vadd.f32 0.0, %v3080
      %3082 = vmatmul.f32.gmra.mxu0 %v2971
      %v3083 = vpop.f32.mrf.mxu0
      %v3084 = vadd.f32 0.0, %v3083
      %3085 = vmatmul.f32.gmra.mxu0 %v2974
      %v3086 = vpop.f32.mrf.mxu0
      %v3087 = vadd.f32 0.0, %v3086
      %3088 = vmatmul.f32.gmra.mxu0 %v2977
      %v3089 = vpop.f32.mrf.mxu0
      %v3090 = vadd.f32 0.0, %v3089
      %3091 = vmatmul.f32.gmra.mxu0 %v2980
      %v3092 = vpop.f32.mrf.mxu0
      %v3093 = vadd.f32 0.0, %v3092
      %3094 = vmatmul.f32.gmra.mxu0 %v2983
      %v3095 = vpop.f32.mrf.mxu0
      %v3096 = vadd.f32 0.0, %v3095
      %3097 = vmatmul.f32.gmra.mxu0 %v2986
      %v3098 = vpop.f32.mrf.mxu0
      %v3099 = vadd.f32 0.0, %v3098
      %3100 = vdwg.mxu0
      %v3101 = vadd.f32 %v2826, %v3006
      %v3102 = vadd.f32 %v2827, %v3009
      %v3103 = vadd.f32 %v2828, %v3012
      %v3104 = vadd.f32 %v2829, %v3015
      %v3105 = vadd.f32 %v2830, %v3018
      %v3106 = vadd.f32 %v2831, %v3021
      %v3107 = vadd.f32 %v2832, %v3024
      %v3108 = vadd.f32 %v2833, %v3027
      %v3109 = vadd.f32 %v2834, %v3030
      %v3110 = vadd.f32 %v2835, %v3033
      %v3111 = vadd.f32 %v2836, %v3036
      %v3112 = vadd.f32 %v2837, %v3039
      %v3113 = vadd.f32 %v2838, %v3042
      %v3114 = vadd.f32 %v2839, %v3045
      %v3115 = vadd.f32 %v2840, %v3048
      %v3116 = vadd.f32 %v2841, %v3051
      %v3117 = vadd.f32 %v2842, %v3054
      %v3118 = vadd.f32 %v2843, %v3057
      %v3119 = vadd.f32 %v2844, %v3060
      %v3120 = vadd.f32 %v2845, %v3063
      %v3121 = vadd.f32 %v2846, %v3066
      %v3122 = vadd.f32 %v2847, %v3069
      %v3123 = vadd.f32 %v2848, %v3072
      %v3124 = vadd.f32 %v2849, %v3075
      %v3125 = vadd.f32 %v2850, %v3078
      %v3126 = vadd.f32 %v2851, %v3081
      %v3127 = vadd.f32 %v2852, %v3084
      %v3128 = vadd.f32 %v2853, %v3087
      %v3129 = vadd.f32 %v2854, %v3090
      %v3130 = vadd.f32 %v2855, %v3093
      %v3131 = vadd.f32 %v2856, %v3096
      %v3132 = vadd.f32 %v2857, %v3099
      %3133 = vst.msk [vmem:[%s457] sm:$0xff] %vm603, %v3101
      %3134 = vst.msk [vmem:[%s457 + $0x8] sm:$0xff] %vm603, %v3102
      %3135 = vst.msk [vmem:[%s457 + $0x10] sm:$0xff] %vm603, %v3103
      %3136 = vst.msk [vmem:[%s457 + $0x18] sm:$0xff] %vm603, %v3104
      %3137 = vst.msk [vmem:[%s457 + $0x20] sm:$0xff] %vm603, %v3105
      %3138 = vst.msk [vmem:[%s457 + $0x28] sm:$0xff] %vm603, %v3106
      %3139 = vst.msk [vmem:[%s457 + $0x30] sm:$0xff] %vm603, %v3107
      %3140 = vst.msk [vmem:[%s457 + $0x38] sm:$0xff] %vm603, %v3108
      %3141 = vst.msk [vmem:[%s457 + $0x40] sm:$0xff] %vm603, %v3109
      %3142 = vst.msk [vmem:[%s457 + $0x48] sm:$0xff] %vm603, %v3110
      %3143 = vst.msk [vmem:[%s457 + $0x50] sm:$0xff] %vm603, %v3111
      %3144 = vst.msk [vmem:[%s457 + $0x58] sm:$0xff] %vm603, %v3112
      %3145 = vst.msk [vmem:[%s457 + $0x60] sm:$0xff] %vm603, %v3113
      %3146 = vst.msk [vmem:[%s457 + $0x68] sm:$0xff] %vm603, %v3114
      %3147 = vst.msk [vmem:[%s457 + $0x70] sm:$0xff] %vm603, %v3115
      %3148 = vst.msk [vmem:[%s457 + $0x78] sm:$0xff] %vm603, %v3116
      %3149 = vst.msk [vmem:[%s457 + $0x80] sm:$0xff] %vm603, %v3117
      %3150 = vst.msk [vmem:[%s457 + $0x88] sm:$0xff] %vm603, %v3118
      %3151 = vst.msk [vmem:[%s457 + $0x90] sm:$0xff] %vm603, %v3119
      %3152 = vst.msk [vmem:[%s457 + $0x98] sm:$0xff] %vm603, %v3120
      %3153 = vst.msk [vmem:[%s457 + $0xa0] sm:$0xff] %vm603, %v3121
      %3154 = vst.msk [vmem:[%s457 + $0xa8] sm:$0xff] %vm603, %v3122
      %3155 = vst.msk [vmem:[%s457 + $0xb0] sm:$0xff] %vm603, %v3123
      %3156 = vst.msk [vmem:[%s457 + $0xb8] sm:$0xff] %vm603, %v3124
      %3157 = vst.msk [vmem:[%s457 + $0xc0] sm:$0xff] %vm603, %v3125
      %3158 = vst.msk [vmem:[%s457 + $0xc8] sm:$0xff] %vm603, %v3126
      %3159 = vst.msk [vmem:[%s457 + $0xd0] sm:$0xff] %vm603, %v3127
      %3160 = vst.msk [vmem:[%s457 + $0xd8] sm:$0xff] %vm603, %v3128
      %3161 = vst.msk [vmem:[%s457 + $0xe0] sm:$0xff] %vm603, %v3129
      %3162 = vst.msk [vmem:[%s457 + $0xe8] sm:$0xff] %vm603, %v3130
      %3163 = vst.msk [vmem:[%s457 + $0xf0] sm:$0xff] %vm603, %v3131
      %3164 = vst.msk [vmem:[%s457 + $0xf8] sm:$0xff] %vm603, %v3132
      %v3165 = vsel %vm603, %v3101, 0.0
      %v3166 = vsel %vm603, %v3102, 0.0
      %v3167 = vadd.f32 %v3165, %v3166
      %v3168 = vsel %vm603, %v3103, 0.0
      %v3169 = vadd.f32 %v3167, %v3168
      %v3170 = vsel %vm603, %v3104, 0.0
      %v3171 = vadd.f32 %v3169, %v3170
      %v3172 = vsel %vm603, %v3105, 0.0
      %v3173 = vadd.f32 %v3171, %v3172
      %v3174 = vsel %vm603, %v3106, 0.0
      %v3175 = vadd.f32 %v3173, %v3174
      %v3176 = vsel %vm603, %v3107, 0.0
      %v3177 = vadd.f32 %v3175, %v3176
      %v3178 = vsel %vm603, %v3108, 0.0
      %v3179 = vadd.f32 %v3177, %v3178
      %v3180 = vsel %vm603, %v3109, 0.0
      %v3181 = vadd.f32 %v3179, %v3180
      %v3182 = vsel %vm603, %v3110, 0.0
      %v3183 = vadd.f32 %v3181, %v3182
      %v3184 = vsel %vm603, %v3111, 0.0
      %v3185 = vadd.f32 %v3183, %v3184
      %v3186 = vsel %vm603, %v3112, 0.0
      %v3187 = vadd.f32 %v3185, %v3186
      %v3188 = vsel %vm603, %v3113, 0.0
      %v3189 = vadd.f32 %v3187, %v3188
      %v3190 = vsel %vm603, %v3114, 0.0
      %v3191 = vadd.f32 %v3189, %v3190
      %v3192 = vsel %vm603, %v3115, 0.0
      %v3193 = vadd.f32 %v3191, %v3192
      %v3194 = vsel %vm603, %v3116, 0.0
      %v3195 = vadd.f32 %v3193, %v3194
      %v3196 = vsel %vm603, %v3117, 0.0
      %v3197 = vadd.f32 %v3195, %v3196
      %v3198 = vsel %vm603, %v3118, 0.0
      %v3199 = vadd.f32 %v3197, %v3198
      %v3200 = vsel %vm603, %v3119, 0.0
      %v3201 = vadd.f32 %v3199, %v3200
      %v3202 = vsel %vm603, %v3120, 0.0
      %v3203 = vadd.f32 %v3201, %v3202
      %v3204 = vsel %vm603, %v3121, 0.0
      %v3205 = vadd.f32 %v3203, %v3204
      %v3206 = vsel %vm603, %v3122, 0.0
      %v3207 = vadd.f32 %v3205, %v3206
      %v3208 = vsel %vm603, %v3123, 0.0
      %v3209 = vadd.f32 %v3207, %v3208
      %v3210 = vsel %vm603, %v3124, 0.0
      %v3211 = vadd.f32 %v3209, %v3210
      %v3212 = vsel %vm603, %v3125, 0.0
      %v3213 = vadd.f32 %v3211, %v3212
      %v3214 = vsel %vm603, %v3126, 0.0
      %v3215 = vadd.f32 %v3213, %v3214
      %v3216 = vsel %vm603, %v3127, 0.0
      %v3217 = vadd.f32 %v3215, %v3216
      %v3218 = vsel %vm603, %v3128, 0.0
      %v3219 = vadd.f32 %v3217, %v3218
      %v3220 = vsel %vm603, %v3129, 0.0
      %v3221 = vadd.f32 %v3219, %v3220
      %v3222 = vsel %vm603, %v3130, 0.0
      %v3223 = vadd.f32 %v3221, %v3222
      %v3224 = vsel %vm603, %v3131, 0.0
      %v3225 = vadd.f32 %v3223, %v3224
      %v3226 = vsel %vm603, %v3132, 0.0
      %v3227 = vadd.f32 %v3225, %v3226
      %v3228 = vrot.slane %v3227, 4
      %v3229 = vadd.f32 %v3227, %v3228
      %v3230 = vrot.slane %v3229, 2
      %v3231 = vadd.f32 %v3229, %v3230
      %v3232 = vrot.slane %v3231, 1
      %v3233 = vadd.f32 %v3231, %v3232
      %v3234 = vmul.f32 %v3233, 0.00390625
      %v3235 = vsub.f32 %v3101, %v3234
      %v3236 = vsub.f32 %v3102, %v3234
      %v3237 = vsub.f32 %v3103, %v3234
      %v3238 = vsub.f32 %v3104, %v3234
      %v3239 = vsub.f32 %v3105, %v3234
      %v3240 = vsub.f32 %v3106, %v3234
      %v3241 = vsub.f32 %v3107, %v3234
      %v3242 = vsub.f32 %v3108, %v3234
      %v3243 = vsub.f32 %v3109, %v3234
      %v3244 = vsub.f32 %v3110, %v3234
      %v3245 = vsub.f32 %v3111, %v3234
      %v3246 = vsub.f32 %v3112, %v3234
      %v3247 = vsub.f32 %v3113, %v3234
      %v3248 = vsub.f32 %v3114, %v3234
      %v3249 = vsub.f32 %v3115, %v3234
      %v3250 = vsub.f32 %v3116, %v3234
      %v3251 = vsub.f32 %v3117, %v3234
      %v3252 = vsub.f32 %v3118, %v3234
      %v3253 = vsub.f32 %v3119, %v3234
      %v3254 = vsub.f32 %v3120, %v3234
      %v3255 = vsub.f32 %v3121, %v3234
      %v3256 = vsub.f32 %v3122, %v3234
      %v3257 = vsub.f32 %v3123, %v3234
      %v3258 = vsub.f32 %v3124, %v3234
      %v3259 = vsub.f32 %v3125, %v3234
      %v3260 = vsub.f32 %v3126, %v3234
      %v3261 = vsub.f32 %v3127, %v3234
      %v3262 = vsub.f32 %v3128, %v3234
      %v3263 = vsub.f32 %v3129, %v3234
      %v3264 = vsub.f32 %v3130, %v3234
      %v3265 = vsub.f32 %v3131, %v3234
      %v3266 = vsub.f32 %v3132, %v3234
      %v3267 = vmul.f32 %v3235, %v3235
      %v3268 = vmul.f32 %v3236, %v3236
      %v3269 = vmul.f32 %v3237, %v3237
      %v3270 = vmul.f32 %v3238, %v3238
      %v3271 = vmul.f32 %v3239, %v3239
      %v3272 = vmul.f32 %v3240, %v3240
      %v3273 = vmul.f32 %v3241, %v3241
      %v3274 = vmul.f32 %v3242, %v3242
      %v3275 = vmul.f32 %v3243, %v3243
      %v3276 = vmul.f32 %v3244, %v3244
      %v3277 = vmul.f32 %v3245, %v3245
      %v3278 = vmul.f32 %v3246, %v3246
      %v3279 = vmul.f32 %v3247, %v3247
      %v3280 = vmul.f32 %v3248, %v3248
      %v3281 = vmul.f32 %v3249, %v3249
      %v3282 = vmul.f32 %v3250, %v3250
      %v3283 = vmul.f32 %v3251, %v3251
      %v3284 = vmul.f32 %v3252, %v3252
      %v3285 = vmul.f32 %v3253, %v3253
      %v3286 = vmul.f32 %v3254, %v3254
      %v3287 = vmul.f32 %v3255, %v3255
      %v3288 = vmul.f32 %v3256, %v3256
      %v3289 = vmul.f32 %v3257, %v3257
      %v3290 = vmul.f32 %v3258, %v3258
      %v3291 = vmul.f32 %v3259, %v3259
      %v3292 = vmul.f32 %v3260, %v3260
      %v3293 = vmul.f32 %v3261, %v3261
      %v3294 = vmul.f32 %v3262, %v3262
      %v3295 = vmul.f32 %v3263, %v3263
      %v3296 = vmul.f32 %v3264, %v3264
      %v3297 = vmul.f32 %v3265, %v3265
      %v3298 = vmul.f32 %v3266, %v3266
      %v3299 = vsel %vm603, %v3267, 0.0
      %v3300 = vsel %vm603, %v3268, 0.0
      %v3301 = vadd.f32 %v3299, %v3300
      %v3302 = vsel %vm603, %v3269, 0.0
      %v3303 = vadd.f32 %v3301, %v3302
      %v3304 = vsel %vm603, %v3270, 0.0
      %v3305 = vadd.f32 %v3303, %v3304
      %v3306 = vsel %vm603, %v3271, 0.0
      %v3307 = vadd.f32 %v3305, %v3306
      %v3308 = vsel %vm603, %v3272, 0.0
      %v3309 = vadd.f32 %v3307, %v3308
      %v3310 = vsel %vm603, %v3273, 0.0
      %v3311 = vadd.f32 %v3309, %v3310
      %v3312 = vsel %vm603, %v3274, 0.0
      %v3313 = vadd.f32 %v3311, %v3312
      %v3314 = vsel %vm603, %v3275, 0.0
      %v3315 = vadd.f32 %v3313, %v3314
      %v3316 = vsel %vm603, %v3276, 0.0
      %v3317 = vadd.f32 %v3315, %v3316
      %v3318 = vsel %vm603, %v3277, 0.0
      %v3319 = vadd.f32 %v3317, %v3318
      %v3320 = vsel %vm603, %v3278, 0.0
      %v3321 = vadd.f32 %v3319, %v3320
      %v3322 = vsel %vm603, %v3279, 0.0
      %v3323 = vadd.f32 %v3321, %v3322
      %v3324 = vsel %vm603, %v3280, 0.0
      %v3325 = vadd.f32 %v3323, %v3324
      %v3326 = vsel %vm603, %v3281, 0.0
      %v3327 = vadd.f32 %v3325, %v3326
      %v3328 = vsel %vm603, %v3282, 0.0
      %v3329 = vadd.f32 %v3327, %v3328
      %v3330 = vsel %vm603, %v3283, 0.0
      %v3331 = vadd.f32 %v3329, %v3330
      %v3332 = vsel %vm603, %v3284, 0.0
      %v3333 = vadd.f32 %v3331, %v3332
      %v3334 = vsel %vm603, %v3285, 0.0
      %v3335 = vadd.f32 %v3333, %v3334
      %v3336 = vsel %vm603, %v3286, 0.0
      %v3337 = vadd.f32 %v3335, %v3336
      %v3338 = vsel %vm603, %v3287, 0.0
      %v3339 = vadd.f32 %v3337, %v3338
      %v3340 = vsel %vm603, %v3288, 0.0
      %v3341 = vadd.f32 %v3339, %v3340
      %v3342 = vsel %vm603, %v3289, 0.0
      %v3343 = vadd.f32 %v3341, %v3342
      %v3344 = vsel %vm603, %v3290, 0.0
      %v3345 = vadd.f32 %v3343, %v3344
      %v3346 = vsel %vm603, %v3291, 0.0
      %v3347 = vadd.f32 %v3345, %v3346
      %v3348 = vsel %vm603, %v3292, 0.0
      %v3349 = vadd.f32 %v3347, %v3348
      %v3350 = vsel %vm603, %v3293, 0.0
      %v3351 = vadd.f32 %v3349, %v3350
      %v3352 = vsel %vm603, %v3294, 0.0
      %v3353 = vadd.f32 %v3351, %v3352
      %v3354 = vsel %vm603, %v3295, 0.0
      %v3355 = vadd.f32 %v3353, %v3354
      %v3356 = vsel %vm603, %v3296, 0.0
      %v3357 = vadd.f32 %v3355, %v3356
      %v3358 = vsel %vm603, %v3297, 0.0
      %v3359 = vadd.f32 %v3357, %v3358
      %v3360 = vsel %vm603, %v3298, 0.0
      %v3361 = vadd.f32 %v3359, %v3360
      %v3362 = vrot.slane %v3361, 4
      %v3363 = vadd.f32 %v3361, %v3362
      %v3364 = vrot.slane %v3363, 2
      %v3365 = vadd.f32 %v3363, %v3364
      %v3366 = vrot.slane %v3365, 1
      %v3367 = vadd.f32 %v3365, %v3366
      %vm3368 = vcmask 1040384
      %v3369 = vsel %vm3368, %v3233, %v3367
      %vm3370 = vcmask 58368
      %3371 = vst.msk [vmem:[%s465] sm:$0x3] %vm3370, %v3369
      %s3372 = smul.u32 16, %s24
      %p3373 = scmp.lt.s32.totalorder %s23, 1
      %s3374 = scalar_select %p3373, %s23, 1
      %p3375 = scmp.lt.s32.totalorder %s3372, 15
      %s3376 = scalar_select %p3375, %s3372, 15
      %s3377 = smul.addr %s3376, 2
      %s3378 = smul.addr %s3374, 32
      %s3379 = sadd.s32 %s3377, %s3378
      %s3380 = smul.addr %s3379, 8
      %s3381 = scalar_lea.vmem %s6, %s3380
      %p3382 = scmp.lt.s32.totalorder %s23, 1
      %s3383 = scalar_select %p3382, %s23, 1
      %p3384 = scmp.lt.s32.totalorder %s24, 0
      %s3385 = scalar_select %p3384, %s24, 0
      %s3386 = sadd.s32 %s3385, %s3383
      %s3387 = smul.addr %s3386, 2
      %s3388 = scalar_lea.vmem %s7, %s3387
      // Predicated region
      $region45: #{double_conv.4} parent=43 // pred_check
        %p3389 = pneg %p214
      $region46: #{double_conv.4} parent=43 // pred_check_branch
        %3391 = sbr.rel (%p3389) target = $region48
      $region47: #{double_conv.4} parent=43 // pred_region
        %s3392 = smul.u32 16, %s24
      $region48: #{double_conv.4} parent=43 // pred_fallthru
        _
      // Predicated region
      $region49: #{double_conv.4} parent=43 // pred_check
        %p3393 = pneg %p242
      $region50: #{double_conv.4} parent=43 // pred_check_branch
        %3395 = sbr.rel (%p3393) target = $region52
      $region51: #{double_conv.4} parent=43 // pred_region
        _
      $region52: #{double_conv.4} parent=43 // pred_fallthru
        _
    $region44: #{double_conv.4} parent=5 // pred_fallthru
      _
    %p3396 = scmp.le.s32.totalorder 2, %s14
    // Predicated region
    $region53: #{double_conv.4} parent=5 // pred_check
      %p3397 = pneg %p3396
    $region54: #{double_conv.4} parent=5 // pred_check_branch
      %3399 = sbr.rel (%p3397) target = $region56
    $region55: #{double_conv.4} parent=5 // pred_region
      %s3400 = ssub.s32 %s14, 2
      // Predicated region
      $region57: #{double_conv.4} parent=55 // pred_check
        %p3401 = pneg %p220
      $region58: #{double_conv.4} parent=55 // pred_check_branch
        %3403 = sbr.rel (%p3401) target = $region60
      $region59: #{double_conv.4} parent=55 // pred_region
        %s3404 = smul.u32 16, %s26
        %p3405 = scmp.lt.s32.totalorder %s25, 1
        %s3406 = scalar_select %p3405, %s25, 1
        %p3407 = scmp.lt.s32.totalorder %s3404, 15
        %s3408 = scalar_select %p3407, %s3404, 15
        %s3409 = smul.addr %s3408, 2
        %s3410 = smul.addr %s3406, 32
        %s3411 = sadd.s32 %s3409, %s3410
        %s3412 = smul.addr %s3411, 8
        %s3413 = scalar_lea.vmem %s6, %s3412
      $region60: #{double_conv.4} parent=55 // pred_fallthru
        _
      // Predicated region
      $region61: #{double_conv.4} parent=55 // pred_check
        %p3414 = pneg %p248
      $region62: #{double_conv.4} parent=55 // pred_check_branch
        %3416 = sbr.rel (%p3414) target = $region64
      $region63: #{double_conv.4} parent=55 // pred_region
        %p3417 = scmp.lt.s32.totalorder %s25, 1
        %s3418 = scalar_select %p3417, %s25, 1
        %p3419 = scmp.lt.s32.totalorder %s26, 0
        %s3420 = scalar_select %p3419, %s26, 0
        %s3421 = sadd.s32 %s3420, %s3418
        %s3422 = smul.addr %s3421, 2
        %s3423 = scalar_lea.vmem %s7, %s3422
      $region64: #{double_conv.4} parent=55 // pred_fallthru
        _
    $region56: #{double_conv.4} parent=5 // pred_fallthru
      _
  $region6: #{double_conv.4} parent=0 // loop_footer
    %s18 = sadd.s32 1, %s14
  $region7: #{double_conv.4} parent=0 // loop_footer_branch
    %13 = sbr.rel target = $region3
  $region8: #{double_conv.4} parent=0 // loop_exit
    _

</llo_original>
